<compile_context>
chip_gen: v5e
topology: v5e:2x2
jax: 0.10.0
libtpu: 0.0.40
codegen_flags: <defaults>
</compile_context>

<pallas_src>
import functools

import numpy as np
import jax
import jax.numpy as jnp
from jax.experimental import pallas as pl
from jax.experimental.pallas import tpu as pltpu


_TAPS = tuple((dh, dw) for dh in (-1, 0, 1) for dw in (-1, 0, 1))


# ----------------------------------------------------------------------------
# In-kernel building blocks (activations are (H*W, Cpad) f32 values)
# ----------------------------------------------------------------------------
def _conv3x3_bn(x, w, b, H, W, masks, relu, compute_dtype):
    """3x3 same-conv + folded BN (+ ReLU) as ONE MXU matmul.

    x     : (M, C) f32, M = H*W, channels zero-padded to C
    w     : (9*C, C) compute_dtype (BN scale folded in, tap-major rows)
    b     : (1, C) f32 (folded BN bias)
    masks : 8 precomputed (M, 1) f32 zero-padding masks (non-center taps,
            same row-major tap order as the loop below).
    """
    M = H * W
    slabs = []
    mi = 0
    for dh, dw in _TAPS:
        s = dh * W + dw                       # want slab[i] = x[i + s]
        if s == 0:
            slab = x
        else:
            # roll along sublanes (XLU) + precomputed f32 mask = zero padding
            slab = pltpu.roll(x, shift=(-s) % M, axis=0) * masks[mi]
            mi += 1
        slabs.append(slab.astype(compute_dtype))
    lhs = jnp.concatenate(slabs, axis=-1)     # (M, 9*C): one big-K matmul
    y = jnp.dot(lhs, w, preferred_element_type=jnp.float32) + b
    return jnp.maximum(y, 0.0) if relu else y


def _conv1x1_bn(x, w, b, compute_dtype):
    """1x1 conv + folded BN (BasicBlock downsample)."""
    y = jnp.dot(x.astype(compute_dtype), w, preferred_element_type=jnp.float32)
    return y + b


def _maxpool2x2(x, sel, H, W, compute_dtype):
    """2x2 / stride-2 max-pool on a flattened (H*W, C) f32 activation.

    Neighbor max via sublane rolls, then an exact 0/1 bf16 selection matmul
    compacts (H*W, C) -> (H/2*W/2, C).  Wrap-around rows/cols from the rolls
    are never selected (sel only picks even (h, w) positions).
    """
    M = H * W
    right = pltpu.roll(x, shift=M - 1, axis=0)        # right[i] = x[i + 1]
    xm = jnp.maximum(x, right)
    below = pltpu.roll(xm, shift=M - W, axis=0)       # below[i] = xm[i + W]
    xm = jnp.maximum(xm, below)
    return jnp.dot(sel, xm.astype(compute_dtype),
                   preferred_element_type=jnp.float32)


# ----------------------------------------------------------------------------
# Fused whole-network kernel
# ----------------------------------------------------------------------------
def _resnet_kernel(x_ref, w3_ref, w1_ref, b_ref, masks_ref, sel1_ref, sel2_ref,
                   o_ref, *, plan, H0, W0, mask_offs, compute_dtype):
    x = x_ref[0].astype(jnp.float32)                  # (H0*W0, Cpad)
    H, W = H0, W0
    res = 0                                           # resolution index 0/1/2
    sel_refs = (sel1_ref, sel2_ref)
    mask_cache = {}

    def get_masks():
        # Slice the host-precomputed (M, 8) mask table once per resolution
        # and reuse the 8 (M, 1) columns across every conv at that resolution.
        if res not in mask_cache:
            off = mask_offs[res]
            blk = masks_ref[off:off + H * W, :]       # (M, 8) f32
            mask_cache[res] = tuple(blk[:, j:j + 1] for j in range(8))
        return mask_cache[res]

    for op in plan:
        kind = op[0]
        if kind == "conv":                            # conv3x3 -> BN -> ReLU
            _, wi, bi = op
            x = _conv3x3_bn(x, w3_ref[wi], b_ref[bi:bi + 1, :], H, W,
                            get_masks(), True, compute_dtype)
        elif kind == "block":                         # BasicBlock (expansion=1)
            _, w1i, b1i, w2i, b2i, wdi, bdi = op
            residual = x
            if wdi >= 0:                              # 1x1 downsample + BN
                residual = _conv1x1_bn(x, w1_ref[wdi], b_ref[bdi:bdi + 1, :],
                                       compute_dtype)
            y = _conv3x3_bn(x, w3_ref[w1i], b_ref[b1i:b1i + 1, :], H, W,
                            get_masks(), True, compute_dtype)
            y = _conv3x3_bn(y, w3_ref[w2i], b_ref[b2i:b2i + 1, :], H, W,
                            get_masks(), False, compute_dtype)
            x = jnp.maximum(y + residual, 0.0)
        else:                                         # "pool": 2x2 stride-2
            _, sidx = op
            x = _maxpool2x2(x, sel_refs[sidx][...], H, W, compute_dtype)
            H, W = H // 2, W // 2
            res += 1

    o_ref[0] = x.astype(o_ref.dtype)


# ----------------------------------------------------------------------------
# Host-side folding / packing helpers
# ----------------------------------------------------------------------------
def _fold3x3(d, cpad, compute_dtype):
    w, s, b = d["w"], d["s"], d["b"]                   # (3,3,cin,cout)
    cin, cout = w.shape[2], w.shape[3]
    w = w * s[None, None, None, :]                     # fold BN scale
    wp = jnp.zeros((3, 3, cpad, cpad), jnp.float32).at[:, :, :cin, :cout].set(w)
    bp = jnp.zeros((cpad,), jnp.float32).at[:cout].set(b)
    return wp.reshape(9 * cpad, cpad).astype(compute_dtype), bp


def _fold1x1(d, cpad, compute_dtype):
    w, s, b = d["w"], d["s"], d["b"]                   # (cin, cout)
    cin, cout = w.shape
    w = w * s[None, :]
    wp = jnp.zeros((cpad, cpad), jnp.float32).at[:cin, :cout].set(w)
    bp = jnp.zeros((cpad,), jnp.float32).at[:cout].set(b)
    return wp.astype(compute_dtype), bp


def _pool_select_matrix(H, W, dtype):
    """(H/2*W/2, H*W) exact 0/1 matrix picking flat index 2h'*W + 2w'."""
    Hp, Wp = H // 2, W // 2
    j = np.arange(Hp * Wp)
    tgt = 2 * (j // Wp) * W + 2 * (j % Wp)
    sel = np.zeros((Hp * Wp, H * W), np.float32)
    sel[j, tgt] = 1.0
    return jnp.asarray(sel, dtype=dtype)


def _boundary_masks(H, W):
    """(H*W, 8) f32 zero-padding masks for the 8 non-center 3x3 taps."""
    M = H * W
    hh, ww = np.arange(M) // W, np.arange(M) % W
    cols = []
    for dh in (-1, 0, 1):
        for dw in (-1, 0, 1):
            if dh == 0 and dw == 0:
                continue
            ok = ((hh + dh >= 0) & (hh + dh < H) &
                  (ww + dw >= 0) & (ww + dw < W))
            cols.append(ok.astype(np.float32))
    return np.stack(cols, axis=1)


# ----------------------------------------------------------------------------
# Wrapper
# ----------------------------------------------------------------------------
def resnet_v2_forward(x_nchw, params, *, compute_dtype=jnp.bfloat16):
    """Forward pass matching the PyTorch ResNetV2 module (inference-mode BN)."""
    N, cin, H, W = x_nchw.shape
    assert N >= 1 and H % 4 == 0 and W % 4 == 0, (N, H, W)

    # --- single padded channel width (free below 128 lanes) -----------------
    chans = [cin]
    def _visit(d):
        chans.append(int(d["b"].shape[0]))
    _visit(params["conv0_1"]); _visit(params["conv0_2"])
    for name in ("conv1", "conv2", "conv3", "conv4_1"):
        _visit(params[name])
    for name in ("layer1", "layer2", "layer3", "layer4"):
        for blk in params[name]:
            _visit(blk["c1"]); _visit(blk["c2"])
            if "down" in blk:
                _visit(blk["down"])
    cpad = -(-max(chans) // 8) * 8
    cout_final = int(params["conv4_1"]["b"].shape[0])

    # --- fold BN, pad channels, pack parameters into a few blobs ------------
    plan, w3_list, w1_list, b_list = [], [], [], []

    def add3(d):
        wp, bp = _fold3x3(d, cpad, compute_dtype)
        w3_list.append(wp); b_list.append(bp)
        return len(w3_list) - 1, len(b_list) - 1

    def add1(d):
        wp, bp = _fold1x1(d, cpad, compute_dtype)
        w1_list.append(wp); b_list.append(bp)
        return len(w1_list) - 1, len(b_list) - 1

    def conv(d):
        wi, bi = add3(d)
        plan.append(("conv", wi, bi))

    def block(blk):
        w1i, b1i = add3(blk["c1"])
        w2i, b2i = add3(blk["c2"])
        wdi, bdi = add1(blk["down"]) if "down" in blk else (-1, -1)
        plan.append(("block", w1i, b1i, w2i, b2i, wdi, bdi))

    conv(params["conv0_1"]); conv(params["conv0_2"])
    plan.append(("pool", 0))
    for blk in params["layer1"]:
        block(blk)
    conv(params["conv1"])
    plan.append(("pool", 1))
    for blk in params["layer2"]:
        block(blk)
    conv(params["conv2"])
    for blk in params["layer3"]:
        block(blk)
    conv(params["conv3"])
    for blk in params["layer4"]:
        block(blk)
    conv(params["conv4_1"])

    w3_blob = jnp.stack(w3_list)                        # (n3, 9*cpad, cpad)
    w1_blob = (jnp.stack(w1_list) if w1_list
               else jnp.zeros((1, cpad, cpad), compute_dtype))
    b_blob = jnp.stack(b_list)                          # (nb, cpad) f32

    # Boundary-mask tables (one per resolution, row-packed) and pool selectors.
    m1 = _boundary_masks(H, W)
    m2 = _boundary_masks(H // 2, W // 2)
    m3 = _boundary_masks(H // 4, W // 4)
    masks_blob = jnp.asarray(np.concatenate([m1, m2, m3], axis=0))
    mask_offs = (0, H * W, H * W + (H // 2) * (W // 2))
    sel1 = _pool_select_matrix(H, W, compute_dtype)
    sel2 = _pool_select_matrix(H // 2, W // 2, compute_dtype)

    # --- input: NCHW -> (N, H*W, cpad) f32 -----------------------------------
    x = jnp.transpose(x_nchw, (0, 2, 3, 1)).astype(jnp.float32)
    x = x.reshape(N, H * W, cin)
    if cin < cpad:
        x = jnp.pad(x, ((0, 0), (0, 0), (0, cpad - cin)))

    m_out = (H // 4) * (W // 4)
    kernel = functools.partial(
        _resnet_kernel, plan=tuple(plan), H0=H, W0=W,
        mask_offs=mask_offs, compute_dtype=compute_dtype)

    out = pl.pallas_call(
        kernel,
        out_shape=jax.ShapeDtypeStruct((N, m_out, cpad), jnp.float32),
        grid=(N,),
        in_specs=[
            pl.BlockSpec((1, H * W, cpad), lambda n: (n, 0, 0)),   # image
            pl.BlockSpec(w3_blob.shape, lambda n: (0, 0, 0)),      # 3x3 weights
            pl.BlockSpec(w1_blob.shape, lambda n: (0, 0, 0)),      # 1x1 weights
            pl.BlockSpec(b_blob.shape, lambda n: (0, 0)),          # biases
            pl.BlockSpec(masks_blob.shape, lambda n: (0, 0)),      # pad masks
            pl.BlockSpec(sel1.shape, lambda n: (0, 0)),            # pool sel 1
            pl.BlockSpec(sel2.shape, lambda n: (0, 0)),            # pool sel 2
        ],
        out_specs=pl.BlockSpec((1, m_out, cpad), lambda n: (n, 0, 0)),
        compiler_params=pltpu.CompilerParams(
            dimension_semantics=("parallel",)),
    )(x, w3_blob, w1_blob, b_blob, masks_blob, sel1, sel2)

    out = out[:, :, :cout_final].reshape(N, H // 4, W // 4, cout_final)
    return jnp.transpose(out, (0, 3, 1, 2))             # NHWC -> NCHW


# ----------------------------------------------------------------------------
# Pure-JAX f32 reference (for a tolerance check against the bf16 kernel)
# ----------------------------------------------------------------------------
def _ref_forward(x_nchw, params):
    x = jnp.transpose(x_nchw, (0, 2, 3, 1))             # NHWC

    def conv3(x, d, relu=True):
        w = d["w"] * d["s"][None, None, None, :]
        y = jax.lax.conv_general_dilated(
            x, w, (1, 1), "SAME",
            dimension_numbers=("NHWC", "HWIO", "NHWC"))
        y = y + d["b"][None, None, None, :]
        return jnp.maximum(y, 0.0) if relu else y

    def conv1(x, d):
        w = d["w"] * d["s"][None, :]
        return jnp.einsum("nhwc,cd->nhwd", x, w) + d["b"]

    def pool(x):
        return jax.lax.reduce_window(x, -jnp.inf, jax.lax.max,
                                     (1, 2, 2, 1), (1, 2, 2, 1), "VALID")

    def block(x, blk):
        r = conv1(x, blk["down"]) if "down" in blk else x
        y = conv3(x, blk["c1"], True)
        y = conv3(y, blk["c2"], False)
        return jnp.maximum(y + r, 0.0)

    x = conv3(x, params["conv0_1"]); x = conv3(x, params["conv0_2"])
    x = pool(x)
    for blk in params["layer1"]:
        x = block(x, blk)
    x = conv3(x, params["conv1"])
    x = pool(x)
    for blk in params["layer2"]:
        x = block(x, blk)
    x = conv3(x, params["conv2"])
    for blk in params["layer3"]:
        x = block(x, blk)
    x = conv3(x, params["conv3"])
    for blk in params["layer4"]:
        x = block(x, blk)
    x = conv3(x, params["conv4_1"])
    return jnp.transpose(x, (0, 3, 1, 2))


# ----------------------------------------------------------------------------
# Deterministic synthetic parameters (shapes per the module's __init__)
# ----------------------------------------------------------------------------
def _conv_weight(key, cin, cout, k):
    shape = (3, 3, cin, cout) if k == 3 else (cin, cout)
    fan_in = cin * k * k
    return jax.random.normal(key, shape, jnp.float32) / jnp.sqrt(fan_in)


def _bn_folded(key, c, eps=1e-5):
    k1, k2, k3, k4 = jax.random.split(key, 4)
    gamma = 1.0 + 0.1 * jax.random.normal(k1, (c,), jnp.float32)
    beta = 0.1 * jax.random.normal(k2, (c,), jnp.float32)
    mean = 0.1 * jax.random.normal(k3, (c,), jnp.float32)
    var = 1.0 + 0.1 * jax.random.uniform(k4, (c,), jnp.float32)
    scale = gamma / jnp.sqrt(var + eps)           # inference-mode BN, folded
    bias = beta - mean * scale
    return scale, bias


def init_params(key, input_channel, output_channel, layers):
    keys = iter(jax.random.split(key, 512))
    oc = output_channel
    ocb = [oc // 4, oc // 2, oc, oc]
    inplanes = oc // 8

    def conv_bn(cin, cout, k=3):
        wgt = _conv_weight(next(keys), cin, cout, k)
        s, b = _bn_folded(next(keys), cout)
        return {"w": wgt, "s": s, "b": b}

    p = {}
    p["conv0_1"] = conv_bn(input_channel, oc // 16)
    p["conv0_2"] = conv_bn(oc // 16, inplanes)

    def make_layer(planes, nblocks):
        nonlocal inplanes
        blocks = []
        for i in range(nblocks):
            blk = {"c1": conv_bn(inplanes, planes),
                   "c2": conv_bn(planes, planes)}
            if i == 0 and inplanes != planes:     # stride is always 1 here
                blk["down"] = conv_bn(inplanes, planes, k=1)
            blocks.append(blk)
            inplanes = planes
        return blocks

    p["layer1"] = make_layer(ocb[0], layers[0])
    p["conv1"] = conv_bn(ocb[0], ocb[0])
    p["layer2"] = make_layer(ocb[1], layers[1])
    p["conv2"] = conv_bn(ocb[1], ocb[1])
    p["layer3"] = make_layer(ocb[2], layers[2])
    p["conv3"] = conv_bn(ocb[2], ocb[2])
    p["layer4"] = make_layer(ocb[3], layers[3])
    p["conv4_1"] = conv_bn(ocb[3], ocb[3])
    return p


# ----------------------------------------------------------------------------
if __name__ == "__main__":
    N, Cin, H, W = 2, 4, 16, 16             # small, consistent with the module
    output_channel = 32                      # -> channel blocks [8, 16, 32, 32]
    layers = [1, 1, 1, 1]                    # one BasicBlock per stage

    x = jax.random.normal(jax.random.PRNGKey(0), (N, Cin, H, W), jnp.float32)
    params = init_params(jax.random.PRNGKey(1), Cin, output_channel, layers)

    y = jax.jit(resnet_v2_forward)(x, params)
    y = jax.block_until_ready(y)

    assert y.shape == (N, output_channel, H // 4, W // 4), y.shape
    assert bool(jnp.all(jnp.isfinite(y)))

    # Tolerance check vs. the f32 XLA reference (kernel uses bf16 MXU operands).
    y_ref = jax.block_until_ready(jax.jit(_ref_forward)(x, params))
    rel = jnp.linalg.norm(y - y_ref) / (jnp.linalg.norm(y_ref) + 1e-6)
    assert float(rel) < 5e-2, float(rel)

    print("KERNEL_OK")
</pallas_src>

<mosaic_0001>
module attributes {stable_mosaic.version = 11 : i64} {
  func.func @_resnet_kernel(%arg0: i32, %arg1: memref<1x256x32xf32, #tpu.memory_space<vmem>>, %arg2: memref<14x288x32xbf16, #tpu.memory_space<vmem>>, %arg3: memref<3x32x32xbf16, #tpu.memory_space<vmem>>, %arg4: memref<17x32xf32, #tpu.memory_space<vmem>>, %arg5: memref<336x8xf32, #tpu.memory_space<vmem>>, %arg6: memref<64x256xbf16, #tpu.memory_space<vmem>>, %arg7: memref<16x64xbf16, #tpu.memory_space<vmem>>, %arg8: memref<1x16x32xf32, #tpu.memory_space<vmem>>) attributes {dimension_semantics = [#tpu.dimension_semantics<parallel>], iteration_bounds = array<i64: 2>, scalar_prefetch = 0 : i64, scratch_operands = 0 : i64, tpu.core_type = #tpu.core_type<tc>, window_params = [{transform_indices = @transform_0, window_bounds = array<i64: 1, 256, 32>}, {pipeline_mode = #tpu.pipeline_mode<synchronous>, transform_indices = @transform_1, window_bounds = array<i64: 14, 288, 32>}, {pipeline_mode = #tpu.pipeline_mode<synchronous>, transform_indices = @transform_2, window_bounds = array<i64: 3, 32, 32>}, {pipeline_mode = #tpu.pipeline_mode<synchronous>, transform_indices = @transform_3, window_bounds = array<i64: 17, 32>}, {pipeline_mode = #tpu.pipeline_mode<synchronous>, transform_indices = @transform_4, window_bounds = array<i64: 336, 8>}, {pipeline_mode = #tpu.pipeline_mode<synchronous>, transform_indices = @transform_5, window_bounds = array<i64: 64, 256>}, {pipeline_mode = #tpu.pipeline_mode<synchronous>, transform_indices = @transform_6, window_bounds = array<i64: 16, 64>}, {transform_indices = @transform_7, window_bounds = array<i64: 1, 16, 32>}]} {
    %c0 = arith.constant 0 : index
    %c0_0 = arith.constant 0 : index
    %c0_1 = arith.constant 0 : index
    %0 = vector.load %arg1[%c0, %c0_0, %c0_1] : memref<1x256x32xf32, #tpu.memory_space<vmem>>, vector<1x256x32xf32>
    %1 = vector.shape_cast %0 : vector<1x256x32xf32> to vector<256x32xf32>
    %c0_2 = arith.constant 0 : index
    %c0_3 = arith.constant 0 : index
    %c0_4 = arith.constant 0 : index
    %2 = vector.load %arg2[%c0_2, %c0_3, %c0_4] : memref<14x288x32xbf16, #tpu.memory_space<vmem>>, vector<1x288x32xbf16>
    %3 = vector.shape_cast %2 : vector<1x288x32xbf16> to vector<288x32xbf16>
    %c0_5 = arith.constant 0 : index
    %c0_6 = arith.constant 0 : index
    %4 = vector.load %arg4[%c0_5, %c0_6] : memref<17x32xf32, #tpu.memory_space<vmem>>, vector<1x32xf32>
    %c0_7 = arith.constant 0 : index
    %c0_8 = arith.constant 0 : index
    %5 = vector.load %arg5[%c0_7, %c0_8] : memref<336x8xf32, #tpu.memory_space<vmem>>, vector<256x8xf32>
    %6 = vector.extract_strided_slice %5 {offsets = [0, 0], sizes = [256, 1], strides = [1, 1]} : vector<256x8xf32> to vector<256x1xf32>
    %7 = vector.extract_strided_slice %5 {offsets = [0, 1], sizes = [256, 1], strides = [1, 1]} : vector<256x8xf32> to vector<256x1xf32>
    %8 = vector.extract_strided_slice %5 {offsets = [0, 2], sizes = [256, 1], strides = [1, 1]} : vector<256x8xf32> to vector<256x1xf32>
    %9 = vector.extract_strided_slice %5 {offsets = [0, 3], sizes = [256, 1], strides = [1, 1]} : vector<256x8xf32> to vector<256x1xf32>
    %10 = vector.extract_strided_slice %5 {offsets = [0, 4], sizes = [256, 1], strides = [1, 1]} : vector<256x8xf32> to vector<256x1xf32>
    %11 = vector.extract_strided_slice %5 {offsets = [0, 5], sizes = [256, 1], strides = [1, 1]} : vector<256x8xf32> to vector<256x1xf32>
    %12 = vector.extract_strided_slice %5 {offsets = [0, 6], sizes = [256, 1], strides = [1, 1]} : vector<256x8xf32> to vector<256x1xf32>
    %13 = vector.extract_strided_slice %5 {offsets = [0, 7], sizes = [256, 1], strides = [1, 1]} : vector<256x8xf32> to vector<256x1xf32>
    %c17_i32 = arith.constant 17 : i32
    %14 = tpu.dynamic_rotate %1 by %c17_i32 dim 0 : vector<256x32xf32>, i32 -> vector<256x32xf32>
    %15 = vector.broadcast %6 : vector<256x1xf32> to vector<256x32xf32>
    %16 = arith.mulf %14, %15 : vector<256x32xf32>
    %17 = arith.truncf %16 : vector<256x32xf32> to vector<256x32xbf16>
    %c16_i32 = arith.constant 16 : i32
    %18 = tpu.dynamic_rotate %1 by %c16_i32 dim 0 : vector<256x32xf32>, i32 -> vector<256x32xf32>
    %19 = vector.broadcast %7 : vector<256x1xf32> to vector<256x32xf32>
    %20 = arith.mulf %18, %19 : vector<256x32xf32>
    %21 = arith.truncf %20 : vector<256x32xf32> to vector<256x32xbf16>
    %c15_i32 = arith.constant 15 : i32
    %22 = tpu.dynamic_rotate %1 by %c15_i32 dim 0 : vector<256x32xf32>, i32 -> vector<256x32xf32>
    %23 = vector.broadcast %8 : vector<256x1xf32> to vector<256x32xf32>
    %24 = arith.mulf %22, %23 : vector<256x32xf32>
    %25 = arith.truncf %24 : vector<256x32xf32> to vector<256x32xbf16>
    %c1_i32 = arith.constant 1 : i32
    %26 = tpu.dynamic_rotate %1 by %c1_i32 dim 0 : vector<256x32xf32>, i32 -> vector<256x32xf32>
    %27 = vector.broadcast %9 : vector<256x1xf32> to vector<256x32xf32>
    %28 = arith.mulf %26, %27 : vector<256x32xf32>
    %29 = arith.truncf %28 : vector<256x32xf32> to vector<256x32xbf16>
    %30 = arith.truncf %1 : vector<256x32xf32> to vector<256x32xbf16>
    %c255_i32 = arith.constant 255 : i32
    %31 = tpu.dynamic_rotate %1 by %c255_i32 dim 0 : vector<256x32xf32>, i32 -> vector<256x32xf32>
    %32 = vector.broadcast %10 : vector<256x1xf32> to vector<256x32xf32>
    %33 = arith.mulf %31, %32 : vector<256x32xf32>
    %34 = arith.truncf %33 : vector<256x32xf32> to vector<256x32xbf16>
    %c241_i32 = arith.constant 241 : i32
    %35 = tpu.dynamic_rotate %1 by %c241_i32 dim 0 : vector<256x32xf32>, i32 -> vector<256x32xf32>
    %36 = vector.broadcast %11 : vector<256x1xf32> to vector<256x32xf32>
    %37 = arith.mulf %35, %36 : vector<256x32xf32>
    %38 = arith.truncf %37 : vector<256x32xf32> to vector<256x32xbf16>
    %c240_i32 = arith.constant 240 : i32
    %39 = tpu.dynamic_rotate %1 by %c240_i32 dim 0 : vector<256x32xf32>, i32 -> vector<256x32xf32>
    %40 = vector.broadcast %12 : vector<256x1xf32> to vector<256x32xf32>
    %41 = arith.mulf %39, %40 : vector<256x32xf32>
    %42 = arith.truncf %41 : vector<256x32xf32> to vector<256x32xbf16>
    %c239_i32 = arith.constant 239 : i32
    %43 = tpu.dynamic_rotate %1 by %c239_i32 dim 0 : vector<256x32xf32>, i32 -> vector<256x32xf32>
    %44 = vector.broadcast %13 : vector<256x1xf32> to vector<256x32xf32>
    %45 = arith.mulf %43, %44 : vector<256x32xf32>
    %46 = arith.truncf %45 : vector<256x32xf32> to vector<256x32xbf16>
    %47 = tpu.concatenate %17, %21, %25, %29, %30, %34, %38, %42, %46 in 1 : vector<256x32xbf16>, vector<256x32xbf16>, vector<256x32xbf16>, vector<256x32xbf16>, vector<256x32xbf16>, vector<256x32xbf16>, vector<256x32xbf16>, vector<256x32xbf16>, vector<256x32xbf16> -> vector<256x288xbf16>
    %cst = arith.constant dense<0.000000e+00> : vector<256x32xf32>
    %48 = tpu.matmul %47, %3, %cst {dimension_numbers = #tpu.dot_dimension_numbers<[1], [0], [0], [1], [0, 0, 1, 1], [], []>} : vector<256x288xbf16>, vector<288x32xbf16>, vector<256x32xf32> -> vector<256x32xf32>
    %49 = vector.broadcast %4 : vector<1x32xf32> to vector<256x32xf32>
    %50 = arith.addf %48, %49 : vector<256x32xf32>
    %cst_9 = arith.constant 0.000000e+00 : f32
    %51 = vector.broadcast %cst_9 : f32 to vector<256x32xf32>
    %52 = arith.maximumf %50, %51 : vector<256x32xf32>
    %c1 = arith.constant 1 : index
    %c0_10 = arith.constant 0 : index
    %c0_11 = arith.constant 0 : index
    %53 = vector.load %arg2[%c1, %c0_10, %c0_11] : memref<14x288x32xbf16, #tpu.memory_space<vmem>>, vector<1x288x32xbf16>
    %54 = vector.shape_cast %53 : vector<1x288x32xbf16> to vector<288x32xbf16>
    %c1_12 = arith.constant 1 : index
    %c0_13 = arith.constant 0 : index
    %55 = vector.load %arg4[%c1_12, %c0_13] : memref<17x32xf32, #tpu.memory_space<vmem>>, vector<1x32xf32>
    %c17_i32_14 = arith.constant 17 : i32
    %56 = tpu.dynamic_rotate %52 by %c17_i32_14 dim 0 : vector<256x32xf32>, i32 -> vector<256x32xf32>
    %57 = vector.broadcast %6 : vector<256x1xf32> to vector<256x32xf32>
    %58 = arith.mulf %56, %57 : vector<256x32xf32>
    %59 = arith.truncf %58 : vector<256x32xf32> to vector<256x32xbf16>
    %c16_i32_15 = arith.constant 16 : i32
    %60 = tpu.dynamic_rotate %52 by %c16_i32_15 dim 0 : vector<256x32xf32>, i32 -> vector<256x32xf32>
    %61 = vector.broadcast %7 : vector<256x1xf32> to vector<256x32xf32>
    %62 = arith.mulf %60, %61 : vector<256x32xf32>
    %63 = arith.truncf %62 : vector<256x32xf32> to vector<256x32xbf16>
    %c15_i32_16 = arith.constant 15 : i32
    %64 = tpu.dynamic_rotate %52 by %c15_i32_16 dim 0 : vector<256x32xf32>, i32 -> vector<256x32xf32>
    %65 = vector.broadcast %8 : vector<256x1xf32> to vector<256x32xf32>
    %66 = arith.mulf %64, %65 : vector<256x32xf32>
    %67 = arith.truncf %66 : vector<256x32xf32> to vector<256x32xbf16>
    %c1_i32_17 = arith.constant 1 : i32
    %68 = tpu.dynamic_rotate %52 by %c1_i32_17 dim 0 : vector<256x32xf32>, i32 -> vector<256x32xf32>
    %69 = vector.broadcast %9 : vector<256x1xf32> to vector<256x32xf32>
    %70 = arith.mulf %68, %69 : vector<256x32xf32>
    %71 = arith.truncf %70 : vector<256x32xf32> to vector<256x32xbf16>
    %72 = arith.truncf %52 : vector<256x32xf32> to vector<256x32xbf16>
    %c255_i32_18 = arith.constant 255 : i32
    %73 = tpu.dynamic_rotate %52 by %c255_i32_18 dim 0 : vector<256x32xf32>, i32 -> vector<256x32xf32>
    %74 = vector.broadcast %10 : vector<256x1xf32> to vector<256x32xf32>
    %75 = arith.mulf %73, %74 : vector<256x32xf32>
    %76 = arith.truncf %75 : vector<256x32xf32> to vector<256x32xbf16>
    %c241_i32_19 = arith.constant 241 : i32
    %77 = tpu.dynamic_rotate %52 by %c241_i32_19 dim 0 : vector<256x32xf32>, i32 -> vector<256x32xf32>
    %78 = vector.broadcast %11 : vector<256x1xf32> to vector<256x32xf32>
    %79 = arith.mulf %77, %78 : vector<256x32xf32>
    %80 = arith.truncf %79 : vector<256x32xf32> to vector<256x32xbf16>
    %c240_i32_20 = arith.constant 240 : i32
    %81 = tpu.dynamic_rotate %52 by %c240_i32_20 dim 0 : vector<256x32xf32>, i32 -> vector<256x32xf32>
    %82 = vector.broadcast %12 : vector<256x1xf32> to vector<256x32xf32>
    %83 = arith.mulf %81, %82 : vector<256x32xf32>
    %84 = arith.truncf %83 : vector<256x32xf32> to vector<256x32xbf16>
    %c239_i32_21 = arith.constant 239 : i32
    %85 = tpu.dynamic_rotate %52 by %c239_i32_21 dim 0 : vector<256x32xf32>, i32 -> vector<256x32xf32>
    %86 = vector.broadcast %13 : vector<256x1xf32> to vector<256x32xf32>
    %87 = arith.mulf %85, %86 : vector<256x32xf32>
    %88 = arith.truncf %87 : vector<256x32xf32> to vector<256x32xbf16>
    %89 = tpu.concatenate %59, %63, %67, %71, %72, %76, %80, %84, %88 in 1 : vector<256x32xbf16>, vector<256x32xbf16>, vector<256x32xbf16>, vector<256x32xbf16>, vector<256x32xbf16>, vector<256x32xbf16>, vector<256x32xbf16>, vector<256x32xbf16>, vector<256x32xbf16> -> vector<256x288xbf16>
    %cst_22 = arith.constant dense<0.000000e+00> : vector<256x32xf32>
    %90 = tpu.matmul %89, %54, %cst_22 {dimension_numbers = #tpu.dot_dimension_numbers<[1], [0], [0], [1], [0, 0, 1, 1], [], []>} : vector<256x288xbf16>, vector<288x32xbf16>, vector<256x32xf32> -> vector<256x32xf32>
    %91 = vector.broadcast %55 : vector<1x32xf32> to vector<256x32xf32>
    %92 = arith.addf %90, %91 : vector<256x32xf32>
    %cst_23 = arith.constant 0.000000e+00 : f32
    %93 = vector.broadcast %cst_23 : f32 to vector<256x32xf32>
    %94 = arith.maximumf %92, %93 : vector<256x32xf32>
    %c0_24 = arith.constant 0 : index
    %c0_25 = arith.constant 0 : index
    %95 = vector.load %arg6[%c0_24, %c0_25] : memref<64x256xbf16, #tpu.memory_space<vmem>>, vector<64x256xbf16>
    %c255_i32_26 = arith.constant 255 : i32
    %96 = tpu.dynamic_rotate %94 by %c255_i32_26 dim 0 : vector<256x32xf32>, i32 -> vector<256x32xf32>
    %97 = arith.maximumf %94, %96 : vector<256x32xf32>
    %c240_i32_27 = arith.constant 240 : i32
    %98 = tpu.dynamic_rotate %97 by %c240_i32_27 dim 0 : vector<256x32xf32>, i32 -> vector<256x32xf32>
    %99 = arith.maximumf %97, %98 : vector<256x32xf32>
    %100 = arith.truncf %99 : vector<256x32xf32> to vector<256x32xbf16>
    %cst_28 = arith.constant dense<0.000000e+00> : vector<64x32xf32>
    %101 = tpu.matmul %95, %100, %cst_28 {dimension_numbers = #tpu.dot_dimension_numbers<[1], [0], [0], [1], [0, 0, 1, 1], [], []>} : vector<64x256xbf16>, vector<256x32xbf16>, vector<64x32xf32> -> vector<64x32xf32>
    %c0_29 = arith.constant 0 : index
    %c0_30 = arith.constant 0 : index
    %c0_31 = arith.constant 0 : index
    %102 = vector.load %arg3[%c0_29, %c0_30, %c0_31] : memref<3x32x32xbf16, #tpu.memory_space<vmem>>, vector<1x32x32xbf16>
    %103 = vector.shape_cast %102 : vector<1x32x32xbf16> to vector<32x32xbf16>
    %c4 = arith.constant 4 : index
    %c0_32 = arith.constant 0 : index
    %104 = vector.load %arg4[%c4, %c0_32] : memref<17x32xf32, #tpu.memory_space<vmem>>, vector<1x32xf32>
    %105 = arith.truncf %101 : vector<64x32xf32> to vector<64x32xbf16>
    %cst_33 = arith.constant dense<0.000000e+00> : vector<64x32xf32>
    %106 = tpu.matmul %105, %103, %cst_33 {dimension_numbers = #tpu.dot_dimension_numbers<[1], [0], [0], [1], [0, 0, 1, 1], [], []>} : vector<64x32xbf16>, vector<32x32xbf16>, vector<64x32xf32> -> vector<64x32xf32>
    %107 = vector.broadcast %104 : vector<1x32xf32> to vector<64x32xf32>
    %108 = arith.addf %106, %107 : vector<64x32xf32>
    %c2 = arith.constant 2 : index
    %c0_34 = arith.constant 0 : index
    %c0_35 = arith.constant 0 : index
    %109 = vector.load %arg2[%c2, %c0_34, %c0_35] : memref<14x288x32xbf16, #tpu.memory_space<vmem>>, vector<1x288x32xbf16>
    %110 = vector.shape_cast %109 : vector<1x288x32xbf16> to vector<288x32xbf16>
    %c2_36 = arith.constant 2 : index
    %c0_37 = arith.constant 0 : index
    %111 = vector.load %arg4[%c2_36, %c0_37] : memref<17x32xf32, #tpu.memory_space<vmem>>, vector<1x32xf32>
    %c256 = arith.constant 256 : index
    %c0_38 = arith.constant 0 : index
    %112 = vector.load %arg5[%c256, %c0_38] : memref<336x8xf32, #tpu.memory_space<vmem>>, vector<64x8xf32>
    %113 = vector.extract_strided_slice %112 {offsets = [0, 0], sizes = [64, 1], strides = [1, 1]} : vector<64x8xf32> to vector<64x1xf32>
    %114 = vector.extract_strided_slice %112 {offsets = [0, 1], sizes = [64, 1], strides = [1, 1]} : vector<64x8xf32> to vector<64x1xf32>
    %115 = vector.extract_strided_slice %112 {offsets = [0, 2], sizes = [64, 1], strides = [1, 1]} : vector<64x8xf32> to vector<64x1xf32>
    %116 = vector.extract_strided_slice %112 {offsets = [0, 3], sizes = [64, 1], strides = [1, 1]} : vector<64x8xf32> to vector<64x1xf32>
    %117 = vector.extract_strided_slice %112 {offsets = [0, 4], sizes = [64, 1], strides = [1, 1]} : vector<64x8xf32> to vector<64x1xf32>
    %118 = vector.extract_strided_slice %112 {offsets = [0, 5], sizes = [64, 1], strides = [1, 1]} : vector<64x8xf32> to vector<64x1xf32>
    %119 = vector.extract_strided_slice %112 {offsets = [0, 6], sizes = [64, 1], strides = [1, 1]} : vector<64x8xf32> to vector<64x1xf32>
    %120 = vector.extract_strided_slice %112 {offsets = [0, 7], sizes = [64, 1], strides = [1, 1]} : vector<64x8xf32> to vector<64x1xf32>
    %c9_i32 = arith.constant 9 : i32
    %121 = tpu.dynamic_rotate %101 by %c9_i32 dim 0 : vector<64x32xf32>, i32 -> vector<64x32xf32>
    %122 = vector.broadcast %113 : vector<64x1xf32> to vector<64x32xf32>
    %123 = arith.mulf %121, %122 : vector<64x32xf32>
    %124 = arith.truncf %123 : vector<64x32xf32> to vector<64x32xbf16>
    %c8_i32 = arith.constant 8 : i32
    %125 = tpu.dynamic_rotate %101 by %c8_i32 dim 0 : vector<64x32xf32>, i32 -> vector<64x32xf32>
    %126 = vector.broadcast %114 : vector<64x1xf32> to vector<64x32xf32>
    %127 = arith.mulf %125, %126 : vector<64x32xf32>
    %128 = arith.truncf %127 : vector<64x32xf32> to vector<64x32xbf16>
    %c7_i32 = arith.constant 7 : i32
    %129 = tpu.dynamic_rotate %101 by %c7_i32 dim 0 : vector<64x32xf32>, i32 -> vector<64x32xf32>
    %130 = vector.broadcast %115 : vector<64x1xf32> to vector<64x32xf32>
    %131 = arith.mulf %129, %130 : vector<64x32xf32>
    %132 = arith.truncf %131 : vector<64x32xf32> to vector<64x32xbf16>
    %c1_i32_39 = arith.constant 1 : i32
    %133 = tpu.dynamic_rotate %101 by %c1_i32_39 dim 0 : vector<64x32xf32>, i32 -> vector<64x32xf32>
    %134 = vector.broadcast %116 : vector<64x1xf32> to vector<64x32xf32>
    %135 = arith.mulf %133, %134 : vector<64x32xf32>
    %136 = arith.truncf %135 : vector<64x32xf32> to vector<64x32xbf16>
    %137 = arith.truncf %101 : vector<64x32xf32> to vector<64x32xbf16>
    %c63_i32 = arith.constant 63 : i32
    %138 = tpu.dynamic_rotate %101 by %c63_i32 dim 0 : vector<64x32xf32>, i32 -> vector<64x32xf32>
    %139 = vector.broadcast %117 : vector<64x1xf32> to vector<64x32xf32>
    %140 = arith.mulf %138, %139 : vector<64x32xf32>
    %141 = arith.truncf %140 : vector<64x32xf32> to vector<64x32xbf16>
    %c57_i32 = arith.constant 57 : i32
    %142 = tpu.dynamic_rotate %101 by %c57_i32 dim 0 : vector<64x32xf32>, i32 -> vector<64x32xf32>
    %143 = vector.broadcast %118 : vector<64x1xf32> to vector<64x32xf32>
    %144 = arith.mulf %142, %143 : vector<64x32xf32>
    %145 = arith.truncf %144 : vector<64x32xf32> to vector<64x32xbf16>
    %c56_i32 = arith.constant 56 : i32
    %146 = tpu.dynamic_rotate %101 by %c56_i32 dim 0 : vector<64x32xf32>, i32 -> vector<64x32xf32>
    %147 = vector.broadcast %119 : vector<64x1xf32> to vector<64x32xf32>
    %148 = arith.mulf %146, %147 : vector<64x32xf32>
    %149 = arith.truncf %148 : vector<64x32xf32> to vector<64x32xbf16>
    %c55_i32 = arith.constant 55 : i32
    %150 = tpu.dynamic_rotate %101 by %c55_i32 dim 0 : vector<64x32xf32>, i32 -> vector<64x32xf32>
    %151 = vector.broadcast %120 : vector<64x1xf32> to vector<64x32xf32>
    %152 = arith.mulf %150, %151 : vector<64x32xf32>
    %153 = arith.truncf %152 : vector<64x32xf32> to vector<64x32xbf16>
    %154 = tpu.concatenate %124, %128, %132, %136, %137, %141, %145, %149, %153 in 1 : vector<64x32xbf16>, vector<64x32xbf16>, vector<64x32xbf16>, vector<64x32xbf16>, vector<64x32xbf16>, vector<64x32xbf16>, vector<64x32xbf16>, vector<64x32xbf16>, vector<64x32xbf16> -> vector<64x288xbf16>
    %cst_40 = arith.constant dense<0.000000e+00> : vector<64x32xf32>
    %155 = tpu.matmul %154, %110, %cst_40 {dimension_numbers = #tpu.dot_dimension_numbers<[1], [0], [0], [1], [0, 0, 1, 1], [], []>} : vector<64x288xbf16>, vector<288x32xbf16>, vector<64x32xf32> -> vector<64x32xf32>
    %156 = vector.broadcast %111 : vector<1x32xf32> to vector<64x32xf32>
    %157 = arith.addf %155, %156 : vector<64x32xf32>
    %cst_41 = arith.constant 0.000000e+00 : f32
    %158 = vector.broadcast %cst_41 : f32 to vector<64x32xf32>
    %159 = arith.maximumf %157, %158 : vector<64x32xf32>
    %c3 = arith.constant 3 : index
    %c0_42 = arith.constant 0 : index
    %c0_43 = arith.constant 0 : index
    %160 = vector.load %arg2[%c3, %c0_42, %c0_43] : memref<14x288x32xbf16, #tpu.memory_space<vmem>>, vector<1x288x32xbf16>
    %161 = vector.shape_cast %160 : vector<1x288x32xbf16> to vector<288x32xbf16>
    %c3_44 = arith.constant 3 : index
    %c0_45 = arith.constant 0 : index
    %162 = vector.load %arg4[%c3_44, %c0_45] : memref<17x32xf32, #tpu.memory_space<vmem>>, vector<1x32xf32>
    %c9_i32_46 = arith.constant 9 : i32
    %163 = tpu.dynamic_rotate %159 by %c9_i32_46 dim 0 : vector<64x32xf32>, i32 -> vector<64x32xf32>
    %164 = vector.broadcast %113 : vector<64x1xf32> to vector<64x32xf32>
    %165 = arith.mulf %163, %164 : vector<64x32xf32>
    %166 = arith.truncf %165 : vector<64x32xf32> to vector<64x32xbf16>
    %c8_i32_47 = arith.constant 8 : i32
    %167 = tpu.dynamic_rotate %159 by %c8_i32_47 dim 0 : vector<64x32xf32>, i32 -> vector<64x32xf32>
    %168 = vector.broadcast %114 : vector<64x1xf32> to vector<64x32xf32>
    %169 = arith.mulf %167, %168 : vector<64x32xf32>
    %170 = arith.truncf %169 : vector<64x32xf32> to vector<64x32xbf16>
    %c7_i32_48 = arith.constant 7 : i32
    %171 = tpu.dynamic_rotate %159 by %c7_i32_48 dim 0 : vector<64x32xf32>, i32 -> vector<64x32xf32>
    %172 = vector.broadcast %115 : vector<64x1xf32> to vector<64x32xf32>
    %173 = arith.mulf %171, %172 : vector<64x32xf32>
    %174 = arith.truncf %173 : vector<64x32xf32> to vector<64x32xbf16>
    %c1_i32_49 = arith.constant 1 : i32
    %175 = tpu.dynamic_rotate %159 by %c1_i32_49 dim 0 : vector<64x32xf32>, i32 -> vector<64x32xf32>
    %176 = vector.broadcast %116 : vector<64x1xf32> to vector<64x32xf32>
    %177 = arith.mulf %175, %176 : vector<64x32xf32>
    %178 = arith.truncf %177 : vector<64x32xf32> to vector<64x32xbf16>
    %179 = arith.truncf %159 : vector<64x32xf32> to vector<64x32xbf16>
    %c63_i32_50 = arith.constant 63 : i32
    %180 = tpu.dynamic_rotate %159 by %c63_i32_50 dim 0 : vector<64x32xf32>, i32 -> vector<64x32xf32>
    %181 = vector.broadcast %117 : vector<64x1xf32> to vector<64x32xf32>
    %182 = arith.mulf %180, %181 : vector<64x32xf32>
    %183 = arith.truncf %182 : vector<64x32xf32> to vector<64x32xbf16>
    %c57_i32_51 = arith.constant 57 : i32
    %184 = tpu.dynamic_rotate %159 by %c57_i32_51 dim 0 : vector<64x32xf32>, i32 -> vector<64x32xf32>
    %185 = vector.broadcast %118 : vector<64x1xf32> to vector<64x32xf32>
    %186 = arith.mulf %184, %185 : vector<64x32xf32>
    %187 = arith.truncf %186 : vector<64x32xf32> to vector<64x32xbf16>
    %c56_i32_52 = arith.constant 56 : i32
    %188 = tpu.dynamic_rotate %159 by %c56_i32_52 dim 0 : vector<64x32xf32>, i32 -> vector<64x32xf32>
    %189 = vector.broadcast %119 : vector<64x1xf32> to vector<64x32xf32>
    %190 = arith.mulf %188, %189 : vector<64x32xf32>
    %191 = arith.truncf %190 : vector<64x32xf32> to vector<64x32xbf16>
    %c55_i32_53 = arith.constant 55 : i32
    %192 = tpu.dynamic_rotate %159 by %c55_i32_53 dim 0 : vector<64x32xf32>, i32 -> vector<64x32xf32>
    %193 = vector.broadcast %120 : vector<64x1xf32> to vector<64x32xf32>
    %194 = arith.mulf %192, %193 : vector<64x32xf32>
    %195 = arith.truncf %194 : vector<64x32xf32> to vector<64x32xbf16>
    %196 = tpu.concatenate %166, %170, %174, %178, %179, %183, %187, %191, %195 in 1 : vector<64x32xbf16>, vector<64x32xbf16>, vector<64x32xbf16>, vector<64x32xbf16>, vector<64x32xbf16>, vector<64x32xbf16>, vector<64x32xbf16>, vector<64x32xbf16>, vector<64x32xbf16> -> vector<64x288xbf16>
    %cst_54 = arith.constant dense<0.000000e+00> : vector<64x32xf32>
    %197 = tpu.matmul %196, %161, %cst_54 {dimension_numbers = #tpu.dot_dimension_numbers<[1], [0], [0], [1], [0, 0, 1, 1], [], []>} : vector<64x288xbf16>, vector<288x32xbf16>, vector<64x32xf32> -> vector<64x32xf32>
    %198 = vector.broadcast %162 : vector<1x32xf32> to vector<64x32xf32>
    %199 = arith.addf %197, %198 : vector<64x32xf32>
    %200 = arith.addf %199, %108 : vector<64x32xf32>
    %cst_55 = arith.constant 0.000000e+00 : f32
    %201 = vector.broadcast %cst_55 : f32 to vector<64x32xf32>
    %202 = arith.maximumf %200, %201 : vector<64x32xf32>
    %c4_56 = arith.constant 4 : index
    %c0_57 = arith.constant 0 : index
    %c0_58 = arith.constant 0 : index
    %203 = vector.load %arg2[%c4_56, %c0_57, %c0_58] : memref<14x288x32xbf16, #tpu.memory_space<vmem>>, vector<1x288x32xbf16>
    %204 = vector.shape_cast %203 : vector<1x288x32xbf16> to vector<288x32xbf16>
    %c5 = arith.constant 5 : index
    %c0_59 = arith.constant 0 : index
    %205 = vector.load %arg4[%c5, %c0_59] : memref<17x32xf32, #tpu.memory_space<vmem>>, vector<1x32xf32>
    %c9_i32_60 = arith.constant 9 : i32
    %206 = tpu.dynamic_rotate %202 by %c9_i32_60 dim 0 : vector<64x32xf32>, i32 -> vector<64x32xf32>
    %207 = vector.broadcast %113 : vector<64x1xf32> to vector<64x32xf32>
    %208 = arith.mulf %206, %207 : vector<64x32xf32>
    %209 = arith.truncf %208 : vector<64x32xf32> to vector<64x32xbf16>
    %c8_i32_61 = arith.constant 8 : i32
    %210 = tpu.dynamic_rotate %202 by %c8_i32_61 dim 0 : vector<64x32xf32>, i32 -> vector<64x32xf32>
    %211 = vector.broadcast %114 : vector<64x1xf32> to vector<64x32xf32>
    %212 = arith.mulf %210, %211 : vector<64x32xf32>
    %213 = arith.truncf %212 : vector<64x32xf32> to vector<64x32xbf16>
    %c7_i32_62 = arith.constant 7 : i32
    %214 = tpu.dynamic_rotate %202 by %c7_i32_62 dim 0 : vector<64x32xf32>, i32 -> vector<64x32xf32>
    %215 = vector.broadcast %115 : vector<64x1xf32> to vector<64x32xf32>
    %216 = arith.mulf %214, %215 : vector<64x32xf32>
    %217 = arith.truncf %216 : vector<64x32xf32> to vector<64x32xbf16>
    %c1_i32_63 = arith.constant 1 : i32
    %218 = tpu.dynamic_rotate %202 by %c1_i32_63 dim 0 : vector<64x32xf32>, i32 -> vector<64x32xf32>
    %219 = vector.broadcast %116 : vector<64x1xf32> to vector<64x32xf32>
    %220 = arith.mulf %218, %219 : vector<64x32xf32>
    %221 = arith.truncf %220 : vector<64x32xf32> to vector<64x32xbf16>
    %222 = arith.truncf %202 : vector<64x32xf32> to vector<64x32xbf16>
    %c63_i32_64 = arith.constant 63 : i32
    %223 = tpu.dynamic_rotate %202 by %c63_i32_64 dim 0 : vector<64x32xf32>, i32 -> vector<64x32xf32>
    %224 = vector.broadcast %117 : vector<64x1xf32> to vector<64x32xf32>
    %225 = arith.mulf %223, %224 : vector<64x32xf32>
    %226 = arith.truncf %225 : vector<64x32xf32> to vector<64x32xbf16>
    %c57_i32_65 = arith.constant 57 : i32
    %227 = tpu.dynamic_rotate %202 by %c57_i32_65 dim 0 : vector<64x32xf32>, i32 -> vector<64x32xf32>
    %228 = vector.broadcast %118 : vector<64x1xf32> to vector<64x32xf32>
    %229 = arith.mulf %227, %228 : vector<64x32xf32>
    %230 = arith.truncf %229 : vector<64x32xf32> to vector<64x32xbf16>
    %c56_i32_66 = arith.constant 56 : i32
    %231 = tpu.dynamic_rotate %202 by %c56_i32_66 dim 0 : vector<64x32xf32>, i32 -> vector<64x32xf32>
    %232 = vector.broadcast %119 : vector<64x1xf32> to vector<64x32xf32>
    %233 = arith.mulf %231, %232 : vector<64x32xf32>
    %234 = arith.truncf %233 : vector<64x32xf32> to vector<64x32xbf16>
    %c55_i32_67 = arith.constant 55 : i32
    %235 = tpu.dynamic_rotate %202 by %c55_i32_67 dim 0 : vector<64x32xf32>, i32 -> vector<64x32xf32>
    %236 = vector.broadcast %120 : vector<64x1xf32> to vector<64x32xf32>
    %237 = arith.mulf %235, %236 : vector<64x32xf32>
    %238 = arith.truncf %237 : vector<64x32xf32> to vector<64x32xbf16>
    %239 = tpu.concatenate %209, %213, %217, %221, %222, %226, %230, %234, %238 in 1 : vector<64x32xbf16>, vector<64x32xbf16>, vector<64x32xbf16>, vector<64x32xbf16>, vector<64x32xbf16>, vector<64x32xbf16>, vector<64x32xbf16>, vector<64x32xbf16>, vector<64x32xbf16> -> vector<64x288xbf16>
    %cst_68 = arith.constant dense<0.000000e+00> : vector<64x32xf32>
    %240 = tpu.matmul %239, %204, %cst_68 {dimension_numbers = #tpu.dot_dimension_numbers<[1], [0], [0], [1], [0, 0, 1, 1], [], []>} : vector<64x288xbf16>, vector<288x32xbf16>, vector<64x32xf32> -> vector<64x32xf32>
    %241 = vector.broadcast %205 : vector<1x32xf32> to vector<64x32xf32>
    %242 = arith.addf %240, %241 : vector<64x32xf32>
    %cst_69 = arith.constant 0.000000e+00 : f32
    %243 = vector.broadcast %cst_69 : f32 to vector<64x32xf32>
    %244 = arith.maximumf %242, %243 : vector<64x32xf32>
    %c0_70 = arith.constant 0 : index
    %c0_71 = arith.constant 0 : index
    %245 = vector.load %arg7[%c0_70, %c0_71] : memref<16x64xbf16, #tpu.memory_space<vmem>>, vector<16x64xbf16>
    %c63_i32_72 = arith.constant 63 : i32
    %246 = tpu.dynamic_rotate %244 by %c63_i32_72 dim 0 : vector<64x32xf32>, i32 -> vector<64x32xf32>
    %247 = arith.maximumf %244, %246 : vector<64x32xf32>
    %c56_i32_73 = arith.constant 56 : i32
    %248 = tpu.dynamic_rotate %247 by %c56_i32_73 dim 0 : vector<64x32xf32>, i32 -> vector<64x32xf32>
    %249 = arith.maximumf %247, %248 : vector<64x32xf32>
    %250 = arith.truncf %249 : vector<64x32xf32> to vector<64x32xbf16>
    %cst_74 = arith.constant dense<0.000000e+00> : vector<16x32xf32>
    %251 = tpu.matmul %245, %250, %cst_74 {dimension_numbers = #tpu.dot_dimension_numbers<[1], [0], [0], [1], [0, 0, 1, 1], [], []>} : vector<16x64xbf16>, vector<64x32xbf16>, vector<16x32xf32> -> vector<16x32xf32>
    %c1_75 = arith.constant 1 : index
    %c0_76 = arith.constant 0 : index
    %c0_77 = arith.constant 0 : index
    %252 = vector.load %arg3[%c1_75, %c0_76, %c0_77] : memref<3x32x32xbf16, #tpu.memory_space<vmem>>, vector<1x32x32xbf16>
    %253 = vector.shape_cast %252 : vector<1x32x32xbf16> to vector<32x32xbf16>
    %c8 = arith.constant 8 : index
    %c0_78 = arith.constant 0 : index
    %254 = vector.load %arg4[%c8, %c0_78] : memref<17x32xf32, #tpu.memory_space<vmem>>, vector<1x32xf32>
    %255 = arith.truncf %251 : vector<16x32xf32> to vector<16x32xbf16>
    %cst_79 = arith.constant dense<0.000000e+00> : vector<16x32xf32>
    %256 = tpu.matmul %255, %253, %cst_79 {dimension_numbers = #tpu.dot_dimension_numbers<[1], [0], [0], [1], [0, 0, 1, 1], [], []>} : vector<16x32xbf16>, vector<32x32xbf16>, vector<16x32xf32> -> vector<16x32xf32>
    %257 = vector.broadcast %254 : vector<1x32xf32> to vector<16x32xf32>
    %258 = arith.addf %256, %257 : vector<16x32xf32>
    %c5_80 = arith.constant 5 : index
    %c0_81 = arith.constant 0 : index
    %c0_82 = arith.constant 0 : index
    %259 = vector.load %arg2[%c5_80, %c0_81, %c0_82] : memref<14x288x32xbf16, #tpu.memory_space<vmem>>, vector<1x288x32xbf16>
    %260 = vector.shape_cast %259 : vector<1x288x32xbf16> to vector<288x32xbf16>
    %c6 = arith.constant 6 : index
    %c0_83 = arith.constant 0 : index
    %261 = vector.load %arg4[%c6, %c0_83] : memref<17x32xf32, #tpu.memory_space<vmem>>, vector<1x32xf32>
    %c320 = arith.constant 320 : index
    %c0_84 = arith.constant 0 : index
    %262 = vector.load %arg5[%c320, %c0_84] : memref<336x8xf32, #tpu.memory_space<vmem>>, vector<16x8xf32>
    %263 = vector.extract_strided_slice %262 {offsets = [0, 0], sizes = [16, 1], strides = [1, 1]} : vector<16x8xf32> to vector<16x1xf32>
    %264 = vector.extract_strided_slice %262 {offsets = [0, 1], sizes = [16, 1], strides = [1, 1]} : vector<16x8xf32> to vector<16x1xf32>
    %265 = vector.extract_strided_slice %262 {offsets = [0, 2], sizes = [16, 1], strides = [1, 1]} : vector<16x8xf32> to vector<16x1xf32>
    %266 = vector.extract_strided_slice %262 {offsets = [0, 3], sizes = [16, 1], strides = [1, 1]} : vector<16x8xf32> to vector<16x1xf32>
    %267 = vector.extract_strided_slice %262 {offsets = [0, 4], sizes = [16, 1], strides = [1, 1]} : vector<16x8xf32> to vector<16x1xf32>
    %268 = vector.extract_strided_slice %262 {offsets = [0, 5], sizes = [16, 1], strides = [1, 1]} : vector<16x8xf32> to vector<16x1xf32>
    %269 = vector.extract_strided_slice %262 {offsets = [0, 6], sizes = [16, 1], strides = [1, 1]} : vector<16x8xf32> to vector<16x1xf32>
    %270 = vector.extract_strided_slice %262 {offsets = [0, 7], sizes = [16, 1], strides = [1, 1]} : vector<16x8xf32> to vector<16x1xf32>
    %c5_i32 = arith.constant 5 : i32
    %271 = tpu.dynamic_rotate %251 by %c5_i32 dim 0 : vector<16x32xf32>, i32 -> vector<16x32xf32>
    %272 = vector.broadcast %263 : vector<16x1xf32> to vector<16x32xf32>
    %273 = arith.mulf %271, %272 : vector<16x32xf32>
    %274 = arith.truncf %273 : vector<16x32xf32> to vector<16x32xbf16>
    %c4_i32 = arith.constant 4 : i32
    %275 = tpu.dynamic_rotate %251 by %c4_i32 dim 0 : vector<16x32xf32>, i32 -> vector<16x32xf32>
    %276 = vector.broadcast %264 : vector<16x1xf32> to vector<16x32xf32>
    %277 = arith.mulf %275, %276 : vector<16x32xf32>
    %278 = arith.truncf %277 : vector<16x32xf32> to vector<16x32xbf16>
    %c3_i32 = arith.constant 3 : i32
    %279 = tpu.dynamic_rotate %251 by %c3_i32 dim 0 : vector<16x32xf32>, i32 -> vector<16x32xf32>
    %280 = vector.broadcast %265 : vector<16x1xf32> to vector<16x32xf32>
    %281 = arith.mulf %279, %280 : vector<16x32xf32>
    %282 = arith.truncf %281 : vector<16x32xf32> to vector<16x32xbf16>
    %c1_i32_85 = arith.constant 1 : i32
    %283 = tpu.dynamic_rotate %251 by %c1_i32_85 dim 0 : vector<16x32xf32>, i32 -> vector<16x32xf32>
    %284 = vector.broadcast %266 : vector<16x1xf32> to vector<16x32xf32>
    %285 = arith.mulf %283, %284 : vector<16x32xf32>
    %286 = arith.truncf %285 : vector<16x32xf32> to vector<16x32xbf16>
    %287 = arith.truncf %251 : vector<16x32xf32> to vector<16x32xbf16>
    %c15_i32_86 = arith.constant 15 : i32
    %288 = tpu.dynamic_rotate %251 by %c15_i32_86 dim 0 : vector<16x32xf32>, i32 -> vector<16x32xf32>
    %289 = vector.broadcast %267 : vector<16x1xf32> to vector<16x32xf32>
    %290 = arith.mulf %288, %289 : vector<16x32xf32>
    %291 = arith.truncf %290 : vector<16x32xf32> to vector<16x32xbf16>
    %c13_i32 = arith.constant 13 : i32
    %292 = tpu.dynamic_rotate %251 by %c13_i32 dim 0 : vector<16x32xf32>, i32 -> vector<16x32xf32>
    %293 = vector.broadcast %268 : vector<16x1xf32> to vector<16x32xf32>
    %294 = arith.mulf %292, %293 : vector<16x32xf32>
    %295 = arith.truncf %294 : vector<16x32xf32> to vector<16x32xbf16>
    %c12_i32 = arith.constant 12 : i32
    %296 = tpu.dynamic_rotate %251 by %c12_i32 dim 0 : vector<16x32xf32>, i32 -> vector<16x32xf32>
    %297 = vector.broadcast %269 : vector<16x1xf32> to vector<16x32xf32>
    %298 = arith.mulf %296, %297 : vector<16x32xf32>
    %299 = arith.truncf %298 : vector<16x32xf32> to vector<16x32xbf16>
    %c11_i32 = arith.constant 11 : i32
    %300 = tpu.dynamic_rotate %251 by %c11_i32 dim 0 : vector<16x32xf32>, i32 -> vector<16x32xf32>
    %301 = vector.broadcast %270 : vector<16x1xf32> to vector<16x32xf32>
    %302 = arith.mulf %300, %301 : vector<16x32xf32>
    %303 = arith.truncf %302 : vector<16x32xf32> to vector<16x32xbf16>
    %304 = tpu.concatenate %274, %278, %282, %286, %287, %291, %295, %299, %303 in 1 : vector<16x32xbf16>, vector<16x32xbf16>, vector<16x32xbf16>, vector<16x32xbf16>, vector<16x32xbf16>, vector<16x32xbf16>, vector<16x32xbf16>, vector<16x32xbf16>, vector<16x32xbf16> -> vector<16x288xbf16>
    %cst_87 = arith.constant dense<0.000000e+00> : vector<16x32xf32>
    %305 = tpu.matmul %304, %260, %cst_87 {dimension_numbers = #tpu.dot_dimension_numbers<[1], [0], [0], [1], [0, 0, 1, 1], [], []>} : vector<16x288xbf16>, vector<288x32xbf16>, vector<16x32xf32> -> vector<16x32xf32>
    %306 = vector.broadcast %261 : vector<1x32xf32> to vector<16x32xf32>
    %307 = arith.addf %305, %306 : vector<16x32xf32>
    %cst_88 = arith.constant 0.000000e+00 : f32
    %308 = vector.broadcast %cst_88 : f32 to vector<16x32xf32>
    %309 = arith.maximumf %307, %308 : vector<16x32xf32>
    %c6_89 = arith.constant 6 : index
    %c0_90 = arith.constant 0 : index
    %c0_91 = arith.constant 0 : index
    %310 = vector.load %arg2[%c6_89, %c0_90, %c0_91] : memref<14x288x32xbf16, #tpu.memory_space<vmem>>, vector<1x288x32xbf16>
    %311 = vector.shape_cast %310 : vector<1x288x32xbf16> to vector<288x32xbf16>
    %c7 = arith.constant 7 : index
    %c0_92 = arith.constant 0 : index
    %312 = vector.load %arg4[%c7, %c0_92] : memref<17x32xf32, #tpu.memory_space<vmem>>, vector<1x32xf32>
    %c5_i32_93 = arith.constant 5 : i32
    %313 = tpu.dynamic_rotate %309 by %c5_i32_93 dim 0 : vector<16x32xf32>, i32 -> vector<16x32xf32>
    %314 = vector.broadcast %263 : vector<16x1xf32> to vector<16x32xf32>
    %315 = arith.mulf %313, %314 : vector<16x32xf32>
    %316 = arith.truncf %315 : vector<16x32xf32> to vector<16x32xbf16>
    %c4_i32_94 = arith.constant 4 : i32
    %317 = tpu.dynamic_rotate %309 by %c4_i32_94 dim 0 : vector<16x32xf32>, i32 -> vector<16x32xf32>
    %318 = vector.broadcast %264 : vector<16x1xf32> to vector<16x32xf32>
    %319 = arith.mulf %317, %318 : vector<16x32xf32>
    %320 = arith.truncf %319 : vector<16x32xf32> to vector<16x32xbf16>
    %c3_i32_95 = arith.constant 3 : i32
    %321 = tpu.dynamic_rotate %309 by %c3_i32_95 dim 0 : vector<16x32xf32>, i32 -> vector<16x32xf32>
    %322 = vector.broadcast %265 : vector<16x1xf32> to vector<16x32xf32>
    %323 = arith.mulf %321, %322 : vector<16x32xf32>
    %324 = arith.truncf %323 : vector<16x32xf32> to vector<16x32xbf16>
    %c1_i32_96 = arith.constant 1 : i32
    %325 = tpu.dynamic_rotate %309 by %c1_i32_96 dim 0 : vector<16x32xf32>, i32 -> vector<16x32xf32>
    %326 = vector.broadcast %266 : vector<16x1xf32> to vector<16x32xf32>
    %327 = arith.mulf %325, %326 : vector<16x32xf32>
    %328 = arith.truncf %327 : vector<16x32xf32> to vector<16x32xbf16>
    %329 = arith.truncf %309 : vector<16x32xf32> to vector<16x32xbf16>
    %c15_i32_97 = arith.constant 15 : i32
    %330 = tpu.dynamic_rotate %309 by %c15_i32_97 dim 0 : vector<16x32xf32>, i32 -> vector<16x32xf32>
    %331 = vector.broadcast %267 : vector<16x1xf32> to vector<16x32xf32>
    %332 = arith.mulf %330, %331 : vector<16x32xf32>
    %333 = arith.truncf %332 : vector<16x32xf32> to vector<16x32xbf16>
    %c13_i32_98 = arith.constant 13 : i32
    %334 = tpu.dynamic_rotate %309 by %c13_i32_98 dim 0 : vector<16x32xf32>, i32 -> vector<16x32xf32>
    %335 = vector.broadcast %268 : vector<16x1xf32> to vector<16x32xf32>
    %336 = arith.mulf %334, %335 : vector<16x32xf32>
    %337 = arith.truncf %336 : vector<16x32xf32> to vector<16x32xbf16>
    %c12_i32_99 = arith.constant 12 : i32
    %338 = tpu.dynamic_rotate %309 by %c12_i32_99 dim 0 : vector<16x32xf32>, i32 -> vector<16x32xf32>
    %339 = vector.broadcast %269 : vector<16x1xf32> to vector<16x32xf32>
    %340 = arith.mulf %338, %339 : vector<16x32xf32>
    %341 = arith.truncf %340 : vector<16x32xf32> to vector<16x32xbf16>
    %c11_i32_100 = arith.constant 11 : i32
    %342 = tpu.dynamic_rotate %309 by %c11_i32_100 dim 0 : vector<16x32xf32>, i32 -> vector<16x32xf32>
    %343 = vector.broadcast %270 : vector<16x1xf32> to vector<16x32xf32>
    %344 = arith.mulf %342, %343 : vector<16x32xf32>
    %345 = arith.truncf %344 : vector<16x32xf32> to vector<16x32xbf16>
    %346 = tpu.concatenate %316, %320, %324, %328, %329, %333, %337, %341, %345 in 1 : vector<16x32xbf16>, vector<16x32xbf16>, vector<16x32xbf16>, vector<16x32xbf16>, vector<16x32xbf16>, vector<16x32xbf16>, vector<16x32xbf16>, vector<16x32xbf16>, vector<16x32xbf16> -> vector<16x288xbf16>
    %cst_101 = arith.constant dense<0.000000e+00> : vector<16x32xf32>
    %347 = tpu.matmul %346, %311, %cst_101 {dimension_numbers = #tpu.dot_dimension_numbers<[1], [0], [0], [1], [0, 0, 1, 1], [], []>} : vector<16x288xbf16>, vector<288x32xbf16>, vector<16x32xf32> -> vector<16x32xf32>
    %348 = vector.broadcast %312 : vector<1x32xf32> to vector<16x32xf32>
    %349 = arith.addf %347, %348 : vector<16x32xf32>
    %350 = arith.addf %349, %258 : vector<16x32xf32>
    %cst_102 = arith.constant 0.000000e+00 : f32
    %351 = vector.broadcast %cst_102 : f32 to vector<16x32xf32>
    %352 = arith.maximumf %350, %351 : vector<16x32xf32>
    %c7_103 = arith.constant 7 : index
    %c0_104 = arith.constant 0 : index
    %c0_105 = arith.constant 0 : index
    %353 = vector.load %arg2[%c7_103, %c0_104, %c0_105] : memref<14x288x32xbf16, #tpu.memory_space<vmem>>, vector<1x288x32xbf16>
    %354 = vector.shape_cast %353 : vector<1x288x32xbf16> to vector<288x32xbf16>
    %c9 = arith.constant 9 : index
    %c0_106 = arith.constant 0 : index
    %355 = vector.load %arg4[%c9, %c0_106] : memref<17x32xf32, #tpu.memory_space<vmem>>, vector<1x32xf32>
    %c5_i32_107 = arith.constant 5 : i32
    %356 = tpu.dynamic_rotate %352 by %c5_i32_107 dim 0 : vector<16x32xf32>, i32 -> vector<16x32xf32>
    %357 = vector.broadcast %263 : vector<16x1xf32> to vector<16x32xf32>
    %358 = arith.mulf %356, %357 : vector<16x32xf32>
    %359 = arith.truncf %358 : vector<16x32xf32> to vector<16x32xbf16>
    %c4_i32_108 = arith.constant 4 : i32
    %360 = tpu.dynamic_rotate %352 by %c4_i32_108 dim 0 : vector<16x32xf32>, i32 -> vector<16x32xf32>
    %361 = vector.broadcast %264 : vector<16x1xf32> to vector<16x32xf32>
    %362 = arith.mulf %360, %361 : vector<16x32xf32>
    %363 = arith.truncf %362 : vector<16x32xf32> to vector<16x32xbf16>
    %c3_i32_109 = arith.constant 3 : i32
    %364 = tpu.dynamic_rotate %352 by %c3_i32_109 dim 0 : vector<16x32xf32>, i32 -> vector<16x32xf32>
    %365 = vector.broadcast %265 : vector<16x1xf32> to vector<16x32xf32>
    %366 = arith.mulf %364, %365 : vector<16x32xf32>
    %367 = arith.truncf %366 : vector<16x32xf32> to vector<16x32xbf16>
    %c1_i32_110 = arith.constant 1 : i32
    %368 = tpu.dynamic_rotate %352 by %c1_i32_110 dim 0 : vector<16x32xf32>, i32 -> vector<16x32xf32>
    %369 = vector.broadcast %266 : vector<16x1xf32> to vector<16x32xf32>
    %370 = arith.mulf %368, %369 : vector<16x32xf32>
    %371 = arith.truncf %370 : vector<16x32xf32> to vector<16x32xbf16>
    %372 = arith.truncf %352 : vector<16x32xf32> to vector<16x32xbf16>
    %c15_i32_111 = arith.constant 15 : i32
    %373 = tpu.dynamic_rotate %352 by %c15_i32_111 dim 0 : vector<16x32xf32>, i32 -> vector<16x32xf32>
    %374 = vector.broadcast %267 : vector<16x1xf32> to vector<16x32xf32>
    %375 = arith.mulf %373, %374 : vector<16x32xf32>
    %376 = arith.truncf %375 : vector<16x32xf32> to vector<16x32xbf16>
    %c13_i32_112 = arith.constant 13 : i32
    %377 = tpu.dynamic_rotate %352 by %c13_i32_112 dim 0 : vector<16x32xf32>, i32 -> vector<16x32xf32>
    %378 = vector.broadcast %268 : vector<16x1xf32> to vector<16x32xf32>
    %379 = arith.mulf %377, %378 : vector<16x32xf32>
    %380 = arith.truncf %379 : vector<16x32xf32> to vector<16x32xbf16>
    %c12_i32_113 = arith.constant 12 : i32
    %381 = tpu.dynamic_rotate %352 by %c12_i32_113 dim 0 : vector<16x32xf32>, i32 -> vector<16x32xf32>
    %382 = vector.broadcast %269 : vector<16x1xf32> to vector<16x32xf32>
    %383 = arith.mulf %381, %382 : vector<16x32xf32>
    %384 = arith.truncf %383 : vector<16x32xf32> to vector<16x32xbf16>
    %c11_i32_114 = arith.constant 11 : i32
    %385 = tpu.dynamic_rotate %352 by %c11_i32_114 dim 0 : vector<16x32xf32>, i32 -> vector<16x32xf32>
    %386 = vector.broadcast %270 : vector<16x1xf32> to vector<16x32xf32>
    %387 = arith.mulf %385, %386 : vector<16x32xf32>
    %388 = arith.truncf %387 : vector<16x32xf32> to vector<16x32xbf16>
    %389 = tpu.concatenate %359, %363, %367, %371, %372, %376, %380, %384, %388 in 1 : vector<16x32xbf16>, vector<16x32xbf16>, vector<16x32xbf16>, vector<16x32xbf16>, vector<16x32xbf16>, vector<16x32xbf16>, vector<16x32xbf16>, vector<16x32xbf16>, vector<16x32xbf16> -> vector<16x288xbf16>
    %cst_115 = arith.constant dense<0.000000e+00> : vector<16x32xf32>
    %390 = tpu.matmul %389, %354, %cst_115 {dimension_numbers = #tpu.dot_dimension_numbers<[1], [0], [0], [1], [0, 0, 1, 1], [], []>} : vector<16x288xbf16>, vector<288x32xbf16>, vector<16x32xf32> -> vector<16x32xf32>
    %391 = vector.broadcast %355 : vector<1x32xf32> to vector<16x32xf32>
    %392 = arith.addf %390, %391 : vector<16x32xf32>
    %cst_116 = arith.constant 0.000000e+00 : f32
    %393 = vector.broadcast %cst_116 : f32 to vector<16x32xf32>
    %394 = arith.maximumf %392, %393 : vector<16x32xf32>
    %c2_117 = arith.constant 2 : index
    %c0_118 = arith.constant 0 : index
    %c0_119 = arith.constant 0 : index
    %395 = vector.load %arg3[%c2_117, %c0_118, %c0_119] : memref<3x32x32xbf16, #tpu.memory_space<vmem>>, vector<1x32x32xbf16>
    %396 = vector.shape_cast %395 : vector<1x32x32xbf16> to vector<32x32xbf16>
    %c12 = arith.constant 12 : index
    %c0_120 = arith.constant 0 : index
    %397 = vector.load %arg4[%c12, %c0_120] : memref<17x32xf32, #tpu.memory_space<vmem>>, vector<1x32xf32>
    %398 = arith.truncf %394 : vector<16x32xf32> to vector<16x32xbf16>
    %cst_121 = arith.constant dense<0.000000e+00> : vector<16x32xf32>
    %399 = tpu.matmul %398, %396, %cst_121 {dimension_numbers = #tpu.dot_dimension_numbers<[1], [0], [0], [1], [0, 0, 1, 1], [], []>} : vector<16x32xbf16>, vector<32x32xbf16>, vector<16x32xf32> -> vector<16x32xf32>
    %400 = vector.broadcast %397 : vector<1x32xf32> to vector<16x32xf32>
    %401 = arith.addf %399, %400 : vector<16x32xf32>
    %c8_122 = arith.constant 8 : index
    %c0_123 = arith.constant 0 : index
    %c0_124 = arith.constant 0 : index
    %402 = vector.load %arg2[%c8_122, %c0_123, %c0_124] : memref<14x288x32xbf16, #tpu.memory_space<vmem>>, vector<1x288x32xbf16>
    %403 = vector.shape_cast %402 : vector<1x288x32xbf16> to vector<288x32xbf16>
    %c10 = arith.constant 10 : index
    %c0_125 = arith.constant 0 : index
    %404 = vector.load %arg4[%c10, %c0_125] : memref<17x32xf32, #tpu.memory_space<vmem>>, vector<1x32xf32>
    %c5_i32_126 = arith.constant 5 : i32
    %405 = tpu.dynamic_rotate %394 by %c5_i32_126 dim 0 : vector<16x32xf32>, i32 -> vector<16x32xf32>
    %406 = vector.broadcast %263 : vector<16x1xf32> to vector<16x32xf32>
    %407 = arith.mulf %405, %406 : vector<16x32xf32>
    %408 = arith.truncf %407 : vector<16x32xf32> to vector<16x32xbf16>
    %c4_i32_127 = arith.constant 4 : i32
    %409 = tpu.dynamic_rotate %394 by %c4_i32_127 dim 0 : vector<16x32xf32>, i32 -> vector<16x32xf32>
    %410 = vector.broadcast %264 : vector<16x1xf32> to vector<16x32xf32>
    %411 = arith.mulf %409, %410 : vector<16x32xf32>
    %412 = arith.truncf %411 : vector<16x32xf32> to vector<16x32xbf16>
    %c3_i32_128 = arith.constant 3 : i32
    %413 = tpu.dynamic_rotate %394 by %c3_i32_128 dim 0 : vector<16x32xf32>, i32 -> vector<16x32xf32>
    %414 = vector.broadcast %265 : vector<16x1xf32> to vector<16x32xf32>
    %415 = arith.mulf %413, %414 : vector<16x32xf32>
    %416 = arith.truncf %415 : vector<16x32xf32> to vector<16x32xbf16>
    %c1_i32_129 = arith.constant 1 : i32
    %417 = tpu.dynamic_rotate %394 by %c1_i32_129 dim 0 : vector<16x32xf32>, i32 -> vector<16x32xf32>
    %418 = vector.broadcast %266 : vector<16x1xf32> to vector<16x32xf32>
    %419 = arith.mulf %417, %418 : vector<16x32xf32>
    %420 = arith.truncf %419 : vector<16x32xf32> to vector<16x32xbf16>
    %421 = arith.truncf %394 : vector<16x32xf32> to vector<16x32xbf16>
    %c15_i32_130 = arith.constant 15 : i32
    %422 = tpu.dynamic_rotate %394 by %c15_i32_130 dim 0 : vector<16x32xf32>, i32 -> vector<16x32xf32>
    %423 = vector.broadcast %267 : vector<16x1xf32> to vector<16x32xf32>
    %424 = arith.mulf %422, %423 : vector<16x32xf32>
    %425 = arith.truncf %424 : vector<16x32xf32> to vector<16x32xbf16>
    %c13_i32_131 = arith.constant 13 : i32
    %426 = tpu.dynamic_rotate %394 by %c13_i32_131 dim 0 : vector<16x32xf32>, i32 -> vector<16x32xf32>
    %427 = vector.broadcast %268 : vector<16x1xf32> to vector<16x32xf32>
    %428 = arith.mulf %426, %427 : vector<16x32xf32>
    %429 = arith.truncf %428 : vector<16x32xf32> to vector<16x32xbf16>
    %c12_i32_132 = arith.constant 12 : i32
    %430 = tpu.dynamic_rotate %394 by %c12_i32_132 dim 0 : vector<16x32xf32>, i32 -> vector<16x32xf32>
    %431 = vector.broadcast %269 : vector<16x1xf32> to vector<16x32xf32>
    %432 = arith.mulf %430, %431 : vector<16x32xf32>
    %433 = arith.truncf %432 : vector<16x32xf32> to vector<16x32xbf16>
    %c11_i32_133 = arith.constant 11 : i32
    %434 = tpu.dynamic_rotate %394 by %c11_i32_133 dim 0 : vector<16x32xf32>, i32 -> vector<16x32xf32>
    %435 = vector.broadcast %270 : vector<16x1xf32> to vector<16x32xf32>
    %436 = arith.mulf %434, %435 : vector<16x32xf32>
    %437 = arith.truncf %436 : vector<16x32xf32> to vector<16x32xbf16>
    %438 = tpu.concatenate %408, %412, %416, %420, %421, %425, %429, %433, %437 in 1 : vector<16x32xbf16>, vector<16x32xbf16>, vector<16x32xbf16>, vector<16x32xbf16>, vector<16x32xbf16>, vector<16x32xbf16>, vector<16x32xbf16>, vector<16x32xbf16>, vector<16x32xbf16> -> vector<16x288xbf16>
    %cst_134 = arith.constant dense<0.000000e+00> : vector<16x32xf32>
    %439 = tpu.matmul %438, %403, %cst_134 {dimension_numbers = #tpu.dot_dimension_numbers<[1], [0], [0], [1], [0, 0, 1, 1], [], []>} : vector<16x288xbf16>, vector<288x32xbf16>, vector<16x32xf32> -> vector<16x32xf32>
    %440 = vector.broadcast %404 : vector<1x32xf32> to vector<16x32xf32>
    %441 = arith.addf %439, %440 : vector<16x32xf32>
    %cst_135 = arith.constant 0.000000e+00 : f32
    %442 = vector.broadcast %cst_135 : f32 to vector<16x32xf32>
    %443 = arith.maximumf %441, %442 : vector<16x32xf32>
    %c9_136 = arith.constant 9 : index
    %c0_137 = arith.constant 0 : index
    %c0_138 = arith.constant 0 : index
    %444 = vector.load %arg2[%c9_136, %c0_137, %c0_138] : memref<14x288x32xbf16, #tpu.memory_space<vmem>>, vector<1x288x32xbf16>
    %445 = vector.shape_cast %444 : vector<1x288x32xbf16> to vector<288x32xbf16>
    %c11 = arith.constant 11 : index
    %c0_139 = arith.constant 0 : index
    %446 = vector.load %arg4[%c11, %c0_139] : memref<17x32xf32, #tpu.memory_space<vmem>>, vector<1x32xf32>
    %c5_i32_140 = arith.constant 5 : i32
    %447 = tpu.dynamic_rotate %443 by %c5_i32_140 dim 0 : vector<16x32xf32>, i32 -> vector<16x32xf32>
    %448 = vector.broadcast %263 : vector<16x1xf32> to vector<16x32xf32>
    %449 = arith.mulf %447, %448 : vector<16x32xf32>
    %450 = arith.truncf %449 : vector<16x32xf32> to vector<16x32xbf16>
    %c4_i32_141 = arith.constant 4 : i32
    %451 = tpu.dynamic_rotate %443 by %c4_i32_141 dim 0 : vector<16x32xf32>, i32 -> vector<16x32xf32>
    %452 = vector.broadcast %264 : vector<16x1xf32> to vector<16x32xf32>
    %453 = arith.mulf %451, %452 : vector<16x32xf32>
    %454 = arith.truncf %453 : vector<16x32xf32> to vector<16x32xbf16>
    %c3_i32_142 = arith.constant 3 : i32
    %455 = tpu.dynamic_rotate %443 by %c3_i32_142 dim 0 : vector<16x32xf32>, i32 -> vector<16x32xf32>
    %456 = vector.broadcast %265 : vector<16x1xf32> to vector<16x32xf32>
    %457 = arith.mulf %455, %456 : vector<16x32xf32>
    %458 = arith.truncf %457 : vector<16x32xf32> to vector<16x32xbf16>
    %c1_i32_143 = arith.constant 1 : i32
    %459 = tpu.dynamic_rotate %443 by %c1_i32_143 dim 0 : vector<16x32xf32>, i32 -> vector<16x32xf32>
    %460 = vector.broadcast %266 : vector<16x1xf32> to vector<16x32xf32>
    %461 = arith.mulf %459, %460 : vector<16x32xf32>
    %462 = arith.truncf %461 : vector<16x32xf32> to vector<16x32xbf16>
    %463 = arith.truncf %443 : vector<16x32xf32> to vector<16x32xbf16>
    %c15_i32_144 = arith.constant 15 : i32
    %464 = tpu.dynamic_rotate %443 by %c15_i32_144 dim 0 : vector<16x32xf32>, i32 -> vector<16x32xf32>
    %465 = vector.broadcast %267 : vector<16x1xf32> to vector<16x32xf32>
    %466 = arith.mulf %464, %465 : vector<16x32xf32>
    %467 = arith.truncf %466 : vector<16x32xf32> to vector<16x32xbf16>
    %c13_i32_145 = arith.constant 13 : i32
    %468 = tpu.dynamic_rotate %443 by %c13_i32_145 dim 0 : vector<16x32xf32>, i32 -> vector<16x32xf32>
    %469 = vector.broadcast %268 : vector<16x1xf32> to vector<16x32xf32>
    %470 = arith.mulf %468, %469 : vector<16x32xf32>
    %471 = arith.truncf %470 : vector<16x32xf32> to vector<16x32xbf16>
    %c12_i32_146 = arith.constant 12 : i32
    %472 = tpu.dynamic_rotate %443 by %c12_i32_146 dim 0 : vector<16x32xf32>, i32 -> vector<16x32xf32>
    %473 = vector.broadcast %269 : vector<16x1xf32> to vector<16x32xf32>
    %474 = arith.mulf %472, %473 : vector<16x32xf32>
    %475 = arith.truncf %474 : vector<16x32xf32> to vector<16x32xbf16>
    %c11_i32_147 = arith.constant 11 : i32
    %476 = tpu.dynamic_rotate %443 by %c11_i32_147 dim 0 : vector<16x32xf32>, i32 -> vector<16x32xf32>
    %477 = vector.broadcast %270 : vector<16x1xf32> to vector<16x32xf32>
    %478 = arith.mulf %476, %477 : vector<16x32xf32>
    %479 = arith.truncf %478 : vector<16x32xf32> to vector<16x32xbf16>
    %480 = tpu.concatenate %450, %454, %458, %462, %463, %467, %471, %475, %479 in 1 : vector<16x32xbf16>, vector<16x32xbf16>, vector<16x32xbf16>, vector<16x32xbf16>, vector<16x32xbf16>, vector<16x32xbf16>, vector<16x32xbf16>, vector<16x32xbf16>, vector<16x32xbf16> -> vector<16x288xbf16>
    %cst_148 = arith.constant dense<0.000000e+00> : vector<16x32xf32>
    %481 = tpu.matmul %480, %445, %cst_148 {dimension_numbers = #tpu.dot_dimension_numbers<[1], [0], [0], [1], [0, 0, 1, 1], [], []>} : vector<16x288xbf16>, vector<288x32xbf16>, vector<16x32xf32> -> vector<16x32xf32>
    %482 = vector.broadcast %446 : vector<1x32xf32> to vector<16x32xf32>
    %483 = arith.addf %481, %482 : vector<16x32xf32>
    %484 = arith.addf %483, %401 : vector<16x32xf32>
    %cst_149 = arith.constant 0.000000e+00 : f32
    %485 = vector.broadcast %cst_149 : f32 to vector<16x32xf32>
    %486 = arith.maximumf %484, %485 : vector<16x32xf32>
    %c10_150 = arith.constant 10 : index
    %c0_151 = arith.constant 0 : index
    %c0_152 = arith.constant 0 : index
    %487 = vector.load %arg2[%c10_150, %c0_151, %c0_152] : memref<14x288x32xbf16, #tpu.memory_space<vmem>>, vector<1x288x32xbf16>
    %488 = vector.shape_cast %487 : vector<1x288x32xbf16> to vector<288x32xbf16>
    %c13 = arith.constant 13 : index
    %c0_153 = arith.constant 0 : index
    %489 = vector.load %arg4[%c13, %c0_153] : memref<17x32xf32, #tpu.memory_space<vmem>>, vector<1x32xf32>
    %c5_i32_154 = arith.constant 5 : i32
    %490 = tpu.dynamic_rotate %486 by %c5_i32_154 dim 0 : vector<16x32xf32>, i32 -> vector<16x32xf32>
    %491 = vector.broadcast %263 : vector<16x1xf32> to vector<16x32xf32>
    %492 = arith.mulf %490, %491 : vector<16x32xf32>
    %493 = arith.truncf %492 : vector<16x32xf32> to vector<16x32xbf16>
    %c4_i32_155 = arith.constant 4 : i32
    %494 = tpu.dynamic_rotate %486 by %c4_i32_155 dim 0 : vector<16x32xf32>, i32 -> vector<16x32xf32>
    %495 = vector.broadcast %264 : vector<16x1xf32> to vector<16x32xf32>
    %496 = arith.mulf %494, %495 : vector<16x32xf32>
    %497 = arith.truncf %496 : vector<16x32xf32> to vector<16x32xbf16>
    %c3_i32_156 = arith.constant 3 : i32
    %498 = tpu.dynamic_rotate %486 by %c3_i32_156 dim 0 : vector<16x32xf32>, i32 -> vector<16x32xf32>
    %499 = vector.broadcast %265 : vector<16x1xf32> to vector<16x32xf32>
    %500 = arith.mulf %498, %499 : vector<16x32xf32>
    %501 = arith.truncf %500 : vector<16x32xf32> to vector<16x32xbf16>
    %c1_i32_157 = arith.constant 1 : i32
    %502 = tpu.dynamic_rotate %486 by %c1_i32_157 dim 0 : vector<16x32xf32>, i32 -> vector<16x32xf32>
    %503 = vector.broadcast %266 : vector<16x1xf32> to vector<16x32xf32>
    %504 = arith.mulf %502, %503 : vector<16x32xf32>
    %505 = arith.truncf %504 : vector<16x32xf32> to vector<16x32xbf16>
    %506 = arith.truncf %486 : vector<16x32xf32> to vector<16x32xbf16>
    %c15_i32_158 = arith.constant 15 : i32
    %507 = tpu.dynamic_rotate %486 by %c15_i32_158 dim 0 : vector<16x32xf32>, i32 -> vector<16x32xf32>
    %508 = vector.broadcast %267 : vector<16x1xf32> to vector<16x32xf32>
    %509 = arith.mulf %507, %508 : vector<16x32xf32>
    %510 = arith.truncf %509 : vector<16x32xf32> to vector<16x32xbf16>
    %c13_i32_159 = arith.constant 13 : i32
    %511 = tpu.dynamic_rotate %486 by %c13_i32_159 dim 0 : vector<16x32xf32>, i32 -> vector<16x32xf32>
    %512 = vector.broadcast %268 : vector<16x1xf32> to vector<16x32xf32>
    %513 = arith.mulf %511, %512 : vector<16x32xf32>
    %514 = arith.truncf %513 : vector<16x32xf32> to vector<16x32xbf16>
    %c12_i32_160 = arith.constant 12 : i32
    %515 = tpu.dynamic_rotate %486 by %c12_i32_160 dim 0 : vector<16x32xf32>, i32 -> vector<16x32xf32>
    %516 = vector.broadcast %269 : vector<16x1xf32> to vector<16x32xf32>
    %517 = arith.mulf %515, %516 : vector<16x32xf32>
    %518 = arith.truncf %517 : vector<16x32xf32> to vector<16x32xbf16>
    %c11_i32_161 = arith.constant 11 : i32
    %519 = tpu.dynamic_rotate %486 by %c11_i32_161 dim 0 : vector<16x32xf32>, i32 -> vector<16x32xf32>
    %520 = vector.broadcast %270 : vector<16x1xf32> to vector<16x32xf32>
    %521 = arith.mulf %519, %520 : vector<16x32xf32>
    %522 = arith.truncf %521 : vector<16x32xf32> to vector<16x32xbf16>
    %523 = tpu.concatenate %493, %497, %501, %505, %506, %510, %514, %518, %522 in 1 : vector<16x32xbf16>, vector<16x32xbf16>, vector<16x32xbf16>, vector<16x32xbf16>, vector<16x32xbf16>, vector<16x32xbf16>, vector<16x32xbf16>, vector<16x32xbf16>, vector<16x32xbf16> -> vector<16x288xbf16>
    %cst_162 = arith.constant dense<0.000000e+00> : vector<16x32xf32>
    %524 = tpu.matmul %523, %488, %cst_162 {dimension_numbers = #tpu.dot_dimension_numbers<[1], [0], [0], [1], [0, 0, 1, 1], [], []>} : vector<16x288xbf16>, vector<288x32xbf16>, vector<16x32xf32> -> vector<16x32xf32>
    %525 = vector.broadcast %489 : vector<1x32xf32> to vector<16x32xf32>
    %526 = arith.addf %524, %525 : vector<16x32xf32>
    %cst_163 = arith.constant 0.000000e+00 : f32
    %527 = vector.broadcast %cst_163 : f32 to vector<16x32xf32>
    %528 = arith.maximumf %526, %527 : vector<16x32xf32>
    %c11_164 = arith.constant 11 : index
    %c0_165 = arith.constant 0 : index
    %c0_166 = arith.constant 0 : index
    %529 = vector.load %arg2[%c11_164, %c0_165, %c0_166] : memref<14x288x32xbf16, #tpu.memory_space<vmem>>, vector<1x288x32xbf16>
    %530 = vector.shape_cast %529 : vector<1x288x32xbf16> to vector<288x32xbf16>
    %c14 = arith.constant 14 : index
    %c0_167 = arith.constant 0 : index
    %531 = vector.load %arg4[%c14, %c0_167] : memref<17x32xf32, #tpu.memory_space<vmem>>, vector<1x32xf32>
    %c5_i32_168 = arith.constant 5 : i32
    %532 = tpu.dynamic_rotate %528 by %c5_i32_168 dim 0 : vector<16x32xf32>, i32 -> vector<16x32xf32>
    %533 = vector.broadcast %263 : vector<16x1xf32> to vector<16x32xf32>
    %534 = arith.mulf %532, %533 : vector<16x32xf32>
    %535 = arith.truncf %534 : vector<16x32xf32> to vector<16x32xbf16>
    %c4_i32_169 = arith.constant 4 : i32
    %536 = tpu.dynamic_rotate %528 by %c4_i32_169 dim 0 : vector<16x32xf32>, i32 -> vector<16x32xf32>
    %537 = vector.broadcast %264 : vector<16x1xf32> to vector<16x32xf32>
    %538 = arith.mulf %536, %537 : vector<16x32xf32>
    %539 = arith.truncf %538 : vector<16x32xf32> to vector<16x32xbf16>
    %c3_i32_170 = arith.constant 3 : i32
    %540 = tpu.dynamic_rotate %528 by %c3_i32_170 dim 0 : vector<16x32xf32>, i32 -> vector<16x32xf32>
    %541 = vector.broadcast %265 : vector<16x1xf32> to vector<16x32xf32>
    %542 = arith.mulf %540, %541 : vector<16x32xf32>
    %543 = arith.truncf %542 : vector<16x32xf32> to vector<16x32xbf16>
    %c1_i32_171 = arith.constant 1 : i32
    %544 = tpu.dynamic_rotate %528 by %c1_i32_171 dim 0 : vector<16x32xf32>, i32 -> vector<16x32xf32>
    %545 = vector.broadcast %266 : vector<16x1xf32> to vector<16x32xf32>
    %546 = arith.mulf %544, %545 : vector<16x32xf32>
    %547 = arith.truncf %546 : vector<16x32xf32> to vector<16x32xbf16>
    %548 = arith.truncf %528 : vector<16x32xf32> to vector<16x32xbf16>
    %c15_i32_172 = arith.constant 15 : i32
    %549 = tpu.dynamic_rotate %528 by %c15_i32_172 dim 0 : vector<16x32xf32>, i32 -> vector<16x32xf32>
    %550 = vector.broadcast %267 : vector<16x1xf32> to vector<16x32xf32>
    %551 = arith.mulf %549, %550 : vector<16x32xf32>
    %552 = arith.truncf %551 : vector<16x32xf32> to vector<16x32xbf16>
    %c13_i32_173 = arith.constant 13 : i32
    %553 = tpu.dynamic_rotate %528 by %c13_i32_173 dim 0 : vector<16x32xf32>, i32 -> vector<16x32xf32>
    %554 = vector.broadcast %268 : vector<16x1xf32> to vector<16x32xf32>
    %555 = arith.mulf %553, %554 : vector<16x32xf32>
    %556 = arith.truncf %555 : vector<16x32xf32> to vector<16x32xbf16>
    %c12_i32_174 = arith.constant 12 : i32
    %557 = tpu.dynamic_rotate %528 by %c12_i32_174 dim 0 : vector<16x32xf32>, i32 -> vector<16x32xf32>
    %558 = vector.broadcast %269 : vector<16x1xf32> to vector<16x32xf32>
    %559 = arith.mulf %557, %558 : vector<16x32xf32>
    %560 = arith.truncf %559 : vector<16x32xf32> to vector<16x32xbf16>
    %c11_i32_175 = arith.constant 11 : i32
    %561 = tpu.dynamic_rotate %528 by %c11_i32_175 dim 0 : vector<16x32xf32>, i32 -> vector<16x32xf32>
    %562 = vector.broadcast %270 : vector<16x1xf32> to vector<16x32xf32>
    %563 = arith.mulf %561, %562 : vector<16x32xf32>
    %564 = arith.truncf %563 : vector<16x32xf32> to vector<16x32xbf16>
    %565 = tpu.concatenate %535, %539, %543, %547, %548, %552, %556, %560, %564 in 1 : vector<16x32xbf16>, vector<16x32xbf16>, vector<16x32xbf16>, vector<16x32xbf16>, vector<16x32xbf16>, vector<16x32xbf16>, vector<16x32xbf16>, vector<16x32xbf16>, vector<16x32xbf16> -> vector<16x288xbf16>
    %cst_176 = arith.constant dense<0.000000e+00> : vector<16x32xf32>
    %566 = tpu.matmul %565, %530, %cst_176 {dimension_numbers = #tpu.dot_dimension_numbers<[1], [0], [0], [1], [0, 0, 1, 1], [], []>} : vector<16x288xbf16>, vector<288x32xbf16>, vector<16x32xf32> -> vector<16x32xf32>
    %567 = vector.broadcast %531 : vector<1x32xf32> to vector<16x32xf32>
    %568 = arith.addf %566, %567 : vector<16x32xf32>
    %cst_177 = arith.constant 0.000000e+00 : f32
    %569 = vector.broadcast %cst_177 : f32 to vector<16x32xf32>
    %570 = arith.maximumf %568, %569 : vector<16x32xf32>
    %c12_178 = arith.constant 12 : index
    %c0_179 = arith.constant 0 : index
    %c0_180 = arith.constant 0 : index
    %571 = vector.load %arg2[%c12_178, %c0_179, %c0_180] : memref<14x288x32xbf16, #tpu.memory_space<vmem>>, vector<1x288x32xbf16>
    %572 = vector.shape_cast %571 : vector<1x288x32xbf16> to vector<288x32xbf16>
    %c15 = arith.constant 15 : index
    %c0_181 = arith.constant 0 : index
    %573 = vector.load %arg4[%c15, %c0_181] : memref<17x32xf32, #tpu.memory_space<vmem>>, vector<1x32xf32>
    %c5_i32_182 = arith.constant 5 : i32
    %574 = tpu.dynamic_rotate %570 by %c5_i32_182 dim 0 : vector<16x32xf32>, i32 -> vector<16x32xf32>
    %575 = vector.broadcast %263 : vector<16x1xf32> to vector<16x32xf32>
    %576 = arith.mulf %574, %575 : vector<16x32xf32>
    %577 = arith.truncf %576 : vector<16x32xf32> to vector<16x32xbf16>
    %c4_i32_183 = arith.constant 4 : i32
    %578 = tpu.dynamic_rotate %570 by %c4_i32_183 dim 0 : vector<16x32xf32>, i32 -> vector<16x32xf32>
    %579 = vector.broadcast %264 : vector<16x1xf32> to vector<16x32xf32>
    %580 = arith.mulf %578, %579 : vector<16x32xf32>
    %581 = arith.truncf %580 : vector<16x32xf32> to vector<16x32xbf16>
    %c3_i32_184 = arith.constant 3 : i32
    %582 = tpu.dynamic_rotate %570 by %c3_i32_184 dim 0 : vector<16x32xf32>, i32 -> vector<16x32xf32>
    %583 = vector.broadcast %265 : vector<16x1xf32> to vector<16x32xf32>
    %584 = arith.mulf %582, %583 : vector<16x32xf32>
    %585 = arith.truncf %584 : vector<16x32xf32> to vector<16x32xbf16>
    %c1_i32_185 = arith.constant 1 : i32
    %586 = tpu.dynamic_rotate %570 by %c1_i32_185 dim 0 : vector<16x32xf32>, i32 -> vector<16x32xf32>
    %587 = vector.broadcast %266 : vector<16x1xf32> to vector<16x32xf32>
    %588 = arith.mulf %586, %587 : vector<16x32xf32>
    %589 = arith.truncf %588 : vector<16x32xf32> to vector<16x32xbf16>
    %590 = arith.truncf %570 : vector<16x32xf32> to vector<16x32xbf16>
    %c15_i32_186 = arith.constant 15 : i32
    %591 = tpu.dynamic_rotate %570 by %c15_i32_186 dim 0 : vector<16x32xf32>, i32 -> vector<16x32xf32>
    %592 = vector.broadcast %267 : vector<16x1xf32> to vector<16x32xf32>
    %593 = arith.mulf %591, %592 : vector<16x32xf32>
    %594 = arith.truncf %593 : vector<16x32xf32> to vector<16x32xbf16>
    %c13_i32_187 = arith.constant 13 : i32
    %595 = tpu.dynamic_rotate %570 by %c13_i32_187 dim 0 : vector<16x32xf32>, i32 -> vector<16x32xf32>
    %596 = vector.broadcast %268 : vector<16x1xf32> to vector<16x32xf32>
    %597 = arith.mulf %595, %596 : vector<16x32xf32>
    %598 = arith.truncf %597 : vector<16x32xf32> to vector<16x32xbf16>
    %c12_i32_188 = arith.constant 12 : i32
    %599 = tpu.dynamic_rotate %570 by %c12_i32_188 dim 0 : vector<16x32xf32>, i32 -> vector<16x32xf32>
    %600 = vector.broadcast %269 : vector<16x1xf32> to vector<16x32xf32>
    %601 = arith.mulf %599, %600 : vector<16x32xf32>
    %602 = arith.truncf %601 : vector<16x32xf32> to vector<16x32xbf16>
    %c11_i32_189 = arith.constant 11 : i32
    %603 = tpu.dynamic_rotate %570 by %c11_i32_189 dim 0 : vector<16x32xf32>, i32 -> vector<16x32xf32>
    %604 = vector.broadcast %270 : vector<16x1xf32> to vector<16x32xf32>
    %605 = arith.mulf %603, %604 : vector<16x32xf32>
    %606 = arith.truncf %605 : vector<16x32xf32> to vector<16x32xbf16>
    %607 = tpu.concatenate %577, %581, %585, %589, %590, %594, %598, %602, %606 in 1 : vector<16x32xbf16>, vector<16x32xbf16>, vector<16x32xbf16>, vector<16x32xbf16>, vector<16x32xbf16>, vector<16x32xbf16>, vector<16x32xbf16>, vector<16x32xbf16>, vector<16x32xbf16> -> vector<16x288xbf16>
    %cst_190 = arith.constant dense<0.000000e+00> : vector<16x32xf32>
    %608 = tpu.matmul %607, %572, %cst_190 {dimension_numbers = #tpu.dot_dimension_numbers<[1], [0], [0], [1], [0, 0, 1, 1], [], []>} : vector<16x288xbf16>, vector<288x32xbf16>, vector<16x32xf32> -> vector<16x32xf32>
    %609 = vector.broadcast %573 : vector<1x32xf32> to vector<16x32xf32>
    %610 = arith.addf %608, %609 : vector<16x32xf32>
    %611 = arith.addf %610, %528 : vector<16x32xf32>
    %cst_191 = arith.constant 0.000000e+00 : f32
    %612 = vector.broadcast %cst_191 : f32 to vector<16x32xf32>
    %613 = arith.maximumf %611, %612 : vector<16x32xf32>
    %c13_192 = arith.constant 13 : index
    %c0_193 = arith.constant 0 : index
    %c0_194 = arith.constant 0 : index
    %614 = vector.load %arg2[%c13_192, %c0_193, %c0_194] : memref<14x288x32xbf16, #tpu.memory_space<vmem>>, vector<1x288x32xbf16>
    %615 = vector.shape_cast %614 : vector<1x288x32xbf16> to vector<288x32xbf16>
    %c16 = arith.constant 16 : index
    %c0_195 = arith.constant 0 : index
    %616 = vector.load %arg4[%c16, %c0_195] : memref<17x32xf32, #tpu.memory_space<vmem>>, vector<1x32xf32>
    %c5_i32_196 = arith.constant 5 : i32
    %617 = tpu.dynamic_rotate %613 by %c5_i32_196 dim 0 : vector<16x32xf32>, i32 -> vector<16x32xf32>
    %618 = vector.broadcast %263 : vector<16x1xf32> to vector<16x32xf32>
    %619 = arith.mulf %617, %618 : vector<16x32xf32>
    %620 = arith.truncf %619 : vector<16x32xf32> to vector<16x32xbf16>
    %c4_i32_197 = arith.constant 4 : i32
    %621 = tpu.dynamic_rotate %613 by %c4_i32_197 dim 0 : vector<16x32xf32>, i32 -> vector<16x32xf32>
    %622 = vector.broadcast %264 : vector<16x1xf32> to vector<16x32xf32>
    %623 = arith.mulf %621, %622 : vector<16x32xf32>
    %624 = arith.truncf %623 : vector<16x32xf32> to vector<16x32xbf16>
    %c3_i32_198 = arith.constant 3 : i32
    %625 = tpu.dynamic_rotate %613 by %c3_i32_198 dim 0 : vector<16x32xf32>, i32 -> vector<16x32xf32>
    %626 = vector.broadcast %265 : vector<16x1xf32> to vector<16x32xf32>
    %627 = arith.mulf %625, %626 : vector<16x32xf32>
    %628 = arith.truncf %627 : vector<16x32xf32> to vector<16x32xbf16>
    %c1_i32_199 = arith.constant 1 : i32
    %629 = tpu.dynamic_rotate %613 by %c1_i32_199 dim 0 : vector<16x32xf32>, i32 -> vector<16x32xf32>
    %630 = vector.broadcast %266 : vector<16x1xf32> to vector<16x32xf32>
    %631 = arith.mulf %629, %630 : vector<16x32xf32>
    %632 = arith.truncf %631 : vector<16x32xf32> to vector<16x32xbf16>
    %633 = arith.truncf %613 : vector<16x32xf32> to vector<16x32xbf16>
    %c15_i32_200 = arith.constant 15 : i32
    %634 = tpu.dynamic_rotate %613 by %c15_i32_200 dim 0 : vector<16x32xf32>, i32 -> vector<16x32xf32>
    %635 = vector.broadcast %267 : vector<16x1xf32> to vector<16x32xf32>
    %636 = arith.mulf %634, %635 : vector<16x32xf32>
    %637 = arith.truncf %636 : vector<16x32xf32> to vector<16x32xbf16>
    %c13_i32_201 = arith.constant 13 : i32
    %638 = tpu.dynamic_rotate %613 by %c13_i32_201 dim 0 : vector<16x32xf32>, i32 -> vector<16x32xf32>
    %639 = vector.broadcast %268 : vector<16x1xf32> to vector<16x32xf32>
    %640 = arith.mulf %638, %639 : vector<16x32xf32>
    %641 = arith.truncf %640 : vector<16x32xf32> to vector<16x32xbf16>
    %c12_i32_202 = arith.constant 12 : i32
    %642 = tpu.dynamic_rotate %613 by %c12_i32_202 dim 0 : vector<16x32xf32>, i32 -> vector<16x32xf32>
    %643 = vector.broadcast %269 : vector<16x1xf32> to vector<16x32xf32>
    %644 = arith.mulf %642, %643 : vector<16x32xf32>
    %645 = arith.truncf %644 : vector<16x32xf32> to vector<16x32xbf16>
    %c11_i32_203 = arith.constant 11 : i32
    %646 = tpu.dynamic_rotate %613 by %c11_i32_203 dim 0 : vector<16x32xf32>, i32 -> vector<16x32xf32>
    %647 = vector.broadcast %270 : vector<16x1xf32> to vector<16x32xf32>
    %648 = arith.mulf %646, %647 : vector<16x32xf32>
    %649 = arith.truncf %648 : vector<16x32xf32> to vector<16x32xbf16>
    %650 = tpu.concatenate %620, %624, %628, %632, %633, %637, %641, %645, %649 in 1 : vector<16x32xbf16>, vector<16x32xbf16>, vector<16x32xbf16>, vector<16x32xbf16>, vector<16x32xbf16>, vector<16x32xbf16>, vector<16x32xbf16>, vector<16x32xbf16>, vector<16x32xbf16> -> vector<16x288xbf16>
    %cst_204 = arith.constant dense<0.000000e+00> : vector<16x32xf32>
    %651 = tpu.matmul %650, %615, %cst_204 {dimension_numbers = #tpu.dot_dimension_numbers<[1], [0], [0], [1], [0, 0, 1, 1], [], []>} : vector<16x288xbf16>, vector<288x32xbf16>, vector<16x32xf32> -> vector<16x32xf32>
    %652 = vector.broadcast %616 : vector<1x32xf32> to vector<16x32xf32>
    %653 = arith.addf %651, %652 : vector<16x32xf32>
    %cst_205 = arith.constant 0.000000e+00 : f32
    %654 = vector.broadcast %cst_205 : f32 to vector<16x32xf32>
    %655 = arith.maximumf %653, %654 : vector<16x32xf32>
    %c0_206 = arith.constant 0 : index
    %c0_207 = arith.constant 0 : index
    %c0_208 = arith.constant 0 : index
    %656 = vector.load %arg8[%c0_206, %c0_207, %c0_208] : memref<1x16x32xf32, #tpu.memory_space<vmem>>, vector<1x16x32xf32>
    %657 = vector.shape_cast %656 : vector<1x16x32xf32> to vector<16x32xf32>
    %658 = vector.shape_cast %655 : vector<16x32xf32> to vector<1x16x32xf32>
    tpu.vector_store %arg8[%c0_206, %c0_207, %c0_208], %658 {strides = array<i32>} : memref<1x16x32xf32, #tpu.memory_space<vmem>>, vector<1x16x32xf32>,
    return
  }
  func.func @transform_0(%arg0: i32) -> (i32, i32, i32) {
    %c0_i32 = arith.constant 0 : i32
    %c0_i32_0 = arith.constant 0 : i32
    %c0_i32_1 = arith.constant 0 : i32
    return %arg0, %c0_i32, %c0_i32_0 : i32, i32, i32
  }
  func.func @transform_1(%arg0: i32) -> (i32, i32, i32) {
    %c0_i32 = arith.constant 0 : i32
    %c0_i32_0 = arith.constant 0 : i32
    %c0_i32_1 = arith.constant 0 : i32
    %c0_i32_2 = arith.constant 0 : i32
    return %c0_i32, %c0_i32_0, %c0_i32_1 : i32, i32, i32
  }
  func.func @transform_2(%arg0: i32) -> (i32, i32, i32) {
    %c0_i32 = arith.constant 0 : i32
    %c0_i32_0 = arith.constant 0 : i32
    %c0_i32_1 = arith.constant 0 : i32
    %c0_i32_2 = arith.constant 0 : i32
    return %c0_i32, %c0_i32_0, %c0_i32_1 : i32, i32, i32
  }
  func.func @transform_3(%arg0: i32) -> (i32, i32) {
    %c0_i32 = arith.constant 0 : i32
    %c0_i32_0 = arith.constant 0 : i32
    %c0_i32_1 = arith.constant 0 : i32
    return %c0_i32, %c0_i32_0 : i32, i32
  }
  func.func @transform_4(%arg0: i32) -> (i32, i32) {
    %c0_i32 = arith.constant 0 : i32
    %c0_i32_0 = arith.constant 0 : i32
    %c0_i32_1 = arith.constant 0 : i32
    return %c0_i32, %c0_i32_0 : i32, i32
  }
  func.func @transform_5(%arg0: i32) -> (i32, i32) {
    %c0_i32 = arith.constant 0 : i32
    %c0_i32_0 = arith.constant 0 : i32
    %c0_i32_1 = arith.constant 0 : i32
    return %c0_i32, %c0_i32_0 : i32, i32
  }
  func.func @transform_6(%arg0: i32) -> (i32, i32) {
    %c0_i32 = arith.constant 0 : i32
    %c0_i32_0 = arith.constant 0 : i32
    %c0_i32_1 = arith.constant 0 : i32
    return %c0_i32, %c0_i32_0 : i32, i32
  }
  func.func @transform_7(%arg0: i32) -> (i32, i32, i32) {
    %c0_i32 = arith.constant 0 : i32
    %c0_i32_0 = arith.constant 0 : i32
    %c0_i32_1 = arith.constant 0 : i32
    return %arg0, %c0_i32, %c0_i32_0 : i32, i32, i32
  }
}

</mosaic_0001>

<llo_original>
// kernel: resnet_v2_forward.1
$region0: #{resnet_v2_forward.1}
  #allocation0 [shape = 'u32[]', space=smem, size = 0x4, offset = 0x4, fixed_abs, tag = 'smem constant byte address 0x4 - core index']
  #allocation1 [shape = 'u32[72,128]{1,0:T(1,128)}', space=vmem, size = 0x9000, scoped, tag = 'internal scratch']
  %s0 = inlined_call_operand.vmem [shape: f32[2,256,32], index: 0, kind: input, shape index: {}]
  %s1 = inlined_call_operand.vmem [shape: bf16[14,288,32], index: 1, kind: input, shape index: {}]
  %s2 = inlined_call_operand.vmem [shape: bf16[3,32,32], index: 2, kind: input, shape index: {}]
  %s3 = inlined_call_operand.vmem [shape: f32[17,32], index: 3, kind: input, shape index: {}]
  %s4 = inlined_call_operand.vmem [shape: f32[336,8], index: 4, kind: input, shape index: {}]
  %s5 = inlined_call_operand.vmem [shape: bf16[64,256], index: 5, kind: input, shape index: {}]
  %s6 = inlined_call_operand.vmem [shape: bf16[16,64], index: 6, kind: input, shape index: {}]
  %s7 = inlined_call_operand.hbm [shape: f32[2,16,32], index: 7, kind: output, shape index: {}]
  %s8 = sld [smem:[#allocation0]]
  $region61: #{resnet_v2_forward.1} parent=0
    _
  %s10 = ssub.s32 1, %s8
  %s11 = scalar_select 0, %s10, %s8
  $region1: #{resnet_v2_forward.1} parent=0
    #allocation2 [shape = 'u8[16384]{0}', space=vmem, size = 0x4000, scoped, tag = 'output window, operand 0']
    #allocation3 [shape = 's32[2]{0}', space=sflag, size = 0x8, scoped, tag = 'scoped memory for resnet_v2_forward.1']
    %12 = vsyncpa [#allocation3], 0
    %s13 = scalar_lea.sflag [#allocation3], 1
    %14 = vsyncpa %s13, 0
    loop: start=0, step=1, limit=4
    $region2: #{resnet_v2_forward.1} parent=1 // loop_pre_header
      _
    $region3: #{resnet_v2_forward.1} parent=1 // loop_header
      %s16 = sphi 0, %s20
      %p17 = scmp.ge.s32.totalorder %s16, 4
      %s26 = sphi 0, %s28
      %s29 = sphi 0, %s26
      %s30 = sphi 0, %s29
      %s46 = sphi 0, %s30
      %s50 = sphi 0, %s50
      %s52 = sphi 0, %s50
      %s53 = sphi 0, %s52
      %s67 = sphi 0, %s53
      %s71 = sphi 0, %s71
      %s73 = sphi 0, %s71
      %s74 = sphi 0, %s73
      %s88 = sphi 0, %s74
      %s92 = sphi 0, %s92
      %s94 = sphi 0, %s92
      %s95 = sphi 0, %s94
      %s109 = sphi 0, %s95
      %s113 = sphi 0, %s113
      %s115 = sphi 0, %s113
      %s116 = sphi 0, %s115
      %s130 = sphi 0, %s116
      %s134 = sphi 0, %s134
      %s136 = sphi 0, %s134
      %s137 = sphi 0, %s136
      %s151 = sphi 0, %s137
      %s155 = sphi 0, %s155
      %s157 = sphi 0, %s155
      %s158 = sphi 0, %s157
      %s172 = sphi 0, %s158
      %s178 = sphi 0, %s180
      %s181 = sphi 0, %s178
      %s182 = sphi 0, %s181
      %s198 = sphi 0, %s182
    $region4: #{resnet_v2_forward.1} parent=1 // loop_header_branch
      %19 = sbr.rel (%p17) target = $region8
    $region5: #{resnet_v2_forward.1} parent=1 // loop_body
      %s21 = ssub.s32 %s16, 1
      %s22 = ssub.s32 %s16, 2
      %s23 = sadd.s32 %s16, 1
      %s24 = ssub.s32 %s16, %s23
      %p25 = scmp.eq.s32.totalorder %s24, 0
      %s27 = sadd.s32 %s26, 1
      %s28 = scalar_select %p25, %s26, %s27
      %p31 = pneg %p25
      %p32 = scmp.eq.s32.totalorder %s16, 1
      %p33 = por %p31, %p32
      %p34 = scmp.ne.s32.totalorder %s26, %s29
      %p35 = scmp.eq.s32.totalorder %s16, 0
      %p36 = por %p34, %p35
      %p37 = scmp.ne.s32.totalorder %s26, %s29
      %p38 = scmp.eq.s32.totalorder %s21, 1
      %p39 = por %p37, %p38
      %p40 = scmp.ne.s32.totalorder %s29, %s30
      %p41 = scmp.eq.s32.totalorder %s21, 0
      %p42 = por %p40, %p41
      %p43 = scmp.ne.s32.totalorder %s29, %s30
      %p44 = scmp.eq.s32.totalorder %s22, 1
      %p45 = por %p43, %p44
      %p47 = scmp.ne.s32.totalorder %s30, %s46
      %p48 = scmp.eq.s32.totalorder %s22, 0
      %p49 = por %p47, %p48
      %s51 = sadd.s32 %s50, 1
      %p54 = scmp.eq.s32.totalorder %s16, 1
      %p55 = scmp.ne.s32.totalorder %s50, %s52
      %p56 = scmp.eq.s32.totalorder %s16, 0
      %p57 = por %p55, %p56
      %p58 = scmp.ne.s32.totalorder %s50, %s52
      %p59 = scmp.eq.s32.totalorder %s21, 1
      %p60 = por %p58, %p59
      %p61 = scmp.ne.s32.totalorder %s52, %s53
      %p62 = scmp.eq.s32.totalorder %s21, 0
      %p63 = por %p61, %p62
      %p64 = scmp.ne.s32.totalorder %s52, %s53
      %p65 = scmp.eq.s32.totalorder %s22, 1
      %p66 = por %p64, %p65
      %p68 = scmp.ne.s32.totalorder %s53, %s67
      %p69 = scmp.eq.s32.totalorder %s22, 0
      %p70 = por %p68, %p69
      %s72 = sadd.s32 %s71, 1
      %p75 = scmp.eq.s32.totalorder %s16, 1
      %p76 = scmp.ne.s32.totalorder %s71, %s73
      %p77 = scmp.eq.s32.totalorder %s16, 0
      %p78 = por %p76, %p77
      %p79 = scmp.ne.s32.totalorder %s71, %s73
      %p80 = scmp.eq.s32.totalorder %s21, 1
      %p81 = por %p79, %p80
      %p82 = scmp.ne.s32.totalorder %s73, %s74
      %p83 = scmp.eq.s32.totalorder %s21, 0
      %p84 = por %p82, %p83
      %p85 = scmp.ne.s32.totalorder %s73, %s74
      %p86 = scmp.eq.s32.totalorder %s22, 1
      %p87 = por %p85, %p86
      %p89 = scmp.ne.s32.totalorder %s74, %s88
      %p90 = scmp.eq.s32.totalorder %s22, 0
      %p91 = por %p89, %p90
      %s93 = sadd.s32 %s92, 1
      %p96 = scmp.eq.s32.totalorder %s16, 1
      %p97 = scmp.ne.s32.totalorder %s92, %s94
      %p98 = scmp.eq.s32.totalorder %s16, 0
      %p99 = por %p97, %p98
      %p100 = scmp.ne.s32.totalorder %s92, %s94
      %p101 = scmp.eq.s32.totalorder %s21, 1
      %p102 = por %p100, %p101
      %p103 = scmp.ne.s32.totalorder %s94, %s95
      %p104 = scmp.eq.s32.totalorder %s21, 0
      %p105 = por %p103, %p104
      %p106 = scmp.ne.s32.totalorder %s94, %s95
      %p107 = scmp.eq.s32.totalorder %s22, 1
      %p108 = por %p106, %p107
      %p110 = scmp.ne.s32.totalorder %s95, %s109
      %p111 = scmp.eq.s32.totalorder %s22, 0
      %p112 = por %p110, %p111
      %s114 = sadd.s32 %s113, 1
      %p117 = scmp.eq.s32.totalorder %s16, 1
      %p118 = scmp.ne.s32.totalorder %s113, %s115
      %p119 = scmp.eq.s32.totalorder %s16, 0
      %p120 = por %p118, %p119
      %p121 = scmp.ne.s32.totalorder %s113, %s115
      %p122 = scmp.eq.s32.totalorder %s21, 1
      %p123 = por %p121, %p122
      %p124 = scmp.ne.s32.totalorder %s115, %s116
      %p125 = scmp.eq.s32.totalorder %s21, 0
      %p126 = por %p124, %p125
      %p127 = scmp.ne.s32.totalorder %s115, %s116
      %p128 = scmp.eq.s32.totalorder %s22, 1
      %p129 = por %p127, %p128
      %p131 = scmp.ne.s32.totalorder %s116, %s130
      %p132 = scmp.eq.s32.totalorder %s22, 0
      %p133 = por %p131, %p132
      %s135 = sadd.s32 %s134, 1
      %p138 = scmp.eq.s32.totalorder %s16, 1
      %p139 = scmp.ne.s32.totalorder %s134, %s136
      %p140 = scmp.eq.s32.totalorder %s16, 0
      %p141 = por %p139, %p140
      %p142 = scmp.ne.s32.totalorder %s134, %s136
      %p143 = scmp.eq.s32.totalorder %s21, 1
      %p144 = por %p142, %p143
      %p145 = scmp.ne.s32.totalorder %s136, %s137
      %p146 = scmp.eq.s32.totalorder %s21, 0
      %p147 = por %p145, %p146
      %p148 = scmp.ne.s32.totalorder %s136, %s137
      %p149 = scmp.eq.s32.totalorder %s22, 1
      %p150 = por %p148, %p149
      %p152 = scmp.ne.s32.totalorder %s137, %s151
      %p153 = scmp.eq.s32.totalorder %s22, 0
      %p154 = por %p152, %p153
      %s156 = sadd.s32 %s155, 1
      %p159 = scmp.eq.s32.totalorder %s16, 1
      %p160 = scmp.ne.s32.totalorder %s155, %s157
      %p161 = scmp.eq.s32.totalorder %s16, 0
      %p162 = por %p160, %p161
      %p163 = scmp.ne.s32.totalorder %s155, %s157
      %p164 = scmp.eq.s32.totalorder %s21, 1
      %p165 = por %p163, %p164
      %p166 = scmp.ne.s32.totalorder %s157, %s158
      %p167 = scmp.eq.s32.totalorder %s21, 0
      %p168 = por %p166, %p167
      %p169 = scmp.ne.s32.totalorder %s157, %s158
      %p170 = scmp.eq.s32.totalorder %s22, 1
      %p171 = por %p169, %p170
      %p173 = scmp.ne.s32.totalorder %s158, %s172
      %p174 = scmp.eq.s32.totalorder %s22, 0
      %p175 = por %p173, %p174
      %s176 = ssub.s32 %s16, %s23
      %p177 = scmp.eq.s32.totalorder %s176, 0
      %s179 = sadd.s32 %s178, 1
      %s180 = scalar_select %p177, %s178, %s179
      %p183 = pneg %p177
      %p184 = scmp.eq.s32.totalorder %s16, 1
      %p185 = por %p183, %p184
      %p186 = scmp.ne.s32.totalorder %s178, %s181
      %p187 = scmp.eq.s32.totalorder %s16, 0
      %p188 = por %p186, %p187
      %p189 = scmp.ne.s32.totalorder %s178, %s181
      %p190 = scmp.eq.s32.totalorder %s21, 1
      %p191 = por %p189, %p190
      %p192 = scmp.ne.s32.totalorder %s181, %s182
      %p193 = scmp.eq.s32.totalorder %s21, 0
      %p194 = por %p192, %p193
      %p195 = scmp.ne.s32.totalorder %s181, %s182
      %p196 = scmp.eq.s32.totalorder %s22, 1
      %p197 = por %p195, %p196
      %p199 = scmp.ne.s32.totalorder %s182, %s198
      %p200 = scmp.eq.s32.totalorder %s22, 0
      %p201 = por %p199, %p200
      %p202 = scmp.le.s32.totalorder 1, %s16
      %p203 = scmp.lt.s32.totalorder %s16, 3
      %p204 = pnand %p202, %p203
      %p205 = pneg %p204
      // Predicated region
      $region9: #{resnet_v2_forward.1} parent=5 // pred_check
        _
      $region10: #{resnet_v2_forward.1} parent=5 // pred_check_branch
        %207 = sbr.rel (%p204) target = $region12
      $region11: #{resnet_v2_forward.1} parent=5 // pred_region
        %s208 = ssub.s32 %s16, 1
        // Predicated region
        $region13: #{resnet_v2_forward.1} parent=11 // pred_check
          %p209 = pneg %p63
        $region14: #{resnet_v2_forward.1} parent=11 // pred_check_branch
          %211 = sbr.rel (%p209) target = $region16
        $region15: #{resnet_v2_forward.1} parent=11 // pred_region
          _
        $region16: #{resnet_v2_forward.1} parent=11 // pred_fallthru
          _
        // Predicated region
        $region17: #{resnet_v2_forward.1} parent=11 // pred_check
          %p212 = pneg %p84
        $region18: #{resnet_v2_forward.1} parent=11 // pred_check_branch
          %214 = sbr.rel (%p212) target = $region20
        $region19: #{resnet_v2_forward.1} parent=11 // pred_region
          _
        $region20: #{resnet_v2_forward.1} parent=11 // pred_fallthru
          _
        // Predicated region
        $region21: #{resnet_v2_forward.1} parent=11 // pred_check
          %p215 = pneg %p105
        $region22: #{resnet_v2_forward.1} parent=11 // pred_check_branch
          %217 = sbr.rel (%p215) target = $region24
        $region23: #{resnet_v2_forward.1} parent=11 // pred_region
          _
        $region24: #{resnet_v2_forward.1} parent=11 // pred_fallthru
          _
        // Predicated region
        $region25: #{resnet_v2_forward.1} parent=11 // pred_check
          %p218 = pneg %p126
        $region26: #{resnet_v2_forward.1} parent=11 // pred_check_branch
          %220 = sbr.rel (%p218) target = $region28
        $region27: #{resnet_v2_forward.1} parent=11 // pred_region
          _
        $region28: #{resnet_v2_forward.1} parent=11 // pred_fallthru
          _
        // Predicated region
        $region29: #{resnet_v2_forward.1} parent=11 // pred_check
          %p221 = pneg %p147
        $region30: #{resnet_v2_forward.1} parent=11 // pred_check_branch
          %223 = sbr.rel (%p221) target = $region32
        $region31: #{resnet_v2_forward.1} parent=11 // pred_region
          _
        $region32: #{resnet_v2_forward.1} parent=11 // pred_fallthru
          _
        // Predicated region
        $region33: #{resnet_v2_forward.1} parent=11 // pred_check
          %p224 = pneg %p168
        $region34: #{resnet_v2_forward.1} parent=11 // pred_check_branch
          %226 = sbr.rel (%p224) target = $region36
        $region35: #{resnet_v2_forward.1} parent=11 // pred_region
          _
        $region36: #{resnet_v2_forward.1} parent=11 // pred_fallthru
          _
      $region12: #{resnet_v2_forward.1} parent=5 // pred_fallthru
        _
      %p227 = scmp.lt.s32.totalorder %s16, 2
      // Predicated region
      $region37: #{resnet_v2_forward.1} parent=5 // pred_check
        %p228 = pneg %p227
      $region38: #{resnet_v2_forward.1} parent=5 // pred_check_branch
        %230 = sbr.rel (%p228) target = $region40
      $region39: #{resnet_v2_forward.1} parent=5 // pred_region
        // Predicated region
        $region41: #{resnet_v2_forward.1} parent=39 // pred_check
          %p231 = pneg %p36
        $region42: #{resnet_v2_forward.1} parent=39 // pred_check_branch
          %233 = sbr.rel (%p231) target = $region44
        $region43: #{resnet_v2_forward.1} parent=39 // pred_region
          %p234 = scmp.lt.s32.totalorder %s16, 1
          %s235 = scalar_select %p234, %s16, 1
          %s236 = smul.addr %s235, 32
          %s237 = smul.addr %s236, 8
          %s238 = scalar_lea.vmem %s0, %s237
        $region44: #{resnet_v2_forward.1} parent=39 // pred_fallthru
          _
      $region40: #{resnet_v2_forward.1} parent=5 // pred_fallthru
        _
      %p239 = scmp.le.s32.totalorder 1, %s16
      %p240 = scmp.lt.s32.totalorder %s16, 3
      %p241 = pnand %p239, %p240
      %p242 = pneg %p241
      // Predicated region
      $region45: #{resnet_v2_forward.1} parent=5 // pred_check
        _
      $region46: #{resnet_v2_forward.1} parent=5 // pred_check_branch
        %244 = sbr.rel (%p241) target = $region48
      $region47: #{resnet_v2_forward.1} parent=5 // pred_region
        %s245 = ssub.s32 %s16, 1
        %p246 = scmp.lt.s32.totalorder %s21, 1
        %s247 = scalar_select %p246, %s21, 1
        %s248 = smul.addr %s247, 32
        %s249 = smul.addr %s248, 8
        %s250 = scalar_lea.vmem %s0, %s249
        %p251 = pneg %p42
        %p252 = pneg %p39
        %p253 = pneg %p63
        %p254 = pneg %p60
        %p255 = pneg %p84
        %p256 = pneg %p81
        %p257 = pneg %p105
        %p258 = pneg %p102
        %p259 = pneg %p126
        %p260 = pneg %p123
        %p261 = pneg %p147
        %p262 = pneg %p144
        %p263 = pneg %p168
        %p264 = pneg %p165
        %p265 = pneg %p194
        %p266 = pneg %p191
        %s267 = sand.u32 %s181, 1
        %s268 = scalar_lea.sflag [#allocation3], %s267
        %s269 = sand.u32 %s181, 1
        %s270 = smul.addr %s269, 16
        %s271 = scalar_lea.vmem [#allocation2], %s270
        %p272 = scmp.lt.s32.totalorder %s21, 1
        %s273 = scalar_select %p272, %s21, 1
        %s274 = smul.addr %s273, 32
        %s275 = smul.addr %s274, 8
        %s276 = scalar_lea.vmem %s0, %s275
        %v278 = vld [vmem:[%s276] sm:$0xff]
        %v279 = vld [vmem:[%s276 + $0x8] sm:$0xff]
        %v280 = vld [vmem:[%s276 + $0x10] sm:$0xff]
        %v281 = vld [vmem:[%s276 + $0x18] sm:$0xff]
        %v282 = vld [vmem:[%s276 + $0x20] sm:$0xff]
        %v283 = vld [vmem:[%s276 + $0x28] sm:$0xff]
        %v284 = vld [vmem:[%s276 + $0x30] sm:$0xff]
        %v285 = vld [vmem:[%s276 + $0x38] sm:$0xff]
        %v286 = vld [vmem:[%s276 + $0x40] sm:$0xff]
        %v287 = vld [vmem:[%s276 + $0x48] sm:$0xff]
        %v288 = vld [vmem:[%s276 + $0x50] sm:$0xff]
        %v289 = vld [vmem:[%s276 + $0x58] sm:$0xff]
        %v290 = vld [vmem:[%s276 + $0x60] sm:$0xff]
        %v291 = vld [vmem:[%s276 + $0x68] sm:$0xff]
        %v292 = vld [vmem:[%s276 + $0x70] sm:$0xff]
        %v293 = vld [vmem:[%s276 + $0x78] sm:$0xff]
        %v294 = vld [vmem:[%s276 + $0x80] sm:$0xff]
        %v295 = vld [vmem:[%s276 + $0x88] sm:$0xff]
        %v296 = vld [vmem:[%s276 + $0x90] sm:$0xff]
        %v297 = vld [vmem:[%s276 + $0x98] sm:$0xff]
        %v298 = vld [vmem:[%s276 + $0xa0] sm:$0xff]
        %v299 = vld [vmem:[%s276 + $0xa8] sm:$0xff]
        %v300 = vld [vmem:[%s276 + $0xb0] sm:$0xff]
        %v301 = vld [vmem:[%s276 + $0xb8] sm:$0xff]
        %v302 = vld [vmem:[%s276 + $0xc0] sm:$0xff]
        %v303 = vld [vmem:[%s276 + $0xc8] sm:$0xff]
        %v304 = vld [vmem:[%s276 + $0xd0] sm:$0xff]
        %v305 = vld [vmem:[%s276 + $0xd8] sm:$0xff]
        %v306 = vld [vmem:[%s276 + $0xe0] sm:$0xff]
        %v307 = vld [vmem:[%s276 + $0xe8] sm:$0xff]
        %v308 = vld [vmem:[%s276 + $0xf0] sm:$0xff]
        %v309 = vld [vmem:[%s276 + $0xf8] sm:$0xff]
        %v310 = vld [vmem:[%s1] sm:$0xf]
        %v311 = vld [vmem:[%s1 + $0x4] sm:$0xf]
        %v312 = vld [vmem:[%s1 + $0x8] sm:$0xf]
        %v313 = vld [vmem:[%s1 + $0xc] sm:$0xf]
        %v314 = vld [vmem:[%s1 + $0x10] sm:$0xf]
        %v315 = vld [vmem:[%s1 + $0x14] sm:$0xf]
        %v316 = vld [vmem:[%s1 + $0x18] sm:$0xf]
        %v317 = vld [vmem:[%s1 + $0x1c] sm:$0xf]
        %v318 = vld [vmem:[%s1 + $0x20] sm:$0xf]
        %v319 = vld [vmem:[%s1 + $0x24] sm:$0xf]
        %v320 = vld [vmem:[%s1 + $0x28] sm:$0xf]
        %v321 = vld [vmem:[%s1 + $0x2c] sm:$0xf]
        %v322 = vld [vmem:[%s1 + $0x30] sm:$0xf]
        %v323 = vld [vmem:[%s1 + $0x34] sm:$0xf]
        %v324 = vld [vmem:[%s1 + $0x38] sm:$0xf]
        %v325 = vld [vmem:[%s1 + $0x3c] sm:$0xf]
        %v326 = vld [vmem:[%s1 + $0x40] sm:$0xf]
        %v327 = vld [vmem:[%s1 + $0x44] sm:$0xf]
        %v328 = vld [vmem:[%s1 + $0x48] sm:$0xf]
        %v329 = vld [vmem:[%s1 + $0x4c] sm:$0xf]
        %v330 = vld [vmem:[%s1 + $0x50] sm:$0xf]
        %v331 = vld [vmem:[%s1 + $0x54] sm:$0xf]
        %v332 = vld [vmem:[%s1 + $0x58] sm:$0xf]
        %v333 = vld [vmem:[%s1 + $0x5c] sm:$0xf]
        %v334 = vld [vmem:[%s1 + $0x60] sm:$0xf]
        %v335 = vld [vmem:[%s1 + $0x64] sm:$0xf]
        %v336 = vld [vmem:[%s1 + $0x68] sm:$0xf]
        %v337 = vld [vmem:[%s1 + $0x6c] sm:$0xf]
        %v338 = vld [vmem:[%s1 + $0x70] sm:$0xf]
        %v339 = vld [vmem:[%s1 + $0x74] sm:$0xf]
        %v340 = vld [vmem:[%s1 + $0x78] sm:$0xf]
        %v341 = vld [vmem:[%s1 + $0x7c] sm:$0xf]
        %v342 = vld [vmem:[%s1 + $0x80] sm:$0xf]
        %v343 = vld [vmem:[%s1 + $0x84] sm:$0xf]
        %v344 = vld [vmem:[%s1 + $0x88] sm:$0xf]
        %v345 = vld [vmem:[%s1 + $0x8c] sm:$0xf]
        %v346 = vld [vmem:[%s3] sm:$0x1]
        %v347 = vld [vmem:[%s4] sm:$0xff]
        %v348 = vld [vmem:[%s4 + $0x8] sm:$0xff]
        %v349 = vld [vmem:[%s4 + $0x10] sm:$0xff]
        %v350 = vld [vmem:[%s4 + $0x18] sm:$0xff]
        %v351 = vld [vmem:[%s4 + $0x20] sm:$0xff]
        %v352 = vld [vmem:[%s4 + $0x28] sm:$0xff]
        %v353 = vld [vmem:[%s4 + $0x30] sm:$0xff]
        %v354 = vld [vmem:[%s4 + $0x38] sm:$0xff]
        %v355 = vld [vmem:[%s4 + $0x40] sm:$0xff]
        %v356 = vld [vmem:[%s4 + $0x48] sm:$0xff]
        %v357 = vld [vmem:[%s4 + $0x50] sm:$0xff]
        %v358 = vld [vmem:[%s4 + $0x58] sm:$0xff]
        %v359 = vld [vmem:[%s4 + $0x60] sm:$0xff]
        %v360 = vld [vmem:[%s4 + $0x68] sm:$0xff]
        %v361 = vld [vmem:[%s4 + $0x70] sm:$0xff]
        %v362 = vld [vmem:[%s4 + $0x78] sm:$0xff]
        %v363 = vld [vmem:[%s4 + $0x80] sm:$0xff]
        %v364 = vld [vmem:[%s4 + $0x88] sm:$0xff]
        %v365 = vld [vmem:[%s4 + $0x90] sm:$0xff]
        %v366 = vld [vmem:[%s4 + $0x98] sm:$0xff]
        %v367 = vld [vmem:[%s4 + $0xa0] sm:$0xff]
        %v368 = vld [vmem:[%s4 + $0xa8] sm:$0xff]
        %v369 = vld [vmem:[%s4 + $0xb0] sm:$0xff]
        %v370 = vld [vmem:[%s4 + $0xb8] sm:$0xff]
        %v371 = vld [vmem:[%s4 + $0xc0] sm:$0xff]
        %v372 = vld [vmem:[%s4 + $0xc8] sm:$0xff]
        %v373 = vld [vmem:[%s4 + $0xd0] sm:$0xff]
        %v374 = vld [vmem:[%s4 + $0xd8] sm:$0xff]
        %v375 = vld [vmem:[%s4 + $0xe0] sm:$0xff]
        %v376 = vld [vmem:[%s4 + $0xe8] sm:$0xff]
        %v377 = vld [vmem:[%s4 + $0xf0] sm:$0xff]
        %v378 = vld [vmem:[%s4 + $0xf8] sm:$0xff]
        %v379 = vrot.slane %v278, 7
        %v380 = vrot.slane %v279, 7
        %v381 = vrot.slane %v280, 7
        %v382 = vrot.slane %v281, 7
        %v383 = vrot.slane %v282, 7
        %v384 = vrot.slane %v283, 7
        %v385 = vrot.slane %v284, 7
        %v386 = vrot.slane %v285, 7
        %v387 = vrot.slane %v286, 7
        %v388 = vrot.slane %v287, 7
        %v389 = vrot.slane %v288, 7
        %v390 = vrot.slane %v289, 7
        %v391 = vrot.slane %v290, 7
        %v392 = vrot.slane %v291, 7
        %v393 = vrot.slane %v292, 7
        %v394 = vrot.slane %v293, 7
        %v395 = vrot.slane %v294, 7
        %v396 = vrot.slane %v295, 7
        %v397 = vrot.slane %v296, 7
        %v398 = vrot.slane %v297, 7
        %v399 = vrot.slane %v298, 7
        %v400 = vrot.slane %v299, 7
        %v401 = vrot.slane %v300, 7
        %v402 = vrot.slane %v301, 7
        %v403 = vrot.slane %v302, 7
        %v404 = vrot.slane %v303, 7
        %v405 = vrot.slane %v304, 7
        %v406 = vrot.slane %v305, 7
        %v407 = vrot.slane %v306, 7
        %v408 = vrot.slane %v307, 7
        %v409 = vrot.slane %v308, 7
        %v410 = vrot.slane %v309, 7
        %v411 = vlaneseq
        %v412 = vshrl.u32 %v411, 7
        %vm413 = vcmp.lt.s32.totalorder %v412, 1
        %v414 = vsel %vm413, %v409, %v410
        %v415 = vsel %vm413, %v408, %v409
        %v416 = vsel %vm413, %v407, %v408
        %v417 = vsel %vm413, %v406, %v407
        %v418 = vsel %vm413, %v405, %v406
        %v419 = vsel %vm413, %v404, %v405
        %v420 = vsel %vm413, %v403, %v404
        %v421 = vsel %vm413, %v402, %v403
        %v422 = vsel %vm413, %v401, %v402
        %v423 = vsel %vm413, %v400, %v401
        %v424 = vsel %vm413, %v399, %v400
        %v425 = vsel %vm413, %v398, %v399
        %v426 = vsel %vm413, %v397, %v398
        %v427 = vsel %vm413, %v396, %v397
        %v428 = vsel %vm413, %v395, %v396
        %v429 = vsel %vm413, %v394, %v395
        %v430 = vsel %vm413, %v393, %v394
        %v431 = vsel %vm413, %v392, %v393
        %v432 = vsel %vm413, %v391, %v392
        %v433 = vsel %vm413, %v390, %v391
        %v434 = vsel %vm413, %v389, %v390
        %v435 = vsel %vm413, %v388, %v389
        %v436 = vsel %vm413, %v387, %v388
        %v437 = vsel %vm413, %v386, %v387
        %v438 = vsel %vm413, %v385, %v386
        %v439 = vsel %vm413, %v384, %v385
        %v440 = vsel %vm413, %v383, %v384
        %v441 = vsel %vm413, %v382, %v383
        %v442 = vsel %vm413, %v381, %v382
        %v443 = vsel %vm413, %v380, %v381
        %v444 = vsel %vm413, %v379, %v380
        %v445 = vsel %vm413, %v410, %v379
        %447 = vset.pattern.permute.xlu0 0
        %448 = vperm.xlu0 %447, %v347
        %v449 = vpop.permute.xlu0 %448
        %452 = vset.pattern.permute.xlu0 0
        %453 = vperm.xlu0 %452, %v348
        %v454 = vpop.permute.xlu0 %453
        %457 = vset.pattern.permute.xlu0 0
        %458 = vperm.xlu0 %457, %v349
        %v459 = vpop.permute.xlu0 %458
        %462 = vset.pattern.permute.xlu0 0
        %463 = vperm.xlu0 %462, %v350
        %v464 = vpop.permute.xlu0 %463
        %467 = vset.pattern.permute.xlu0 0
        %468 = vperm.xlu0 %467, %v351
        %v469 = vpop.permute.xlu0 %468
        %472 = vset.pattern.permute.xlu0 0
        %473 = vperm.xlu0 %472, %v352
        %v474 = vpop.permute.xlu0 %473
        %477 = vset.pattern.permute.xlu0 0
        %478 = vperm.xlu0 %477, %v353
        %v479 = vpop.permute.xlu0 %478
        %482 = vset.pattern.permute.xlu0 0
        %483 = vperm.xlu0 %482, %v354
        %v484 = vpop.permute.xlu0 %483
        %487 = vset.pattern.permute.xlu0 0
        %488 = vperm.xlu0 %487, %v355
        %v489 = vpop.permute.xlu0 %488
        %492 = vset.pattern.permute.xlu0 0
        %493 = vperm.xlu0 %492, %v356
        %v494 = vpop.permute.xlu0 %493
        %497 = vset.pattern.permute.xlu0 0
        %498 = vperm.xlu0 %497, %v357
        %v499 = vpop.permute.xlu0 %498
        %502 = vset.pattern.permute.xlu0 0
        %503 = vperm.xlu0 %502, %v358
        %v504 = vpop.permute.xlu0 %503
        %507 = vset.pattern.permute.xlu0 0
        %508 = vperm.xlu0 %507, %v359
        %v509 = vpop.permute.xlu0 %508
        %512 = vset.pattern.permute.xlu0 0
        %513 = vperm.xlu0 %512, %v360
        %v514 = vpop.permute.xlu0 %513
        %517 = vset.pattern.permute.xlu0 0
        %518 = vperm.xlu0 %517, %v361
        %v519 = vpop.permute.xlu0 %518
        %522 = vset.pattern.permute.xlu0 0
        %523 = vperm.xlu0 %522, %v362
        %v524 = vpop.permute.xlu0 %523
        %527 = vset.pattern.permute.xlu0 0
        %528 = vperm.xlu0 %527, %v363
        %v529 = vpop.permute.xlu0 %528
        %532 = vset.pattern.permute.xlu0 0
        %533 = vperm.xlu0 %532, %v364
        %v534 = vpop.permute.xlu0 %533
        %537 = vset.pattern.permute.xlu0 0
        %538 = vperm.xlu0 %537, %v365
        %v539 = vpop.permute.xlu0 %538
        %542 = vset.pattern.permute.xlu0 0
        %543 = vperm.xlu0 %542, %v366
        %v544 = vpop.permute.xlu0 %543
        %547 = vset.pattern.permute.xlu0 0
        %548 = vperm.xlu0 %547, %v367
        %v549 = vpop.permute.xlu0 %548
        %552 = vset.pattern.permute.xlu0 0
        %553 = vperm.xlu0 %552, %v368
        %v554 = vpop.permute.xlu0 %553
        %557 = vset.pattern.permute.xlu0 0
        %558 = vperm.xlu0 %557, %v369
        %v559 = vpop.permute.xlu0 %558
        %562 = vset.pattern.permute.xlu0 0
        %563 = vperm.xlu0 %562, %v370
        %v564 = vpop.permute.xlu0 %563
        %567 = vset.pattern.permute.xlu0 0
        %568 = vperm.xlu0 %567, %v371
        %v569 = vpop.permute.xlu0 %568
        %572 = vset.pattern.permute.xlu0 0
        %573 = vperm.xlu0 %572, %v372
        %v574 = vpop.permute.xlu0 %573
        %577 = vset.pattern.permute.xlu0 0
        %578 = vperm.xlu0 %577, %v373
        %v579 = vpop.permute.xlu0 %578
        %582 = vset.pattern.permute.xlu0 0
        %583 = vperm.xlu0 %582, %v374
        %v584 = vpop.permute.xlu0 %583
        %587 = vset.pattern.permute.xlu0 0
        %588 = vperm.xlu0 %587, %v375
        %v589 = vpop.permute.xlu0 %588
        %592 = vset.pattern.permute.xlu0 0
        %593 = vperm.xlu0 %592, %v376
        %v594 = vpop.permute.xlu0 %593
        %597 = vset.pattern.permute.xlu0 0
        %598 = vperm.xlu0 %597, %v377
        %v599 = vpop.permute.xlu0 %598
        %602 = vset.pattern.permute.xlu0 0
        %603 = vperm.xlu0 %602, %v378
        %v604 = vpop.permute.xlu0 %603
        %v606 = vmul.f32 %v415, %v449
        %v607 = vmul.f32 %v414, %v454
        %v608 = vmul.f32 %v445, %v459
        %v609 = vmul.f32 %v444, %v464
        %v610 = vmul.f32 %v443, %v469
        %v611 = vmul.f32 %v442, %v474
        %v612 = vmul.f32 %v441, %v479
        %v613 = vmul.f32 %v440, %v484
        %v614 = vmul.f32 %v439, %v489
        %v615 = vmul.f32 %v438, %v494
        %v616 = vmul.f32 %v437, %v499
        %v617 = vmul.f32 %v436, %v504
        %v618 = vmul.f32 %v435, %v509
        %v619 = vmul.f32 %v434, %v514
        %v620 = vmul.f32 %v433, %v519
        %v621 = vmul.f32 %v432, %v524
        %v622 = vmul.f32 %v431, %v529
        %v623 = vmul.f32 %v430, %v534
        %v624 = vmul.f32 %v429, %v539
        %v625 = vmul.f32 %v428, %v544
        %v626 = vmul.f32 %v427, %v549
        %v627 = vmul.f32 %v426, %v554
        %v628 = vmul.f32 %v425, %v559
        %v629 = vmul.f32 %v424, %v564
        %v630 = vmul.f32 %v423, %v569
        %v631 = vmul.f32 %v422, %v574
        %v632 = vmul.f32 %v421, %v579
        %v633 = vmul.f32 %v420, %v584
        %v634 = vmul.f32 %v419, %v589
        %v635 = vmul.f32 %v418, %v594
        %v636 = vmul.f32 %v417, %v599
        %v637 = vmul.f32 %v416, %v604
        %v638 = vpack.c.bf16 %v606, %v606
        %v639 = vpack.c.bf16 %v607, %v607
        %v640 = vpack.c.bf16 %v608, %v608
        %v641 = vpack.c.bf16 %v609, %v609
        %v642 = vpack.c.bf16 %v610, %v610
        %v643 = vpack.c.bf16 %v611, %v611
        %v644 = vpack.c.bf16 %v612, %v612
        %v645 = vpack.c.bf16 %v613, %v613
        %v646 = vpack.c.bf16 %v614, %v614
        %v647 = vpack.c.bf16 %v615, %v615
        %v648 = vpack.c.bf16 %v616, %v616
        %v649 = vpack.c.bf16 %v617, %v617
        %v650 = vpack.c.bf16 %v618, %v618
        %v651 = vpack.c.bf16 %v619, %v619
        %v652 = vpack.c.bf16 %v620, %v620
        %v653 = vpack.c.bf16 %v621, %v621
        %v654 = vpack.c.bf16 %v622, %v622
        %v655 = vpack.c.bf16 %v623, %v623
        %v656 = vpack.c.bf16 %v624, %v624
        %v657 = vpack.c.bf16 %v625, %v625
        %v658 = vpack.c.bf16 %v626, %v626
        %v659 = vpack.c.bf16 %v627, %v627
        %v660 = vpack.c.bf16 %v628, %v628
        %v661 = vpack.c.bf16 %v629, %v629
        %v662 = vpack.c.bf16 %v630, %v630
        %v663 = vpack.c.bf16 %v631, %v631
        %v664 = vpack.c.bf16 %v632, %v632
        %v665 = vpack.c.bf16 %v633, %v633
        %v666 = vpack.c.bf16 %v634, %v634
        %v667 = vpack.c.bf16 %v635, %v635
        %v668 = vpack.c.bf16 %v636, %v636
        %v669 = vpack.c.bf16 %v637, %v637
        %670 = vset.pattern.permute.xlu0 1
        %671 = vperm.xlu0 %670, %v347
        %v672 = vpop.permute.xlu0 %671
        %674 = vset.pattern.permute.xlu0 1
        %675 = vperm.xlu0 %674, %v348
        %v676 = vpop.permute.xlu0 %675
        %678 = vset.pattern.permute.xlu0 1
        %679 = vperm.xlu0 %678, %v349
        %v680 = vpop.permute.xlu0 %679
        %682 = vset.pattern.permute.xlu0 1
        %683 = vperm.xlu0 %682, %v350
        %v684 = vpop.permute.xlu0 %683
        %686 = vset.pattern.permute.xlu0 1
        %687 = vperm.xlu0 %686, %v351
        %v688 = vpop.permute.xlu0 %687
        %690 = vset.pattern.permute.xlu0 1
        %691 = vperm.xlu0 %690, %v352
        %v692 = vpop.permute.xlu0 %691
        %694 = vset.pattern.permute.xlu0 1
        %695 = vperm.xlu0 %694, %v353
        %v696 = vpop.permute.xlu0 %695
        %698 = vset.pattern.permute.xlu0 1
        %699 = vperm.xlu0 %698, %v354
        %v700 = vpop.permute.xlu0 %699
        %702 = vset.pattern.permute.xlu0 1
        %703 = vperm.xlu0 %702, %v355
        %v704 = vpop.permute.xlu0 %703
        %706 = vset.pattern.permute.xlu0 1
        %707 = vperm.xlu0 %706, %v356
        %v708 = vpop.permute.xlu0 %707
        %710 = vset.pattern.permute.xlu0 1
        %711 = vperm.xlu0 %710, %v357
        %v712 = vpop.permute.xlu0 %711
        %714 = vset.pattern.permute.xlu0 1
        %715 = vperm.xlu0 %714, %v358
        %v716 = vpop.permute.xlu0 %715
        %718 = vset.pattern.permute.xlu0 1
        %719 = vperm.xlu0 %718, %v359
        %v720 = vpop.permute.xlu0 %719
        %722 = vset.pattern.permute.xlu0 1
        %723 = vperm.xlu0 %722, %v360
        %v724 = vpop.permute.xlu0 %723
        %726 = vset.pattern.permute.xlu0 1
        %727 = vperm.xlu0 %726, %v361
        %v728 = vpop.permute.xlu0 %727
        %730 = vset.pattern.permute.xlu0 1
        %731 = vperm.xlu0 %730, %v362
        %v732 = vpop.permute.xlu0 %731
        %734 = vset.pattern.permute.xlu0 1
        %735 = vperm.xlu0 %734, %v363
        %v736 = vpop.permute.xlu0 %735
        %738 = vset.pattern.permute.xlu0 1
        %739 = vperm.xlu0 %738, %v364
        %v740 = vpop.permute.xlu0 %739
        %742 = vset.pattern.permute.xlu0 1
        %743 = vperm.xlu0 %742, %v365
        %v744 = vpop.permute.xlu0 %743
        %746 = vset.pattern.permute.xlu0 1
        %747 = vperm.xlu0 %746, %v366
        %v748 = vpop.permute.xlu0 %747
        %750 = vset.pattern.permute.xlu0 1
        %751 = vperm.xlu0 %750, %v367
        %v752 = vpop.permute.xlu0 %751
        %754 = vset.pattern.permute.xlu0 1
        %755 = vperm.xlu0 %754, %v368
        %v756 = vpop.permute.xlu0 %755
        %758 = vset.pattern.permute.xlu0 1
        %759 = vperm.xlu0 %758, %v369
        %v760 = vpop.permute.xlu0 %759
        %762 = vset.pattern.permute.xlu0 1
        %763 = vperm.xlu0 %762, %v370
        %v764 = vpop.permute.xlu0 %763
        %766 = vset.pattern.permute.xlu0 1
        %767 = vperm.xlu0 %766, %v371
        %v768 = vpop.permute.xlu0 %767
        %770 = vset.pattern.permute.xlu0 1
        %771 = vperm.xlu0 %770, %v372
        %v772 = vpop.permute.xlu0 %771
        %774 = vset.pattern.permute.xlu0 1
        %775 = vperm.xlu0 %774, %v373
        %v776 = vpop.permute.xlu0 %775
        %778 = vset.pattern.permute.xlu0 1
        %779 = vperm.xlu0 %778, %v374
        %v780 = vpop.permute.xlu0 %779
        %782 = vset.pattern.permute.xlu0 1
        %783 = vperm.xlu0 %782, %v375
        %v784 = vpop.permute.xlu0 %783
        %786 = vset.pattern.permute.xlu0 1
        %787 = vperm.xlu0 %786, %v376
        %v788 = vpop.permute.xlu0 %787
        %790 = vset.pattern.permute.xlu0 1
        %791 = vperm.xlu0 %790, %v377
        %v792 = vpop.permute.xlu0 %791
        %794 = vset.pattern.permute.xlu0 1
        %795 = vperm.xlu0 %794, %v378
        %v796 = vpop.permute.xlu0 %795
        %v798 = vmul.f32 %v308, %v672
        %v799 = vmul.f32 %v309, %v676
        %v800 = vmul.f32 %v278, %v680
        %v801 = vmul.f32 %v279, %v684
        %v802 = vmul.f32 %v280, %v688
        %v803 = vmul.f32 %v281, %v692
        %v804 = vmul.f32 %v282, %v696
        %v805 = vmul.f32 %v283, %v700
        %v806 = vmul.f32 %v284, %v704
        %v807 = vmul.f32 %v285, %v708
        %v808 = vmul.f32 %v286, %v712
        %v809 = vmul.f32 %v287, %v716
        %v810 = vmul.f32 %v288, %v720
        %v811 = vmul.f32 %v289, %v724
        %v812 = vmul.f32 %v290, %v728
        %v813 = vmul.f32 %v291, %v732
        %v814 = vmul.f32 %v292, %v736
        %v815 = vmul.f32 %v293, %v740
        %v816 = vmul.f32 %v294, %v744
        %v817 = vmul.f32 %v295, %v748
        %v818 = vmul.f32 %v296, %v752
        %v819 = vmul.f32 %v297, %v756
        %v820 = vmul.f32 %v298, %v760
        %v821 = vmul.f32 %v299, %v764
        %v822 = vmul.f32 %v300, %v768
        %v823 = vmul.f32 %v301, %v772
        %v824 = vmul.f32 %v302, %v776
        %v825 = vmul.f32 %v303, %v780
        %v826 = vmul.f32 %v304, %v784
        %v827 = vmul.f32 %v305, %v788
        %v828 = vmul.f32 %v306, %v792
        %v829 = vmul.f32 %v307, %v796
        %v830 = vpack.c.bf16 %v798, %v798
        %v831 = vpack.c.bf16 %v799, %v799
        %v832 = vpack.c.bf16 %v800, %v800
        %v833 = vpack.c.bf16 %v801, %v801
        %v834 = vpack.c.bf16 %v802, %v802
        %v835 = vpack.c.bf16 %v803, %v803
        %v836 = vpack.c.bf16 %v804, %v804
        %v837 = vpack.c.bf16 %v805, %v805
        %v838 = vpack.c.bf16 %v806, %v806
        %v839 = vpack.c.bf16 %v807, %v807
        %v840 = vpack.c.bf16 %v808, %v808
        %v841 = vpack.c.bf16 %v809, %v809
        %v842 = vpack.c.bf16 %v810, %v810
        %v843 = vpack.c.bf16 %v811, %v811
        %v844 = vpack.c.bf16 %v812, %v812
        %v845 = vpack.c.bf16 %v813, %v813
        %v846 = vpack.c.bf16 %v814, %v814
        %v847 = vpack.c.bf16 %v815, %v815
        %v848 = vpack.c.bf16 %v816, %v816
        %v849 = vpack.c.bf16 %v817, %v817
        %v850 = vpack.c.bf16 %v818, %v818
        %v851 = vpack.c.bf16 %v819, %v819
        %v852 = vpack.c.bf16 %v820, %v820
        %v853 = vpack.c.bf16 %v821, %v821
        %v854 = vpack.c.bf16 %v822, %v822
        %v855 = vpack.c.bf16 %v823, %v823
        %v856 = vpack.c.bf16 %v824, %v824
        %v857 = vpack.c.bf16 %v825, %v825
        %v858 = vpack.c.bf16 %v826, %v826
        %v859 = vpack.c.bf16 %v827, %v827
        %v860 = vpack.c.bf16 %v828, %v828
        %v861 = vpack.c.bf16 %v829, %v829
        %v862 = vrot.slane %v278, 1
        %v863 = vrot.slane %v279, 1
        %v864 = vrot.slane %v280, 1
        %v865 = vrot.slane %v281, 1
        %v866 = vrot.slane %v282, 1
        %v867 = vrot.slane %v283, 1
        %v868 = vrot.slane %v284, 1
        %v869 = vrot.slane %v285, 1
        %v870 = vrot.slane %v286, 1
        %v871 = vrot.slane %v287, 1
        %v872 = vrot.slane %v288, 1
        %v873 = vrot.slane %v289, 1
        %v874 = vrot.slane %v290, 1
        %v875 = vrot.slane %v291, 1
        %v876 = vrot.slane %v292, 1
        %v877 = vrot.slane %v293, 1
        %v878 = vrot.slane %v294, 1
        %v879 = vrot.slane %v295, 1
        %v880 = vrot.slane %v296, 1
        %v881 = vrot.slane %v297, 1
        %v882 = vrot.slane %v298, 1
        %v883 = vrot.slane %v299, 1
        %v884 = vrot.slane %v300, 1
        %v885 = vrot.slane %v301, 1
        %v886 = vrot.slane %v302, 1
        %v887 = vrot.slane %v303, 1
        %v888 = vrot.slane %v304, 1
        %v889 = vrot.slane %v305, 1
        %v890 = vrot.slane %v306, 1
        %v891 = vrot.slane %v307, 1
        %v892 = vrot.slane %v308, 1
        %v893 = vrot.slane %v309, 1
        %vm894 = vcmp.lt.s32.totalorder %v412, 7
        %v895 = vsel %vm894, %v892, %v893
        %v896 = vsel %vm894, %v891, %v892
        %v897 = vsel %vm894, %v890, %v891
        %v898 = vsel %vm894, %v889, %v890
        %v899 = vsel %vm894, %v888, %v889
        %v900 = vsel %vm894, %v887, %v888
        %v901 = vsel %vm894, %v886, %v887
        %v902 = vsel %vm894, %v885, %v886
        %v903 = vsel %vm894, %v884, %v885
        %v904 = vsel %vm894, %v883, %v884
        %v905 = vsel %vm894, %v882, %v883
        %v906 = vsel %vm894, %v881, %v882
        %v907 = vsel %vm894, %v880, %v881
        %v908 = vsel %vm894, %v879, %v880
        %v909 = vsel %vm894, %v878, %v879
        %v910 = vsel %vm894, %v877, %v878
        %v911 = vsel %vm894, %v876, %v877
        %v912 = vsel %vm894, %v875, %v876
        %v913 = vsel %vm894, %v874, %v875
        %v914 = vsel %vm894, %v873, %v874
        %v915 = vsel %vm894, %v872, %v873
        %v916 = vsel %vm894, %v871, %v872
        %v917 = vsel %vm894, %v870, %v871
        %v918 = vsel %vm894, %v869, %v870
        %v919 = vsel %vm894, %v868, %v869
        %v920 = vsel %vm894, %v867, %v868
        %v921 = vsel %vm894, %v866, %v867
        %v922 = vsel %vm894, %v865, %v866
        %v923 = vsel %vm894, %v864, %v865
        %v924 = vsel %vm894, %v863, %v864
        %v925 = vsel %vm894, %v862, %v863
        %v926 = vsel %vm894, %v893, %v862
        %927 = vset.pattern.permute.xlu0 2
        %928 = vperm.xlu0 %927, %v347
        %v929 = vpop.permute.xlu0 %928
        %931 = vset.pattern.permute.xlu0 2
        %932 = vperm.xlu0 %931, %v348
        %v933 = vpop.permute.xlu0 %932
        %935 = vset.pattern.permute.xlu0 2
        %936 = vperm.xlu0 %935, %v349
        %v937 = vpop.permute.xlu0 %936
        %939 = vset.pattern.permute.xlu0 2
        %940 = vperm.xlu0 %939, %v350
        %v941 = vpop.permute.xlu0 %940
        %943 = vset.pattern.permute.xlu0 2
        %944 = vperm.xlu0 %943, %v351
        %v945 = vpop.permute.xlu0 %944
        %947 = vset.pattern.permute.xlu0 2
        %948 = vperm.xlu0 %947, %v352
        %v949 = vpop.permute.xlu0 %948
        %951 = vset.pattern.permute.xlu0 2
        %952 = vperm.xlu0 %951, %v353
        %v953 = vpop.permute.xlu0 %952
        %955 = vset.pattern.permute.xlu0 2
        %956 = vperm.xlu0 %955, %v354
        %v957 = vpop.permute.xlu0 %956
        %959 = vset.pattern.permute.xlu0 2
        %960 = vperm.xlu0 %959, %v355
        %v961 = vpop.permute.xlu0 %960
        %963 = vset.pattern.permute.xlu0 2
        %964 = vperm.xlu0 %963, %v356
        %v965 = vpop.permute.xlu0 %964
        %967 = vset.pattern.permute.xlu0 2
        %968 = vperm.xlu0 %967, %v357
        %v969 = vpop.permute.xlu0 %968
        %971 = vset.pattern.permute.xlu0 2
        %972 = vperm.xlu0 %971, %v358
        %v973 = vpop.permute.xlu0 %972
        %975 = vset.pattern.permute.xlu0 2
        %976 = vperm.xlu0 %975, %v359
        %v977 = vpop.permute.xlu0 %976
        %979 = vset.pattern.permute.xlu0 2
        %980 = vperm.xlu0 %979, %v360
        %v981 = vpop.permute.xlu0 %980
        %983 = vset.pattern.permute.xlu0 2
        %984 = vperm.xlu0 %983, %v361
        %v985 = vpop.permute.xlu0 %984
        %987 = vset.pattern.permute.xlu0 2
        %988 = vperm.xlu0 %987, %v362
        %v989 = vpop.permute.xlu0 %988
        %991 = vset.pattern.permute.xlu0 2
        %992 = vperm.xlu0 %991, %v363
        %v993 = vpop.permute.xlu0 %992
        %995 = vset.pattern.permute.xlu0 2
        %996 = vperm.xlu0 %995, %v364
        %v997 = vpop.permute.xlu0 %996
        %999 = vset.pattern.permute.xlu0 2
        %1000 = vperm.xlu0 %999, %v365
        %v1001 = vpop.permute.xlu0 %1000
        %1003 = vset.pattern.permute.xlu0 2
        %1004 = vperm.xlu0 %1003, %v366
        %v1005 = vpop.permute.xlu0 %1004
        %1007 = vset.pattern.permute.xlu0 2
        %1008 = vperm.xlu0 %1007, %v367
        %v1009 = vpop.permute.xlu0 %1008
        %1011 = vset.pattern.permute.xlu0 2
        %1012 = vperm.xlu0 %1011, %v368
        %v1013 = vpop.permute.xlu0 %1012
        %1015 = vset.pattern.permute.xlu0 2
        %1016 = vperm.xlu0 %1015, %v369
        %v1017 = vpop.permute.xlu0 %1016
        %1019 = vset.pattern.permute.xlu0 2
        %1020 = vperm.xlu0 %1019, %v370
        %v1021 = vpop.permute.xlu0 %1020
        %1023 = vset.pattern.permute.xlu0 2
        %1024 = vperm.xlu0 %1023, %v371
        %v1025 = vpop.permute.xlu0 %1024
        %1027 = vset.pattern.permute.xlu0 2
        %1028 = vperm.xlu0 %1027, %v372
        %v1029 = vpop.permute.xlu0 %1028
        %1031 = vset.pattern.permute.xlu0 2
        %1032 = vperm.xlu0 %1031, %v373
        %v1033 = vpop.permute.xlu0 %1032
        %1035 = vset.pattern.permute.xlu0 2
        %1036 = vperm.xlu0 %1035, %v374
        %v1037 = vpop.permute.xlu0 %1036
        %1039 = vset.pattern.permute.xlu0 2
        %1040 = vperm.xlu0 %1039, %v375
        %v1041 = vpop.permute.xlu0 %1040
        %1043 = vset.pattern.permute.xlu0 2
        %1044 = vperm.xlu0 %1043, %v376
        %v1045 = vpop.permute.xlu0 %1044
        %1047 = vset.pattern.permute.xlu0 2
        %1048 = vperm.xlu0 %1047, %v377
        %v1049 = vpop.permute.xlu0 %1048
        %1051 = vset.pattern.permute.xlu0 2
        %1052 = vperm.xlu0 %1051, %v378
        %v1053 = vpop.permute.xlu0 %1052
        %v1055 = vmul.f32 %v895, %v929
        %v1056 = vmul.f32 %v926, %v933
        %v1057 = vmul.f32 %v925, %v937
        %v1058 = vmul.f32 %v924, %v941
        %v1059 = vmul.f32 %v923, %v945
        %v1060 = vmul.f32 %v922, %v949
        %v1061 = vmul.f32 %v921, %v953
        %v1062 = vmul.f32 %v920, %v957
        %v1063 = vmul.f32 %v919, %v961
        %v1064 = vmul.f32 %v918, %v965
        %v1065 = vmul.f32 %v917, %v969
        %v1066 = vmul.f32 %v916, %v973
        %v1067 = vmul.f32 %v915, %v977
        %v1068 = vmul.f32 %v914, %v981
        %v1069 = vmul.f32 %v913, %v985
        %v1070 = vmul.f32 %v912, %v989
        %v1071 = vmul.f32 %v911, %v993
        %v1072 = vmul.f32 %v910, %v997
        %v1073 = vmul.f32 %v909, %v1001
        %v1074 = vmul.f32 %v908, %v1005
        %v1075 = vmul.f32 %v907, %v1009
        %v1076 = vmul.f32 %v906, %v1013
        %v1077 = vmul.f32 %v905, %v1017
        %v1078 = vmul.f32 %v904, %v1021
        %v1079 = vmul.f32 %v903, %v1025
        %v1080 = vmul.f32 %v902, %v1029
        %v1081 = vmul.f32 %v901, %v1033
        %v1082 = vmul.f32 %v900, %v1037
        %v1083 = vmul.f32 %v899, %v1041
        %v1084 = vmul.f32 %v898, %v1045
        %v1085 = vmul.f32 %v897, %v1049
        %v1086 = vmul.f32 %v896, %v1053
        %v1087 = vpack.c.bf16 %v1055, %v1055
        %v1088 = vpack.c.bf16 %v1056, %v1056
        %v1089 = vpack.c.bf16 %v1057, %v1057
        %v1090 = vpack.c.bf16 %v1058, %v1058
        %v1091 = vpack.c.bf16 %v1059, %v1059
        %v1092 = vpack.c.bf16 %v1060, %v1060
        %v1093 = vpack.c.bf16 %v1061, %v1061
        %v1094 = vpack.c.bf16 %v1062, %v1062
        %v1095 = vpack.c.bf16 %v1063, %v1063
        %v1096 = vpack.c.bf16 %v1064, %v1064
        %v1097 = vpack.c.bf16 %v1065, %v1065
        %v1098 = vpack.c.bf16 %v1066, %v1066
        %v1099 = vpack.c.bf16 %v1067, %v1067
        %v1100 = vpack.c.bf16 %v1068, %v1068
        %v1101 = vpack.c.bf16 %v1069, %v1069
        %v1102 = vpack.c.bf16 %v1070, %v1070
        %v1103 = vpack.c.bf16 %v1071, %v1071
        %v1104 = vpack.c.bf16 %v1072, %v1072
        %v1105 = vpack.c.bf16 %v1073, %v1073
        %v1106 = vpack.c.bf16 %v1074, %v1074
        %v1107 = vpack.c.bf16 %v1075, %v1075
        %v1108 = vpack.c.bf16 %v1076, %v1076
        %v1109 = vpack.c.bf16 %v1077, %v1077
        %v1110 = vpack.c.bf16 %v1078, %v1078
        %v1111 = vpack.c.bf16 %v1079, %v1079
        %v1112 = vpack.c.bf16 %v1080, %v1080
        %v1113 = vpack.c.bf16 %v1081, %v1081
        %v1114 = vpack.c.bf16 %v1082, %v1082
        %v1115 = vpack.c.bf16 %v1083, %v1083
        %v1116 = vpack.c.bf16 %v1084, %v1084
        %v1117 = vpack.c.bf16 %v1085, %v1085
        %v1118 = vpack.c.bf16 %v1086, %v1086
        %1119 = vset.pattern.permute.xlu0 3
        %1120 = vperm.xlu0 %1119, %v347
        %v1121 = vpop.permute.xlu0 %1120
        %1123 = vset.pattern.permute.xlu0 3
        %1124 = vperm.xlu0 %1123, %v348
        %v1125 = vpop.permute.xlu0 %1124
        %1127 = vset.pattern.permute.xlu0 3
        %1128 = vperm.xlu0 %1127, %v349
        %v1129 = vpop.permute.xlu0 %1128
        %1131 = vset.pattern.permute.xlu0 3
        %1132 = vperm.xlu0 %1131, %v350
        %v1133 = vpop.permute.xlu0 %1132
        %1135 = vset.pattern.permute.xlu0 3
        %1136 = vperm.xlu0 %1135, %v351
        %v1137 = vpop.permute.xlu0 %1136
        %1139 = vset.pattern.permute.xlu0 3
        %1140 = vperm.xlu0 %1139, %v352
        %v1141 = vpop.permute.xlu0 %1140
        %1143 = vset.pattern.permute.xlu0 3
        %1144 = vperm.xlu0 %1143, %v353
        %v1145 = vpop.permute.xlu0 %1144
        %1147 = vset.pattern.permute.xlu0 3
        %1148 = vperm.xlu0 %1147, %v354
        %v1149 = vpop.permute.xlu0 %1148
        %1151 = vset.pattern.permute.xlu0 3
        %1152 = vperm.xlu0 %1151, %v355
        %v1153 = vpop.permute.xlu0 %1152
        %1155 = vset.pattern.permute.xlu0 3
        %1156 = vperm.xlu0 %1155, %v356
        %v1157 = vpop.permute.xlu0 %1156
        %1159 = vset.pattern.permute.xlu0 3
        %1160 = vperm.xlu0 %1159, %v357
        %v1161 = vpop.permute.xlu0 %1160
        %1163 = vset.pattern.permute.xlu0 3
        %1164 = vperm.xlu0 %1163, %v358
        %v1165 = vpop.permute.xlu0 %1164
        %1167 = vset.pattern.permute.xlu0 3
        %1168 = vperm.xlu0 %1167, %v359
        %v1169 = vpop.permute.xlu0 %1168
        %1171 = vset.pattern.permute.xlu0 3
        %1172 = vperm.xlu0 %1171, %v360
        %v1173 = vpop.permute.xlu0 %1172
        %1175 = vset.pattern.permute.xlu0 3
        %1176 = vperm.xlu0 %1175, %v361
        %v1177 = vpop.permute.xlu0 %1176
        %1179 = vset.pattern.permute.xlu0 3
        %1180 = vperm.xlu0 %1179, %v362
        %v1181 = vpop.permute.xlu0 %1180
        %1183 = vset.pattern.permute.xlu0 3
        %1184 = vperm.xlu0 %1183, %v363
        %v1185 = vpop.permute.xlu0 %1184
        %1187 = vset.pattern.permute.xlu0 3
        %1188 = vperm.xlu0 %1187, %v364
        %v1189 = vpop.permute.xlu0 %1188
        %1191 = vset.pattern.permute.xlu0 3
        %1192 = vperm.xlu0 %1191, %v365
        %v1193 = vpop.permute.xlu0 %1192
        %1195 = vset.pattern.permute.xlu0 3
        %1196 = vperm.xlu0 %1195, %v366
        %v1197 = vpop.permute.xlu0 %1196
        %1199 = vset.pattern.permute.xlu0 3
        %1200 = vperm.xlu0 %1199, %v367
        %v1201 = vpop.permute.xlu0 %1200
        %1203 = vset.pattern.permute.xlu0 3
        %1204 = vperm.xlu0 %1203, %v368
        %v1205 = vpop.permute.xlu0 %1204
        %1207 = vset.pattern.permute.xlu0 3
        %1208 = vperm.xlu0 %1207, %v369
        %v1209 = vpop.permute.xlu0 %1208
        %1211 = vset.pattern.permute.xlu0 3
        %1212 = vperm.xlu0 %1211, %v370
        %v1213 = vpop.permute.xlu0 %1212
        %1215 = vset.pattern.permute.xlu0 3
        %1216 = vperm.xlu0 %1215, %v371
        %v1217 = vpop.permute.xlu0 %1216
        %1219 = vset.pattern.permute.xlu0 3
        %1220 = vperm.xlu0 %1219, %v372
        %v1221 = vpop.permute.xlu0 %1220
        %1223 = vset.pattern.permute.xlu0 3
        %1224 = vperm.xlu0 %1223, %v373
        %v1225 = vpop.permute.xlu0 %1224
        %1227 = vset.pattern.permute.xlu0 3
        %1228 = vperm.xlu0 %1227, %v374
        %v1229 = vpop.permute.xlu0 %1228
        %1231 = vset.pattern.permute.xlu0 3
        %1232 = vperm.xlu0 %1231, %v375
        %v1233 = vpop.permute.xlu0 %1232
        %1235 = vset.pattern.permute.xlu0 3
        %1236 = vperm.xlu0 %1235, %v376
        %v1237 = vpop.permute.xlu0 %1236
        %1239 = vset.pattern.permute.xlu0 3
        %1240 = vperm.xlu0 %1239, %v377
        %v1241 = vpop.permute.xlu0 %1240
        %1243 = vset.pattern.permute.xlu0 3
        %1244 = vperm.xlu0 %1243, %v378
        %v1245 = vpop.permute.xlu0 %1244
        %v1247 = vmul.f32 %v445, %v1121
        %v1248 = vmul.f32 %v444, %v1125
        %v1249 = vmul.f32 %v443, %v1129
        %v1250 = vmul.f32 %v442, %v1133
        %v1251 = vmul.f32 %v441, %v1137
        %v1252 = vmul.f32 %v440, %v1141
        %v1253 = vmul.f32 %v439, %v1145
        %v1254 = vmul.f32 %v438, %v1149
        %v1255 = vmul.f32 %v437, %v1153
        %v1256 = vmul.f32 %v436, %v1157
        %v1257 = vmul.f32 %v435, %v1161
        %v1258 = vmul.f32 %v434, %v1165
        %v1259 = vmul.f32 %v433, %v1169
        %v1260 = vmul.f32 %v432, %v1173
        %v1261 = vmul.f32 %v431, %v1177
        %v1262 = vmul.f32 %v430, %v1181
        %v1263 = vmul.f32 %v429, %v1185
        %v1264 = vmul.f32 %v428, %v1189
        %v1265 = vmul.f32 %v427, %v1193
        %v1266 = vmul.f32 %v426, %v1197
        %v1267 = vmul.f32 %v425, %v1201
        %v1268 = vmul.f32 %v424, %v1205
        %v1269 = vmul.f32 %v423, %v1209
        %v1270 = vmul.f32 %v422, %v1213
        %v1271 = vmul.f32 %v421, %v1217
        %v1272 = vmul.f32 %v420, %v1221
        %v1273 = vmul.f32 %v419, %v1225
        %v1274 = vmul.f32 %v418, %v1229
        %v1275 = vmul.f32 %v417, %v1233
        %v1276 = vmul.f32 %v416, %v1237
        %v1277 = vmul.f32 %v415, %v1241
        %v1278 = vmul.f32 %v414, %v1245
        %v1279 = vpack.c.bf16 %v1247, %v1247
        %v1280 = vpack.c.bf16 %v1248, %v1248
        %v1281 = vpack.c.bf16 %v1249, %v1249
        %v1282 = vpack.c.bf16 %v1250, %v1250
        %v1283 = vpack.c.bf16 %v1251, %v1251
        %v1284 = vpack.c.bf16 %v1252, %v1252
        %v1285 = vpack.c.bf16 %v1253, %v1253
        %v1286 = vpack.c.bf16 %v1254, %v1254
        %v1287 = vpack.c.bf16 %v1255, %v1255
        %v1288 = vpack.c.bf16 %v1256, %v1256
        %v1289 = vpack.c.bf16 %v1257, %v1257
        %v1290 = vpack.c.bf16 %v1258, %v1258
        %v1291 = vpack.c.bf16 %v1259, %v1259
        %v1292 = vpack.c.bf16 %v1260, %v1260
        %v1293 = vpack.c.bf16 %v1261, %v1261
        %v1294 = vpack.c.bf16 %v1262, %v1262
        %v1295 = vpack.c.bf16 %v1263, %v1263
        %v1296 = vpack.c.bf16 %v1264, %v1264
        %v1297 = vpack.c.bf16 %v1265, %v1265
        %v1298 = vpack.c.bf16 %v1266, %v1266
        %v1299 = vpack.c.bf16 %v1267, %v1267
        %v1300 = vpack.c.bf16 %v1268, %v1268
        %v1301 = vpack.c.bf16 %v1269, %v1269
        %v1302 = vpack.c.bf16 %v1270, %v1270
        %v1303 = vpack.c.bf16 %v1271, %v1271
        %v1304 = vpack.c.bf16 %v1272, %v1272
        %v1305 = vpack.c.bf16 %v1273, %v1273
        %v1306 = vpack.c.bf16 %v1274, %v1274
        %v1307 = vpack.c.bf16 %v1275, %v1275
        %v1308 = vpack.c.bf16 %v1276, %v1276
        %v1309 = vpack.c.bf16 %v1277, %v1277
        %v1310 = vpack.c.bf16 %v1278, %v1278
        %v1311 = vpack.c.bf16 %v278, %v278
        %v1312 = vpack.c.bf16 %v279, %v279
        %v1313 = vpack.c.bf16 %v280, %v280
        %v1314 = vpack.c.bf16 %v281, %v281
        %v1315 = vpack.c.bf16 %v282, %v282
        %v1316 = vpack.c.bf16 %v283, %v283
        %v1317 = vpack.c.bf16 %v284, %v284
        %v1318 = vpack.c.bf16 %v285, %v285
        %v1319 = vpack.c.bf16 %v286, %v286
        %v1320 = vpack.c.bf16 %v287, %v287
        %v1321 = vpack.c.bf16 %v288, %v288
        %v1322 = vpack.c.bf16 %v289, %v289
        %v1323 = vpack.c.bf16 %v290, %v290
        %v1324 = vpack.c.bf16 %v291, %v291
        %v1325 = vpack.c.bf16 %v292, %v292
        %v1326 = vpack.c.bf16 %v293, %v293
        %v1327 = vpack.c.bf16 %v294, %v294
        %v1328 = vpack.c.bf16 %v295, %v295
        %v1329 = vpack.c.bf16 %v296, %v296
        %v1330 = vpack.c.bf16 %v297, %v297
        %v1331 = vpack.c.bf16 %v298, %v298
        %v1332 = vpack.c.bf16 %v299, %v299
        %v1333 = vpack.c.bf16 %v300, %v300
        %v1334 = vpack.c.bf16 %v301, %v301
        %v1335 = vpack.c.bf16 %v302, %v302
        %v1336 = vpack.c.bf16 %v303, %v303
        %v1337 = vpack.c.bf16 %v304, %v304
        %v1338 = vpack.c.bf16 %v305, %v305
        %v1339 = vpack.c.bf16 %v306, %v306
        %v1340 = vpack.c.bf16 %v307, %v307
        %v1341 = vpack.c.bf16 %v308, %v308
        %v1342 = vpack.c.bf16 %v309, %v309
        %1343 = vset.pattern.permute.xlu0 4
        %1344 = vperm.xlu0 %1343, %v347
        %v1345 = vpop.permute.xlu0 %1344
        %1347 = vset.pattern.permute.xlu0 4
        %1348 = vperm.xlu0 %1347, %v348
        %v1349 = vpop.permute.xlu0 %1348
        %1351 = vset.pattern.permute.xlu0 4
        %1352 = vperm.xlu0 %1351, %v349
        %v1353 = vpop.permute.xlu0 %1352
        %1355 = vset.pattern.permute.xlu0 4
        %1356 = vperm.xlu0 %1355, %v350
        %v1357 = vpop.permute.xlu0 %1356
        %1359 = vset.pattern.permute.xlu0 4
        %1360 = vperm.xlu0 %1359, %v351
        %v1361 = vpop.permute.xlu0 %1360
        %1363 = vset.pattern.permute.xlu0 4
        %1364 = vperm.xlu0 %1363, %v352
        %v1365 = vpop.permute.xlu0 %1364
        %1367 = vset.pattern.permute.xlu0 4
        %1368 = vperm.xlu0 %1367, %v353
        %v1369 = vpop.permute.xlu0 %1368
        %1371 = vset.pattern.permute.xlu0 4
        %1372 = vperm.xlu0 %1371, %v354
        %v1373 = vpop.permute.xlu0 %1372
        %1375 = vset.pattern.permute.xlu0 4
        %1376 = vperm.xlu0 %1375, %v355
        %v1377 = vpop.permute.xlu0 %1376
        %1379 = vset.pattern.permute.xlu0 4
        %1380 = vperm.xlu0 %1379, %v356
        %v1381 = vpop.permute.xlu0 %1380
        %1383 = vset.pattern.permute.xlu0 4
        %1384 = vperm.xlu0 %1383, %v357
        %v1385 = vpop.permute.xlu0 %1384
        %1387 = vset.pattern.permute.xlu0 4
        %1388 = vperm.xlu0 %1387, %v358
        %v1389 = vpop.permute.xlu0 %1388
        %1391 = vset.pattern.permute.xlu0 4
        %1392 = vperm.xlu0 %1391, %v359
        %v1393 = vpop.permute.xlu0 %1392
        %1395 = vset.pattern.permute.xlu0 4
        %1396 = vperm.xlu0 %1395, %v360
        %v1397 = vpop.permute.xlu0 %1396
        %1399 = vset.pattern.permute.xlu0 4
        %1400 = vperm.xlu0 %1399, %v361
        %v1401 = vpop.permute.xlu0 %1400
        %1403 = vset.pattern.permute.xlu0 4
        %1404 = vperm.xlu0 %1403, %v362
        %v1405 = vpop.permute.xlu0 %1404
        %1407 = vset.pattern.permute.xlu0 4
        %1408 = vperm.xlu0 %1407, %v363
        %v1409 = vpop.permute.xlu0 %1408
        %1411 = vset.pattern.permute.xlu0 4
        %1412 = vperm.xlu0 %1411, %v364
        %v1413 = vpop.permute.xlu0 %1412
        %1415 = vset.pattern.permute.xlu0 4
        %1416 = vperm.xlu0 %1415, %v365
        %v1417 = vpop.permute.xlu0 %1416
        %1419 = vset.pattern.permute.xlu0 4
        %1420 = vperm.xlu0 %1419, %v366
        %v1421 = vpop.permute.xlu0 %1420
        %1423 = vset.pattern.permute.xlu0 4
        %1424 = vperm.xlu0 %1423, %v367
        %v1425 = vpop.permute.xlu0 %1424
        %1427 = vset.pattern.permute.xlu0 4
        %1428 = vperm.xlu0 %1427, %v368
        %v1429 = vpop.permute.xlu0 %1428
        %1431 = vset.pattern.permute.xlu0 4
        %1432 = vperm.xlu0 %1431, %v369
        %v1433 = vpop.permute.xlu0 %1432
        %1435 = vset.pattern.permute.xlu0 4
        %1436 = vperm.xlu0 %1435, %v370
        %v1437 = vpop.permute.xlu0 %1436
        %1439 = vset.pattern.permute.xlu0 4
        %1440 = vperm.xlu0 %1439, %v371
        %v1441 = vpop.permute.xlu0 %1440
        %1443 = vset.pattern.permute.xlu0 4
        %1444 = vperm.xlu0 %1443, %v372
        %v1445 = vpop.permute.xlu0 %1444
        %1447 = vset.pattern.permute.xlu0 4
        %1448 = vperm.xlu0 %1447, %v373
        %v1449 = vpop.permute.xlu0 %1448
        %1451 = vset.pattern.permute.xlu0 4
        %1452 = vperm.xlu0 %1451, %v374
        %v1453 = vpop.permute.xlu0 %1452
        %1455 = vset.pattern.permute.xlu0 4
        %1456 = vperm.xlu0 %1455, %v375
        %v1457 = vpop.permute.xlu0 %1456
        %1459 = vset.pattern.permute.xlu0 4
        %1460 = vperm.xlu0 %1459, %v376
        %v1461 = vpop.permute.xlu0 %1460
        %1463 = vset.pattern.permute.xlu0 4
        %1464 = vperm.xlu0 %1463, %v377
        %v1465 = vpop.permute.xlu0 %1464
        %1467 = vset.pattern.permute.xlu0 4
        %1468 = vperm.xlu0 %1467, %v378
        %v1469 = vpop.permute.xlu0 %1468
        %v1471 = vmul.f32 %v925, %v1345
        %v1472 = vmul.f32 %v924, %v1349
        %v1473 = vmul.f32 %v923, %v1353
        %v1474 = vmul.f32 %v922, %v1357
        %v1475 = vmul.f32 %v921, %v1361
        %v1476 = vmul.f32 %v920, %v1365
        %v1477 = vmul.f32 %v919, %v1369
        %v1478 = vmul.f32 %v918, %v1373
        %v1479 = vmul.f32 %v917, %v1377
        %v1480 = vmul.f32 %v916, %v1381
        %v1481 = vmul.f32 %v915, %v1385
        %v1482 = vmul.f32 %v914, %v1389
        %v1483 = vmul.f32 %v913, %v1393
        %v1484 = vmul.f32 %v912, %v1397
        %v1485 = vmul.f32 %v911, %v1401
        %v1486 = vmul.f32 %v910, %v1405
        %v1487 = vmul.f32 %v909, %v1409
        %v1488 = vmul.f32 %v908, %v1413
        %v1489 = vmul.f32 %v907, %v1417
        %v1490 = vmul.f32 %v906, %v1421
        %v1491 = vmul.f32 %v905, %v1425
        %v1492 = vmul.f32 %v904, %v1429
        %v1493 = vmul.f32 %v903, %v1433
        %v1494 = vmul.f32 %v902, %v1437
        %v1495 = vmul.f32 %v901, %v1441
        %v1496 = vmul.f32 %v900, %v1445
        %v1497 = vmul.f32 %v899, %v1449
        %v1498 = vmul.f32 %v898, %v1453
        %v1499 = vmul.f32 %v897, %v1457
        %v1500 = vmul.f32 %v896, %v1461
        %v1501 = vmul.f32 %v895, %v1465
        %v1502 = vmul.f32 %v926, %v1469
        %v1503 = vpack.c.bf16 %v1471, %v1471
        %v1504 = vpack.c.bf16 %v1472, %v1472
        %v1505 = vpack.c.bf16 %v1473, %v1473
        %v1506 = vpack.c.bf16 %v1474, %v1474
        %v1507 = vpack.c.bf16 %v1475, %v1475
        %v1508 = vpack.c.bf16 %v1476, %v1476
        %v1509 = vpack.c.bf16 %v1477, %v1477
        %v1510 = vpack.c.bf16 %v1478, %v1478
        %v1511 = vpack.c.bf16 %v1479, %v1479
        %v1512 = vpack.c.bf16 %v1480, %v1480
        %v1513 = vpack.c.bf16 %v1481, %v1481
        %v1514 = vpack.c.bf16 %v1482, %v1482
        %v1515 = vpack.c.bf16 %v1483, %v1483
        %v1516 = vpack.c.bf16 %v1484, %v1484
        %v1517 = vpack.c.bf16 %v1485, %v1485
        %v1518 = vpack.c.bf16 %v1486, %v1486
        %v1519 = vpack.c.bf16 %v1487, %v1487
        %v1520 = vpack.c.bf16 %v1488, %v1488
        %v1521 = vpack.c.bf16 %v1489, %v1489
        %v1522 = vpack.c.bf16 %v1490, %v1490
        %v1523 = vpack.c.bf16 %v1491, %v1491
        %v1524 = vpack.c.bf16 %v1492, %v1492
        %v1525 = vpack.c.bf16 %v1493, %v1493
        %v1526 = vpack.c.bf16 %v1494, %v1494
        %v1527 = vpack.c.bf16 %v1495, %v1495
        %v1528 = vpack.c.bf16 %v1496, %v1496
        %v1529 = vpack.c.bf16 %v1497, %v1497
        %v1530 = vpack.c.bf16 %v1498, %v1498
        %v1531 = vpack.c.bf16 %v1499, %v1499
        %v1532 = vpack.c.bf16 %v1500, %v1500
        %v1533 = vpack.c.bf16 %v1501, %v1501
        %v1534 = vpack.c.bf16 %v1502, %v1502
        %1535 = vset.pattern.permute.xlu0 5
        %1536 = vperm.xlu0 %1535, %v347
        %v1537 = vpop.permute.xlu0 %1536
        %1539 = vset.pattern.permute.xlu0 5
        %1540 = vperm.xlu0 %1539, %v348
        %v1541 = vpop.permute.xlu0 %1540
        %1543 = vset.pattern.permute.xlu0 5
        %1544 = vperm.xlu0 %1543, %v349
        %v1545 = vpop.permute.xlu0 %1544
        %1547 = vset.pattern.permute.xlu0 5
        %1548 = vperm.xlu0 %1547, %v350
        %v1549 = vpop.permute.xlu0 %1548
        %1551 = vset.pattern.permute.xlu0 5
        %1552 = vperm.xlu0 %1551, %v351
        %v1553 = vpop.permute.xlu0 %1552
        %1555 = vset.pattern.permute.xlu0 5
        %1556 = vperm.xlu0 %1555, %v352
        %v1557 = vpop.permute.xlu0 %1556
        %1559 = vset.pattern.permute.xlu0 5
        %1560 = vperm.xlu0 %1559, %v353
        %v1561 = vpop.permute.xlu0 %1560
        %1563 = vset.pattern.permute.xlu0 5
        %1564 = vperm.xlu0 %1563, %v354
        %v1565 = vpop.permute.xlu0 %1564
        %1567 = vset.pattern.permute.xlu0 5
        %1568 = vperm.xlu0 %1567, %v355
        %v1569 = vpop.permute.xlu0 %1568
        %1571 = vset.pattern.permute.xlu0 5
        %1572 = vperm.xlu0 %1571, %v356
        %v1573 = vpop.permute.xlu0 %1572
        %1575 = vset.pattern.permute.xlu0 5
        %1576 = vperm.xlu0 %1575, %v357
        %v1577 = vpop.permute.xlu0 %1576
        %1579 = vset.pattern.permute.xlu0 5
        %1580 = vperm.xlu0 %1579, %v358
        %v1581 = vpop.permute.xlu0 %1580
        %1583 = vset.pattern.permute.xlu0 5
        %1584 = vperm.xlu0 %1583, %v359
        %v1585 = vpop.permute.xlu0 %1584
        %1587 = vset.pattern.permute.xlu0 5
        %1588 = vperm.xlu0 %1587, %v360
        %v1589 = vpop.permute.xlu0 %1588
        %1591 = vset.pattern.permute.xlu0 5
        %1592 = vperm.xlu0 %1591, %v361
        %v1593 = vpop.permute.xlu0 %1592
        %1595 = vset.pattern.permute.xlu0 5
        %1596 = vperm.xlu0 %1595, %v362
        %v1597 = vpop.permute.xlu0 %1596
        %1599 = vset.pattern.permute.xlu0 5
        %1600 = vperm.xlu0 %1599, %v363
        %v1601 = vpop.permute.xlu0 %1600
        %1603 = vset.pattern.permute.xlu0 5
        %1604 = vperm.xlu0 %1603, %v364
        %v1605 = vpop.permute.xlu0 %1604
        %1607 = vset.pattern.permute.xlu0 5
        %1608 = vperm.xlu0 %1607, %v365
        %v1609 = vpop.permute.xlu0 %1608
        %1611 = vset.pattern.permute.xlu0 5
        %1612 = vperm.xlu0 %1611, %v366
        %v1613 = vpop.permute.xlu0 %1612
        %1615 = vset.pattern.permute.xlu0 5
        %1616 = vperm.xlu0 %1615, %v367
        %v1617 = vpop.permute.xlu0 %1616
        %1619 = vset.pattern.permute.xlu0 5
        %1620 = vperm.xlu0 %1619, %v368
        %v1621 = vpop.permute.xlu0 %1620
        %1623 = vset.pattern.permute.xlu0 5
        %1624 = vperm.xlu0 %1623, %v369
        %v1625 = vpop.permute.xlu0 %1624
        %1627 = vset.pattern.permute.xlu0 5
        %1628 = vperm.xlu0 %1627, %v370
        %v1629 = vpop.permute.xlu0 %1628
        %1631 = vset.pattern.permute.xlu0 5
        %1632 = vperm.xlu0 %1631, %v371
        %v1633 = vpop.permute.xlu0 %1632
        %1635 = vset.pattern.permute.xlu0 5
        %1636 = vperm.xlu0 %1635, %v372
        %v1637 = vpop.permute.xlu0 %1636
        %1639 = vset.pattern.permute.xlu0 5
        %1640 = vperm.xlu0 %1639, %v373
        %v1641 = vpop.permute.xlu0 %1640
        %1643 = vset.pattern.permute.xlu0 5
        %1644 = vperm.xlu0 %1643, %v374
        %v1645 = vpop.permute.xlu0 %1644
        %1647 = vset.pattern.permute.xlu0 5
        %1648 = vperm.xlu0 %1647, %v375
        %v1649 = vpop.permute.xlu0 %1648
        %1651 = vset.pattern.permute.xlu0 5
        %1652 = vperm.xlu0 %1651, %v376
        %v1653 = vpop.permute.xlu0 %1652
        %1655 = vset.pattern.permute.xlu0 5
        %1656 = vperm.xlu0 %1655, %v377
        %v1657 = vpop.permute.xlu0 %1656
        %1659 = vset.pattern.permute.xlu0 5
        %1660 = vperm.xlu0 %1659, %v378
        %v1661 = vpop.permute.xlu0 %1660
        %v1663 = vmul.f32 %v443, %v1537
        %v1664 = vmul.f32 %v442, %v1541
        %v1665 = vmul.f32 %v441, %v1545
        %v1666 = vmul.f32 %v440, %v1549
        %v1667 = vmul.f32 %v439, %v1553
        %v1668 = vmul.f32 %v438, %v1557
        %v1669 = vmul.f32 %v437, %v1561
        %v1670 = vmul.f32 %v436, %v1565
        %v1671 = vmul.f32 %v435, %v1569
        %v1672 = vmul.f32 %v434, %v1573
        %v1673 = vmul.f32 %v433, %v1577
        %v1674 = vmul.f32 %v432, %v1581
        %v1675 = vmul.f32 %v431, %v1585
        %v1676 = vmul.f32 %v430, %v1589
        %v1677 = vmul.f32 %v429, %v1593
        %v1678 = vmul.f32 %v428, %v1597
        %v1679 = vmul.f32 %v427, %v1601
        %v1680 = vmul.f32 %v426, %v1605
        %v1681 = vmul.f32 %v425, %v1609
        %v1682 = vmul.f32 %v424, %v1613
        %v1683 = vmul.f32 %v423, %v1617
        %v1684 = vmul.f32 %v422, %v1621
        %v1685 = vmul.f32 %v421, %v1625
        %v1686 = vmul.f32 %v420, %v1629
        %v1687 = vmul.f32 %v419, %v1633
        %v1688 = vmul.f32 %v418, %v1637
        %v1689 = vmul.f32 %v417, %v1641
        %v1690 = vmul.f32 %v416, %v1645
        %v1691 = vmul.f32 %v415, %v1649
        %v1692 = vmul.f32 %v414, %v1653
        %v1693 = vmul.f32 %v445, %v1657
        %v1694 = vmul.f32 %v444, %v1661
        %v1695 = vpack.c.bf16 %v1663, %v1663
        %v1696 = vpack.c.bf16 %v1664, %v1664
        %v1697 = vpack.c.bf16 %v1665, %v1665
        %v1698 = vpack.c.bf16 %v1666, %v1666
        %v1699 = vpack.c.bf16 %v1667, %v1667
        %v1700 = vpack.c.bf16 %v1668, %v1668
        %v1701 = vpack.c.bf16 %v1669, %v1669
        %v1702 = vpack.c.bf16 %v1670, %v1670
        %v1703 = vpack.c.bf16 %v1671, %v1671
        %v1704 = vpack.c.bf16 %v1672, %v1672
        %v1705 = vpack.c.bf16 %v1673, %v1673
        %v1706 = vpack.c.bf16 %v1674, %v1674
        %v1707 = vpack.c.bf16 %v1675, %v1675
        %v1708 = vpack.c.bf16 %v1676, %v1676
        %v1709 = vpack.c.bf16 %v1677, %v1677
        %v1710 = vpack.c.bf16 %v1678, %v1678
        %v1711 = vpack.c.bf16 %v1679, %v1679
        %v1712 = vpack.c.bf16 %v1680, %v1680
        %v1713 = vpack.c.bf16 %v1681, %v1681
        %v1714 = vpack.c.bf16 %v1682, %v1682
        %v1715 = vpack.c.bf16 %v1683, %v1683
        %v1716 = vpack.c.bf16 %v1684, %v1684
        %v1717 = vpack.c.bf16 %v1685, %v1685
        %v1718 = vpack.c.bf16 %v1686, %v1686
        %v1719 = vpack.c.bf16 %v1687, %v1687
        %v1720 = vpack.c.bf16 %v1688, %v1688
        %v1721 = vpack.c.bf16 %v1689, %v1689
        %v1722 = vpack.c.bf16 %v1690, %v1690
        %v1723 = vpack.c.bf16 %v1691, %v1691
        %v1724 = vpack.c.bf16 %v1692, %v1692
        %v1725 = vpack.c.bf16 %v1693, %v1693
        %v1726 = vpack.c.bf16 %v1694, %v1694
        %1727 = vset.pattern.permute.xlu0 6
        %1728 = vperm.xlu0 %1727, %v347
        %v1729 = vpop.permute.xlu0 %1728
        %1731 = vset.pattern.permute.xlu0 6
        %1732 = vperm.xlu0 %1731, %v348
        %v1733 = vpop.permute.xlu0 %1732
        %1735 = vset.pattern.permute.xlu0 6
        %1736 = vperm.xlu0 %1735, %v349
        %v1737 = vpop.permute.xlu0 %1736
        %1739 = vset.pattern.permute.xlu0 6
        %1740 = vperm.xlu0 %1739, %v350
        %v1741 = vpop.permute.xlu0 %1740
        %1743 = vset.pattern.permute.xlu0 6
        %1744 = vperm.xlu0 %1743, %v351
        %v1745 = vpop.permute.xlu0 %1744
        %1747 = vset.pattern.permute.xlu0 6
        %1748 = vperm.xlu0 %1747, %v352
        %v1749 = vpop.permute.xlu0 %1748
        %1751 = vset.pattern.permute.xlu0 6
        %1752 = vperm.xlu0 %1751, %v353
        %v1753 = vpop.permute.xlu0 %1752
        %1755 = vset.pattern.permute.xlu0 6
        %1756 = vperm.xlu0 %1755, %v354
        %v1757 = vpop.permute.xlu0 %1756
        %1759 = vset.pattern.permute.xlu0 6
        %1760 = vperm.xlu0 %1759, %v355
        %v1761 = vpop.permute.xlu0 %1760
        %1763 = vset.pattern.permute.xlu0 6
        %1764 = vperm.xlu0 %1763, %v356
        %v1765 = vpop.permute.xlu0 %1764
        %1767 = vset.pattern.permute.xlu0 6
        %1768 = vperm.xlu0 %1767, %v357
        %v1769 = vpop.permute.xlu0 %1768
        %1771 = vset.pattern.permute.xlu0 6
        %1772 = vperm.xlu0 %1771, %v358
        %v1773 = vpop.permute.xlu0 %1772
        %1775 = vset.pattern.permute.xlu0 6
        %1776 = vperm.xlu0 %1775, %v359
        %v1777 = vpop.permute.xlu0 %1776
        %1779 = vset.pattern.permute.xlu0 6
        %1780 = vperm.xlu0 %1779, %v360
        %v1781 = vpop.permute.xlu0 %1780
        %1783 = vset.pattern.permute.xlu0 6
        %1784 = vperm.xlu0 %1783, %v361
        %v1785 = vpop.permute.xlu0 %1784
        %1787 = vset.pattern.permute.xlu0 6
        %1788 = vperm.xlu0 %1787, %v362
        %v1789 = vpop.permute.xlu0 %1788
        %1791 = vset.pattern.permute.xlu0 6
        %1792 = vperm.xlu0 %1791, %v363
        %v1793 = vpop.permute.xlu0 %1792
        %1795 = vset.pattern.permute.xlu0 6
        %1796 = vperm.xlu0 %1795, %v364
        %v1797 = vpop.permute.xlu0 %1796
        %1799 = vset.pattern.permute.xlu0 6
        %1800 = vperm.xlu0 %1799, %v365
        %v1801 = vpop.permute.xlu0 %1800
        %1803 = vset.pattern.permute.xlu0 6
        %1804 = vperm.xlu0 %1803, %v366
        %v1805 = vpop.permute.xlu0 %1804
        %1807 = vset.pattern.permute.xlu0 6
        %1808 = vperm.xlu0 %1807, %v367
        %v1809 = vpop.permute.xlu0 %1808
        %1811 = vset.pattern.permute.xlu0 6
        %1812 = vperm.xlu0 %1811, %v368
        %v1813 = vpop.permute.xlu0 %1812
        %1815 = vset.pattern.permute.xlu0 6
        %1816 = vperm.xlu0 %1815, %v369
        %v1817 = vpop.permute.xlu0 %1816
        %1819 = vset.pattern.permute.xlu0 6
        %1820 = vperm.xlu0 %1819, %v370
        %v1821 = vpop.permute.xlu0 %1820
        %1823 = vset.pattern.permute.xlu0 6
        %1824 = vperm.xlu0 %1823, %v371
        %v1825 = vpop.permute.xlu0 %1824
        %1827 = vset.pattern.permute.xlu0 6
        %1828 = vperm.xlu0 %1827, %v372
        %v1829 = vpop.permute.xlu0 %1828
        %1831 = vset.pattern.permute.xlu0 6
        %1832 = vperm.xlu0 %1831, %v373
        %v1833 = vpop.permute.xlu0 %1832
        %1835 = vset.pattern.permute.xlu0 6
        %1836 = vperm.xlu0 %1835, %v374
        %v1837 = vpop.permute.xlu0 %1836
        %1839 = vset.pattern.permute.xlu0 6
        %1840 = vperm.xlu0 %1839, %v375
        %v1841 = vpop.permute.xlu0 %1840
        %1843 = vset.pattern.permute.xlu0 6
        %1844 = vperm.xlu0 %1843, %v376
        %v1845 = vpop.permute.xlu0 %1844
        %1847 = vset.pattern.permute.xlu0 6
        %1848 = vperm.xlu0 %1847, %v377
        %v1849 = vpop.permute.xlu0 %1848
        %1851 = vset.pattern.permute.xlu0 6
        %1852 = vperm.xlu0 %1851, %v378
        %v1853 = vpop.permute.xlu0 %1852
        %v1855 = vmul.f32 %v280, %v1729
        %v1856 = vmul.f32 %v281, %v1733
        %v1857 = vmul.f32 %v282, %v1737
        %v1858 = vmul.f32 %v283, %v1741
        %v1859 = vmul.f32 %v284, %v1745
        %v1860 = vmul.f32 %v285, %v1749
        %v1861 = vmul.f32 %v286, %v1753
        %v1862 = vmul.f32 %v287, %v1757
        %v1863 = vmul.f32 %v288, %v1761
        %v1864 = vmul.f32 %v289, %v1765
        %v1865 = vmul.f32 %v290, %v1769
        %v1866 = vmul.f32 %v291, %v1773
        %v1867 = vmul.f32 %v292, %v1777
        %v1868 = vmul.f32 %v293, %v1781
        %v1869 = vmul.f32 %v294, %v1785
        %v1870 = vmul.f32 %v295, %v1789
        %v1871 = vmul.f32 %v296, %v1793
        %v1872 = vmul.f32 %v297, %v1797
        %v1873 = vmul.f32 %v298, %v1801
        %v1874 = vmul.f32 %v299, %v1805
        %v1875 = vmul.f32 %v300, %v1809
        %v1876 = vmul.f32 %v301, %v1813
        %v1877 = vmul.f32 %v302, %v1817
        %v1878 = vmul.f32 %v303, %v1821
        %v1879 = vmul.f32 %v304, %v1825
        %v1880 = vmul.f32 %v305, %v1829
        %v1881 = vmul.f32 %v306, %v1833
        %v1882 = vmul.f32 %v307, %v1837
        %v1883 = vmul.f32 %v308, %v1841
        %v1884 = vmul.f32 %v309, %v1845
        %v1885 = vmul.f32 %v278, %v1849
        %v1886 = vmul.f32 %v279, %v1853
        %v1887 = vpack.c.bf16 %v1855, %v1855
        %v1888 = vpack.c.bf16 %v1856, %v1856
        %v1889 = vpack.c.bf16 %v1857, %v1857
        %v1890 = vpack.c.bf16 %v1858, %v1858
        %v1891 = vpack.c.bf16 %v1859, %v1859
        %v1892 = vpack.c.bf16 %v1860, %v1860
        %v1893 = vpack.c.bf16 %v1861, %v1861
        %v1894 = vpack.c.bf16 %v1862, %v1862
        %v1895 = vpack.c.bf16 %v1863, %v1863
        %v1896 = vpack.c.bf16 %v1864, %v1864
        %v1897 = vpack.c.bf16 %v1865, %v1865
        %v1898 = vpack.c.bf16 %v1866, %v1866
        %v1899 = vpack.c.bf16 %v1867, %v1867
        %v1900 = vpack.c.bf16 %v1868, %v1868
        %v1901 = vpack.c.bf16 %v1869, %v1869
        %v1902 = vpack.c.bf16 %v1870, %v1870
        %v1903 = vpack.c.bf16 %v1871, %v1871
        %v1904 = vpack.c.bf16 %v1872, %v1872
        %v1905 = vpack.c.bf16 %v1873, %v1873
        %v1906 = vpack.c.bf16 %v1874, %v1874
        %v1907 = vpack.c.bf16 %v1875, %v1875
        %v1908 = vpack.c.bf16 %v1876, %v1876
        %v1909 = vpack.c.bf16 %v1877, %v1877
        %v1910 = vpack.c.bf16 %v1878, %v1878
        %v1911 = vpack.c.bf16 %v1879, %v1879
        %v1912 = vpack.c.bf16 %v1880, %v1880
        %v1913 = vpack.c.bf16 %v1881, %v1881
        %v1914 = vpack.c.bf16 %v1882, %v1882
        %v1915 = vpack.c.bf16 %v1883, %v1883
        %v1916 = vpack.c.bf16 %v1884, %v1884
        %v1917 = vpack.c.bf16 %v1885, %v1885
        %v1918 = vpack.c.bf16 %v1886, %v1886
        %1919 = vset.pattern.permute.xlu0 7
        %1920 = vperm.xlu0 %1919, %v347
        %v1921 = vpop.permute.xlu0 %1920
        %1923 = vset.pattern.permute.xlu0 7
        %1924 = vperm.xlu0 %1923, %v348
        %v1925 = vpop.permute.xlu0 %1924
        %1927 = vset.pattern.permute.xlu0 7
        %1928 = vperm.xlu0 %1927, %v349
        %v1929 = vpop.permute.xlu0 %1928
        %1931 = vset.pattern.permute.xlu0 7
        %1932 = vperm.xlu0 %1931, %v350
        %v1933 = vpop.permute.xlu0 %1932
        %1935 = vset.pattern.permute.xlu0 7
        %1936 = vperm.xlu0 %1935, %v351
        %v1937 = vpop.permute.xlu0 %1936
        %1939 = vset.pattern.permute.xlu0 7
        %1940 = vperm.xlu0 %1939, %v352
        %v1941 = vpop.permute.xlu0 %1940
        %1943 = vset.pattern.permute.xlu0 7
        %1944 = vperm.xlu0 %1943, %v353
        %v1945 = vpop.permute.xlu0 %1944
        %1947 = vset.pattern.permute.xlu0 7
        %1948 = vperm.xlu0 %1947, %v354
        %v1949 = vpop.permute.xlu0 %1948
        %1951 = vset.pattern.permute.xlu0 7
        %1952 = vperm.xlu0 %1951, %v355
        %v1953 = vpop.permute.xlu0 %1952
        %1955 = vset.pattern.permute.xlu0 7
        %1956 = vperm.xlu0 %1955, %v356
        %v1957 = vpop.permute.xlu0 %1956
        %1959 = vset.pattern.permute.xlu0 7
        %1960 = vperm.xlu0 %1959, %v357
        %v1961 = vpop.permute.xlu0 %1960
        %1963 = vset.pattern.permute.xlu0 7
        %1964 = vperm.xlu0 %1963, %v358
        %v1965 = vpop.permute.xlu0 %1964
        %1967 = vset.pattern.permute.xlu0 7
        %1968 = vperm.xlu0 %1967, %v359
        %v1969 = vpop.permute.xlu0 %1968
        %1971 = vset.pattern.permute.xlu0 7
        %1972 = vperm.xlu0 %1971, %v360
        %v1973 = vpop.permute.xlu0 %1972
        %1975 = vset.pattern.permute.xlu0 7
        %1976 = vperm.xlu0 %1975, %v361
        %v1977 = vpop.permute.xlu0 %1976
        %1979 = vset.pattern.permute.xlu0 7
        %1980 = vperm.xlu0 %1979, %v362
        %v1981 = vpop.permute.xlu0 %1980
        %1983 = vset.pattern.permute.xlu0 7
        %1984 = vperm.xlu0 %1983, %v363
        %v1985 = vpop.permute.xlu0 %1984
        %1987 = vset.pattern.permute.xlu0 7
        %1988 = vperm.xlu0 %1987, %v364
        %v1989 = vpop.permute.xlu0 %1988
        %1991 = vset.pattern.permute.xlu0 7
        %1992 = vperm.xlu0 %1991, %v365
        %v1993 = vpop.permute.xlu0 %1992
        %1995 = vset.pattern.permute.xlu0 7
        %1996 = vperm.xlu0 %1995, %v366
        %v1997 = vpop.permute.xlu0 %1996
        %1999 = vset.pattern.permute.xlu0 7
        %2000 = vperm.xlu0 %1999, %v367
        %v2001 = vpop.permute.xlu0 %2000
        %2003 = vset.pattern.permute.xlu0 7
        %2004 = vperm.xlu0 %2003, %v368
        %v2005 = vpop.permute.xlu0 %2004
        %2007 = vset.pattern.permute.xlu0 7
        %2008 = vperm.xlu0 %2007, %v369
        %v2009 = vpop.permute.xlu0 %2008
        %2011 = vset.pattern.permute.xlu0 7
        %2012 = vperm.xlu0 %2011, %v370
        %v2013 = vpop.permute.xlu0 %2012
        %2015 = vset.pattern.permute.xlu0 7
        %2016 = vperm.xlu0 %2015, %v371
        %v2017 = vpop.permute.xlu0 %2016
        %2019 = vset.pattern.permute.xlu0 7
        %2020 = vperm.xlu0 %2019, %v372
        %v2021 = vpop.permute.xlu0 %2020
        %2023 = vset.pattern.permute.xlu0 7
        %2024 = vperm.xlu0 %2023, %v373
        %v2025 = vpop.permute.xlu0 %2024
        %2027 = vset.pattern.permute.xlu0 7
        %2028 = vperm.xlu0 %2027, %v374
        %v2029 = vpop.permute.xlu0 %2028
        %2031 = vset.pattern.permute.xlu0 7
        %2032 = vperm.xlu0 %2031, %v375
        %v2033 = vpop.permute.xlu0 %2032
        %2035 = vset.pattern.permute.xlu0 7
        %2036 = vperm.xlu0 %2035, %v376
        %v2037 = vpop.permute.xlu0 %2036
        %2039 = vset.pattern.permute.xlu0 7
        %2040 = vperm.xlu0 %2039, %v377
        %v2041 = vpop.permute.xlu0 %2040
        %2043 = vset.pattern.permute.xlu0 7
        %2044 = vperm.xlu0 %2043, %v378
        %v2045 = vpop.permute.xlu0 %2044
        %v2047 = vmul.f32 %v923, %v1921
        %v2048 = vmul.f32 %v922, %v1925
        %v2049 = vmul.f32 %v921, %v1929
        %v2050 = vmul.f32 %v920, %v1933
        %v2051 = vmul.f32 %v919, %v1937
        %v2052 = vmul.f32 %v918, %v1941
        %v2053 = vmul.f32 %v917, %v1945
        %v2054 = vmul.f32 %v916, %v1949
        %v2055 = vmul.f32 %v915, %v1953
        %v2056 = vmul.f32 %v914, %v1957
        %v2057 = vmul.f32 %v913, %v1961
        %v2058 = vmul.f32 %v912, %v1965
        %v2059 = vmul.f32 %v911, %v1969
        %v2060 = vmul.f32 %v910, %v1973
        %v2061 = vmul.f32 %v909, %v1977
        %v2062 = vmul.f32 %v908, %v1981
        %v2063 = vmul.f32 %v907, %v1985
        %v2064 = vmul.f32 %v906, %v1989
        %v2065 = vmul.f32 %v905, %v1993
        %v2066 = vmul.f32 %v904, %v1997
        %v2067 = vmul.f32 %v903, %v2001
        %v2068 = vmul.f32 %v902, %v2005
        %v2069 = vmul.f32 %v901, %v2009
        %v2070 = vmul.f32 %v900, %v2013
        %v2071 = vmul.f32 %v899, %v2017
        %v2072 = vmul.f32 %v898, %v2021
        %v2073 = vmul.f32 %v897, %v2025
        %v2074 = vmul.f32 %v896, %v2029
        %v2075 = vmul.f32 %v895, %v2033
        %v2076 = vmul.f32 %v926, %v2037
        %v2077 = vmul.f32 %v925, %v2041
        %v2078 = vmul.f32 %v924, %v2045
        %v2079 = vpack.c.bf16 %v2047, %v2047
        %v2080 = vpack.c.bf16 %v2048, %v2048
        %v2081 = vpack.c.bf16 %v2049, %v2049
        %v2082 = vpack.c.bf16 %v2050, %v2050
        %v2083 = vpack.c.bf16 %v2051, %v2051
        %v2084 = vpack.c.bf16 %v2052, %v2052
        %v2085 = vpack.c.bf16 %v2053, %v2053
        %v2086 = vpack.c.bf16 %v2054, %v2054
        %v2087 = vpack.c.bf16 %v2055, %v2055
        %v2088 = vpack.c.bf16 %v2056, %v2056
        %v2089 = vpack.c.bf16 %v2057, %v2057
        %v2090 = vpack.c.bf16 %v2058, %v2058
        %v2091 = vpack.c.bf16 %v2059, %v2059
        %v2092 = vpack.c.bf16 %v2060, %v2060
        %v2093 = vpack.c.bf16 %v2061, %v2061
        %v2094 = vpack.c.bf16 %v2062, %v2062
        %v2095 = vpack.c.bf16 %v2063, %v2063
        %v2096 = vpack.c.bf16 %v2064, %v2064
        %v2097 = vpack.c.bf16 %v2065, %v2065
        %v2098 = vpack.c.bf16 %v2066, %v2066
        %v2099 = vpack.c.bf16 %v2067, %v2067
        %v2100 = vpack.c.bf16 %v2068, %v2068
        %v2101 = vpack.c.bf16 %v2069, %v2069
        %v2102 = vpack.c.bf16 %v2070, %v2070
        %v2103 = vpack.c.bf16 %v2071, %v2071
        %v2104 = vpack.c.bf16 %v2072, %v2072
        %v2105 = vpack.c.bf16 %v2073, %v2073
        %v2106 = vpack.c.bf16 %v2074, %v2074
        %v2107 = vpack.c.bf16 %v2075, %v2075
        %v2108 = vpack.c.bf16 %v2076, %v2076
        %v2109 = vpack.c.bf16 %v2077, %v2077
        %v2110 = vpack.c.bf16 %v2078, %v2078
        %v2143 = vunpack.c.l.b16 %v638
        %v2144 = vunpack.c.l.b16 %v639
        %v2145 = vunpack.c.l.b16 %v640
        %v2146 = vunpack.c.l.b16 %v641
        %v2147 = vunpack.c.l.b16 %v642
        %v2148 = vunpack.c.l.b16 %v643
        %v2149 = vunpack.c.l.b16 %v644
        %v2150 = vunpack.c.l.b16 %v645
        %v2151 = vunpack.c.l.b16 %v646
        %v2152 = vunpack.c.l.b16 %v647
        %v2153 = vunpack.c.l.b16 %v648
        %v2154 = vunpack.c.l.b16 %v649
        %v2155 = vunpack.c.l.b16 %v650
        %v2156 = vunpack.c.l.b16 %v651
        %v2157 = vunpack.c.l.b16 %v652
        %v2158 = vunpack.c.l.b16 %v653
        %v2159 = vunpack.c.l.b16 %v654
        %v2160 = vunpack.c.l.b16 %v655
        %v2161 = vunpack.c.l.b16 %v656
        %v2162 = vunpack.c.l.b16 %v657
        %v2163 = vunpack.c.l.b16 %v658
        %v2164 = vunpack.c.l.b16 %v659
        %v2165 = vunpack.c.l.b16 %v660
        %v2166 = vunpack.c.l.b16 %v661
        %v2167 = vunpack.c.l.b16 %v662
        %v2168 = vunpack.c.l.b16 %v663
        %v2169 = vunpack.c.l.b16 %v664
        %v2170 = vunpack.c.l.b16 %v665
        %v2171 = vunpack.c.l.b16 %v666
        %v2172 = vunpack.c.l.b16 %v667
        %v2173 = vunpack.c.l.b16 %v668
        %v2174 = vunpack.c.l.b16 %v669
        %v2175 = vpack.c.b16 %v2144, %v2143
        %v2176 = vpack.c.b16 %v2146, %v2145
        %v2177 = vpack.c.b16 %v2148, %v2147
        %v2178 = vpack.c.b16 %v2150, %v2149
        %v2179 = vpack.c.b16 %v2152, %v2151
        %v2180 = vpack.c.b16 %v2154, %v2153
        %v2181 = vpack.c.b16 %v2156, %v2155
        %v2182 = vpack.c.b16 %v2158, %v2157
        %v2183 = vpack.c.b16 %v2160, %v2159
        %v2184 = vpack.c.b16 %v2162, %v2161
        %v2185 = vpack.c.b16 %v2164, %v2163
        %v2186 = vpack.c.b16 %v2166, %v2165
        %v2187 = vpack.c.b16 %v2168, %v2167
        %v2188 = vpack.c.b16 %v2170, %v2169
        %v2189 = vpack.c.b16 %v2172, %v2171
        %v2190 = vpack.c.b16 %v2174, %v2173
        %v2223 = vunpack.c.l.b16 %v830
        %v2224 = vunpack.c.l.b16 %v831
        %v2225 = vunpack.c.l.b16 %v832
        %v2226 = vunpack.c.l.b16 %v833
        %v2227 = vunpack.c.l.b16 %v834
        %v2228 = vunpack.c.l.b16 %v835
        %v2229 = vunpack.c.l.b16 %v836
        %v2230 = vunpack.c.l.b16 %v837
        %v2231 = vunpack.c.l.b16 %v838
        %v2232 = vunpack.c.l.b16 %v839
        %v2233 = vunpack.c.l.b16 %v840
        %v2234 = vunpack.c.l.b16 %v841
        %v2235 = vunpack.c.l.b16 %v842
        %v2236 = vunpack.c.l.b16 %v843
        %v2237 = vunpack.c.l.b16 %v844
        %v2238 = vunpack.c.l.b16 %v845
        %v2239 = vunpack.c.l.b16 %v846
        %v2240 = vunpack.c.l.b16 %v847
        %v2241 = vunpack.c.l.b16 %v848
        %v2242 = vunpack.c.l.b16 %v849
        %v2243 = vunpack.c.l.b16 %v850
        %v2244 = vunpack.c.l.b16 %v851
        %v2245 = vunpack.c.l.b16 %v852
        %v2246 = vunpack.c.l.b16 %v853
        %v2247 = vunpack.c.l.b16 %v854
        %v2248 = vunpack.c.l.b16 %v855
        %v2249 = vunpack.c.l.b16 %v856
        %v2250 = vunpack.c.l.b16 %v857
        %v2251 = vunpack.c.l.b16 %v858
        %v2252 = vunpack.c.l.b16 %v859
        %v2253 = vunpack.c.l.b16 %v860
        %v2254 = vunpack.c.l.b16 %v861
        %v2255 = vpack.c.b16 %v2224, %v2223
        %v2256 = vpack.c.b16 %v2226, %v2225
        %v2257 = vpack.c.b16 %v2228, %v2227
        %v2258 = vpack.c.b16 %v2230, %v2229
        %v2259 = vpack.c.b16 %v2232, %v2231
        %v2260 = vpack.c.b16 %v2234, %v2233
        %v2261 = vpack.c.b16 %v2236, %v2235
        %v2262 = vpack.c.b16 %v2238, %v2237
        %v2263 = vpack.c.b16 %v2240, %v2239
        %v2264 = vpack.c.b16 %v2242, %v2241
        %v2265 = vpack.c.b16 %v2244, %v2243
        %v2266 = vpack.c.b16 %v2246, %v2245
        %v2267 = vpack.c.b16 %v2248, %v2247
        %v2268 = vpack.c.b16 %v2250, %v2249
        %v2269 = vpack.c.b16 %v2252, %v2251
        %v2270 = vpack.c.b16 %v2254, %v2253
        %2271 = vrot.lane.b32.xlu0 %v2255, 32
        %v2272 = vpop.permute.xlu0 %2271
        %2273 = vrot.lane.b32.xlu0 %v2256, 32
        %v2274 = vpop.permute.xlu0 %2273
        %2275 = vrot.lane.b32.xlu0 %v2257, 32
        %v2276 = vpop.permute.xlu0 %2275
        %2277 = vrot.lane.b32.xlu0 %v2258, 32
        %v2278 = vpop.permute.xlu0 %2277
        %2279 = vrot.lane.b32.xlu0 %v2259, 32
        %v2280 = vpop.permute.xlu0 %2279
        %2281 = vrot.lane.b32.xlu0 %v2260, 32
        %v2282 = vpop.permute.xlu0 %2281
        %2283 = vrot.lane.b32.xlu0 %v2261, 32
        %v2284 = vpop.permute.xlu0 %2283
        %2285 = vrot.lane.b32.xlu0 %v2262, 32
        %v2286 = vpop.permute.xlu0 %2285
        %2287 = vrot.lane.b32.xlu0 %v2263, 32
        %v2288 = vpop.permute.xlu0 %2287
        %2289 = vrot.lane.b32.xlu0 %v2264, 32
        %v2290 = vpop.permute.xlu0 %2289
        %2291 = vrot.lane.b32.xlu0 %v2265, 32
        %v2292 = vpop.permute.xlu0 %2291
        %2293 = vrot.lane.b32.xlu0 %v2266, 32
        %v2294 = vpop.permute.xlu0 %2293
        %2295 = vrot.lane.b32.xlu0 %v2267, 32
        %v2296 = vpop.permute.xlu0 %2295
        %2297 = vrot.lane.b32.xlu0 %v2268, 32
        %v2298 = vpop.permute.xlu0 %2297
        %2299 = vrot.lane.b32.xlu0 %v2269, 32
        %v2300 = vpop.permute.xlu0 %2299
        %2301 = vrot.lane.b32.xlu0 %v2270, 32
        %v2302 = vpop.permute.xlu0 %2301
        %v2335 = vunpack.c.l.b16 %v1087
        %v2336 = vunpack.c.l.b16 %v1088
        %v2337 = vunpack.c.l.b16 %v1089
        %v2338 = vunpack.c.l.b16 %v1090
        %v2339 = vunpack.c.l.b16 %v1091
        %v2340 = vunpack.c.l.b16 %v1092
        %v2341 = vunpack.c.l.b16 %v1093
        %v2342 = vunpack.c.l.b16 %v1094
        %v2343 = vunpack.c.l.b16 %v1095
        %v2344 = vunpack.c.l.b16 %v1096
        %v2345 = vunpack.c.l.b16 %v1097
        %v2346 = vunpack.c.l.b16 %v1098
        %v2347 = vunpack.c.l.b16 %v1099
        %v2348 = vunpack.c.l.b16 %v1100
        %v2349 = vunpack.c.l.b16 %v1101
        %v2350 = vunpack.c.l.b16 %v1102
        %v2351 = vunpack.c.l.b16 %v1103
        %v2352 = vunpack.c.l.b16 %v1104
        %v2353 = vunpack.c.l.b16 %v1105
        %v2354 = vunpack.c.l.b16 %v1106
        %v2355 = vunpack.c.l.b16 %v1107
        %v2356 = vunpack.c.l.b16 %v1108
        %v2357 = vunpack.c.l.b16 %v1109
        %v2358 = vunpack.c.l.b16 %v1110
        %v2359 = vunpack.c.l.b16 %v1111
        %v2360 = vunpack.c.l.b16 %v1112
        %v2361 = vunpack.c.l.b16 %v1113
        %v2362 = vunpack.c.l.b16 %v1114
        %v2363 = vunpack.c.l.b16 %v1115
        %v2364 = vunpack.c.l.b16 %v1116
        %v2365 = vunpack.c.l.b16 %v1117
        %v2366 = vunpack.c.l.b16 %v1118
        %v2367 = vpack.c.b16 %v2336, %v2335
        %v2368 = vpack.c.b16 %v2338, %v2337
        %v2369 = vpack.c.b16 %v2340, %v2339
        %v2370 = vpack.c.b16 %v2342, %v2341
        %v2371 = vpack.c.b16 %v2344, %v2343
        %v2372 = vpack.c.b16 %v2346, %v2345
        %v2373 = vpack.c.b16 %v2348, %v2347
        %v2374 = vpack.c.b16 %v2350, %v2349
        %v2375 = vpack.c.b16 %v2352, %v2351
        %v2376 = vpack.c.b16 %v2354, %v2353
        %v2377 = vpack.c.b16 %v2356, %v2355
        %v2378 = vpack.c.b16 %v2358, %v2357
        %v2379 = vpack.c.b16 %v2360, %v2359
        %v2380 = vpack.c.b16 %v2362, %v2361
        %v2381 = vpack.c.b16 %v2364, %v2363
        %v2382 = vpack.c.b16 %v2366, %v2365
        %2383 = vrot.lane.b32.xlu0 %v2367, 64
        %v2384 = vpop.permute.xlu0 %2383
        %2385 = vrot.lane.b32.xlu0 %v2368, 64
        %v2386 = vpop.permute.xlu0 %2385
        %2387 = vrot.lane.b32.xlu0 %v2369, 64
        %v2388 = vpop.permute.xlu0 %2387
        %2389 = vrot.lane.b32.xlu0 %v2370, 64
        %v2390 = vpop.permute.xlu0 %2389
        %2391 = vrot.lane.b32.xlu0 %v2371, 64
        %v2392 = vpop.permute.xlu0 %2391
        %2393 = vrot.lane.b32.xlu0 %v2372, 64
        %v2394 = vpop.permute.xlu0 %2393
        %2395 = vrot.lane.b32.xlu0 %v2373, 64
        %v2396 = vpop.permute.xlu0 %2395
        %2397 = vrot.lane.b32.xlu0 %v2374, 64
        %v2398 = vpop.permute.xlu0 %2397
        %2399 = vrot.lane.b32.xlu0 %v2375, 64
        %v2400 = vpop.permute.xlu0 %2399
        %2401 = vrot.lane.b32.xlu0 %v2376, 64
        %v2402 = vpop.permute.xlu0 %2401
        %2403 = vrot.lane.b32.xlu0 %v2377, 64
        %v2404 = vpop.permute.xlu0 %2403
        %2405 = vrot.lane.b32.xlu0 %v2378, 64
        %v2406 = vpop.permute.xlu0 %2405
        %2407 = vrot.lane.b32.xlu0 %v2379, 64
        %v2408 = vpop.permute.xlu0 %2407
        %2409 = vrot.lane.b32.xlu0 %v2380, 64
        %v2410 = vpop.permute.xlu0 %2409
        %2411 = vrot.lane.b32.xlu0 %v2381, 64
        %v2412 = vpop.permute.xlu0 %2411
        %2413 = vrot.lane.b32.xlu0 %v2382, 64
        %v2414 = vpop.permute.xlu0 %2413
        %v2447 = vunpack.c.l.b16 %v1279
        %v2448 = vunpack.c.l.b16 %v1280
        %v2449 = vunpack.c.l.b16 %v1281
        %v2450 = vunpack.c.l.b16 %v1282
        %v2451 = vunpack.c.l.b16 %v1283
        %v2452 = vunpack.c.l.b16 %v1284
        %v2453 = vunpack.c.l.b16 %v1285
        %v2454 = vunpack.c.l.b16 %v1286
        %v2455 = vunpack.c.l.b16 %v1287
        %v2456 = vunpack.c.l.b16 %v1288
        %v2457 = vunpack.c.l.b16 %v1289
        %v2458 = vunpack.c.l.b16 %v1290
        %v2459 = vunpack.c.l.b16 %v1291
        %v2460 = vunpack.c.l.b16 %v1292
        %v2461 = vunpack.c.l.b16 %v1293
        %v2462 = vunpack.c.l.b16 %v1294
        %v2463 = vunpack.c.l.b16 %v1295
        %v2464 = vunpack.c.l.b16 %v1296
        %v2465 = vunpack.c.l.b16 %v1297
        %v2466 = vunpack.c.l.b16 %v1298
        %v2467 = vunpack.c.l.b16 %v1299
        %v2468 = vunpack.c.l.b16 %v1300
        %v2469 = vunpack.c.l.b16 %v1301
        %v2470 = vunpack.c.l.b16 %v1302
        %v2471 = vunpack.c.l.b16 %v1303
        %v2472 = vunpack.c.l.b16 %v1304
        %v2473 = vunpack.c.l.b16 %v1305
        %v2474 = vunpack.c.l.b16 %v1306
        %v2475 = vunpack.c.l.b16 %v1307
        %v2476 = vunpack.c.l.b16 %v1308
        %v2477 = vunpack.c.l.b16 %v1309
        %v2478 = vunpack.c.l.b16 %v1310
        %v2479 = vpack.c.b16 %v2448, %v2447
        %v2480 = vpack.c.b16 %v2450, %v2449
        %v2481 = vpack.c.b16 %v2452, %v2451
        %v2482 = vpack.c.b16 %v2454, %v2453
        %v2483 = vpack.c.b16 %v2456, %v2455
        %v2484 = vpack.c.b16 %v2458, %v2457
        %v2485 = vpack.c.b16 %v2460, %v2459
        %v2486 = vpack.c.b16 %v2462, %v2461
        %v2487 = vpack.c.b16 %v2464, %v2463
        %v2488 = vpack.c.b16 %v2466, %v2465
        %v2489 = vpack.c.b16 %v2468, %v2467
        %v2490 = vpack.c.b16 %v2470, %v2469
        %v2491 = vpack.c.b16 %v2472, %v2471
        %v2492 = vpack.c.b16 %v2474, %v2473
        %v2493 = vpack.c.b16 %v2476, %v2475
        %v2494 = vpack.c.b16 %v2478, %v2477
        %2495 = vrot.lane.b32.xlu0 %v2479, 96
        %v2496 = vpop.permute.xlu0 %2495
        %2497 = vrot.lane.b32.xlu0 %v2480, 96
        %v2498 = vpop.permute.xlu0 %2497
        %2499 = vrot.lane.b32.xlu0 %v2481, 96
        %v2500 = vpop.permute.xlu0 %2499
        %2501 = vrot.lane.b32.xlu0 %v2482, 96
        %v2502 = vpop.permute.xlu0 %2501
        %2503 = vrot.lane.b32.xlu0 %v2483, 96
        %v2504 = vpop.permute.xlu0 %2503
        %2505 = vrot.lane.b32.xlu0 %v2484, 96
        %v2506 = vpop.permute.xlu0 %2505
        %2507 = vrot.lane.b32.xlu0 %v2485, 96
        %v2508 = vpop.permute.xlu0 %2507
        %2509 = vrot.lane.b32.xlu0 %v2486, 96
        %v2510 = vpop.permute.xlu0 %2509
        %2511 = vrot.lane.b32.xlu0 %v2487, 96
        %v2512 = vpop.permute.xlu0 %2511
        %2513 = vrot.lane.b32.xlu0 %v2488, 96
        %v2514 = vpop.permute.xlu0 %2513
        %2515 = vrot.lane.b32.xlu0 %v2489, 96
        %v2516 = vpop.permute.xlu0 %2515
        %2517 = vrot.lane.b32.xlu0 %v2490, 96
        %v2518 = vpop.permute.xlu0 %2517
        %2519 = vrot.lane.b32.xlu0 %v2491, 96
        %v2520 = vpop.permute.xlu0 %2519
        %2521 = vrot.lane.b32.xlu0 %v2492, 96
        %v2522 = vpop.permute.xlu0 %2521
        %2523 = vrot.lane.b32.xlu0 %v2493, 96
        %v2524 = vpop.permute.xlu0 %2523
        %2525 = vrot.lane.b32.xlu0 %v2494, 96
        %v2526 = vpop.permute.xlu0 %2525
        %v2559 = vunpack.c.l.b16 %v1311
        %v2560 = vunpack.c.l.b16 %v1312
        %v2561 = vunpack.c.l.b16 %v1313
        %v2562 = vunpack.c.l.b16 %v1314
        %v2563 = vunpack.c.l.b16 %v1315
        %v2564 = vunpack.c.l.b16 %v1316
        %v2565 = vunpack.c.l.b16 %v1317
        %v2566 = vunpack.c.l.b16 %v1318
        %v2567 = vunpack.c.l.b16 %v1319
        %v2568 = vunpack.c.l.b16 %v1320
        %v2569 = vunpack.c.l.b16 %v1321
        %v2570 = vunpack.c.l.b16 %v1322
        %v2571 = vunpack.c.l.b16 %v1323
        %v2572 = vunpack.c.l.b16 %v1324
        %v2573 = vunpack.c.l.b16 %v1325
        %v2574 = vunpack.c.l.b16 %v1326
        %v2575 = vunpack.c.l.b16 %v1327
        %v2576 = vunpack.c.l.b16 %v1328
        %v2577 = vunpack.c.l.b16 %v1329
        %v2578 = vunpack.c.l.b16 %v1330
        %v2579 = vunpack.c.l.b16 %v1331
        %v2580 = vunpack.c.l.b16 %v1332
        %v2581 = vunpack.c.l.b16 %v1333
        %v2582 = vunpack.c.l.b16 %v1334
        %v2583 = vunpack.c.l.b16 %v1335
        %v2584 = vunpack.c.l.b16 %v1336
        %v2585 = vunpack.c.l.b16 %v1337
        %v2586 = vunpack.c.l.b16 %v1338
        %v2587 = vunpack.c.l.b16 %v1339
        %v2588 = vunpack.c.l.b16 %v1340
        %v2589 = vunpack.c.l.b16 %v1341
        %v2590 = vunpack.c.l.b16 %v1342
        %v2591 = vpack.c.b16 %v2560, %v2559
        %v2592 = vpack.c.b16 %v2562, %v2561
        %v2593 = vpack.c.b16 %v2564, %v2563
        %v2594 = vpack.c.b16 %v2566, %v2565
        %v2595 = vpack.c.b16 %v2568, %v2567
        %v2596 = vpack.c.b16 %v2570, %v2569
        %v2597 = vpack.c.b16 %v2572, %v2571
        %v2598 = vpack.c.b16 %v2574, %v2573
        %v2599 = vpack.c.b16 %v2576, %v2575
        %v2600 = vpack.c.b16 %v2578, %v2577
        %v2601 = vpack.c.b16 %v2580, %v2579
        %v2602 = vpack.c.b16 %v2582, %v2581
        %v2603 = vpack.c.b16 %v2584, %v2583
        %v2604 = vpack.c.b16 %v2586, %v2585
        %v2605 = vpack.c.b16 %v2588, %v2587
        %v2606 = vpack.c.b16 %v2590, %v2589
        %v2639 = vunpack.c.l.b16 %v1503
        %v2640 = vunpack.c.l.b16 %v1504
        %v2641 = vunpack.c.l.b16 %v1505
        %v2642 = vunpack.c.l.b16 %v1506
        %v2643 = vunpack.c.l.b16 %v1507
        %v2644 = vunpack.c.l.b16 %v1508
        %v2645 = vunpack.c.l.b16 %v1509
        %v2646 = vunpack.c.l.b16 %v1510
        %v2647 = vunpack.c.l.b16 %v1511
        %v2648 = vunpack.c.l.b16 %v1512
        %v2649 = vunpack.c.l.b16 %v1513
        %v2650 = vunpack.c.l.b16 %v1514
        %v2651 = vunpack.c.l.b16 %v1515
        %v2652 = vunpack.c.l.b16 %v1516
        %v2653 = vunpack.c.l.b16 %v1517
        %v2654 = vunpack.c.l.b16 %v1518
        %v2655 = vunpack.c.l.b16 %v1519
        %v2656 = vunpack.c.l.b16 %v1520
        %v2657 = vunpack.c.l.b16 %v1521
        %v2658 = vunpack.c.l.b16 %v1522
        %v2659 = vunpack.c.l.b16 %v1523
        %v2660 = vunpack.c.l.b16 %v1524
        %v2661 = vunpack.c.l.b16 %v1525
        %v2662 = vunpack.c.l.b16 %v1526
        %v2663 = vunpack.c.l.b16 %v1527
        %v2664 = vunpack.c.l.b16 %v1528
        %v2665 = vunpack.c.l.b16 %v1529
        %v2666 = vunpack.c.l.b16 %v1530
        %v2667 = vunpack.c.l.b16 %v1531
        %v2668 = vunpack.c.l.b16 %v1532
        %v2669 = vunpack.c.l.b16 %v1533
        %v2670 = vunpack.c.l.b16 %v1534
        %v2671 = vpack.c.b16 %v2640, %v2639
        %v2672 = vpack.c.b16 %v2642, %v2641
        %v2673 = vpack.c.b16 %v2644, %v2643
        %v2674 = vpack.c.b16 %v2646, %v2645
        %v2675 = vpack.c.b16 %v2648, %v2647
        %v2676 = vpack.c.b16 %v2650, %v2649
        %v2677 = vpack.c.b16 %v2652, %v2651
        %v2678 = vpack.c.b16 %v2654, %v2653
        %v2679 = vpack.c.b16 %v2656, %v2655
        %v2680 = vpack.c.b16 %v2658, %v2657
        %v2681 = vpack.c.b16 %v2660, %v2659
        %v2682 = vpack.c.b16 %v2662, %v2661
        %v2683 = vpack.c.b16 %v2664, %v2663
        %v2684 = vpack.c.b16 %v2666, %v2665
        %v2685 = vpack.c.b16 %v2668, %v2667
        %v2686 = vpack.c.b16 %v2670, %v2669
        %2687 = vrot.lane.b32.xlu0 %v2671, 32
        %v2688 = vpop.permute.xlu0 %2687
        %2689 = vrot.lane.b32.xlu0 %v2672, 32
        %v2690 = vpop.permute.xlu0 %2689
        %2691 = vrot.lane.b32.xlu0 %v2673, 32
        %v2692 = vpop.permute.xlu0 %2691
        %2693 = vrot.lane.b32.xlu0 %v2674, 32
        %v2694 = vpop.permute.xlu0 %2693
        %2695 = vrot.lane.b32.xlu0 %v2675, 32
        %v2696 = vpop.permute.xlu0 %2695
        %2697 = vrot.lane.b32.xlu0 %v2676, 32
        %v2698 = vpop.permute.xlu0 %2697
        %2699 = vrot.lane.b32.xlu0 %v2677, 32
        %v2700 = vpop.permute.xlu0 %2699
        %2701 = vrot.lane.b32.xlu0 %v2678, 32
        %v2702 = vpop.permute.xlu0 %2701
        %2703 = vrot.lane.b32.xlu0 %v2679, 32
        %v2704 = vpop.permute.xlu0 %2703
        %2705 = vrot.lane.b32.xlu0 %v2680, 32
        %v2706 = vpop.permute.xlu0 %2705
        %2707 = vrot.lane.b32.xlu0 %v2681, 32
        %v2708 = vpop.permute.xlu0 %2707
        %2709 = vrot.lane.b32.xlu0 %v2682, 32
        %v2710 = vpop.permute.xlu0 %2709
        %2711 = vrot.lane.b32.xlu0 %v2683, 32
        %v2712 = vpop.permute.xlu0 %2711
        %2713 = vrot.lane.b32.xlu0 %v2684, 32
        %v2714 = vpop.permute.xlu0 %2713
        %2715 = vrot.lane.b32.xlu0 %v2685, 32
        %v2716 = vpop.permute.xlu0 %2715
        %2717 = vrot.lane.b32.xlu0 %v2686, 32
        %v2718 = vpop.permute.xlu0 %2717
        %v2751 = vunpack.c.l.b16 %v1695
        %v2752 = vunpack.c.l.b16 %v1696
        %v2753 = vunpack.c.l.b16 %v1697
        %v2754 = vunpack.c.l.b16 %v1698
        %v2755 = vunpack.c.l.b16 %v1699
        %v2756 = vunpack.c.l.b16 %v1700
        %v2757 = vunpack.c.l.b16 %v1701
        %v2758 = vunpack.c.l.b16 %v1702
        %v2759 = vunpack.c.l.b16 %v1703
        %v2760 = vunpack.c.l.b16 %v1704
        %v2761 = vunpack.c.l.b16 %v1705
        %v2762 = vunpack.c.l.b16 %v1706
        %v2763 = vunpack.c.l.b16 %v1707
        %v2764 = vunpack.c.l.b16 %v1708
        %v2765 = vunpack.c.l.b16 %v1709
        %v2766 = vunpack.c.l.b16 %v1710
        %v2767 = vunpack.c.l.b16 %v1711
        %v2768 = vunpack.c.l.b16 %v1712
        %v2769 = vunpack.c.l.b16 %v1713
        %v2770 = vunpack.c.l.b16 %v1714
        %v2771 = vunpack.c.l.b16 %v1715
        %v2772 = vunpack.c.l.b16 %v1716
        %v2773 = vunpack.c.l.b16 %v1717
        %v2774 = vunpack.c.l.b16 %v1718
        %v2775 = vunpack.c.l.b16 %v1719
        %v2776 = vunpack.c.l.b16 %v1720
        %v2777 = vunpack.c.l.b16 %v1721
        %v2778 = vunpack.c.l.b16 %v1722
        %v2779 = vunpack.c.l.b16 %v1723
        %v2780 = vunpack.c.l.b16 %v1724
        %v2781 = vunpack.c.l.b16 %v1725
        %v2782 = vunpack.c.l.b16 %v1726
        %v2783 = vpack.c.b16 %v2752, %v2751
        %v2784 = vpack.c.b16 %v2754, %v2753
        %v2785 = vpack.c.b16 %v2756, %v2755
        %v2786 = vpack.c.b16 %v2758, %v2757
        %v2787 = vpack.c.b16 %v2760, %v2759
        %v2788 = vpack.c.b16 %v2762, %v2761
        %v2789 = vpack.c.b16 %v2764, %v2763
        %v2790 = vpack.c.b16 %v2766, %v2765
        %v2791 = vpack.c.b16 %v2768, %v2767
        %v2792 = vpack.c.b16 %v2770, %v2769
        %v2793 = vpack.c.b16 %v2772, %v2771
        %v2794 = vpack.c.b16 %v2774, %v2773
        %v2795 = vpack.c.b16 %v2776, %v2775
        %v2796 = vpack.c.b16 %v2778, %v2777
        %v2797 = vpack.c.b16 %v2780, %v2779
        %v2798 = vpack.c.b16 %v2782, %v2781
        %2799 = vrot.lane.b32.xlu0 %v2783, 64
        %v2800 = vpop.permute.xlu0 %2799
        %2801 = vrot.lane.b32.xlu0 %v2784, 64
        %v2802 = vpop.permute.xlu0 %2801
        %2803 = vrot.lane.b32.xlu0 %v2785, 64
        %v2804 = vpop.permute.xlu0 %2803
        %2805 = vrot.lane.b32.xlu0 %v2786, 64
        %v2806 = vpop.permute.xlu0 %2805
        %2807 = vrot.lane.b32.xlu0 %v2787, 64
        %v2808 = vpop.permute.xlu0 %2807
        %2809 = vrot.lane.b32.xlu0 %v2788, 64
        %v2810 = vpop.permute.xlu0 %2809
        %2811 = vrot.lane.b32.xlu0 %v2789, 64
        %v2812 = vpop.permute.xlu0 %2811
        %2813 = vrot.lane.b32.xlu0 %v2790, 64
        %v2814 = vpop.permute.xlu0 %2813
        %2815 = vrot.lane.b32.xlu0 %v2791, 64
        %v2816 = vpop.permute.xlu0 %2815
        %2817 = vrot.lane.b32.xlu0 %v2792, 64
        %v2818 = vpop.permute.xlu0 %2817
        %2819 = vrot.lane.b32.xlu0 %v2793, 64
        %v2820 = vpop.permute.xlu0 %2819
        %2821 = vrot.lane.b32.xlu0 %v2794, 64
        %v2822 = vpop.permute.xlu0 %2821
        %2823 = vrot.lane.b32.xlu0 %v2795, 64
        %v2824 = vpop.permute.xlu0 %2823
        %2825 = vrot.lane.b32.xlu0 %v2796, 64
        %v2826 = vpop.permute.xlu0 %2825
        %2827 = vrot.lane.b32.xlu0 %v2797, 64
        %v2828 = vpop.permute.xlu0 %2827
        %2829 = vrot.lane.b32.xlu0 %v2798, 64
        %v2830 = vpop.permute.xlu0 %2829
        %v2863 = vunpack.c.l.b16 %v1887
        %v2864 = vunpack.c.l.b16 %v1888
        %v2865 = vunpack.c.l.b16 %v1889
        %v2866 = vunpack.c.l.b16 %v1890
        %v2867 = vunpack.c.l.b16 %v1891
        %v2868 = vunpack.c.l.b16 %v1892
        %v2869 = vunpack.c.l.b16 %v1893
        %v2870 = vunpack.c.l.b16 %v1894
        %v2871 = vunpack.c.l.b16 %v1895
        %v2872 = vunpack.c.l.b16 %v1896
        %v2873 = vunpack.c.l.b16 %v1897
        %v2874 = vunpack.c.l.b16 %v1898
        %v2875 = vunpack.c.l.b16 %v1899
        %v2876 = vunpack.c.l.b16 %v1900
        %v2877 = vunpack.c.l.b16 %v1901
        %v2878 = vunpack.c.l.b16 %v1902
        %v2879 = vunpack.c.l.b16 %v1903
        %v2880 = vunpack.c.l.b16 %v1904
        %v2881 = vunpack.c.l.b16 %v1905
        %v2882 = vunpack.c.l.b16 %v1906
        %v2883 = vunpack.c.l.b16 %v1907
        %v2884 = vunpack.c.l.b16 %v1908
        %v2885 = vunpack.c.l.b16 %v1909
        %v2886 = vunpack.c.l.b16 %v1910
        %v2887 = vunpack.c.l.b16 %v1911
        %v2888 = vunpack.c.l.b16 %v1912
        %v2889 = vunpack.c.l.b16 %v1913
        %v2890 = vunpack.c.l.b16 %v1914
        %v2891 = vunpack.c.l.b16 %v1915
        %v2892 = vunpack.c.l.b16 %v1916
        %v2893 = vunpack.c.l.b16 %v1917
        %v2894 = vunpack.c.l.b16 %v1918
        %v2895 = vpack.c.b16 %v2864, %v2863
        %v2896 = vpack.c.b16 %v2866, %v2865
        %v2897 = vpack.c.b16 %v2868, %v2867
        %v2898 = vpack.c.b16 %v2870, %v2869
        %v2899 = vpack.c.b16 %v2872, %v2871
        %v2900 = vpack.c.b16 %v2874, %v2873
        %v2901 = vpack.c.b16 %v2876, %v2875
        %v2902 = vpack.c.b16 %v2878, %v2877
        %v2903 = vpack.c.b16 %v2880, %v2879
        %v2904 = vpack.c.b16 %v2882, %v2881
        %v2905 = vpack.c.b16 %v2884, %v2883
        %v2906 = vpack.c.b16 %v2886, %v2885
        %v2907 = vpack.c.b16 %v2888, %v2887
        %v2908 = vpack.c.b16 %v2890, %v2889
        %v2909 = vpack.c.b16 %v2892, %v2891
        %v2910 = vpack.c.b16 %v2894, %v2893
        %2911 = vrot.lane.b32.xlu0 %v2895, 96
        %v2912 = vpop.permute.xlu0 %2911
        %2913 = vrot.lane.b32.xlu0 %v2896, 96
        %v2914 = vpop.permute.xlu0 %2913
        %2915 = vrot.lane.b32.xlu0 %v2897, 96
        %v2916 = vpop.permute.xlu0 %2915
        %2917 = vrot.lane.b32.xlu0 %v2898, 96
        %v2918 = vpop.permute.xlu0 %2917
        %2919 = vrot.lane.b32.xlu0 %v2899, 96
        %v2920 = vpop.permute.xlu0 %2919
        %2921 = vrot.lane.b32.xlu0 %v2900, 96
        %v2922 = vpop.permute.xlu0 %2921
        %2923 = vrot.lane.b32.xlu0 %v2901, 96
        %v2924 = vpop.permute.xlu0 %2923
        %2925 = vrot.lane.b32.xlu0 %v2902, 96
        %v2926 = vpop.permute.xlu0 %2925
        %2927 = vrot.lane.b32.xlu0 %v2903, 96
        %v2928 = vpop.permute.xlu0 %2927
        %2929 = vrot.lane.b32.xlu0 %v2904, 96
        %v2930 = vpop.permute.xlu0 %2929
        %2931 = vrot.lane.b32.xlu0 %v2905, 96
        %v2932 = vpop.permute.xlu0 %2931
        %2933 = vrot.lane.b32.xlu0 %v2906, 96
        %v2934 = vpop.permute.xlu0 %2933
        %2935 = vrot.lane.b32.xlu0 %v2907, 96
        %v2936 = vpop.permute.xlu0 %2935
        %2937 = vrot.lane.b32.xlu0 %v2908, 96
        %v2938 = vpop.permute.xlu0 %2937
        %2939 = vrot.lane.b32.xlu0 %v2909, 96
        %v2940 = vpop.permute.xlu0 %2939
        %2941 = vrot.lane.b32.xlu0 %v2910, 96
        %v2942 = vpop.permute.xlu0 %2941
        %v2975 = vunpack.c.l.b16 %v2079
        %v2976 = vunpack.c.l.b16 %v2080
        %v2977 = vunpack.c.l.b16 %v2081
        %v2978 = vunpack.c.l.b16 %v2082
        %v2979 = vunpack.c.l.b16 %v2083
        %v2980 = vunpack.c.l.b16 %v2084
        %v2981 = vunpack.c.l.b16 %v2085
        %v2982 = vunpack.c.l.b16 %v2086
        %v2983 = vunpack.c.l.b16 %v2087
        %v2984 = vunpack.c.l.b16 %v2088
        %v2985 = vunpack.c.l.b16 %v2089
        %v2986 = vunpack.c.l.b16 %v2090
        %v2987 = vunpack.c.l.b16 %v2091
        %v2988 = vunpack.c.l.b16 %v2092
        %v2989 = vunpack.c.l.b16 %v2093
        %v2990 = vunpack.c.l.b16 %v2094
        %v2991 = vunpack.c.l.b16 %v2095
        %v2992 = vunpack.c.l.b16 %v2096
        %v2993 = vunpack.c.l.b16 %v2097
        %v2994 = vunpack.c.l.b16 %v2098
        %v2995 = vunpack.c.l.b16 %v2099
        %v2996 = vunpack.c.l.b16 %v2100
        %v2997 = vunpack.c.l.b16 %v2101
        %v2998 = vunpack.c.l.b16 %v2102
        %v2999 = vunpack.c.l.b16 %v2103
        %v3000 = vunpack.c.l.b16 %v2104
        %v3001 = vunpack.c.l.b16 %v2105
        %v3002 = vunpack.c.l.b16 %v2106
        %v3003 = vunpack.c.l.b16 %v2107
        %v3004 = vunpack.c.l.b16 %v2108
        %v3005 = vunpack.c.l.b16 %v2109
        %v3006 = vunpack.c.l.b16 %v2110
        %v3007 = vpack.c.b16 %v2976, %v2975
        %v3008 = vpack.c.b16 %v2978, %v2977
        %v3009 = vpack.c.b16 %v2980, %v2979
        %v3010 = vpack.c.b16 %v2982, %v2981
        %v3011 = vpack.c.b16 %v2984, %v2983
        %v3012 = vpack.c.b16 %v2986, %v2985
        %v3013 = vpack.c.b16 %v2988, %v2987
        %v3014 = vpack.c.b16 %v2990, %v2989
        %v3015 = vpack.c.b16 %v2992, %v2991
        %v3016 = vpack.c.b16 %v2994, %v2993
        %v3017 = vpack.c.b16 %v2996, %v2995
        %v3018 = vpack.c.b16 %v2998, %v2997
        %v3019 = vpack.c.b16 %v3000, %v2999
        %v3020 = vpack.c.b16 %v3002, %v3001
        %v3021 = vpack.c.b16 %v3004, %v3003
        %v3022 = vpack.c.b16 %v3006, %v3005
        %vm3023 = vcmask 261120
        %v3026 = vsel %vm3023, %v2175, %v2272
        %v3029 = vsel %vm3023, %v2176, %v2274
        %v3032 = vsel %vm3023, %v2177, %v2276
        %v3035 = vsel %vm3023, %v2178, %v2278
        %v3038 = vsel %vm3023, %v2179, %v2280
        %v3041 = vsel %vm3023, %v2180, %v2282
        %v3044 = vsel %vm3023, %v2181, %v2284
        %v3047 = vsel %vm3023, %v2182, %v2286
        %v3050 = vsel %vm3023, %v2183, %v2288
        %v3053 = vsel %vm3023, %v2184, %v2290
        %v3056 = vsel %vm3023, %v2185, %v2292
        %v3059 = vsel %vm3023, %v2186, %v2294
        %v3062 = vsel %vm3023, %v2187, %v2296
        %v3065 = vsel %vm3023, %v2188, %v2298
        %v3068 = vsel %vm3023, %v2189, %v2300
        %v3071 = vsel %vm3023, %v2190, %v2302
        %vm3072 = vcmask 523264
        %v3074 = vsel %vm3072, %v3026, %v2384
        %v3076 = vsel %vm3072, %v3029, %v2386
        %v3078 = vsel %vm3072, %v3032, %v2388
        %v3080 = vsel %vm3072, %v3035, %v2390
        %v3082 = vsel %vm3072, %v3038, %v2392
        %v3084 = vsel %vm3072, %v3041, %v2394
        %v3086 = vsel %vm3072, %v3044, %v2396
        %v3088 = vsel %vm3072, %v3047, %v2398
        %v3090 = vsel %vm3072, %v3050, %v2400
        %v3092 = vsel %vm3072, %v3053, %v2402
        %v3094 = vsel %vm3072, %v3056, %v2404
        %v3096 = vsel %vm3072, %v3059, %v2406
        %v3098 = vsel %vm3072, %v3062, %v2408
        %v3100 = vsel %vm3072, %v3065, %v2410
        %v3102 = vsel %vm3072, %v3068, %v2412
        %v3104 = vsel %vm3072, %v3071, %v2414
        %vm3105 = vcmask 785408
        %v3107 = vsel %vm3105, %v3074, %v2496
        %v3110 = vsel %vm3105, %v3076, %v2498
        %v3113 = vsel %vm3105, %v3078, %v2500
        %v3116 = vsel %vm3105, %v3080, %v2502
        %v3119 = vsel %vm3105, %v3082, %v2504
        %v3122 = vsel %vm3105, %v3084, %v2506
        %v3125 = vsel %vm3105, %v3086, %v2508
        %v3128 = vsel %vm3105, %v3088, %v2510
        %v3131 = vsel %vm3105, %v3090, %v2512
        %v3134 = vsel %vm3105, %v3092, %v2514
        %v3137 = vsel %vm3105, %v3094, %v2516
        %v3140 = vsel %vm3105, %v3096, %v2518
        %v3143 = vsel %vm3105, %v3098, %v2520
        %v3146 = vsel %vm3105, %v3100, %v2522
        %v3149 = vsel %vm3105, %v3102, %v2524
        %v3152 = vsel %vm3105, %v3104, %v2526
        %v3156 = vsel %vm3023, %v2591, %v2688
        %v3159 = vsel %vm3023, %v2592, %v2690
        %v3162 = vsel %vm3023, %v2593, %v2692
        %v3165 = vsel %vm3023, %v2594, %v2694
        %v3168 = vsel %vm3023, %v2595, %v2696
        %v3171 = vsel %vm3023, %v2596, %v2698
        %v3174 = vsel %vm3023, %v2597, %v2700
        %v3177 = vsel %vm3023, %v2598, %v2702
        %v3180 = vsel %vm3023, %v2599, %v2704
        %v3183 = vsel %vm3023, %v2600, %v2706
        %v3186 = vsel %vm3023, %v2601, %v2708
        %v3189 = vsel %vm3023, %v2602, %v2710
        %v3192 = vsel %vm3023, %v2603, %v2712
        %v3195 = vsel %vm3023, %v2604, %v2714
        %v3198 = vsel %vm3023, %v2605, %v2716
        %v3201 = vsel %vm3023, %v2606, %v2718
        %v3203 = vsel %vm3072, %v3156, %v2800
        %v3205 = vsel %vm3072, %v3159, %v2802
        %v3207 = vsel %vm3072, %v3162, %v2804
        %v3209 = vsel %vm3072, %v3165, %v2806
        %v3211 = vsel %vm3072, %v3168, %v2808
        %v3213 = vsel %vm3072, %v3171, %v2810
        %v3215 = vsel %vm3072, %v3174, %v2812
        %v3217 = vsel %vm3072, %v3177, %v2814
        %v3219 = vsel %vm3072, %v3180, %v2816
        %v3221 = vsel %vm3072, %v3183, %v2818
        %v3223 = vsel %vm3072, %v3186, %v2820
        %v3225 = vsel %vm3072, %v3189, %v2822
        %v3227 = vsel %vm3072, %v3192, %v2824
        %v3229 = vsel %vm3072, %v3195, %v2826
        %v3231 = vsel %vm3072, %v3198, %v2828
        %v3233 = vsel %vm3072, %v3201, %v2830
        %v3235 = vsel %vm3105, %v3203, %v2912
        %v3238 = vsel %vm3105, %v3205, %v2914
        %v3241 = vsel %vm3105, %v3207, %v2916
        %v3244 = vsel %vm3105, %v3209, %v2918
        %v3247 = vsel %vm3105, %v3211, %v2920
        %v3250 = vsel %vm3105, %v3213, %v2922
        %v3253 = vsel %vm3105, %v3215, %v2924
        %v3256 = vsel %vm3105, %v3217, %v2926
        %v3259 = vsel %vm3105, %v3219, %v2928
        %v3262 = vsel %vm3105, %v3221, %v2930
        %v3265 = vsel %vm3105, %v3223, %v2932
        %v3268 = vsel %vm3105, %v3225, %v2934
        %v3271 = vsel %vm3105, %v3227, %v2936
        %v3274 = vsel %vm3105, %v3229, %v2938
        %v3277 = vsel %vm3105, %v3231, %v2940
        %v3280 = vsel %vm3105, %v3233, %v2942
        %v3282 = vperm.slane %v346, 0
        %v3319 = vunpack.c.l.b16 %v310
        %v3320 = vunpack.c.l.b16 %v311
        %v3321 = vunpack.c.l.b16 %v312
        %v3322 = vunpack.c.l.b16 %v313
        %v3323 = vunpack.c.l.b16 %v314
        %v3324 = vunpack.c.l.b16 %v315
        %v3325 = vunpack.c.l.b16 %v316
        %v3326 = vunpack.c.l.b16 %v317
        %v3327 = vunpack.c.l.b16 %v318
        %v3328 = vunpack.c.l.b16 %v319
        %v3329 = vunpack.c.l.b16 %v320
        %v3330 = vunpack.c.l.b16 %v321
        %v3331 = vunpack.c.l.b16 %v322
        %v3332 = vunpack.c.l.b16 %v323
        %v3333 = vunpack.c.l.b16 %v324
        %v3334 = vunpack.c.l.b16 %v325
        %v3335 = vunpack.c.l.b16 %v326
        %v3336 = vunpack.c.l.b16 %v327
        %v3337 = vunpack.c.l.b16 %v328
        %v3338 = vunpack.c.l.b16 %v329
        %v3339 = vunpack.c.l.b16 %v330
        %v3340 = vunpack.c.l.b16 %v331
        %v3341 = vunpack.c.l.b16 %v332
        %v3342 = vunpack.c.l.b16 %v333
        %v3343 = vunpack.c.l.b16 %v334
        %v3344 = vunpack.c.l.b16 %v335
        %v3345 = vunpack.c.l.b16 %v336
        %v3346 = vunpack.c.l.b16 %v337
        %v3347 = vunpack.c.l.b16 %v338
        %v3348 = vunpack.c.l.b16 %v339
        %v3349 = vunpack.c.l.b16 %v340
        %v3350 = vunpack.c.l.b16 %v341
        %v3351 = vunpack.c.l.b16 %v342
        %v3352 = vunpack.c.l.b16 %v343
        %v3353 = vunpack.c.l.b16 %v344
        %v3354 = vunpack.c.l.b16 %v345
        %v3355 = vpack.c.b16 %v3320, %v3319
        %v3356 = vpack.c.b16 %v3322, %v3321
        %v3357 = vpack.c.b16 %v3324, %v3323
        %v3358 = vpack.c.b16 %v3326, %v3325
        %v3359 = vpack.c.b16 %v3328, %v3327
        %v3360 = vpack.c.b16 %v3330, %v3329
        %v3361 = vpack.c.b16 %v3332, %v3331
        %v3362 = vpack.c.b16 %v3334, %v3333
        %v3363 = vpack.c.b16 %v3336, %v3335
        %v3364 = vpack.c.b16 %v3338, %v3337
        %v3365 = vpack.c.b16 %v3340, %v3339
        %v3366 = vpack.c.b16 %v3342, %v3341
        %v3367 = vpack.c.b16 %v3344, %v3343
        %v3368 = vpack.c.b16 %v3346, %v3345
        %v3369 = vpack.c.b16 %v3348, %v3347
        %v3370 = vpack.c.b16 %v3350, %v3349
        %v3371 = vpack.c.b16 %v3352, %v3351
        %v3372 = vpack.c.b16 %v3354, %v3353
        %v3392 = vsel %vm3023, %v3007, 0
        %v3395 = vsel %vm3023, %v3008, 0
        %v3398 = vsel %vm3023, %v3009, 0
        %v3401 = vsel %vm3023, %v3010, 0
        %v3404 = vsel %vm3023, %v3011, 0
        %v3407 = vsel %vm3023, %v3012, 0
        %v3410 = vsel %vm3023, %v3013, 0
        %v3413 = vsel %vm3023, %v3014, 0
        %v3416 = vsel %vm3023, %v3015, 0
        %v3419 = vsel %vm3023, %v3016, 0
        %v3422 = vsel %vm3023, %v3017, 0
        %v3425 = vsel %vm3023, %v3018, 0
        %v3428 = vsel %vm3023, %v3019, 0
        %v3431 = vsel %vm3023, %v3020, 0
        %v3434 = vsel %vm3023, %v3021, 0
        %v3437 = vsel %vm3023, %v3022, 0
        %3439 = vmatpush.bf16.msra.mxu0 %v3362
        %3440 = vmatpush.bf16.msra.mxu0 %v3361
        %3441 = vmatpush.bf16.msra.mxu0 %v3360
        %3442 = vmatpush.bf16.msra.mxu0 %v3359
        %3443 = vmatpush.bf16.msra.mxu0 %v3358
        %3444 = vmatpush.bf16.msra.mxu0 %v3357
        %3445 = vmatpush.bf16.msra.mxu0 %v3356
        %3446 = vmatpush.bf16.msra.mxu0 %v3355
        %3447 = vmatmul.bf16.gmra.mxu0 %v3107
        %v3448 = vpop.f32.mrf.mxu0
        %v3449 = vadd.f32 %v3282, %v3448
        %v3450 = vpop.f32.mrf.mxu0
        %v3451 = vadd.f32 %v3282, %v3450
        %3452 = vmatmul.bf16.gmra.mxu0 %v3110
        %v3453 = vpop.f32.mrf.mxu0
        %v3454 = vadd.f32 %v3282, %v3453
        %v3455 = vpop.f32.mrf.mxu0
        %v3456 = vadd.f32 %v3282, %v3455
        %3457 = vmatmul.bf16.gmra.mxu0 %v3113
        %v3458 = vpop.f32.mrf.mxu0
        %v3459 = vadd.f32 %v3282, %v3458
        %v3460 = vpop.f32.mrf.mxu0
        %v3461 = vadd.f32 %v3282, %v3460
        %3462 = vmatmul.bf16.gmra.mxu0 %v3116
        %v3463 = vpop.f32.mrf.mxu0
        %v3464 = vadd.f32 %v3282, %v3463
        %v3465 = vpop.f32.mrf.mxu0
        %v3466 = vadd.f32 %v3282, %v3465
        %3467 = vmatmul.bf16.gmra.mxu0 %v3119
        %v3468 = vpop.f32.mrf.mxu0
        %v3469 = vadd.f32 %v3282, %v3468
        %v3470 = vpop.f32.mrf.mxu0
        %v3471 = vadd.f32 %v3282, %v3470
        %3472 = vmatmul.bf16.gmra.mxu0 %v3122
        %v3473 = vpop.f32.mrf.mxu0
        %v3474 = vadd.f32 %v3282, %v3473
        %v3475 = vpop.f32.mrf.mxu0
        %v3476 = vadd.f32 %v3282, %v3475
        %3477 = vmatmul.bf16.gmra.mxu0 %v3125
        %v3478 = vpop.f32.mrf.mxu0
        %v3479 = vadd.f32 %v3282, %v3478
        %v3480 = vpop.f32.mrf.mxu0
        %v3481 = vadd.f32 %v3282, %v3480
        %3482 = vmatmul.bf16.gmra.mxu0 %v3128
        %v3483 = vpop.f32.mrf.mxu0
        %v3484 = vadd.f32 %v3282, %v3483
        %v3485 = vpop.f32.mrf.mxu0
        %v3486 = vadd.f32 %v3282, %v3485
        %3487 = vmatmul.bf16.gmra.mxu0 %v3131
        %v3488 = vpop.f32.mrf.mxu0
        %v3489 = vadd.f32 %v3282, %v3488
        %v3490 = vpop.f32.mrf.mxu0
        %v3491 = vadd.f32 %v3282, %v3490
        %3492 = vmatmul.bf16.gmra.mxu0 %v3134
        %v3493 = vpop.f32.mrf.mxu0
        %v3494 = vadd.f32 %v3282, %v3493
        %v3495 = vpop.f32.mrf.mxu0
        %v3496 = vadd.f32 %v3282, %v3495
        %3497 = vmatmul.bf16.gmra.mxu0 %v3137
        %v3498 = vpop.f32.mrf.mxu0
        %v3499 = vadd.f32 %v3282, %v3498
        %v3500 = vpop.f32.mrf.mxu0
        %v3501 = vadd.f32 %v3282, %v3500
        %3502 = vmatmul.bf16.gmra.mxu0 %v3140
        %v3503 = vpop.f32.mrf.mxu0
        %v3504 = vadd.f32 %v3282, %v3503
        %v3505 = vpop.f32.mrf.mxu0
        %v3506 = vadd.f32 %v3282, %v3505
        %3507 = vmatmul.bf16.gmra.mxu0 %v3143
        %v3508 = vpop.f32.mrf.mxu0
        %v3509 = vadd.f32 %v3282, %v3508
        %v3510 = vpop.f32.mrf.mxu0
        %v3511 = vadd.f32 %v3282, %v3510
        %3512 = vmatmul.bf16.gmra.mxu0 %v3146
        %v3513 = vpop.f32.mrf.mxu0
        %v3514 = vadd.f32 %v3282, %v3513
        %v3515 = vpop.f32.mrf.mxu0
        %v3516 = vadd.f32 %v3282, %v3515
        %3517 = vmatmul.bf16.gmra.mxu0 %v3149
        %v3518 = vpop.f32.mrf.mxu0
        %v3519 = vadd.f32 %v3282, %v3518
        %v3520 = vpop.f32.mrf.mxu0
        %v3521 = vadd.f32 %v3282, %v3520
        %3522 = vmatmul.bf16.gmra.mxu0 %v3152
        %v3523 = vpop.f32.mrf.mxu0
        %v3524 = vadd.f32 %v3282, %v3523
        %v3525 = vpop.f32.mrf.mxu0
        %v3526 = vadd.f32 %v3282, %v3525
        %3527 = vdwg.mxu0
        %3528 = vmatpush.bf16.msra.mxu0 %v3370
        %3529 = vmatpush.bf16.msra.mxu0 %v3369
        %3530 = vmatpush.bf16.msra.mxu0 %v3368
        %3531 = vmatpush.bf16.msra.mxu0 %v3367
        %3532 = vmatpush.bf16.msra.mxu0 %v3366
        %3533 = vmatpush.bf16.msra.mxu0 %v3365
        %3534 = vmatpush.bf16.msra.mxu0 %v3364
        %3535 = vmatpush.bf16.msra.mxu0 %v3363
        %3536 = vmatmul.bf16.gmra.mxu0 %v3235
        %v3537 = vpop.f32.mrf.mxu0
        %v3538 = vadd.f32 %v3449, %v3537
        %v3539 = vpop.f32.mrf.mxu0
        %v3540 = vadd.f32 %v3451, %v3539
        %3541 = vmatmul.bf16.gmra.mxu0 %v3238
        %v3542 = vpop.f32.mrf.mxu0
        %v3543 = vadd.f32 %v3454, %v3542
        %v3544 = vpop.f32.mrf.mxu0
        %v3545 = vadd.f32 %v3456, %v3544
        %3546 = vmatmul.bf16.gmra.mxu0 %v3241
        %v3547 = vpop.f32.mrf.mxu0
        %v3548 = vadd.f32 %v3459, %v3547
        %v3549 = vpop.f32.mrf.mxu0
        %v3550 = vadd.f32 %v3461, %v3549
        %3551 = vmatmul.bf16.gmra.mxu0 %v3244
        %v3552 = vpop.f32.mrf.mxu0
        %v3553 = vadd.f32 %v3464, %v3552
        %v3554 = vpop.f32.mrf.mxu0
        %v3555 = vadd.f32 %v3466, %v3554
        %3556 = vmatmul.bf16.gmra.mxu0 %v3247
        %v3557 = vpop.f32.mrf.mxu0
        %v3558 = vadd.f32 %v3469, %v3557
        %v3559 = vpop.f32.mrf.mxu0
        %v3560 = vadd.f32 %v3471, %v3559
        %3561 = vmatmul.bf16.gmra.mxu0 %v3250
        %v3562 = vpop.f32.mrf.mxu0
        %v3563 = vadd.f32 %v3474, %v3562
        %v3564 = vpop.f32.mrf.mxu0
        %v3565 = vadd.f32 %v3476, %v3564
        %3566 = vmatmul.bf16.gmra.mxu0 %v3253
        %v3567 = vpop.f32.mrf.mxu0
        %v3568 = vadd.f32 %v3479, %v3567
        %v3569 = vpop.f32.mrf.mxu0
        %v3570 = vadd.f32 %v3481, %v3569
        %3571 = vmatmul.bf16.gmra.mxu0 %v3256
        %v3572 = vpop.f32.mrf.mxu0
        %v3573 = vadd.f32 %v3484, %v3572
        %v3574 = vpop.f32.mrf.mxu0
        %v3575 = vadd.f32 %v3486, %v3574
        %3576 = vmatmul.bf16.gmra.mxu0 %v3259
        %v3577 = vpop.f32.mrf.mxu0
        %v3578 = vadd.f32 %v3489, %v3577
        %v3579 = vpop.f32.mrf.mxu0
        %v3580 = vadd.f32 %v3491, %v3579
        %3581 = vmatmul.bf16.gmra.mxu0 %v3262
        %v3582 = vpop.f32.mrf.mxu0
        %v3583 = vadd.f32 %v3494, %v3582
        %v3584 = vpop.f32.mrf.mxu0
        %v3585 = vadd.f32 %v3496, %v3584
        %3586 = vmatmul.bf16.gmra.mxu0 %v3265
        %v3587 = vpop.f32.mrf.mxu0
        %v3588 = vadd.f32 %v3499, %v3587
        %v3589 = vpop.f32.mrf.mxu0
        %v3590 = vadd.f32 %v3501, %v3589
        %3591 = vmatmul.bf16.gmra.mxu0 %v3268
        %v3592 = vpop.f32.mrf.mxu0
        %v3593 = vadd.f32 %v3504, %v3592
        %v3594 = vpop.f32.mrf.mxu0
        %v3595 = vadd.f32 %v3506, %v3594
        %3596 = vmatmul.bf16.gmra.mxu0 %v3271
        %v3597 = vpop.f32.mrf.mxu0
        %v3598 = vadd.f32 %v3509, %v3597
        %v3599 = vpop.f32.mrf.mxu0
        %v3600 = vadd.f32 %v3511, %v3599
        %3601 = vmatmul.bf16.gmra.mxu0 %v3274
        %v3602 = vpop.f32.mrf.mxu0
        %v3603 = vadd.f32 %v3514, %v3602
        %v3604 = vpop.f32.mrf.mxu0
        %v3605 = vadd.f32 %v3516, %v3604
        %3606 = vmatmul.bf16.gmra.mxu0 %v3277
        %v3607 = vpop.f32.mrf.mxu0
        %v3608 = vadd.f32 %v3519, %v3607
        %v3609 = vpop.f32.mrf.mxu0
        %v3610 = vadd.f32 %v3521, %v3609
        %3611 = vmatmul.bf16.gmra.mxu0 %v3280
        %v3612 = vpop.f32.mrf.mxu0
        %v3613 = vadd.f32 %v3524, %v3612
        %v3614 = vpop.f32.mrf.mxu0
        %v3615 = vadd.f32 %v3526, %v3614
        %3616 = vdwg.mxu0
        %3617 = vmatpush.bf16.msra.mxu0 0
        %3618 = vmatpush.bf16.msra.mxu0 0
        %3619 = vmatpush.bf16.msra.mxu0 0
        %3620 = vmatpush.bf16.msra.mxu0 0
        %3621 = vmatpush.bf16.msra.mxu0 0
        %3622 = vmatpush.bf16.msra.mxu0 0
        %3623 = vmatpush.bf16.msra.mxu0 %v3372
        %3624 = vmatpush.bf16.msra.mxu0 %v3371
        %3625 = vmatmul.bf16.gmra.mxu0 %v3392
        %v3626 = vpop.f32.mrf.mxu0
        %v3627 = vadd.f32 %v3538, %v3626
        %v3628 = vpop.f32.mrf.mxu0
        %v3629 = vadd.f32 %v3540, %v3628
        %3630 = vmatmul.bf16.gmra.mxu0 %v3395
        %v3631 = vpop.f32.mrf.mxu0
        %v3632 = vadd.f32 %v3543, %v3631
        %v3633 = vpop.f32.mrf.mxu0
        %v3634 = vadd.f32 %v3545, %v3633
        %3635 = vmatmul.bf16.gmra.mxu0 %v3398
        %v3636 = vpop.f32.mrf.mxu0
        %v3637 = vadd.f32 %v3548, %v3636
        %v3638 = vpop.f32.mrf.mxu0
        %v3639 = vadd.f32 %v3550, %v3638
        %3640 = vmatmul.bf16.gmra.mxu0 %v3401
        %v3641 = vpop.f32.mrf.mxu0
        %v3642 = vadd.f32 %v3553, %v3641
        %v3643 = vpop.f32.mrf.mxu0
        %v3644 = vadd.f32 %v3555, %v3643
        %3645 = vmatmul.bf16.gmra.mxu0 %v3404
        %v3646 = vpop.f32.mrf.mxu0
        %v3647 = vadd.f32 %v3558, %v3646
        %v3648 = vpop.f32.mrf.mxu0
        %v3649 = vadd.f32 %v3560, %v3648
        %3650 = vmatmul.bf16.gmra.mxu0 %v3407
        %v3651 = vpop.f32.mrf.mxu0
        %v3652 = vadd.f32 %v3563, %v3651
        %v3653 = vpop.f32.mrf.mxu0
        %v3654 = vadd.f32 %v3565, %v3653
        %3655 = vmatmul.bf16.gmra.mxu0 %v3410
        %v3656 = vpop.f32.mrf.mxu0
        %v3657 = vadd.f32 %v3568, %v3656
        %v3658 = vpop.f32.mrf.mxu0
        %v3659 = vadd.f32 %v3570, %v3658
        %3660 = vmatmul.bf16.gmra.mxu0 %v3413
        %v3661 = vpop.f32.mrf.mxu0
        %v3662 = vadd.f32 %v3573, %v3661
        %v3663 = vpop.f32.mrf.mxu0
        %v3664 = vadd.f32 %v3575, %v3663
        %3665 = vmatmul.bf16.gmra.mxu0 %v3416
        %v3666 = vpop.f32.mrf.mxu0
        %v3667 = vadd.f32 %v3578, %v3666
        %v3668 = vpop.f32.mrf.mxu0
        %v3669 = vadd.f32 %v3580, %v3668
        %3670 = vmatmul.bf16.gmra.mxu0 %v3419
        %v3671 = vpop.f32.mrf.mxu0
        %v3672 = vadd.f32 %v3583, %v3671
        %v3673 = vpop.f32.mrf.mxu0
        %v3674 = vadd.f32 %v3585, %v3673
        %3675 = vmatmul.bf16.gmra.mxu0 %v3422
        %v3676 = vpop.f32.mrf.mxu0
        %v3677 = vadd.f32 %v3588, %v3676
        %v3678 = vpop.f32.mrf.mxu0
        %v3679 = vadd.f32 %v3590, %v3678
        %3680 = vmatmul.bf16.gmra.mxu0 %v3425
        %v3681 = vpop.f32.mrf.mxu0
        %v3682 = vadd.f32 %v3593, %v3681
        %v3683 = vpop.f32.mrf.mxu0
        %v3684 = vadd.f32 %v3595, %v3683
        %3685 = vmatmul.bf16.gmra.mxu0 %v3428
        %v3686 = vpop.f32.mrf.mxu0
        %v3687 = vadd.f32 %v3598, %v3686
        %v3688 = vpop.f32.mrf.mxu0
        %v3689 = vadd.f32 %v3600, %v3688
        %3690 = vmatmul.bf16.gmra.mxu0 %v3431
        %v3691 = vpop.f32.mrf.mxu0
        %v3692 = vadd.f32 %v3603, %v3691
        %v3693 = vpop.f32.mrf.mxu0
        %v3694 = vadd.f32 %v3605, %v3693
        %3695 = vmatmul.bf16.gmra.mxu0 %v3434
        %v3696 = vpop.f32.mrf.mxu0
        %v3697 = vadd.f32 %v3608, %v3696
        %v3698 = vpop.f32.mrf.mxu0
        %v3699 = vadd.f32 %v3610, %v3698
        %3700 = vmatmul.bf16.gmra.mxu0 %v3437
        %v3701 = vpop.f32.mrf.mxu0
        %v3702 = vadd.f32 %v3613, %v3701
        %v3703 = vpop.f32.mrf.mxu0
        %v3704 = vadd.f32 %v3615, %v3703
        %3705 = vdwg.mxu0
        %v3706 = vmax.f32 %v3627, 0.0
        %v3707 = vmax.f32 %v3629, 0.0
        %v3708 = vmax.f32 %v3632, 0.0
        %v3709 = vmax.f32 %v3634, 0.0
        %v3710 = vmax.f32 %v3637, 0.0
        %v3711 = vmax.f32 %v3639, 0.0
        %v3712 = vmax.f32 %v3642, 0.0
        %v3713 = vmax.f32 %v3644, 0.0
        %v3714 = vmax.f32 %v3647, 0.0
        %v3715 = vmax.f32 %v3649, 0.0
        %v3716 = vmax.f32 %v3652, 0.0
        %v3717 = vmax.f32 %v3654, 0.0
        %v3718 = vmax.f32 %v3657, 0.0
        %v3719 = vmax.f32 %v3659, 0.0
        %v3720 = vmax.f32 %v3662, 0.0
        %v3721 = vmax.f32 %v3664, 0.0
        %v3722 = vmax.f32 %v3667, 0.0
        %v3723 = vmax.f32 %v3669, 0.0
        %v3724 = vmax.f32 %v3672, 0.0
        %v3725 = vmax.f32 %v3674, 0.0
        %v3726 = vmax.f32 %v3677, 0.0
        %v3727 = vmax.f32 %v3679, 0.0
        %v3728 = vmax.f32 %v3682, 0.0
        %v3729 = vmax.f32 %v3684, 0.0
        %v3730 = vmax.f32 %v3687, 0.0
        %v3731 = vmax.f32 %v3689, 0.0
        %v3732 = vmax.f32 %v3692, 0.0
        %v3733 = vmax.f32 %v3694, 0.0
        %v3734 = vmax.f32 %v3697, 0.0
        %v3735 = vmax.f32 %v3699, 0.0
        %v3736 = vmax.f32 %v3702, 0.0
        %v3737 = vmax.f32 %v3704, 0.0
        %s3738 = scalar_lea.vmem %s1, 144
        %v3739 = vld [vmem:[%s3738] sm:$0xf]
        %v3740 = vld [vmem:[%s3738 + $0x4] sm:$0xf]
        %v3741 = vld [vmem:[%s3738 + $0x8] sm:$0xf]
        %v3742 = vld [vmem:[%s3738 + $0xc] sm:$0xf]
        %v3743 = vld [vmem:[%s3738 + $0x10] sm:$0xf]
        %v3744 = vld [vmem:[%s3738 + $0x14] sm:$0xf]
        %v3745 = vld [vmem:[%s3738 + $0x18] sm:$0xf]
        %v3746 = vld [vmem:[%s3738 + $0x1c] sm:$0xf]
        %v3747 = vld [vmem:[%s3738 + $0x20] sm:$0xf]
        %v3748 = vld [vmem:[%s3738 + $0x24] sm:$0xf]
        %v3749 = vld [vmem:[%s3738 + $0x28] sm:$0xf]
        %v3750 = vld [vmem:[%s3738 + $0x2c] sm:$0xf]
        %v3751 = vld [vmem:[%s3738 + $0x30] sm:$0xf]
        %v3752 = vld [vmem:[%s3738 + $0x34] sm:$0xf]
        %v3753 = vld [vmem:[%s3738 + $0x38] sm:$0xf]
        %v3754 = vld [vmem:[%s3738 + $0x3c] sm:$0xf]
        %v3755 = vld [vmem:[%s3738 + $0x40] sm:$0xf]
        %v3756 = vld [vmem:[%s3738 + $0x44] sm:$0xf]
        %v3757 = vld [vmem:[%s3738 + $0x48] sm:$0xf]
        %v3758 = vld [vmem:[%s3738 + $0x4c] sm:$0xf]
        %v3759 = vld [vmem:[%s3738 + $0x50] sm:$0xf]
        %v3760 = vld [vmem:[%s3738 + $0x54] sm:$0xf]
        %v3761 = vld [vmem:[%s3738 + $0x58] sm:$0xf]
        %v3762 = vld [vmem:[%s3738 + $0x5c] sm:$0xf]
        %v3763 = vld [vmem:[%s3738 + $0x60] sm:$0xf]
        %v3764 = vld [vmem:[%s3738 + $0x64] sm:$0xf]
        %v3765 = vld [vmem:[%s3738 + $0x68] sm:$0xf]
        %v3766 = vld [vmem:[%s3738 + $0x6c] sm:$0xf]
        %v3767 = vld [vmem:[%s3738 + $0x70] sm:$0xf]
        %v3768 = vld [vmem:[%s3738 + $0x74] sm:$0xf]
        %v3769 = vld [vmem:[%s3738 + $0x78] sm:$0xf]
        %v3770 = vld [vmem:[%s3738 + $0x7c] sm:$0xf]
        %v3771 = vld [vmem:[%s3738 + $0x80] sm:$0xf]
        %v3772 = vld [vmem:[%s3738 + $0x84] sm:$0xf]
        %v3773 = vld [vmem:[%s3738 + $0x88] sm:$0xf]
        %v3774 = vld [vmem:[%s3738 + $0x8c] sm:$0xf]
        %v3775 = vld [vmem:[%s3 + $0x1] sm:$0x1]
        %v3776 = vrot.slane %v3706, 7
        %v3777 = vrot.slane %v3707, 7
        %v3778 = vrot.slane %v3708, 7
        %v3779 = vrot.slane %v3709, 7
        %v3780 = vrot.slane %v3710, 7
        %v3781 = vrot.slane %v3711, 7
        %v3782 = vrot.slane %v3712, 7
        %v3783 = vrot.slane %v3713, 7
        %v3784 = vrot.slane %v3714, 7
        %v3785 = vrot.slane %v3715, 7
        %v3786 = vrot.slane %v3716, 7
        %v3787 = vrot.slane %v3717, 7
        %v3788 = vrot.slane %v3718, 7
        %v3789 = vrot.slane %v3719, 7
        %v3790 = vrot.slane %v3720, 7
        %v3791 = vrot.slane %v3721, 7
        %v3792 = vrot.slane %v3722, 7
        %v3793 = vrot.slane %v3723, 7
        %v3794 = vrot.slane %v3724, 7
        %v3795 = vrot.slane %v3725, 7
        %v3796 = vrot.slane %v3726, 7
        %v3797 = vrot.slane %v3727, 7
        %v3798 = vrot.slane %v3728, 7
        %v3799 = vrot.slane %v3729, 7
        %v3800 = vrot.slane %v3730, 7
        %v3801 = vrot.slane %v3731, 7
        %v3802 = vrot.slane %v3732, 7
        %v3803 = vrot.slane %v3733, 7
        %v3804 = vrot.slane %v3734, 7
        %v3805 = vrot.slane %v3735, 7
        %v3806 = vrot.slane %v3736, 7
        %v3807 = vrot.slane %v3737, 7
        %v3808 = vsel %vm413, %v3806, %v3807
        %v3809 = vsel %vm413, %v3805, %v3806
        %v3810 = vsel %vm413, %v3804, %v3805
        %v3811 = vsel %vm413, %v3803, %v3804
        %v3812 = vsel %vm413, %v3802, %v3803
        %v3813 = vsel %vm413, %v3801, %v3802
        %v3814 = vsel %vm413, %v3800, %v3801
        %v3815 = vsel %vm413, %v3799, %v3800
        %v3816 = vsel %vm413, %v3798, %v3799
        %v3817 = vsel %vm413, %v3797, %v3798
        %v3818 = vsel %vm413, %v3796, %v3797
        %v3819 = vsel %vm413, %v3795, %v3796
        %v3820 = vsel %vm413, %v3794, %v3795
        %v3821 = vsel %vm413, %v3793, %v3794
        %v3822 = vsel %vm413, %v3792, %v3793
        %v3823 = vsel %vm413, %v3791, %v3792
        %v3824 = vsel %vm413, %v3790, %v3791
        %v3825 = vsel %vm413, %v3789, %v3790
        %v3826 = vsel %vm413, %v3788, %v3789
        %v3827 = vsel %vm413, %v3787, %v3788
        %v3828 = vsel %vm413, %v3786, %v3787
        %v3829 = vsel %vm413, %v3785, %v3786
        %v3830 = vsel %vm413, %v3784, %v3785
        %v3831 = vsel %vm413, %v3783, %v3784
        %v3832 = vsel %vm413, %v3782, %v3783
        %v3833 = vsel %vm413, %v3781, %v3782
        %v3834 = vsel %vm413, %v3780, %v3781
        %v3835 = vsel %vm413, %v3779, %v3780
        %v3836 = vsel %vm413, %v3778, %v3779
        %v3837 = vsel %vm413, %v3777, %v3778
        %v3838 = vsel %vm413, %v3776, %v3777
        %v3839 = vsel %vm413, %v3807, %v3776
        %v3840 = vmul.f32 %v3809, %v449
        %v3841 = vmul.f32 %v3808, %v454
        %v3842 = vmul.f32 %v3839, %v459
        %v3843 = vmul.f32 %v3838, %v464
        %v3844 = vmul.f32 %v3837, %v469
        %v3845 = vmul.f32 %v3836, %v474
        %v3846 = vmul.f32 %v3835, %v479
        %v3847 = vmul.f32 %v3834, %v484
        %v3848 = vmul.f32 %v3833, %v489
        %v3849 = vmul.f32 %v3832, %v494
        %v3850 = vmul.f32 %v3831, %v499
        %v3851 = vmul.f32 %v3830, %v504
        %v3852 = vmul.f32 %v3829, %v509
        %v3853 = vmul.f32 %v3828, %v514
        %v3854 = vmul.f32 %v3827, %v519
        %v3855 = vmul.f32 %v3826, %v524
        %v3856 = vmul.f32 %v3825, %v529
        %v3857 = vmul.f32 %v3824, %v534
        %v3858 = vmul.f32 %v3823, %v539
        %v3859 = vmul.f32 %v3822, %v544
        %v3860 = vmul.f32 %v3821, %v549
        %v3861 = vmul.f32 %v3820, %v554
        %v3862 = vmul.f32 %v3819, %v559
        %v3863 = vmul.f32 %v3818, %v564
        %v3864 = vmul.f32 %v3817, %v569
        %v3865 = vmul.f32 %v3816, %v574
        %v3866 = vmul.f32 %v3815, %v579
        %v3867 = vmul.f32 %v3814, %v584
        %v3868 = vmul.f32 %v3813, %v589
        %v3869 = vmul.f32 %v3812, %v594
        %v3870 = vmul.f32 %v3811, %v599
        %v3871 = vmul.f32 %v3810, %v604
        %v3872 = vpack.c.bf16 %v3840, %v3840
        %v3873 = vpack.c.bf16 %v3841, %v3841
        %v3874 = vpack.c.bf16 %v3842, %v3842
        %v3875 = vpack.c.bf16 %v3843, %v3843
        %v3876 = vpack.c.bf16 %v3844, %v3844
        %v3877 = vpack.c.bf16 %v3845, %v3845
        %v3878 = vpack.c.bf16 %v3846, %v3846
        %v3879 = vpack.c.bf16 %v3847, %v3847
        %v3880 = vpack.c.bf16 %v3848, %v3848
        %v3881 = vpack.c.bf16 %v3849, %v3849
        %v3882 = vpack.c.bf16 %v3850, %v3850
        %v3883 = vpack.c.bf16 %v3851, %v3851
        %v3884 = vpack.c.bf16 %v3852, %v3852
        %v3885 = vpack.c.bf16 %v3853, %v3853
        %v3886 = vpack.c.bf16 %v3854, %v3854
        %v3887 = vpack.c.bf16 %v3855, %v3855
        %v3888 = vpack.c.bf16 %v3856, %v3856
        %v3889 = vpack.c.bf16 %v3857, %v3857
        %v3890 = vpack.c.bf16 %v3858, %v3858
        %v3891 = vpack.c.bf16 %v3859, %v3859
        %v3892 = vpack.c.bf16 %v3860, %v3860
        %v3893 = vpack.c.bf16 %v3861, %v3861
        %v3894 = vpack.c.bf16 %v3862, %v3862
        %v3895 = vpack.c.bf16 %v3863, %v3863
        %v3896 = vpack.c.bf16 %v3864, %v3864
        %v3897 = vpack.c.bf16 %v3865, %v3865
        %v3898 = vpack.c.bf16 %v3866, %v3866
        %v3899 = vpack.c.bf16 %v3867, %v3867
        %v3900 = vpack.c.bf16 %v3868, %v3868
        %v3901 = vpack.c.bf16 %v3869, %v3869
        %v3902 = vpack.c.bf16 %v3870, %v3870
        %v3903 = vpack.c.bf16 %v3871, %v3871
        %v3904 = vmul.f32 %v3736, %v672
        %v3905 = vmul.f32 %v3737, %v676
        %v3906 = vmul.f32 %v3706, %v680
        %v3907 = vmul.f32 %v3707, %v684
        %v3908 = vmul.f32 %v3708, %v688
        %v3909 = vmul.f32 %v3709, %v692
        %v3910 = vmul.f32 %v3710, %v696
        %v3911 = vmul.f32 %v3711, %v700
        %v3912 = vmul.f32 %v3712, %v704
        %v3913 = vmul.f32 %v3713, %v708
        %v3914 = vmul.f32 %v3714, %v712
        %v3915 = vmul.f32 %v3715, %v716
        %v3916 = vmul.f32 %v3716, %v720
        %v3917 = vmul.f32 %v3717, %v724
        %v3918 = vmul.f32 %v3718, %v728
        %v3919 = vmul.f32 %v3719, %v732
        %v3920 = vmul.f32 %v3720, %v736
        %v3921 = vmul.f32 %v3721, %v740
        %v3922 = vmul.f32 %v3722, %v744
        %v3923 = vmul.f32 %v3723, %v748
        %v3924 = vmul.f32 %v3724, %v752
        %v3925 = vmul.f32 %v3725, %v756
        %v3926 = vmul.f32 %v3726, %v760
        %v3927 = vmul.f32 %v3727, %v764
        %v3928 = vmul.f32 %v3728, %v768
        %v3929 = vmul.f32 %v3729, %v772
        %v3930 = vmul.f32 %v3730, %v776
        %v3931 = vmul.f32 %v3731, %v780
        %v3932 = vmul.f32 %v3732, %v784
        %v3933 = vmul.f32 %v3733, %v788
        %v3934 = vmul.f32 %v3734, %v792
        %v3935 = vmul.f32 %v3735, %v796
        %v3936 = vpack.c.bf16 %v3904, %v3904
        %v3937 = vpack.c.bf16 %v3905, %v3905
        %v3938 = vpack.c.bf16 %v3906, %v3906
        %v3939 = vpack.c.bf16 %v3907, %v3907
        %v3940 = vpack.c.bf16 %v3908, %v3908
        %v3941 = vpack.c.bf16 %v3909, %v3909
        %v3942 = vpack.c.bf16 %v3910, %v3910
        %v3943 = vpack.c.bf16 %v3911, %v3911
        %v3944 = vpack.c.bf16 %v3912, %v3912
        %v3945 = vpack.c.bf16 %v3913, %v3913
        %v3946 = vpack.c.bf16 %v3914, %v3914
        %v3947 = vpack.c.bf16 %v3915, %v3915
        %v3948 = vpack.c.bf16 %v3916, %v3916
        %v3949 = vpack.c.bf16 %v3917, %v3917
        %v3950 = vpack.c.bf16 %v3918, %v3918
        %v3951 = vpack.c.bf16 %v3919, %v3919
        %v3952 = vpack.c.bf16 %v3920, %v3920
        %v3953 = vpack.c.bf16 %v3921, %v3921
        %v3954 = vpack.c.bf16 %v3922, %v3922
        %v3955 = vpack.c.bf16 %v3923, %v3923
        %v3956 = vpack.c.bf16 %v3924, %v3924
        %v3957 = vpack.c.bf16 %v3925, %v3925
        %v3958 = vpack.c.bf16 %v3926, %v3926
        %v3959 = vpack.c.bf16 %v3927, %v3927
        %v3960 = vpack.c.bf16 %v3928, %v3928
        %v3961 = vpack.c.bf16 %v3929, %v3929
        %v3962 = vpack.c.bf16 %v3930, %v3930
        %v3963 = vpack.c.bf16 %v3931, %v3931
        %v3964 = vpack.c.bf16 %v3932, %v3932
        %v3965 = vpack.c.bf16 %v3933, %v3933
        %v3966 = vpack.c.bf16 %v3934, %v3934
        %v3967 = vpack.c.bf16 %v3935, %v3935
        %v3968 = vrot.slane %v3706, 1
        %v3969 = vrot.slane %v3707, 1
        %v3970 = vrot.slane %v3708, 1
        %v3971 = vrot.slane %v3709, 1
        %v3972 = vrot.slane %v3710, 1
        %v3973 = vrot.slane %v3711, 1
        %v3974 = vrot.slane %v3712, 1
        %v3975 = vrot.slane %v3713, 1
        %v3976 = vrot.slane %v3714, 1
        %v3977 = vrot.slane %v3715, 1
        %v3978 = vrot.slane %v3716, 1
        %v3979 = vrot.slane %v3717, 1
        %v3980 = vrot.slane %v3718, 1
        %v3981 = vrot.slane %v3719, 1
        %v3982 = vrot.slane %v3720, 1
        %v3983 = vrot.slane %v3721, 1
        %v3984 = vrot.slane %v3722, 1
        %v3985 = vrot.slane %v3723, 1
        %v3986 = vrot.slane %v3724, 1
        %v3987 = vrot.slane %v3725, 1
        %v3988 = vrot.slane %v3726, 1
        %v3989 = vrot.slane %v3727, 1
        %v3990 = vrot.slane %v3728, 1
        %v3991 = vrot.slane %v3729, 1
        %v3992 = vrot.slane %v3730, 1
        %v3993 = vrot.slane %v3731, 1
        %v3994 = vrot.slane %v3732, 1
        %v3995 = vrot.slane %v3733, 1
        %v3996 = vrot.slane %v3734, 1
        %v3997 = vrot.slane %v3735, 1
        %v3998 = vrot.slane %v3736, 1
        %v3999 = vrot.slane %v3737, 1
        %v4000 = vsel %vm894, %v3998, %v3999
        %v4001 = vsel %vm894, %v3997, %v3998
        %v4002 = vsel %vm894, %v3996, %v3997
        %v4003 = vsel %vm894, %v3995, %v3996
        %v4004 = vsel %vm894, %v3994, %v3995
        %v4005 = vsel %vm894, %v3993, %v3994
        %v4006 = vsel %vm894, %v3992, %v3993
        %v4007 = vsel %vm894, %v3991, %v3992
        %v4008 = vsel %vm894, %v3990, %v3991
        %v4009 = vsel %vm894, %v3989, %v3990
        %v4010 = vsel %vm894, %v3988, %v3989
        %v4011 = vsel %vm894, %v3987, %v3988
        %v4012 = vsel %vm894, %v3986, %v3987
        %v4013 = vsel %vm894, %v3985, %v3986
        %v4014 = vsel %vm894, %v3984, %v3985
        %v4015 = vsel %vm894, %v3983, %v3984
        %v4016 = vsel %vm894, %v3982, %v3983
        %v4017 = vsel %vm894, %v3981, %v3982
        %v4018 = vsel %vm894, %v3980, %v3981
        %v4019 = vsel %vm894, %v3979, %v3980
        %v4020 = vsel %vm894, %v3978, %v3979
        %v4021 = vsel %vm894, %v3977, %v3978
        %v4022 = vsel %vm894, %v3976, %v3977
        %v4023 = vsel %vm894, %v3975, %v3976
        %v4024 = vsel %vm894, %v3974, %v3975
        %v4025 = vsel %vm894, %v3973, %v3974
        %v4026 = vsel %vm894, %v3972, %v3973
        %v4027 = vsel %vm894, %v3971, %v3972
        %v4028 = vsel %vm894, %v3970, %v3971
        %v4029 = vsel %vm894, %v3969, %v3970
        %v4030 = vsel %vm894, %v3968, %v3969
        %v4031 = vsel %vm894, %v3999, %v3968
        %v4032 = vmul.f32 %v4000, %v929
        %v4033 = vmul.f32 %v4031, %v933
        %v4034 = vmul.f32 %v4030, %v937
        %v4035 = vmul.f32 %v4029, %v941
        %v4036 = vmul.f32 %v4028, %v945
        %v4037 = vmul.f32 %v4027, %v949
        %v4038 = vmul.f32 %v4026, %v953
        %v4039 = vmul.f32 %v4025, %v957
        %v4040 = vmul.f32 %v4024, %v961
        %v4041 = vmul.f32 %v4023, %v965
        %v4042 = vmul.f32 %v4022, %v969
        %v4043 = vmul.f32 %v4021, %v973
        %v4044 = vmul.f32 %v4020, %v977
        %v4045 = vmul.f32 %v4019, %v981
        %v4046 = vmul.f32 %v4018, %v985
        %v4047 = vmul.f32 %v4017, %v989
        %v4048 = vmul.f32 %v4016, %v993
        %v4049 = vmul.f32 %v4015, %v997
        %v4050 = vmul.f32 %v4014, %v1001
        %v4051 = vmul.f32 %v4013, %v1005
        %v4052 = vmul.f32 %v4012, %v1009
        %v4053 = vmul.f32 %v4011, %v1013
        %v4054 = vmul.f32 %v4010, %v1017
        %v4055 = vmul.f32 %v4009, %v1021
        %v4056 = vmul.f32 %v4008, %v1025
        %v4057 = vmul.f32 %v4007, %v1029
        %v4058 = vmul.f32 %v4006, %v1033
        %v4059 = vmul.f32 %v4005, %v1037
        %v4060 = vmul.f32 %v4004, %v1041
        %v4061 = vmul.f32 %v4003, %v1045
        %v4062 = vmul.f32 %v4002, %v1049
        %v4063 = vmul.f32 %v4001, %v1053
        %v4064 = vpack.c.bf16 %v4032, %v4032
        %v4065 = vpack.c.bf16 %v4033, %v4033
        %v4066 = vpack.c.bf16 %v4034, %v4034
        %v4067 = vpack.c.bf16 %v4035, %v4035
        %v4068 = vpack.c.bf16 %v4036, %v4036
        %v4069 = vpack.c.bf16 %v4037, %v4037
        %v4070 = vpack.c.bf16 %v4038, %v4038
        %v4071 = vpack.c.bf16 %v4039, %v4039
        %v4072 = vpack.c.bf16 %v4040, %v4040
        %v4073 = vpack.c.bf16 %v4041, %v4041
        %v4074 = vpack.c.bf16 %v4042, %v4042
        %v4075 = vpack.c.bf16 %v4043, %v4043
        %v4076 = vpack.c.bf16 %v4044, %v4044
        %v4077 = vpack.c.bf16 %v4045, %v4045
        %v4078 = vpack.c.bf16 %v4046, %v4046
        %v4079 = vpack.c.bf16 %v4047, %v4047
        %v4080 = vpack.c.bf16 %v4048, %v4048
        %v4081 = vpack.c.bf16 %v4049, %v4049
        %v4082 = vpack.c.bf16 %v4050, %v4050
        %v4083 = vpack.c.bf16 %v4051, %v4051
        %v4084 = vpack.c.bf16 %v4052, %v4052
        %v4085 = vpack.c.bf16 %v4053, %v4053
        %v4086 = vpack.c.bf16 %v4054, %v4054
        %v4087 = vpack.c.bf16 %v4055, %v4055
        %v4088 = vpack.c.bf16 %v4056, %v4056
        %v4089 = vpack.c.bf16 %v4057, %v4057
        %v4090 = vpack.c.bf16 %v4058, %v4058
        %v4091 = vpack.c.bf16 %v4059, %v4059
        %v4092 = vpack.c.bf16 %v4060, %v4060
        %v4093 = vpack.c.bf16 %v4061, %v4061
        %v4094 = vpack.c.bf16 %v4062, %v4062
        %v4095 = vpack.c.bf16 %v4063, %v4063
        %v4096 = vmul.f32 %v3839, %v1121
        %v4097 = vmul.f32 %v3838, %v1125
        %v4098 = vmul.f32 %v3837, %v1129
        %v4099 = vmul.f32 %v3836, %v1133
        %v4100 = vmul.f32 %v3835, %v1137
        %v4101 = vmul.f32 %v3834, %v1141
        %v4102 = vmul.f32 %v3833, %v1145
        %v4103 = vmul.f32 %v3832, %v1149
        %v4104 = vmul.f32 %v3831, %v1153
        %v4105 = vmul.f32 %v3830, %v1157
        %v4106 = vmul.f32 %v3829, %v1161
        %v4107 = vmul.f32 %v3828, %v1165
        %v4108 = vmul.f32 %v3827, %v1169
        %v4109 = vmul.f32 %v3826, %v1173
        %v4110 = vmul.f32 %v3825, %v1177
        %v4111 = vmul.f32 %v3824, %v1181
        %v4112 = vmul.f32 %v3823, %v1185
        %v4113 = vmul.f32 %v3822, %v1189
        %v4114 = vmul.f32 %v3821, %v1193
        %v4115 = vmul.f32 %v3820, %v1197
        %v4116 = vmul.f32 %v3819, %v1201
        %v4117 = vmul.f32 %v3818, %v1205
        %v4118 = vmul.f32 %v3817, %v1209
        %v4119 = vmul.f32 %v3816, %v1213
        %v4120 = vmul.f32 %v3815, %v1217
        %v4121 = vmul.f32 %v3814, %v1221
        %v4122 = vmul.f32 %v3813, %v1225
        %v4123 = vmul.f32 %v3812, %v1229
        %v4124 = vmul.f32 %v3811, %v1233
        %v4125 = vmul.f32 %v3810, %v1237
        %v4126 = vmul.f32 %v3809, %v1241
        %v4127 = vmul.f32 %v3808, %v1245
        %v4128 = vpack.c.bf16 %v4096, %v4096
        %v4129 = vpack.c.bf16 %v4097, %v4097
        %v4130 = vpack.c.bf16 %v4098, %v4098
        %v4131 = vpack.c.bf16 %v4099, %v4099
        %v4132 = vpack.c.bf16 %v4100, %v4100
        %v4133 = vpack.c.bf16 %v4101, %v4101
        %v4134 = vpack.c.bf16 %v4102, %v4102
        %v4135 = vpack.c.bf16 %v4103, %v4103
        %v4136 = vpack.c.bf16 %v4104, %v4104
        %v4137 = vpack.c.bf16 %v4105, %v4105
        %v4138 = vpack.c.bf16 %v4106, %v4106
        %v4139 = vpack.c.bf16 %v4107, %v4107
        %v4140 = vpack.c.bf16 %v4108, %v4108
        %v4141 = vpack.c.bf16 %v4109, %v4109
        %v4142 = vpack.c.bf16 %v4110, %v4110
        %v4143 = vpack.c.bf16 %v4111, %v4111
        %v4144 = vpack.c.bf16 %v4112, %v4112
        %v4145 = vpack.c.bf16 %v4113, %v4113
        %v4146 = vpack.c.bf16 %v4114, %v4114
        %v4147 = vpack.c.bf16 %v4115, %v4115
        %v4148 = vpack.c.bf16 %v4116, %v4116
        %v4149 = vpack.c.bf16 %v4117, %v4117
        %v4150 = vpack.c.bf16 %v4118, %v4118
        %v4151 = vpack.c.bf16 %v4119, %v4119
        %v4152 = vpack.c.bf16 %v4120, %v4120
        %v4153 = vpack.c.bf16 %v4121, %v4121
        %v4154 = vpack.c.bf16 %v4122, %v4122
        %v4155 = vpack.c.bf16 %v4123, %v4123
        %v4156 = vpack.c.bf16 %v4124, %v4124
        %v4157 = vpack.c.bf16 %v4125, %v4125
        %v4158 = vpack.c.bf16 %v4126, %v4126
        %v4159 = vpack.c.bf16 %v4127, %v4127
        %v4160 = vpack.c.bf16 %v3706, %v3706
        %v4161 = vpack.c.bf16 %v3707, %v3707
        %v4162 = vpack.c.bf16 %v3708, %v3708
        %v4163 = vpack.c.bf16 %v3709, %v3709
        %v4164 = vpack.c.bf16 %v3710, %v3710
        %v4165 = vpack.c.bf16 %v3711, %v3711
        %v4166 = vpack.c.bf16 %v3712, %v3712
        %v4167 = vpack.c.bf16 %v3713, %v3713
        %v4168 = vpack.c.bf16 %v3714, %v3714
        %v4169 = vpack.c.bf16 %v3715, %v3715
        %v4170 = vpack.c.bf16 %v3716, %v3716
        %v4171 = vpack.c.bf16 %v3717, %v3717
        %v4172 = vpack.c.bf16 %v3718, %v3718
        %v4173 = vpack.c.bf16 %v3719, %v3719
        %v4174 = vpack.c.bf16 %v3720, %v3720
        %v4175 = vpack.c.bf16 %v3721, %v3721
        %v4176 = vpack.c.bf16 %v3722, %v3722
        %v4177 = vpack.c.bf16 %v3723, %v3723
        %v4178 = vpack.c.bf16 %v3724, %v3724
        %v4179 = vpack.c.bf16 %v3725, %v3725
        %v4180 = vpack.c.bf16 %v3726, %v3726
        %v4181 = vpack.c.bf16 %v3727, %v3727
        %v4182 = vpack.c.bf16 %v3728, %v3728
        %v4183 = vpack.c.bf16 %v3729, %v3729
        %v4184 = vpack.c.bf16 %v3730, %v3730
        %v4185 = vpack.c.bf16 %v3731, %v3731
        %v4186 = vpack.c.bf16 %v3732, %v3732
        %v4187 = vpack.c.bf16 %v3733, %v3733
        %v4188 = vpack.c.bf16 %v3734, %v3734
        %v4189 = vpack.c.bf16 %v3735, %v3735
        %v4190 = vpack.c.bf16 %v3736, %v3736
        %v4191 = vpack.c.bf16 %v3737, %v3737
        %v4192 = vmul.f32 %v4030, %v1345
        %v4193 = vmul.f32 %v4029, %v1349
        %v4194 = vmul.f32 %v4028, %v1353
        %v4195 = vmul.f32 %v4027, %v1357
        %v4196 = vmul.f32 %v4026, %v1361
        %v4197 = vmul.f32 %v4025, %v1365
        %v4198 = vmul.f32 %v4024, %v1369
        %v4199 = vmul.f32 %v4023, %v1373
        %v4200 = vmul.f32 %v4022, %v1377
        %v4201 = vmul.f32 %v4021, %v1381
        %v4202 = vmul.f32 %v4020, %v1385
        %v4203 = vmul.f32 %v4019, %v1389
        %v4204 = vmul.f32 %v4018, %v1393
        %v4205 = vmul.f32 %v4017, %v1397
        %v4206 = vmul.f32 %v4016, %v1401
        %v4207 = vmul.f32 %v4015, %v1405
        %v4208 = vmul.f32 %v4014, %v1409
        %v4209 = vmul.f32 %v4013, %v1413
        %v4210 = vmul.f32 %v4012, %v1417
        %v4211 = vmul.f32 %v4011, %v1421
        %v4212 = vmul.f32 %v4010, %v1425
        %v4213 = vmul.f32 %v4009, %v1429
        %v4214 = vmul.f32 %v4008, %v1433
        %v4215 = vmul.f32 %v4007, %v1437
        %v4216 = vmul.f32 %v4006, %v1441
        %v4217 = vmul.f32 %v4005, %v1445
        %v4218 = vmul.f32 %v4004, %v1449
        %v4219 = vmul.f32 %v4003, %v1453
        %v4220 = vmul.f32 %v4002, %v1457
        %v4221 = vmul.f32 %v4001, %v1461
        %v4222 = vmul.f32 %v4000, %v1465
        %v4223 = vmul.f32 %v4031, %v1469
        %v4224 = vpack.c.bf16 %v4192, %v4192
        %v4225 = vpack.c.bf16 %v4193, %v4193
        %v4226 = vpack.c.bf16 %v4194, %v4194
        %v4227 = vpack.c.bf16 %v4195, %v4195
        %v4228 = vpack.c.bf16 %v4196, %v4196
        %v4229 = vpack.c.bf16 %v4197, %v4197
        %v4230 = vpack.c.bf16 %v4198, %v4198
        %v4231 = vpack.c.bf16 %v4199, %v4199
        %v4232 = vpack.c.bf16 %v4200, %v4200
        %v4233 = vpack.c.bf16 %v4201, %v4201
        %v4234 = vpack.c.bf16 %v4202, %v4202
        %v4235 = vpack.c.bf16 %v4203, %v4203
        %v4236 = vpack.c.bf16 %v4204, %v4204
        %v4237 = vpack.c.bf16 %v4205, %v4205
        %v4238 = vpack.c.bf16 %v4206, %v4206
        %v4239 = vpack.c.bf16 %v4207, %v4207
        %v4240 = vpack.c.bf16 %v4208, %v4208
        %v4241 = vpack.c.bf16 %v4209, %v4209
        %v4242 = vpack.c.bf16 %v4210, %v4210
        %v4243 = vpack.c.bf16 %v4211, %v4211
        %v4244 = vpack.c.bf16 %v4212, %v4212
        %v4245 = vpack.c.bf16 %v4213, %v4213
        %v4246 = vpack.c.bf16 %v4214, %v4214
        %v4247 = vpack.c.bf16 %v4215, %v4215
        %v4248 = vpack.c.bf16 %v4216, %v4216
        %v4249 = vpack.c.bf16 %v4217, %v4217
        %v4250 = vpack.c.bf16 %v4218, %v4218
        %v4251 = vpack.c.bf16 %v4219, %v4219
        %v4252 = vpack.c.bf16 %v4220, %v4220
        %v4253 = vpack.c.bf16 %v4221, %v4221
        %v4254 = vpack.c.bf16 %v4222, %v4222
        %v4255 = vpack.c.bf16 %v4223, %v4223
        %v4256 = vmul.f32 %v3837, %v1537
        %v4257 = vmul.f32 %v3836, %v1541
        %v4258 = vmul.f32 %v3835, %v1545
        %v4259 = vmul.f32 %v3834, %v1549
        %v4260 = vmul.f32 %v3833, %v1553
        %v4261 = vmul.f32 %v3832, %v1557
        %v4262 = vmul.f32 %v3831, %v1561
        %v4263 = vmul.f32 %v3830, %v1565
        %v4264 = vmul.f32 %v3829, %v1569
        %v4265 = vmul.f32 %v3828, %v1573
        %v4266 = vmul.f32 %v3827, %v1577
        %v4267 = vmul.f32 %v3826, %v1581
        %v4268 = vmul.f32 %v3825, %v1585
        %v4269 = vmul.f32 %v3824, %v1589
        %v4270 = vmul.f32 %v3823, %v1593
        %v4271 = vmul.f32 %v3822, %v1597
        %v4272 = vmul.f32 %v3821, %v1601
        %v4273 = vmul.f32 %v3820, %v1605
        %v4274 = vmul.f32 %v3819, %v1609
        %v4275 = vmul.f32 %v3818, %v1613
        %v4276 = vmul.f32 %v3817, %v1617
        %v4277 = vmul.f32 %v3816, %v1621
        %v4278 = vmul.f32 %v3815, %v1625
        %v4279 = vmul.f32 %v3814, %v1629
        %v4280 = vmul.f32 %v3813, %v1633
        %v4281 = vmul.f32 %v3812, %v1637
        %v4282 = vmul.f32 %v3811, %v1641
        %v4283 = vmul.f32 %v3810, %v1645
        %v4284 = vmul.f32 %v3809, %v1649
        %v4285 = vmul.f32 %v3808, %v1653
        %v4286 = vmul.f32 %v3839, %v1657
        %v4287 = vmul.f32 %v3838, %v1661
        %v4288 = vpack.c.bf16 %v4256, %v4256
        %v4289 = vpack.c.bf16 %v4257, %v4257
        %v4290 = vpack.c.bf16 %v4258, %v4258
        %v4291 = vpack.c.bf16 %v4259, %v4259
        %v4292 = vpack.c.bf16 %v4260, %v4260
        %v4293 = vpack.c.bf16 %v4261, %v4261
        %v4294 = vpack.c.bf16 %v4262, %v4262
        %v4295 = vpack.c.bf16 %v4263, %v4263
        %v4296 = vpack.c.bf16 %v4264, %v4264
        %v4297 = vpack.c.bf16 %v4265, %v4265
        %v4298 = vpack.c.bf16 %v4266, %v4266
        %v4299 = vpack.c.bf16 %v4267, %v4267
        %v4300 = vpack.c.bf16 %v4268, %v4268
        %v4301 = vpack.c.bf16 %v4269, %v4269
        %v4302 = vpack.c.bf16 %v4270, %v4270
        %v4303 = vpack.c.bf16 %v4271, %v4271
        %v4304 = vpack.c.bf16 %v4272, %v4272
        %v4305 = vpack.c.bf16 %v4273, %v4273
        %v4306 = vpack.c.bf16 %v4274, %v4274
        %v4307 = vpack.c.bf16 %v4275, %v4275
        %v4308 = vpack.c.bf16 %v4276, %v4276
        %v4309 = vpack.c.bf16 %v4277, %v4277
        %v4310 = vpack.c.bf16 %v4278, %v4278
        %v4311 = vpack.c.bf16 %v4279, %v4279
        %v4312 = vpack.c.bf16 %v4280, %v4280
        %v4313 = vpack.c.bf16 %v4281, %v4281
        %v4314 = vpack.c.bf16 %v4282, %v4282
        %v4315 = vpack.c.bf16 %v4283, %v4283
        %v4316 = vpack.c.bf16 %v4284, %v4284
        %v4317 = vpack.c.bf16 %v4285, %v4285
        %v4318 = vpack.c.bf16 %v4286, %v4286
        %v4319 = vpack.c.bf16 %v4287, %v4287
        %v4320 = vmul.f32 %v3708, %v1729
        %v4321 = vmul.f32 %v3709, %v1733
        %v4322 = vmul.f32 %v3710, %v1737
        %v4323 = vmul.f32 %v3711, %v1741
        %v4324 = vmul.f32 %v3712, %v1745
        %v4325 = vmul.f32 %v3713, %v1749
        %v4326 = vmul.f32 %v3714, %v1753
        %v4327 = vmul.f32 %v3715, %v1757
        %v4328 = vmul.f32 %v3716, %v1761
        %v4329 = vmul.f32 %v3717, %v1765
        %v4330 = vmul.f32 %v3718, %v1769
        %v4331 = vmul.f32 %v3719, %v1773
        %v4332 = vmul.f32 %v3720, %v1777
        %v4333 = vmul.f32 %v3721, %v1781
        %v4334 = vmul.f32 %v3722, %v1785
        %v4335 = vmul.f32 %v3723, %v1789
        %v4336 = vmul.f32 %v3724, %v1793
        %v4337 = vmul.f32 %v3725, %v1797
        %v4338 = vmul.f32 %v3726, %v1801
        %v4339 = vmul.f32 %v3727, %v1805
        %v4340 = vmul.f32 %v3728, %v1809
        %v4341 = vmul.f32 %v3729, %v1813
        %v4342 = vmul.f32 %v3730, %v1817
        %v4343 = vmul.f32 %v3731, %v1821
        %v4344 = vmul.f32 %v3732, %v1825
        %v4345 = vmul.f32 %v3733, %v1829
        %v4346 = vmul.f32 %v3734, %v1833
        %v4347 = vmul.f32 %v3735, %v1837
        %v4348 = vmul.f32 %v3736, %v1841
        %v4349 = vmul.f32 %v3737, %v1845
        %v4350 = vmul.f32 %v3706, %v1849
        %v4351 = vmul.f32 %v3707, %v1853
        %v4352 = vpack.c.bf16 %v4320, %v4320
        %v4353 = vpack.c.bf16 %v4321, %v4321
        %v4354 = vpack.c.bf16 %v4322, %v4322
        %v4355 = vpack.c.bf16 %v4323, %v4323
        %v4356 = vpack.c.bf16 %v4324, %v4324
        %v4357 = vpack.c.bf16 %v4325, %v4325
        %v4358 = vpack.c.bf16 %v4326, %v4326
        %v4359 = vpack.c.bf16 %v4327, %v4327
        %v4360 = vpack.c.bf16 %v4328, %v4328
        %v4361 = vpack.c.bf16 %v4329, %v4329
        %v4362 = vpack.c.bf16 %v4330, %v4330
        %v4363 = vpack.c.bf16 %v4331, %v4331
        %v4364 = vpack.c.bf16 %v4332, %v4332
        %v4365 = vpack.c.bf16 %v4333, %v4333
        %v4366 = vpack.c.bf16 %v4334, %v4334
        %v4367 = vpack.c.bf16 %v4335, %v4335
        %v4368 = vpack.c.bf16 %v4336, %v4336
        %v4369 = vpack.c.bf16 %v4337, %v4337
        %v4370 = vpack.c.bf16 %v4338, %v4338
        %v4371 = vpack.c.bf16 %v4339, %v4339
        %v4372 = vpack.c.bf16 %v4340, %v4340
        %v4373 = vpack.c.bf16 %v4341, %v4341
        %v4374 = vpack.c.bf16 %v4342, %v4342
        %v4375 = vpack.c.bf16 %v4343, %v4343
        %v4376 = vpack.c.bf16 %v4344, %v4344
        %v4377 = vpack.c.bf16 %v4345, %v4345
        %v4378 = vpack.c.bf16 %v4346, %v4346
        %v4379 = vpack.c.bf16 %v4347, %v4347
        %v4380 = vpack.c.bf16 %v4348, %v4348
        %v4381 = vpack.c.bf16 %v4349, %v4349
        %v4382 = vpack.c.bf16 %v4350, %v4350
        %v4383 = vpack.c.bf16 %v4351, %v4351
        %v4384 = vmul.f32 %v4028, %v1921
        %v4385 = vmul.f32 %v4027, %v1925
        %v4386 = vmul.f32 %v4026, %v1929
        %v4387 = vmul.f32 %v4025, %v1933
        %v4388 = vmul.f32 %v4024, %v1937
        %v4389 = vmul.f32 %v4023, %v1941
        %v4390 = vmul.f32 %v4022, %v1945
        %v4391 = vmul.f32 %v4021, %v1949
        %v4392 = vmul.f32 %v4020, %v1953
        %v4393 = vmul.f32 %v4019, %v1957
        %v4394 = vmul.f32 %v4018, %v1961
        %v4395 = vmul.f32 %v4017, %v1965
        %v4396 = vmul.f32 %v4016, %v1969
        %v4397 = vmul.f32 %v4015, %v1973
        %v4398 = vmul.f32 %v4014, %v1977
        %v4399 = vmul.f32 %v4013, %v1981
        %v4400 = vmul.f32 %v4012, %v1985
        %v4401 = vmul.f32 %v4011, %v1989
        %v4402 = vmul.f32 %v4010, %v1993
        %v4403 = vmul.f32 %v4009, %v1997
        %v4404 = vmul.f32 %v4008, %v2001
        %v4405 = vmul.f32 %v4007, %v2005
        %v4406 = vmul.f32 %v4006, %v2009
        %v4407 = vmul.f32 %v4005, %v2013
        %v4408 = vmul.f32 %v4004, %v2017
        %v4409 = vmul.f32 %v4003, %v2021
        %v4410 = vmul.f32 %v4002, %v2025
        %v4411 = vmul.f32 %v4001, %v2029
        %v4412 = vmul.f32 %v4000, %v2033
        %v4413 = vmul.f32 %v4031, %v2037
        %v4414 = vmul.f32 %v4030, %v2041
        %v4415 = vmul.f32 %v4029, %v2045
        %v4416 = vpack.c.bf16 %v4384, %v4384
        %v4417 = vpack.c.bf16 %v4385, %v4385
        %v4418 = vpack.c.bf16 %v4386, %v4386
        %v4419 = vpack.c.bf16 %v4387, %v4387
        %v4420 = vpack.c.bf16 %v4388, %v4388
        %v4421 = vpack.c.bf16 %v4389, %v4389
        %v4422 = vpack.c.bf16 %v4390, %v4390
        %v4423 = vpack.c.bf16 %v4391, %v4391
        %v4424 = vpack.c.bf16 %v4392, %v4392
        %v4425 = vpack.c.bf16 %v4393, %v4393
        %v4426 = vpack.c.bf16 %v4394, %v4394
        %v4427 = vpack.c.bf16 %v4395, %v4395
        %v4428 = vpack.c.bf16 %v4396, %v4396
        %v4429 = vpack.c.bf16 %v4397, %v4397
        %v4430 = vpack.c.bf16 %v4398, %v4398
        %v4431 = vpack.c.bf16 %v4399, %v4399
        %v4432 = vpack.c.bf16 %v4400, %v4400
        %v4433 = vpack.c.bf16 %v4401, %v4401
        %v4434 = vpack.c.bf16 %v4402, %v4402
        %v4435 = vpack.c.bf16 %v4403, %v4403
        %v4436 = vpack.c.bf16 %v4404, %v4404
        %v4437 = vpack.c.bf16 %v4405, %v4405
        %v4438 = vpack.c.bf16 %v4406, %v4406
        %v4439 = vpack.c.bf16 %v4407, %v4407
        %v4440 = vpack.c.bf16 %v4408, %v4408
        %v4441 = vpack.c.bf16 %v4409, %v4409
        %v4442 = vpack.c.bf16 %v4410, %v4410
        %v4443 = vpack.c.bf16 %v4411, %v4411
        %v4444 = vpack.c.bf16 %v4412, %v4412
        %v4445 = vpack.c.bf16 %v4413, %v4413
        %v4446 = vpack.c.bf16 %v4414, %v4414
        %v4447 = vpack.c.bf16 %v4415, %v4415
        %v4480 = vunpack.c.l.b16 %v3872
        %v4481 = vunpack.c.l.b16 %v3873
        %v4482 = vunpack.c.l.b16 %v3874
        %v4483 = vunpack.c.l.b16 %v3875
        %v4484 = vunpack.c.l.b16 %v3876
        %v4485 = vunpack.c.l.b16 %v3877
        %v4486 = vunpack.c.l.b16 %v3878
        %v4487 = vunpack.c.l.b16 %v3879
        %v4488 = vunpack.c.l.b16 %v3880
        %v4489 = vunpack.c.l.b16 %v3881
        %v4490 = vunpack.c.l.b16 %v3882
        %v4491 = vunpack.c.l.b16 %v3883
        %v4492 = vunpack.c.l.b16 %v3884
        %v4493 = vunpack.c.l.b16 %v3885
        %v4494 = vunpack.c.l.b16 %v3886
        %v4495 = vunpack.c.l.b16 %v3887
        %v4496 = vunpack.c.l.b16 %v3888
        %v4497 = vunpack.c.l.b16 %v3889
        %v4498 = vunpack.c.l.b16 %v3890
        %v4499 = vunpack.c.l.b16 %v3891
        %v4500 = vunpack.c.l.b16 %v3892
        %v4501 = vunpack.c.l.b16 %v3893
        %v4502 = vunpack.c.l.b16 %v3894
        %v4503 = vunpack.c.l.b16 %v3895
        %v4504 = vunpack.c.l.b16 %v3896
        %v4505 = vunpack.c.l.b16 %v3897
        %v4506 = vunpack.c.l.b16 %v3898
        %v4507 = vunpack.c.l.b16 %v3899
        %v4508 = vunpack.c.l.b16 %v3900
        %v4509 = vunpack.c.l.b16 %v3901
        %v4510 = vunpack.c.l.b16 %v3902
        %v4511 = vunpack.c.l.b16 %v3903
        %v4512 = vpack.c.b16 %v4481, %v4480
        %v4513 = vpack.c.b16 %v4483, %v4482
        %v4514 = vpack.c.b16 %v4485, %v4484
        %v4515 = vpack.c.b16 %v4487, %v4486
        %v4516 = vpack.c.b16 %v4489, %v4488
        %v4517 = vpack.c.b16 %v4491, %v4490
        %v4518 = vpack.c.b16 %v4493, %v4492
        %v4519 = vpack.c.b16 %v4495, %v4494
        %v4520 = vpack.c.b16 %v4497, %v4496
        %v4521 = vpack.c.b16 %v4499, %v4498
        %v4522 = vpack.c.b16 %v4501, %v4500
        %v4523 = vpack.c.b16 %v4503, %v4502
        %v4524 = vpack.c.b16 %v4505, %v4504
        %v4525 = vpack.c.b16 %v4507, %v4506
        %v4526 = vpack.c.b16 %v4509, %v4508
        %v4527 = vpack.c.b16 %v4511, %v4510
        %v4560 = vunpack.c.l.b16 %v3936
        %v4561 = vunpack.c.l.b16 %v3937
        %v4562 = vunpack.c.l.b16 %v3938
        %v4563 = vunpack.c.l.b16 %v3939
        %v4564 = vunpack.c.l.b16 %v3940
        %v4565 = vunpack.c.l.b16 %v3941
        %v4566 = vunpack.c.l.b16 %v3942
        %v4567 = vunpack.c.l.b16 %v3943
        %v4568 = vunpack.c.l.b16 %v3944
        %v4569 = vunpack.c.l.b16 %v3945
        %v4570 = vunpack.c.l.b16 %v3946
        %v4571 = vunpack.c.l.b16 %v3947
        %v4572 = vunpack.c.l.b16 %v3948
        %v4573 = vunpack.c.l.b16 %v3949
        %v4574 = vunpack.c.l.b16 %v3950
        %v4575 = vunpack.c.l.b16 %v3951
        %v4576 = vunpack.c.l.b16 %v3952
        %v4577 = vunpack.c.l.b16 %v3953
        %v4578 = vunpack.c.l.b16 %v3954
        %v4579 = vunpack.c.l.b16 %v3955
        %v4580 = vunpack.c.l.b16 %v3956
        %v4581 = vunpack.c.l.b16 %v3957
        %v4582 = vunpack.c.l.b16 %v3958
        %v4583 = vunpack.c.l.b16 %v3959
        %v4584 = vunpack.c.l.b16 %v3960
        %v4585 = vunpack.c.l.b16 %v3961
        %v4586 = vunpack.c.l.b16 %v3962
        %v4587 = vunpack.c.l.b16 %v3963
        %v4588 = vunpack.c.l.b16 %v3964
        %v4589 = vunpack.c.l.b16 %v3965
        %v4590 = vunpack.c.l.b16 %v3966
        %v4591 = vunpack.c.l.b16 %v3967
        %v4592 = vpack.c.b16 %v4561, %v4560
        %v4593 = vpack.c.b16 %v4563, %v4562
        %v4594 = vpack.c.b16 %v4565, %v4564
        %v4595 = vpack.c.b16 %v4567, %v4566
        %v4596 = vpack.c.b16 %v4569, %v4568
        %v4597 = vpack.c.b16 %v4571, %v4570
        %v4598 = vpack.c.b16 %v4573, %v4572
        %v4599 = vpack.c.b16 %v4575, %v4574
        %v4600 = vpack.c.b16 %v4577, %v4576
        %v4601 = vpack.c.b16 %v4579, %v4578
        %v4602 = vpack.c.b16 %v4581, %v4580
        %v4603 = vpack.c.b16 %v4583, %v4582
        %v4604 = vpack.c.b16 %v4585, %v4584
        %v4605 = vpack.c.b16 %v4587, %v4586
        %v4606 = vpack.c.b16 %v4589, %v4588
        %v4607 = vpack.c.b16 %v4591, %v4590
        %4608 = vrot.lane.b32.xlu0 %v4592, 32
        %v4609 = vpop.permute.xlu0 %4608
        %4610 = vrot.lane.b32.xlu0 %v4593, 32
        %v4611 = vpop.permute.xlu0 %4610
        %4612 = vrot.lane.b32.xlu0 %v4594, 32
        %v4613 = vpop.permute.xlu0 %4612
        %4614 = vrot.lane.b32.xlu0 %v4595, 32
        %v4615 = vpop.permute.xlu0 %4614
        %4616 = vrot.lane.b32.xlu0 %v4596, 32
        %v4617 = vpop.permute.xlu0 %4616
        %4618 = vrot.lane.b32.xlu0 %v4597, 32
        %v4619 = vpop.permute.xlu0 %4618
        %4620 = vrot.lane.b32.xlu0 %v4598, 32
        %v4621 = vpop.permute.xlu0 %4620
        %4622 = vrot.lane.b32.xlu0 %v4599, 32
        %v4623 = vpop.permute.xlu0 %4622
        %4624 = vrot.lane.b32.xlu0 %v4600, 32
        %v4625 = vpop.permute.xlu0 %4624
        %4626 = vrot.lane.b32.xlu0 %v4601, 32
        %v4627 = vpop.permute.xlu0 %4626
        %4628 = vrot.lane.b32.xlu0 %v4602, 32
        %v4629 = vpop.permute.xlu0 %4628
        %4630 = vrot.lane.b32.xlu0 %v4603, 32
        %v4631 = vpop.permute.xlu0 %4630
        %4632 = vrot.lane.b32.xlu0 %v4604, 32
        %v4633 = vpop.permute.xlu0 %4632
        %4634 = vrot.lane.b32.xlu0 %v4605, 32
        %v4635 = vpop.permute.xlu0 %4634
        %4636 = vrot.lane.b32.xlu0 %v4606, 32
        %v4637 = vpop.permute.xlu0 %4636
        %4638 = vrot.lane.b32.xlu0 %v4607, 32
        %v4639 = vpop.permute.xlu0 %4638
        %v4672 = vunpack.c.l.b16 %v4064
        %v4673 = vunpack.c.l.b16 %v4065
        %v4674 = vunpack.c.l.b16 %v4066
        %v4675 = vunpack.c.l.b16 %v4067
        %v4676 = vunpack.c.l.b16 %v4068
        %v4677 = vunpack.c.l.b16 %v4069
        %v4678 = vunpack.c.l.b16 %v4070
        %v4679 = vunpack.c.l.b16 %v4071
        %v4680 = vunpack.c.l.b16 %v4072
        %v4681 = vunpack.c.l.b16 %v4073
        %v4682 = vunpack.c.l.b16 %v4074
        %v4683 = vunpack.c.l.b16 %v4075
        %v4684 = vunpack.c.l.b16 %v4076
        %v4685 = vunpack.c.l.b16 %v4077
        %v4686 = vunpack.c.l.b16 %v4078
        %v4687 = vunpack.c.l.b16 %v4079
        %v4688 = vunpack.c.l.b16 %v4080
        %v4689 = vunpack.c.l.b16 %v4081
        %v4690 = vunpack.c.l.b16 %v4082
        %v4691 = vunpack.c.l.b16 %v4083
        %v4692 = vunpack.c.l.b16 %v4084
        %v4693 = vunpack.c.l.b16 %v4085
        %v4694 = vunpack.c.l.b16 %v4086
        %v4695 = vunpack.c.l.b16 %v4087
        %v4696 = vunpack.c.l.b16 %v4088
        %v4697 = vunpack.c.l.b16 %v4089
        %v4698 = vunpack.c.l.b16 %v4090
        %v4699 = vunpack.c.l.b16 %v4091
        %v4700 = vunpack.c.l.b16 %v4092
        %v4701 = vunpack.c.l.b16 %v4093
        %v4702 = vunpack.c.l.b16 %v4094
        %v4703 = vunpack.c.l.b16 %v4095
        %v4704 = vpack.c.b16 %v4673, %v4672
        %v4705 = vpack.c.b16 %v4675, %v4674
        %v4706 = vpack.c.b16 %v4677, %v4676
        %v4707 = vpack.c.b16 %v4679, %v4678
        %v4708 = vpack.c.b16 %v4681, %v4680
        %v4709 = vpack.c.b16 %v4683, %v4682
        %v4710 = vpack.c.b16 %v4685, %v4684
        %v4711 = vpack.c.b16 %v4687, %v4686
        %v4712 = vpack.c.b16 %v4689, %v4688
        %v4713 = vpack.c.b16 %v4691, %v4690
        %v4714 = vpack.c.b16 %v4693, %v4692
        %v4715 = vpack.c.b16 %v4695, %v4694
        %v4716 = vpack.c.b16 %v4697, %v4696
        %v4717 = vpack.c.b16 %v4699, %v4698
        %v4718 = vpack.c.b16 %v4701, %v4700
        %v4719 = vpack.c.b16 %v4703, %v4702
        %4720 = vrot.lane.b32.xlu0 %v4704, 64
        %v4721 = vpop.permute.xlu0 %4720
        %4722 = vrot.lane.b32.xlu0 %v4705, 64
        %v4723 = vpop.permute.xlu0 %4722
        %4724 = vrot.lane.b32.xlu0 %v4706, 64
        %v4725 = vpop.permute.xlu0 %4724
        %4726 = vrot.lane.b32.xlu0 %v4707, 64
        %v4727 = vpop.permute.xlu0 %4726
        %4728 = vrot.lane.b32.xlu0 %v4708, 64
        %v4729 = vpop.permute.xlu0 %4728
        %4730 = vrot.lane.b32.xlu0 %v4709, 64
        %v4731 = vpop.permute.xlu0 %4730
        %4732 = vrot.lane.b32.xlu0 %v4710, 64
        %v4733 = vpop.permute.xlu0 %4732
        %4734 = vrot.lane.b32.xlu0 %v4711, 64
        %v4735 = vpop.permute.xlu0 %4734
        %4736 = vrot.lane.b32.xlu0 %v4712, 64
        %v4737 = vpop.permute.xlu0 %4736
        %4738 = vrot.lane.b32.xlu0 %v4713, 64
        %v4739 = vpop.permute.xlu0 %4738
        %4740 = vrot.lane.b32.xlu0 %v4714, 64
        %v4741 = vpop.permute.xlu0 %4740
        %4742 = vrot.lane.b32.xlu0 %v4715, 64
        %v4743 = vpop.permute.xlu0 %4742
        %4744 = vrot.lane.b32.xlu0 %v4716, 64
        %v4745 = vpop.permute.xlu0 %4744
        %4746 = vrot.lane.b32.xlu0 %v4717, 64
        %v4747 = vpop.permute.xlu0 %4746
        %4748 = vrot.lane.b32.xlu0 %v4718, 64
        %v4749 = vpop.permute.xlu0 %4748
        %4750 = vrot.lane.b32.xlu0 %v4719, 64
        %v4751 = vpop.permute.xlu0 %4750
        %v4784 = vunpack.c.l.b16 %v4128
        %v4785 = vunpack.c.l.b16 %v4129
        %v4786 = vunpack.c.l.b16 %v4130
        %v4787 = vunpack.c.l.b16 %v4131
        %v4788 = vunpack.c.l.b16 %v4132
        %v4789 = vunpack.c.l.b16 %v4133
        %v4790 = vunpack.c.l.b16 %v4134
        %v4791 = vunpack.c.l.b16 %v4135
        %v4792 = vunpack.c.l.b16 %v4136
        %v4793 = vunpack.c.l.b16 %v4137
        %v4794 = vunpack.c.l.b16 %v4138
        %v4795 = vunpack.c.l.b16 %v4139
        %v4796 = vunpack.c.l.b16 %v4140
        %v4797 = vunpack.c.l.b16 %v4141
        %v4798 = vunpack.c.l.b16 %v4142
        %v4799 = vunpack.c.l.b16 %v4143
        %v4800 = vunpack.c.l.b16 %v4144
        %v4801 = vunpack.c.l.b16 %v4145
        %v4802 = vunpack.c.l.b16 %v4146
        %v4803 = vunpack.c.l.b16 %v4147
        %v4804 = vunpack.c.l.b16 %v4148
        %v4805 = vunpack.c.l.b16 %v4149
        %v4806 = vunpack.c.l.b16 %v4150
        %v4807 = vunpack.c.l.b16 %v4151
        %v4808 = vunpack.c.l.b16 %v4152
        %v4809 = vunpack.c.l.b16 %v4153
        %v4810 = vunpack.c.l.b16 %v4154
        %v4811 = vunpack.c.l.b16 %v4155
        %v4812 = vunpack.c.l.b16 %v4156
        %v4813 = vunpack.c.l.b16 %v4157
        %v4814 = vunpack.c.l.b16 %v4158
        %v4815 = vunpack.c.l.b16 %v4159
        %v4816 = vpack.c.b16 %v4785, %v4784
        %v4817 = vpack.c.b16 %v4787, %v4786
        %v4818 = vpack.c.b16 %v4789, %v4788
        %v4819 = vpack.c.b16 %v4791, %v4790
        %v4820 = vpack.c.b16 %v4793, %v4792
        %v4821 = vpack.c.b16 %v4795, %v4794
        %v4822 = vpack.c.b16 %v4797, %v4796
        %v4823 = vpack.c.b16 %v4799, %v4798
        %v4824 = vpack.c.b16 %v4801, %v4800
        %v4825 = vpack.c.b16 %v4803, %v4802
        %v4826 = vpack.c.b16 %v4805, %v4804
        %v4827 = vpack.c.b16 %v4807, %v4806
        %v4828 = vpack.c.b16 %v4809, %v4808
        %v4829 = vpack.c.b16 %v4811, %v4810
        %v4830 = vpack.c.b16 %v4813, %v4812
        %v4831 = vpack.c.b16 %v4815, %v4814
        %4832 = vrot.lane.b32.xlu0 %v4816, 96
        %v4833 = vpop.permute.xlu0 %4832
        %4834 = vrot.lane.b32.xlu0 %v4817, 96
        %v4835 = vpop.permute.xlu0 %4834
        %4836 = vrot.lane.b32.xlu0 %v4818, 96
        %v4837 = vpop.permute.xlu0 %4836
        %4838 = vrot.lane.b32.xlu0 %v4819, 96
        %v4839 = vpop.permute.xlu0 %4838
        %4840 = vrot.lane.b32.xlu0 %v4820, 96
        %v4841 = vpop.permute.xlu0 %4840
        %4842 = vrot.lane.b32.xlu0 %v4821, 96
        %v4843 = vpop.permute.xlu0 %4842
        %4844 = vrot.lane.b32.xlu0 %v4822, 96
        %v4845 = vpop.permute.xlu0 %4844
        %4846 = vrot.lane.b32.xlu0 %v4823, 96
        %v4847 = vpop.permute.xlu0 %4846
        %4848 = vrot.lane.b32.xlu0 %v4824, 96
        %v4849 = vpop.permute.xlu0 %4848
        %4850 = vrot.lane.b32.xlu0 %v4825, 96
        %v4851 = vpop.permute.xlu0 %4850
        %4852 = vrot.lane.b32.xlu0 %v4826, 96
        %v4853 = vpop.permute.xlu0 %4852
        %4854 = vrot.lane.b32.xlu0 %v4827, 96
        %v4855 = vpop.permute.xlu0 %4854
        %4856 = vrot.lane.b32.xlu0 %v4828, 96
        %v4857 = vpop.permute.xlu0 %4856
        %4858 = vrot.lane.b32.xlu0 %v4829, 96
        %v4859 = vpop.permute.xlu0 %4858
        %4860 = vrot.lane.b32.xlu0 %v4830, 96
        %v4861 = vpop.permute.xlu0 %4860
        %4862 = vrot.lane.b32.xlu0 %v4831, 96
        %v4863 = vpop.permute.xlu0 %4862
        %v4896 = vunpack.c.l.b16 %v4160
        %v4897 = vunpack.c.l.b16 %v4161
        %v4898 = vunpack.c.l.b16 %v4162
        %v4899 = vunpack.c.l.b16 %v4163
        %v4900 = vunpack.c.l.b16 %v4164
        %v4901 = vunpack.c.l.b16 %v4165
        %v4902 = vunpack.c.l.b16 %v4166
        %v4903 = vunpack.c.l.b16 %v4167
        %v4904 = vunpack.c.l.b16 %v4168
        %v4905 = vunpack.c.l.b16 %v4169
        %v4906 = vunpack.c.l.b16 %v4170
        %v4907 = vunpack.c.l.b16 %v4171
        %v4908 = vunpack.c.l.b16 %v4172
        %v4909 = vunpack.c.l.b16 %v4173
        %v4910 = vunpack.c.l.b16 %v4174
        %v4911 = vunpack.c.l.b16 %v4175
        %v4912 = vunpack.c.l.b16 %v4176
        %v4913 = vunpack.c.l.b16 %v4177
        %v4914 = vunpack.c.l.b16 %v4178
        %v4915 = vunpack.c.l.b16 %v4179
        %v4916 = vunpack.c.l.b16 %v4180
        %v4917 = vunpack.c.l.b16 %v4181
        %v4918 = vunpack.c.l.b16 %v4182
        %v4919 = vunpack.c.l.b16 %v4183
        %v4920 = vunpack.c.l.b16 %v4184
        %v4921 = vunpack.c.l.b16 %v4185
        %v4922 = vunpack.c.l.b16 %v4186
        %v4923 = vunpack.c.l.b16 %v4187
        %v4924 = vunpack.c.l.b16 %v4188
        %v4925 = vunpack.c.l.b16 %v4189
        %v4926 = vunpack.c.l.b16 %v4190
        %v4927 = vunpack.c.l.b16 %v4191
        %v4928 = vpack.c.b16 %v4897, %v4896
        %v4929 = vpack.c.b16 %v4899, %v4898
        %v4930 = vpack.c.b16 %v4901, %v4900
        %v4931 = vpack.c.b16 %v4903, %v4902
        %v4932 = vpack.c.b16 %v4905, %v4904
        %v4933 = vpack.c.b16 %v4907, %v4906
        %v4934 = vpack.c.b16 %v4909, %v4908
        %v4935 = vpack.c.b16 %v4911, %v4910
        %v4936 = vpack.c.b16 %v4913, %v4912
        %v4937 = vpack.c.b16 %v4915, %v4914
        %v4938 = vpack.c.b16 %v4917, %v4916
        %v4939 = vpack.c.b16 %v4919, %v4918
        %v4940 = vpack.c.b16 %v4921, %v4920
        %v4941 = vpack.c.b16 %v4923, %v4922
        %v4942 = vpack.c.b16 %v4925, %v4924
        %v4943 = vpack.c.b16 %v4927, %v4926
        %v4976 = vunpack.c.l.b16 %v4224
        %v4977 = vunpack.c.l.b16 %v4225
        %v4978 = vunpack.c.l.b16 %v4226
        %v4979 = vunpack.c.l.b16 %v4227
        %v4980 = vunpack.c.l.b16 %v4228
        %v4981 = vunpack.c.l.b16 %v4229
        %v4982 = vunpack.c.l.b16 %v4230
        %v4983 = vunpack.c.l.b16 %v4231
        %v4984 = vunpack.c.l.b16 %v4232
        %v4985 = vunpack.c.l.b16 %v4233
        %v4986 = vunpack.c.l.b16 %v4234
        %v4987 = vunpack.c.l.b16 %v4235
        %v4988 = vunpack.c.l.b16 %v4236
        %v4989 = vunpack.c.l.b16 %v4237
        %v4990 = vunpack.c.l.b16 %v4238
        %v4991 = vunpack.c.l.b16 %v4239
        %v4992 = vunpack.c.l.b16 %v4240
        %v4993 = vunpack.c.l.b16 %v4241
        %v4994 = vunpack.c.l.b16 %v4242
        %v4995 = vunpack.c.l.b16 %v4243
        %v4996 = vunpack.c.l.b16 %v4244
        %v4997 = vunpack.c.l.b16 %v4245
        %v4998 = vunpack.c.l.b16 %v4246
        %v4999 = vunpack.c.l.b16 %v4247
        %v5000 = vunpack.c.l.b16 %v4248
        %v5001 = vunpack.c.l.b16 %v4249
        %v5002 = vunpack.c.l.b16 %v4250
        %v5003 = vunpack.c.l.b16 %v4251
        %v5004 = vunpack.c.l.b16 %v4252
        %v5005 = vunpack.c.l.b16 %v4253
        %v5006 = vunpack.c.l.b16 %v4254
        %v5007 = vunpack.c.l.b16 %v4255
        %v5008 = vpack.c.b16 %v4977, %v4976
        %v5009 = vpack.c.b16 %v4979, %v4978
        %v5010 = vpack.c.b16 %v4981, %v4980
        %v5011 = vpack.c.b16 %v4983, %v4982
        %v5012 = vpack.c.b16 %v4985, %v4984
        %v5013 = vpack.c.b16 %v4987, %v4986
        %v5014 = vpack.c.b16 %v4989, %v4988
        %v5015 = vpack.c.b16 %v4991, %v4990
        %v5016 = vpack.c.b16 %v4993, %v4992
        %v5017 = vpack.c.b16 %v4995, %v4994
        %v5018 = vpack.c.b16 %v4997, %v4996
        %v5019 = vpack.c.b16 %v4999, %v4998
        %v5020 = vpack.c.b16 %v5001, %v5000
        %v5021 = vpack.c.b16 %v5003, %v5002
        %v5022 = vpack.c.b16 %v5005, %v5004
        %v5023 = vpack.c.b16 %v5007, %v5006
        %5024 = vrot.lane.b32.xlu0 %v5008, 32
        %v5025 = vpop.permute.xlu0 %5024
        %5026 = vrot.lane.b32.xlu0 %v5009, 32
        %v5027 = vpop.permute.xlu0 %5026
        %5028 = vrot.lane.b32.xlu0 %v5010, 32
        %v5029 = vpop.permute.xlu0 %5028
        %5030 = vrot.lane.b32.xlu0 %v5011, 32
        %v5031 = vpop.permute.xlu0 %5030
        %5032 = vrot.lane.b32.xlu0 %v5012, 32
        %v5033 = vpop.permute.xlu0 %5032
        %5034 = vrot.lane.b32.xlu0 %v5013, 32
        %v5035 = vpop.permute.xlu0 %5034
        %5036 = vrot.lane.b32.xlu0 %v5014, 32
        %v5037 = vpop.permute.xlu0 %5036
        %5038 = vrot.lane.b32.xlu0 %v5015, 32
        %v5039 = vpop.permute.xlu0 %5038
        %5040 = vrot.lane.b32.xlu0 %v5016, 32
        %v5041 = vpop.permute.xlu0 %5040
        %5042 = vrot.lane.b32.xlu0 %v5017, 32
        %v5043 = vpop.permute.xlu0 %5042
        %5044 = vrot.lane.b32.xlu0 %v5018, 32
        %v5045 = vpop.permute.xlu0 %5044
        %5046 = vrot.lane.b32.xlu0 %v5019, 32
        %v5047 = vpop.permute.xlu0 %5046
        %5048 = vrot.lane.b32.xlu0 %v5020, 32
        %v5049 = vpop.permute.xlu0 %5048
        %5050 = vrot.lane.b32.xlu0 %v5021, 32
        %v5051 = vpop.permute.xlu0 %5050
        %5052 = vrot.lane.b32.xlu0 %v5022, 32
        %v5053 = vpop.permute.xlu0 %5052
        %5054 = vrot.lane.b32.xlu0 %v5023, 32
        %v5055 = vpop.permute.xlu0 %5054
        %v5088 = vunpack.c.l.b16 %v4288
        %v5089 = vunpack.c.l.b16 %v4289
        %v5090 = vunpack.c.l.b16 %v4290
        %v5091 = vunpack.c.l.b16 %v4291
        %v5092 = vunpack.c.l.b16 %v4292
        %v5093 = vunpack.c.l.b16 %v4293
        %v5094 = vunpack.c.l.b16 %v4294
        %v5095 = vunpack.c.l.b16 %v4295
        %v5096 = vunpack.c.l.b16 %v4296
        %v5097 = vunpack.c.l.b16 %v4297
        %v5098 = vunpack.c.l.b16 %v4298
        %v5099 = vunpack.c.l.b16 %v4299
        %v5100 = vunpack.c.l.b16 %v4300
        %v5101 = vunpack.c.l.b16 %v4301
        %v5102 = vunpack.c.l.b16 %v4302
        %v5103 = vunpack.c.l.b16 %v4303
        %v5104 = vunpack.c.l.b16 %v4304
        %v5105 = vunpack.c.l.b16 %v4305
        %v5106 = vunpack.c.l.b16 %v4306
        %v5107 = vunpack.c.l.b16 %v4307
        %v5108 = vunpack.c.l.b16 %v4308
        %v5109 = vunpack.c.l.b16 %v4309
        %v5110 = vunpack.c.l.b16 %v4310
        %v5111 = vunpack.c.l.b16 %v4311
        %v5112 = vunpack.c.l.b16 %v4312
        %v5113 = vunpack.c.l.b16 %v4313
        %v5114 = vunpack.c.l.b16 %v4314
        %v5115 = vunpack.c.l.b16 %v4315
        %v5116 = vunpack.c.l.b16 %v4316
        %v5117 = vunpack.c.l.b16 %v4317
        %v5118 = vunpack.c.l.b16 %v4318
        %v5119 = vunpack.c.l.b16 %v4319
        %v5120 = vpack.c.b16 %v5089, %v5088
        %v5121 = vpack.c.b16 %v5091, %v5090
        %v5122 = vpack.c.b16 %v5093, %v5092
        %v5123 = vpack.c.b16 %v5095, %v5094
        %v5124 = vpack.c.b16 %v5097, %v5096
        %v5125 = vpack.c.b16 %v5099, %v5098
        %v5126 = vpack.c.b16 %v5101, %v5100
        %v5127 = vpack.c.b16 %v5103, %v5102
        %v5128 = vpack.c.b16 %v5105, %v5104
        %v5129 = vpack.c.b16 %v5107, %v5106
        %v5130 = vpack.c.b16 %v5109, %v5108
        %v5131 = vpack.c.b16 %v5111, %v5110
        %v5132 = vpack.c.b16 %v5113, %v5112
        %v5133 = vpack.c.b16 %v5115, %v5114
        %v5134 = vpack.c.b16 %v5117, %v5116
        %v5135 = vpack.c.b16 %v5119, %v5118
        %5136 = vrot.lane.b32.xlu0 %v5120, 64
        %v5137 = vpop.permute.xlu0 %5136
        %5138 = vrot.lane.b32.xlu0 %v5121, 64
        %v5139 = vpop.permute.xlu0 %5138
        %5140 = vrot.lane.b32.xlu0 %v5122, 64
        %v5141 = vpop.permute.xlu0 %5140
        %5142 = vrot.lane.b32.xlu0 %v5123, 64
        %v5143 = vpop.permute.xlu0 %5142
        %5144 = vrot.lane.b32.xlu0 %v5124, 64
        %v5145 = vpop.permute.xlu0 %5144
        %5146 = vrot.lane.b32.xlu0 %v5125, 64
        %v5147 = vpop.permute.xlu0 %5146
        %5148 = vrot.lane.b32.xlu0 %v5126, 64
        %v5149 = vpop.permute.xlu0 %5148
        %5150 = vrot.lane.b32.xlu0 %v5127, 64
        %v5151 = vpop.permute.xlu0 %5150
        %5152 = vrot.lane.b32.xlu0 %v5128, 64
        %v5153 = vpop.permute.xlu0 %5152
        %5154 = vrot.lane.b32.xlu0 %v5129, 64
        %v5155 = vpop.permute.xlu0 %5154
        %5156 = vrot.lane.b32.xlu0 %v5130, 64
        %v5157 = vpop.permute.xlu0 %5156
        %5158 = vrot.lane.b32.xlu0 %v5131, 64
        %v5159 = vpop.permute.xlu0 %5158
        %5160 = vrot.lane.b32.xlu0 %v5132, 64
        %v5161 = vpop.permute.xlu0 %5160
        %5162 = vrot.lane.b32.xlu0 %v5133, 64
        %v5163 = vpop.permute.xlu0 %5162
        %5164 = vrot.lane.b32.xlu0 %v5134, 64
        %v5165 = vpop.permute.xlu0 %5164
        %5166 = vrot.lane.b32.xlu0 %v5135, 64
        %v5167 = vpop.permute.xlu0 %5166
        %v5200 = vunpack.c.l.b16 %v4352
        %v5201 = vunpack.c.l.b16 %v4353
        %v5202 = vunpack.c.l.b16 %v4354
        %v5203 = vunpack.c.l.b16 %v4355
        %v5204 = vunpack.c.l.b16 %v4356
        %v5205 = vunpack.c.l.b16 %v4357
        %v5206 = vunpack.c.l.b16 %v4358
        %v5207 = vunpack.c.l.b16 %v4359
        %v5208 = vunpack.c.l.b16 %v4360
        %v5209 = vunpack.c.l.b16 %v4361
        %v5210 = vunpack.c.l.b16 %v4362
        %v5211 = vunpack.c.l.b16 %v4363
        %v5212 = vunpack.c.l.b16 %v4364
        %v5213 = vunpack.c.l.b16 %v4365
        %v5214 = vunpack.c.l.b16 %v4366
        %v5215 = vunpack.c.l.b16 %v4367
        %v5216 = vunpack.c.l.b16 %v4368
        %v5217 = vunpack.c.l.b16 %v4369
        %v5218 = vunpack.c.l.b16 %v4370
        %v5219 = vunpack.c.l.b16 %v4371
        %v5220 = vunpack.c.l.b16 %v4372
        %v5221 = vunpack.c.l.b16 %v4373
        %v5222 = vunpack.c.l.b16 %v4374
        %v5223 = vunpack.c.l.b16 %v4375
        %v5224 = vunpack.c.l.b16 %v4376
        %v5225 = vunpack.c.l.b16 %v4377
        %v5226 = vunpack.c.l.b16 %v4378
        %v5227 = vunpack.c.l.b16 %v4379
        %v5228 = vunpack.c.l.b16 %v4380
        %v5229 = vunpack.c.l.b16 %v4381
        %v5230 = vunpack.c.l.b16 %v4382
        %v5231 = vunpack.c.l.b16 %v4383
        %v5232 = vpack.c.b16 %v5201, %v5200
        %v5233 = vpack.c.b16 %v5203, %v5202
        %v5234 = vpack.c.b16 %v5205, %v5204
        %v5235 = vpack.c.b16 %v5207, %v5206
        %v5236 = vpack.c.b16 %v5209, %v5208
        %v5237 = vpack.c.b16 %v5211, %v5210
        %v5238 = vpack.c.b16 %v5213, %v5212
        %v5239 = vpack.c.b16 %v5215, %v5214
        %v5240 = vpack.c.b16 %v5217, %v5216
        %v5241 = vpack.c.b16 %v5219, %v5218
        %v5242 = vpack.c.b16 %v5221, %v5220
        %v5243 = vpack.c.b16 %v5223, %v5222
        %v5244 = vpack.c.b16 %v5225, %v5224
        %v5245 = vpack.c.b16 %v5227, %v5226
        %v5246 = vpack.c.b16 %v5229, %v5228
        %v5247 = vpack.c.b16 %v5231, %v5230
        %5248 = vrot.lane.b32.xlu0 %v5232, 96
        %v5249 = vpop.permute.xlu0 %5248
        %5250 = vrot.lane.b32.xlu0 %v5233, 96
        %v5251 = vpop.permute.xlu0 %5250
        %5252 = vrot.lane.b32.xlu0 %v5234, 96
        %v5253 = vpop.permute.xlu0 %5252
        %5254 = vrot.lane.b32.xlu0 %v5235, 96
        %v5255 = vpop.permute.xlu0 %5254
        %5256 = vrot.lane.b32.xlu0 %v5236, 96
        %v5257 = vpop.permute.xlu0 %5256
        %5258 = vrot.lane.b32.xlu0 %v5237, 96
        %v5259 = vpop.permute.xlu0 %5258
        %5260 = vrot.lane.b32.xlu0 %v5238, 96
        %v5261 = vpop.permute.xlu0 %5260
        %5262 = vrot.lane.b32.xlu0 %v5239, 96
        %v5263 = vpop.permute.xlu0 %5262
        %5264 = vrot.lane.b32.xlu0 %v5240, 96
        %v5265 = vpop.permute.xlu0 %5264
        %5266 = vrot.lane.b32.xlu0 %v5241, 96
        %v5267 = vpop.permute.xlu0 %5266
        %5268 = vrot.lane.b32.xlu0 %v5242, 96
        %v5269 = vpop.permute.xlu0 %5268
        %5270 = vrot.lane.b32.xlu0 %v5243, 96
        %v5271 = vpop.permute.xlu0 %5270
        %5272 = vrot.lane.b32.xlu0 %v5244, 96
        %v5273 = vpop.permute.xlu0 %5272
        %5274 = vrot.lane.b32.xlu0 %v5245, 96
        %v5275 = vpop.permute.xlu0 %5274
        %5276 = vrot.lane.b32.xlu0 %v5246, 96
        %v5277 = vpop.permute.xlu0 %5276
        %5278 = vrot.lane.b32.xlu0 %v5247, 96
        %v5279 = vpop.permute.xlu0 %5278
        %v5312 = vunpack.c.l.b16 %v4416
        %v5313 = vunpack.c.l.b16 %v4417
        %v5314 = vunpack.c.l.b16 %v4418
        %v5315 = vunpack.c.l.b16 %v4419
        %v5316 = vunpack.c.l.b16 %v4420
        %v5317 = vunpack.c.l.b16 %v4421
        %v5318 = vunpack.c.l.b16 %v4422
        %v5319 = vunpack.c.l.b16 %v4423
        %v5320 = vunpack.c.l.b16 %v4424
        %v5321 = vunpack.c.l.b16 %v4425
        %v5322 = vunpack.c.l.b16 %v4426
        %v5323 = vunpack.c.l.b16 %v4427
        %v5324 = vunpack.c.l.b16 %v4428
        %v5325 = vunpack.c.l.b16 %v4429
        %v5326 = vunpack.c.l.b16 %v4430
        %v5327 = vunpack.c.l.b16 %v4431
        %v5328 = vunpack.c.l.b16 %v4432
        %v5329 = vunpack.c.l.b16 %v4433
        %v5330 = vunpack.c.l.b16 %v4434
        %v5331 = vunpack.c.l.b16 %v4435
        %v5332 = vunpack.c.l.b16 %v4436
        %v5333 = vunpack.c.l.b16 %v4437
        %v5334 = vunpack.c.l.b16 %v4438
        %v5335 = vunpack.c.l.b16 %v4439
        %v5336 = vunpack.c.l.b16 %v4440
        %v5337 = vunpack.c.l.b16 %v4441
        %v5338 = vunpack.c.l.b16 %v4442
        %v5339 = vunpack.c.l.b16 %v4443
        %v5340 = vunpack.c.l.b16 %v4444
        %v5341 = vunpack.c.l.b16 %v4445
        %v5342 = vunpack.c.l.b16 %v4446
        %v5343 = vunpack.c.l.b16 %v4447
        %v5344 = vpack.c.b16 %v5313, %v5312
        %v5345 = vpack.c.b16 %v5315, %v5314
        %v5346 = vpack.c.b16 %v5317, %v5316
        %v5347 = vpack.c.b16 %v5319, %v5318
        %v5348 = vpack.c.b16 %v5321, %v5320
        %v5349 = vpack.c.b16 %v5323, %v5322
        %v5350 = vpack.c.b16 %v5325, %v5324
        %v5351 = vpack.c.b16 %v5327, %v5326
        %v5352 = vpack.c.b16 %v5329, %v5328
        %v5353 = vpack.c.b16 %v5331, %v5330
        %v5354 = vpack.c.b16 %v5333, %v5332
        %v5355 = vpack.c.b16 %v5335, %v5334
        %v5356 = vpack.c.b16 %v5337, %v5336
        %v5357 = vpack.c.b16 %v5339, %v5338
        %v5358 = vpack.c.b16 %v5341, %v5340
        %v5359 = vpack.c.b16 %v5343, %v5342
        %v5362 = vsel %vm3023, %v4512, %v4609
        %v5365 = vsel %vm3023, %v4513, %v4611
        %v5368 = vsel %vm3023, %v4514, %v4613
        %v5371 = vsel %vm3023, %v4515, %v4615
        %v5374 = vsel %vm3023, %v4516, %v4617
        %v5377 = vsel %vm3023, %v4517, %v4619
        %v5380 = vsel %vm3023, %v4518, %v4621
        %v5383 = vsel %vm3023, %v4519, %v4623
        %v5386 = vsel %vm3023, %v4520, %v4625
        %v5389 = vsel %vm3023, %v4521, %v4627
        %v5392 = vsel %vm3023, %v4522, %v4629
        %v5395 = vsel %vm3023, %v4523, %v4631
        %v5398 = vsel %vm3023, %v4524, %v4633
        %v5401 = vsel %vm3023, %v4525, %v4635
        %v5404 = vsel %vm3023, %v4526, %v4637
        %v5407 = vsel %vm3023, %v4527, %v4639
        %v5409 = vsel %vm3072, %v5362, %v4721
        %v5411 = vsel %vm3072, %v5365, %v4723
        %v5413 = vsel %vm3072, %v5368, %v4725
        %v5415 = vsel %vm3072, %v5371, %v4727
        %v5417 = vsel %vm3072, %v5374, %v4729
        %v5419 = vsel %vm3072, %v5377, %v4731
        %v5421 = vsel %vm3072, %v5380, %v4733
        %v5423 = vsel %vm3072, %v5383, %v4735
        %v5425 = vsel %vm3072, %v5386, %v4737
        %v5427 = vsel %vm3072, %v5389, %v4739
        %v5429 = vsel %vm3072, %v5392, %v4741
        %v5431 = vsel %vm3072, %v5395, %v4743
        %v5433 = vsel %vm3072, %v5398, %v4745
        %v5435 = vsel %vm3072, %v5401, %v4747
        %v5437 = vsel %vm3072, %v5404, %v4749
        %v5439 = vsel %vm3072, %v5407, %v4751
        %v5441 = vsel %vm3105, %v5409, %v4833
        %v5444 = vsel %vm3105, %v5411, %v4835
        %v5447 = vsel %vm3105, %v5413, %v4837
        %v5450 = vsel %vm3105, %v5415, %v4839
        %v5453 = vsel %vm3105, %v5417, %v4841
        %v5456 = vsel %vm3105, %v5419, %v4843
        %v5459 = vsel %vm3105, %v5421, %v4845
        %v5462 = vsel %vm3105, %v5423, %v4847
        %v5465 = vsel %vm3105, %v5425, %v4849
        %v5468 = vsel %vm3105, %v5427, %v4851
        %v5471 = vsel %vm3105, %v5429, %v4853
        %v5474 = vsel %vm3105, %v5431, %v4855
        %v5477 = vsel %vm3105, %v5433, %v4857
        %v5480 = vsel %vm3105, %v5435, %v4859
        %v5483 = vsel %vm3105, %v5437, %v4861
        %v5486 = vsel %vm3105, %v5439, %v4863
        %v5490 = vsel %vm3023, %v4928, %v5025
        %v5493 = vsel %vm3023, %v4929, %v5027
        %v5496 = vsel %vm3023, %v4930, %v5029
        %v5499 = vsel %vm3023, %v4931, %v5031
        %v5502 = vsel %vm3023, %v4932, %v5033
        %v5505 = vsel %vm3023, %v4933, %v5035
        %v5508 = vsel %vm3023, %v4934, %v5037
        %v5511 = vsel %vm3023, %v4935, %v5039
        %v5514 = vsel %vm3023, %v4936, %v5041
        %v5517 = vsel %vm3023, %v4937, %v5043
        %v5520 = vsel %vm3023, %v4938, %v5045
        %v5523 = vsel %vm3023, %v4939, %v5047
        %v5526 = vsel %vm3023, %v4940, %v5049
        %v5529 = vsel %vm3023, %v4941, %v5051
        %v5532 = vsel %vm3023, %v4942, %v5053
        %v5535 = vsel %vm3023, %v4943, %v5055
        %v5537 = vsel %vm3072, %v5490, %v5137
        %v5539 = vsel %vm3072, %v5493, %v5139
        %v5541 = vsel %vm3072, %v5496, %v5141
        %v5543 = vsel %vm3072, %v5499, %v5143
        %v5545 = vsel %vm3072, %v5502, %v5145
        %v5547 = vsel %vm3072, %v5505, %v5147
        %v5549 = vsel %vm3072, %v5508, %v5149
        %v5551 = vsel %vm3072, %v5511, %v5151
        %v5553 = vsel %vm3072, %v5514, %v5153
        %v5555 = vsel %vm3072, %v5517, %v5155
        %v5557 = vsel %vm3072, %v5520, %v5157
        %v5559 = vsel %vm3072, %v5523, %v5159
        %v5561 = vsel %vm3072, %v5526, %v5161
        %v5563 = vsel %vm3072, %v5529, %v5163
        %v5565 = vsel %vm3072, %v5532, %v5165
        %v5567 = vsel %vm3072, %v5535, %v5167
        %v5569 = vsel %vm3105, %v5537, %v5249
        %v5572 = vsel %vm3105, %v5539, %v5251
        %v5575 = vsel %vm3105, %v5541, %v5253
        %v5578 = vsel %vm3105, %v5543, %v5255
        %v5581 = vsel %vm3105, %v5545, %v5257
        %v5584 = vsel %vm3105, %v5547, %v5259
        %v5587 = vsel %vm3105, %v5549, %v5261
        %v5590 = vsel %vm3105, %v5551, %v5263
        %v5593 = vsel %vm3105, %v5553, %v5265
        %v5596 = vsel %vm3105, %v5555, %v5267
        %v5599 = vsel %vm3105, %v5557, %v5269
        %v5602 = vsel %vm3105, %v5559, %v5271
        %v5605 = vsel %vm3105, %v5561, %v5273
        %v5608 = vsel %vm3105, %v5563, %v5275
        %v5611 = vsel %vm3105, %v5565, %v5277
        %v5614 = vsel %vm3105, %v5567, %v5279
        %v5616 = vperm.slane %v3775, 0
        %v5653 = vunpack.c.l.b16 %v3739
        %v5654 = vunpack.c.l.b16 %v3740
        %v5655 = vunpack.c.l.b16 %v3741
        %v5656 = vunpack.c.l.b16 %v3742
        %v5657 = vunpack.c.l.b16 %v3743
        %v5658 = vunpack.c.l.b16 %v3744
        %v5659 = vunpack.c.l.b16 %v3745
        %v5660 = vunpack.c.l.b16 %v3746
        %v5661 = vunpack.c.l.b16 %v3747
        %v5662 = vunpack.c.l.b16 %v3748
        %v5663 = vunpack.c.l.b16 %v3749
        %v5664 = vunpack.c.l.b16 %v3750
        %v5665 = vunpack.c.l.b16 %v3751
        %v5666 = vunpack.c.l.b16 %v3752
        %v5667 = vunpack.c.l.b16 %v3753
        %v5668 = vunpack.c.l.b16 %v3754
        %v5669 = vunpack.c.l.b16 %v3755
        %v5670 = vunpack.c.l.b16 %v3756
        %v5671 = vunpack.c.l.b16 %v3757
        %v5672 = vunpack.c.l.b16 %v3758
        %v5673 = vunpack.c.l.b16 %v3759
        %v5674 = vunpack.c.l.b16 %v3760
        %v5675 = vunpack.c.l.b16 %v3761
        %v5676 = vunpack.c.l.b16 %v3762
        %v5677 = vunpack.c.l.b16 %v3763
        %v5678 = vunpack.c.l.b16 %v3764
        %v5679 = vunpack.c.l.b16 %v3765
        %v5680 = vunpack.c.l.b16 %v3766
        %v5681 = vunpack.c.l.b16 %v3767
        %v5682 = vunpack.c.l.b16 %v3768
        %v5683 = vunpack.c.l.b16 %v3769
        %v5684 = vunpack.c.l.b16 %v3770
        %v5685 = vunpack.c.l.b16 %v3771
        %v5686 = vunpack.c.l.b16 %v3772
        %v5687 = vunpack.c.l.b16 %v3773
        %v5688 = vunpack.c.l.b16 %v3774
        %v5689 = vpack.c.b16 %v5654, %v5653
        %v5690 = vpack.c.b16 %v5656, %v5655
        %v5691 = vpack.c.b16 %v5658, %v5657
        %v5692 = vpack.c.b16 %v5660, %v5659
        %v5693 = vpack.c.b16 %v5662, %v5661
        %v5694 = vpack.c.b16 %v5664, %v5663
        %v5695 = vpack.c.b16 %v5666, %v5665
        %v5696 = vpack.c.b16 %v5668, %v5667
        %v5697 = vpack.c.b16 %v5670, %v5669
        %v5698 = vpack.c.b16 %v5672, %v5671
        %v5699 = vpack.c.b16 %v5674, %v5673
        %v5700 = vpack.c.b16 %v5676, %v5675
        %v5701 = vpack.c.b16 %v5678, %v5677
        %v5702 = vpack.c.b16 %v5680, %v5679
        %v5703 = vpack.c.b16 %v5682, %v5681
        %v5704 = vpack.c.b16 %v5684, %v5683
        %v5705 = vpack.c.b16 %v5686, %v5685
        %v5706 = vpack.c.b16 %v5688, %v5687
        %v5726 = vsel %vm3023, %v5344, 0
        %v5729 = vsel %vm3023, %v5345, 0
        %v5732 = vsel %vm3023, %v5346, 0
        %v5735 = vsel %vm3023, %v5347, 0
        %v5738 = vsel %vm3023, %v5348, 0
        %v5741 = vsel %vm3023, %v5349, 0
        %v5744 = vsel %vm3023, %v5350, 0
        %v5747 = vsel %vm3023, %v5351, 0
        %v5750 = vsel %vm3023, %v5352, 0
        %v5753 = vsel %vm3023, %v5353, 0
        %v5756 = vsel %vm3023, %v5354, 0
        %v5759 = vsel %vm3023, %v5355, 0
        %v5762 = vsel %vm3023, %v5356, 0
        %v5765 = vsel %vm3023, %v5357, 0
        %v5768 = vsel %vm3023, %v5358, 0
        %v5771 = vsel %vm3023, %v5359, 0
        %5773 = vmatpush.bf16.msra.mxu0 %v5696
        %5774 = vmatpush.bf16.msra.mxu0 %v5695
        %5775 = vmatpush.bf16.msra.mxu0 %v5694
        %5776 = vmatpush.bf16.msra.mxu0 %v5693
        %5777 = vmatpush.bf16.msra.mxu0 %v5692
        %5778 = vmatpush.bf16.msra.mxu0 %v5691
        %5779 = vmatpush.bf16.msra.mxu0 %v5690
        %5780 = vmatpush.bf16.msra.mxu0 %v5689
        %5781 = vmatmul.bf16.gmra.mxu0 %v5441
        %v5782 = vpop.f32.mrf.mxu0
        %v5783 = vadd.f32 %v5616, %v5782
        %v5784 = vpop.f32.mrf.mxu0
        %v5785 = vadd.f32 %v5616, %v5784
        %5786 = vmatmul.bf16.gmra.mxu0 %v5444
        %v5787 = vpop.f32.mrf.mxu0
        %v5788 = vadd.f32 %v5616, %v5787
        %v5789 = vpop.f32.mrf.mxu0
        %v5790 = vadd.f32 %v5616, %v5789
        %5791 = vmatmul.bf16.gmra.mxu0 %v5447
        %v5792 = vpop.f32.mrf.mxu0
        %v5793 = vadd.f32 %v5616, %v5792
        %v5794 = vpop.f32.mrf.mxu0
        %v5795 = vadd.f32 %v5616, %v5794
        %5796 = vmatmul.bf16.gmra.mxu0 %v5450
        %v5797 = vpop.f32.mrf.mxu0
        %v5798 = vadd.f32 %v5616, %v5797
        %v5799 = vpop.f32.mrf.mxu0
        %v5800 = vadd.f32 %v5616, %v5799
        %5801 = vmatmul.bf16.gmra.mxu0 %v5453
        %v5802 = vpop.f32.mrf.mxu0
        %v5803 = vadd.f32 %v5616, %v5802
        %v5804 = vpop.f32.mrf.mxu0
        %v5805 = vadd.f32 %v5616, %v5804
        %5806 = vmatmul.bf16.gmra.mxu0 %v5456
        %v5807 = vpop.f32.mrf.mxu0
        %v5808 = vadd.f32 %v5616, %v5807
        %v5809 = vpop.f32.mrf.mxu0
        %v5810 = vadd.f32 %v5616, %v5809
        %5811 = vmatmul.bf16.gmra.mxu0 %v5459
        %v5812 = vpop.f32.mrf.mxu0
        %v5813 = vadd.f32 %v5616, %v5812
        %v5814 = vpop.f32.mrf.mxu0
        %v5815 = vadd.f32 %v5616, %v5814
        %5816 = vmatmul.bf16.gmra.mxu0 %v5462
        %v5817 = vpop.f32.mrf.mxu0
        %v5818 = vadd.f32 %v5616, %v5817
        %v5819 = vpop.f32.mrf.mxu0
        %v5820 = vadd.f32 %v5616, %v5819
        %5821 = vmatmul.bf16.gmra.mxu0 %v5465
        %v5822 = vpop.f32.mrf.mxu0
        %v5823 = vadd.f32 %v5616, %v5822
        %v5824 = vpop.f32.mrf.mxu0
        %v5825 = vadd.f32 %v5616, %v5824
        %5826 = vmatmul.bf16.gmra.mxu0 %v5468
        %v5827 = vpop.f32.mrf.mxu0
        %v5828 = vadd.f32 %v5616, %v5827
        %v5829 = vpop.f32.mrf.mxu0
        %v5830 = vadd.f32 %v5616, %v5829
        %5831 = vmatmul.bf16.gmra.mxu0 %v5471
        %v5832 = vpop.f32.mrf.mxu0
        %v5833 = vadd.f32 %v5616, %v5832
        %v5834 = vpop.f32.mrf.mxu0
        %v5835 = vadd.f32 %v5616, %v5834
        %5836 = vmatmul.bf16.gmra.mxu0 %v5474
        %v5837 = vpop.f32.mrf.mxu0
        %v5838 = vadd.f32 %v5616, %v5837
        %v5839 = vpop.f32.mrf.mxu0
        %v5840 = vadd.f32 %v5616, %v5839
        %5841 = vmatmul.bf16.gmra.mxu0 %v5477
        %v5842 = vpop.f32.mrf.mxu0
        %v5843 = vadd.f32 %v5616, %v5842
        %v5844 = vpop.f32.mrf.mxu0
        %v5845 = vadd.f32 %v5616, %v5844
        %5846 = vmatmul.bf16.gmra.mxu0 %v5480
        %v5847 = vpop.f32.mrf.mxu0
        %v5848 = vadd.f32 %v5616, %v5847
        %v5849 = vpop.f32.mrf.mxu0
        %v5850 = vadd.f32 %v5616, %v5849
        %5851 = vmatmul.bf16.gmra.mxu0 %v5483
        %v5852 = vpop.f32.mrf.mxu0
        %v5853 = vadd.f32 %v5616, %v5852
        %v5854 = vpop.f32.mrf.mxu0
        %v5855 = vadd.f32 %v5616, %v5854
        %5856 = vmatmul.bf16.gmra.mxu0 %v5486
        %v5857 = vpop.f32.mrf.mxu0
        %v5858 = vadd.f32 %v5616, %v5857
        %v5859 = vpop.f32.mrf.mxu0
        %v5860 = vadd.f32 %v5616, %v5859
        %5861 = vdwg.mxu0
        %5862 = vmatpush.bf16.msra.mxu0 %v5704
        %5863 = vmatpush.bf16.msra.mxu0 %v5703
        %5864 = vmatpush.bf16.msra.mxu0 %v5702
        %5865 = vmatpush.bf16.msra.mxu0 %v5701
        %5866 = vmatpush.bf16.msra.mxu0 %v5700
        %5867 = vmatpush.bf16.msra.mxu0 %v5699
        %5868 = vmatpush.bf16.msra.mxu0 %v5698
        %5869 = vmatpush.bf16.msra.mxu0 %v5697
        %5870 = vmatmul.bf16.gmra.mxu0 %v5569
        %v5871 = vpop.f32.mrf.mxu0
        %v5872 = vadd.f32 %v5783, %v5871
        %v5873 = vpop.f32.mrf.mxu0
        %v5874 = vadd.f32 %v5785, %v5873
        %5875 = vmatmul.bf16.gmra.mxu0 %v5572
        %v5876 = vpop.f32.mrf.mxu0
        %v5877 = vadd.f32 %v5788, %v5876
        %v5878 = vpop.f32.mrf.mxu0
        %v5879 = vadd.f32 %v5790, %v5878
        %5880 = vmatmul.bf16.gmra.mxu0 %v5575
        %v5881 = vpop.f32.mrf.mxu0
        %v5882 = vadd.f32 %v5793, %v5881
        %v5883 = vpop.f32.mrf.mxu0
        %v5884 = vadd.f32 %v5795, %v5883
        %5885 = vmatmul.bf16.gmra.mxu0 %v5578
        %v5886 = vpop.f32.mrf.mxu0
        %v5887 = vadd.f32 %v5798, %v5886
        %v5888 = vpop.f32.mrf.mxu0
        %v5889 = vadd.f32 %v5800, %v5888
        %5890 = vmatmul.bf16.gmra.mxu0 %v5581
        %v5891 = vpop.f32.mrf.mxu0
        %v5892 = vadd.f32 %v5803, %v5891
        %v5893 = vpop.f32.mrf.mxu0
        %v5894 = vadd.f32 %v5805, %v5893
        %5895 = vmatmul.bf16.gmra.mxu0 %v5584
        %v5896 = vpop.f32.mrf.mxu0
        %v5897 = vadd.f32 %v5808, %v5896
        %v5898 = vpop.f32.mrf.mxu0
        %v5899 = vadd.f32 %v5810, %v5898
        %5900 = vmatmul.bf16.gmra.mxu0 %v5587
        %v5901 = vpop.f32.mrf.mxu0
        %v5902 = vadd.f32 %v5813, %v5901
        %v5903 = vpop.f32.mrf.mxu0
        %v5904 = vadd.f32 %v5815, %v5903
        %5905 = vmatmul.bf16.gmra.mxu0 %v5590
        %v5906 = vpop.f32.mrf.mxu0
        %v5907 = vadd.f32 %v5818, %v5906
        %v5908 = vpop.f32.mrf.mxu0
        %v5909 = vadd.f32 %v5820, %v5908
        %5910 = vmatmul.bf16.gmra.mxu0 %v5593
        %v5911 = vpop.f32.mrf.mxu0
        %v5912 = vadd.f32 %v5823, %v5911
        %v5913 = vpop.f32.mrf.mxu0
        %v5914 = vadd.f32 %v5825, %v5913
        %5915 = vmatmul.bf16.gmra.mxu0 %v5596
        %v5916 = vpop.f32.mrf.mxu0
        %v5917 = vadd.f32 %v5828, %v5916
        %v5918 = vpop.f32.mrf.mxu0
        %v5919 = vadd.f32 %v5830, %v5918
        %5920 = vmatmul.bf16.gmra.mxu0 %v5599
        %v5921 = vpop.f32.mrf.mxu0
        %v5922 = vadd.f32 %v5833, %v5921
        %v5923 = vpop.f32.mrf.mxu0
        %v5924 = vadd.f32 %v5835, %v5923
        %5925 = vmatmul.bf16.gmra.mxu0 %v5602
        %v5926 = vpop.f32.mrf.mxu0
        %v5927 = vadd.f32 %v5838, %v5926
        %v5928 = vpop.f32.mrf.mxu0
        %v5929 = vadd.f32 %v5840, %v5928
        %5930 = vmatmul.bf16.gmra.mxu0 %v5605
        %v5931 = vpop.f32.mrf.mxu0
        %v5932 = vadd.f32 %v5843, %v5931
        %v5933 = vpop.f32.mrf.mxu0
        %v5934 = vadd.f32 %v5845, %v5933
        %5935 = vmatmul.bf16.gmra.mxu0 %v5608
        %v5936 = vpop.f32.mrf.mxu0
        %v5937 = vadd.f32 %v5848, %v5936
        %v5938 = vpop.f32.mrf.mxu0
        %v5939 = vadd.f32 %v5850, %v5938
        %5940 = vmatmul.bf16.gmra.mxu0 %v5611
        %v5941 = vpop.f32.mrf.mxu0
        %v5942 = vadd.f32 %v5853, %v5941
        %v5943 = vpop.f32.mrf.mxu0
        %v5944 = vadd.f32 %v5855, %v5943
        %5945 = vmatmul.bf16.gmra.mxu0 %v5614
        %v5946 = vpop.f32.mrf.mxu0
        %v5947 = vadd.f32 %v5858, %v5946
        %v5948 = vpop.f32.mrf.mxu0
        %v5949 = vadd.f32 %v5860, %v5948
        %5950 = vdwg.mxu0
        %5951 = vmatpush.bf16.msra.mxu0 0
        %5952 = vmatpush.bf16.msra.mxu0 0
        %5953 = vmatpush.bf16.msra.mxu0 0
        %5954 = vmatpush.bf16.msra.mxu0 0
        %5955 = vmatpush.bf16.msra.mxu0 0
        %5956 = vmatpush.bf16.msra.mxu0 0
        %5957 = vmatpush.bf16.msra.mxu0 %v5706
        %5958 = vmatpush.bf16.msra.mxu0 %v5705
        %5959 = vmatmul.bf16.gmra.mxu0 %v5726
        %v5960 = vpop.f32.mrf.mxu0
        %v5961 = vadd.f32 %v5872, %v5960
        %v5962 = vpop.f32.mrf.mxu0
        %v5963 = vadd.f32 %v5874, %v5962
        %5964 = vmatmul.bf16.gmra.mxu0 %v5729
        %v5965 = vpop.f32.mrf.mxu0
        %v5966 = vadd.f32 %v5877, %v5965
        %v5967 = vpop.f32.mrf.mxu0
        %v5968 = vadd.f32 %v5879, %v5967
        %5969 = vmatmul.bf16.gmra.mxu0 %v5732
        %v5970 = vpop.f32.mrf.mxu0
        %v5971 = vadd.f32 %v5882, %v5970
        %v5972 = vpop.f32.mrf.mxu0
        %v5973 = vadd.f32 %v5884, %v5972
        %5974 = vmatmul.bf16.gmra.mxu0 %v5735
        %v5975 = vpop.f32.mrf.mxu0
        %v5976 = vadd.f32 %v5887, %v5975
        %v5977 = vpop.f32.mrf.mxu0
        %v5978 = vadd.f32 %v5889, %v5977
        %5979 = vmatmul.bf16.gmra.mxu0 %v5738
        %v5980 = vpop.f32.mrf.mxu0
        %v5981 = vadd.f32 %v5892, %v5980
        %v5982 = vpop.f32.mrf.mxu0
        %v5983 = vadd.f32 %v5894, %v5982
        %5984 = vmatmul.bf16.gmra.mxu0 %v5741
        %v5985 = vpop.f32.mrf.mxu0
        %v5986 = vadd.f32 %v5897, %v5985
        %v5987 = vpop.f32.mrf.mxu0
        %v5988 = vadd.f32 %v5899, %v5987
        %5989 = vmatmul.bf16.gmra.mxu0 %v5744
        %v5990 = vpop.f32.mrf.mxu0
        %v5991 = vadd.f32 %v5902, %v5990
        %v5992 = vpop.f32.mrf.mxu0
        %v5993 = vadd.f32 %v5904, %v5992
        %5994 = vmatmul.bf16.gmra.mxu0 %v5747
        %v5995 = vpop.f32.mrf.mxu0
        %v5996 = vadd.f32 %v5907, %v5995
        %v5997 = vpop.f32.mrf.mxu0
        %v5998 = vadd.f32 %v5909, %v5997
        %5999 = vmatmul.bf16.gmra.mxu0 %v5750
        %v6000 = vpop.f32.mrf.mxu0
        %v6001 = vadd.f32 %v5912, %v6000
        %v6002 = vpop.f32.mrf.mxu0
        %v6003 = vadd.f32 %v5914, %v6002
        %6004 = vmatmul.bf16.gmra.mxu0 %v5753
        %v6005 = vpop.f32.mrf.mxu0
        %v6006 = vadd.f32 %v5917, %v6005
        %v6007 = vpop.f32.mrf.mxu0
        %v6008 = vadd.f32 %v5919, %v6007
        %6009 = vmatmul.bf16.gmra.mxu0 %v5756
        %v6010 = vpop.f32.mrf.mxu0
        %v6011 = vadd.f32 %v5922, %v6010
        %v6012 = vpop.f32.mrf.mxu0
        %v6013 = vadd.f32 %v5924, %v6012
        %6014 = vmatmul.bf16.gmra.mxu0 %v5759
        %v6015 = vpop.f32.mrf.mxu0
        %v6016 = vadd.f32 %v5927, %v6015
        %v6017 = vpop.f32.mrf.mxu0
        %v6018 = vadd.f32 %v5929, %v6017
        %6019 = vmatmul.bf16.gmra.mxu0 %v5762
        %v6020 = vpop.f32.mrf.mxu0
        %v6021 = vadd.f32 %v5932, %v6020
        %v6022 = vpop.f32.mrf.mxu0
        %v6023 = vadd.f32 %v5934, %v6022
        %6024 = vmatmul.bf16.gmra.mxu0 %v5765
        %v6025 = vpop.f32.mrf.mxu0
        %v6026 = vadd.f32 %v5937, %v6025
        %v6027 = vpop.f32.mrf.mxu0
        %v6028 = vadd.f32 %v5939, %v6027
        %6029 = vmatmul.bf16.gmra.mxu0 %v5768
        %v6030 = vpop.f32.mrf.mxu0
        %v6031 = vadd.f32 %v5942, %v6030
        %v6032 = vpop.f32.mrf.mxu0
        %v6033 = vadd.f32 %v5944, %v6032
        %6034 = vmatmul.bf16.gmra.mxu0 %v5771
        %v6035 = vpop.f32.mrf.mxu0
        %v6036 = vadd.f32 %v5947, %v6035
        %v6037 = vpop.f32.mrf.mxu0
        %v6038 = vadd.f32 %v5949, %v6037
        %6039 = vdwg.mxu0
        %v6040 = vmax.f32 %v5961, 0.0
        %v6041 = vmax.f32 %v5963, 0.0
        %v6042 = vmax.f32 %v5966, 0.0
        %v6043 = vmax.f32 %v5968, 0.0
        %v6044 = vmax.f32 %v5971, 0.0
        %v6045 = vmax.f32 %v5973, 0.0
        %v6046 = vmax.f32 %v5976, 0.0
        %v6047 = vmax.f32 %v5978, 0.0
        %v6048 = vmax.f32 %v5981, 0.0
        %v6049 = vmax.f32 %v5983, 0.0
        %v6050 = vmax.f32 %v5986, 0.0
        %v6051 = vmax.f32 %v5988, 0.0
        %v6052 = vmax.f32 %v5991, 0.0
        %v6053 = vmax.f32 %v5993, 0.0
        %v6054 = vmax.f32 %v5996, 0.0
        %v6055 = vmax.f32 %v5998, 0.0
        %v6056 = vmax.f32 %v6001, 0.0
        %v6057 = vmax.f32 %v6003, 0.0
        %v6058 = vmax.f32 %v6006, 0.0
        %v6059 = vmax.f32 %v6008, 0.0
        %v6060 = vmax.f32 %v6011, 0.0
        %v6061 = vmax.f32 %v6013, 0.0
        %v6062 = vmax.f32 %v6016, 0.0
        %v6063 = vmax.f32 %v6018, 0.0
        %v6064 = vmax.f32 %v6021, 0.0
        %v6065 = vmax.f32 %v6023, 0.0
        %v6066 = vmax.f32 %v6026, 0.0
        %v6067 = vmax.f32 %v6028, 0.0
        %v6068 = vmax.f32 %v6031, 0.0
        %v6069 = vmax.f32 %v6033, 0.0
        %v6070 = vmax.f32 %v6036, 0.0
        %v6071 = vmax.f32 %v6038, 0.0
        %v6072 = vld [vmem:[%s5] sm:$0xff]
        %v6073 = vld [vmem:[%s5 + $0x8] sm:$0xff]
        %v6074 = vld [vmem:[%s5 + $0x10] sm:$0xff]
        %v6075 = vld [vmem:[%s5 + $0x18] sm:$0xff]
        %v6076 = vld [vmem:[%s5 + $0x20] sm:$0xff]
        %v6077 = vld [vmem:[%s5 + $0x28] sm:$0xff]
        %v6078 = vld [vmem:[%s5 + $0x30] sm:$0xff]
        %v6079 = vld [vmem:[%s5 + $0x38] sm:$0xff]
        %v6080 = vrot.slane %v6040, 1
        %v6081 = vrot.slane %v6041, 1
        %v6082 = vrot.slane %v6042, 1
        %v6083 = vrot.slane %v6043, 1
        %v6084 = vrot.slane %v6044, 1
        %v6085 = vrot.slane %v6045, 1
        %v6086 = vrot.slane %v6046, 1
        %v6087 = vrot.slane %v6047, 1
        %v6088 = vrot.slane %v6048, 1
        %v6089 = vrot.slane %v6049, 1
        %v6090 = vrot.slane %v6050, 1
        %v6091 = vrot.slane %v6051, 1
        %v6092 = vrot.slane %v6052, 1
        %v6093 = vrot.slane %v6053, 1
        %v6094 = vrot.slane %v6054, 1
        %v6095 = vrot.slane %v6055, 1
        %v6096 = vrot.slane %v6056, 1
        %v6097 = vrot.slane %v6057, 1
        %v6098 = vrot.slane %v6058, 1
        %v6099 = vrot.slane %v6059, 1
        %v6100 = vrot.slane %v6060, 1
        %v6101 = vrot.slane %v6061, 1
        %v6102 = vrot.slane %v6062, 1
        %v6103 = vrot.slane %v6063, 1
        %v6104 = vrot.slane %v6064, 1
        %v6105 = vrot.slane %v6065, 1
        %v6106 = vrot.slane %v6066, 1
        %v6107 = vrot.slane %v6067, 1
        %v6108 = vrot.slane %v6068, 1
        %v6109 = vrot.slane %v6069, 1
        %v6110 = vrot.slane %v6070, 1
        %v6111 = vrot.slane %v6071, 1
        %v6112 = vsel %vm894, %v6110, %v6111
        %v6113 = vsel %vm894, %v6109, %v6110
        %v6114 = vsel %vm894, %v6108, %v6109
        %v6115 = vsel %vm894, %v6107, %v6108
        %v6116 = vsel %vm894, %v6106, %v6107
        %v6117 = vsel %vm894, %v6105, %v6106
        %v6118 = vsel %vm894, %v6104, %v6105
        %v6119 = vsel %vm894, %v6103, %v6104
        %v6120 = vsel %vm894, %v6102, %v6103
        %v6121 = vsel %vm894, %v6101, %v6102
        %v6122 = vsel %vm894, %v6100, %v6101
        %v6123 = vsel %vm894, %v6099, %v6100
        %v6124 = vsel %vm894, %v6098, %v6099
        %v6125 = vsel %vm894, %v6097, %v6098
        %v6126 = vsel %vm894, %v6096, %v6097
        %v6127 = vsel %vm894, %v6095, %v6096
        %v6128 = vsel %vm894, %v6094, %v6095
        %v6129 = vsel %vm894, %v6093, %v6094
        %v6130 = vsel %vm894, %v6092, %v6093
        %v6131 = vsel %vm894, %v6091, %v6092
        %v6132 = vsel %vm894, %v6090, %v6091
        %v6133 = vsel %vm894, %v6089, %v6090
        %v6134 = vsel %vm894, %v6088, %v6089
        %v6135 = vsel %vm894, %v6087, %v6088
        %v6136 = vsel %vm894, %v6086, %v6087
        %v6137 = vsel %vm894, %v6085, %v6086
        %v6138 = vsel %vm894, %v6084, %v6085
        %v6139 = vsel %vm894, %v6083, %v6084
        %v6140 = vsel %vm894, %v6082, %v6083
        %v6141 = vsel %vm894, %v6081, %v6082
        %v6142 = vsel %vm894, %v6080, %v6081
        %v6143 = vsel %vm894, %v6111, %v6080
        %v6144 = vmax.f32 %v6040, %v6142
        %v6145 = vmax.f32 %v6041, %v6141
        %v6146 = vmax.f32 %v6042, %v6140
        %v6147 = vmax.f32 %v6043, %v6139
        %v6148 = vmax.f32 %v6044, %v6138
        %v6149 = vmax.f32 %v6045, %v6137
        %v6150 = vmax.f32 %v6046, %v6136
        %v6151 = vmax.f32 %v6047, %v6135
        %v6152 = vmax.f32 %v6048, %v6134
        %v6153 = vmax.f32 %v6049, %v6133
        %v6154 = vmax.f32 %v6050, %v6132
        %v6155 = vmax.f32 %v6051, %v6131
        %v6156 = vmax.f32 %v6052, %v6130
        %v6157 = vmax.f32 %v6053, %v6129
        %v6158 = vmax.f32 %v6054, %v6128
        %v6159 = vmax.f32 %v6055, %v6127
        %v6160 = vmax.f32 %v6056, %v6126
        %v6161 = vmax.f32 %v6057, %v6125
        %v6162 = vmax.f32 %v6058, %v6124
        %v6163 = vmax.f32 %v6059, %v6123
        %v6164 = vmax.f32 %v6060, %v6122
        %v6165 = vmax.f32 %v6061, %v6121
        %v6166 = vmax.f32 %v6062, %v6120
        %v6167 = vmax.f32 %v6063, %v6119
        %v6168 = vmax.f32 %v6064, %v6118
        %v6169 = vmax.f32 %v6065, %v6117
        %v6170 = vmax.f32 %v6066, %v6116
        %v6171 = vmax.f32 %v6067, %v6115
        %v6172 = vmax.f32 %v6068, %v6114
        %v6173 = vmax.f32 %v6069, %v6113
        %v6174 = vmax.f32 %v6070, %v6112
        %v6175 = vmax.f32 %v6071, %v6143
        %v6176 = vmax.f32 %v6144, %v6146
        %v6177 = vmax.f32 %v6145, %v6147
        %v6178 = vmax.f32 %v6146, %v6148
        %v6179 = vmax.f32 %v6147, %v6149
        %v6180 = vmax.f32 %v6148, %v6150
        %v6181 = vmax.f32 %v6149, %v6151
        %v6182 = vmax.f32 %v6150, %v6152
        %v6183 = vmax.f32 %v6151, %v6153
        %v6184 = vmax.f32 %v6152, %v6154
        %v6185 = vmax.f32 %v6153, %v6155
        %v6186 = vmax.f32 %v6154, %v6156
        %v6187 = vmax.f32 %v6155, %v6157
        %v6188 = vmax.f32 %v6156, %v6158
        %v6189 = vmax.f32 %v6157, %v6159
        %v6190 = vmax.f32 %v6158, %v6160
        %v6191 = vmax.f32 %v6159, %v6161
        %v6192 = vmax.f32 %v6160, %v6162
        %v6193 = vmax.f32 %v6161, %v6163
        %v6194 = vmax.f32 %v6162, %v6164
        %v6195 = vmax.f32 %v6163, %v6165
        %v6196 = vmax.f32 %v6164, %v6166
        %v6197 = vmax.f32 %v6165, %v6167
        %v6198 = vmax.f32 %v6166, %v6168
        %v6199 = vmax.f32 %v6167, %v6169
        %v6200 = vmax.f32 %v6168, %v6170
        %v6201 = vmax.f32 %v6169, %v6171
        %v6202 = vmax.f32 %v6170, %v6172
        %v6203 = vmax.f32 %v6171, %v6173
        %v6204 = vmax.f32 %v6172, %v6174
        %v6205 = vmax.f32 %v6173, %v6175
        %v6206 = vmax.f32 %v6174, %v6144
        %v6207 = vmax.f32 %v6175, %v6145
        %v6208 = vpack.c.bf16 %v6177, %v6176
        %v6209 = vpack.c.bf16 %v6179, %v6178
        %v6210 = vpack.c.bf16 %v6181, %v6180
        %v6211 = vpack.c.bf16 %v6183, %v6182
        %v6212 = vpack.c.bf16 %v6185, %v6184
        %v6213 = vpack.c.bf16 %v6187, %v6186
        %v6214 = vpack.c.bf16 %v6189, %v6188
        %v6215 = vpack.c.bf16 %v6191, %v6190
        %v6216 = vpack.c.bf16 %v6193, %v6192
        %v6217 = vpack.c.bf16 %v6195, %v6194
        %v6218 = vpack.c.bf16 %v6197, %v6196
        %v6219 = vpack.c.bf16 %v6199, %v6198
        %v6220 = vpack.c.bf16 %v6201, %v6200
        %v6221 = vpack.c.bf16 %v6203, %v6202
        %v6222 = vpack.c.bf16 %v6205, %v6204
        %v6223 = vpack.c.bf16 %v6207, %v6206
        %v6232 = vunpack.c.l.b16 %v6072
        %v6233 = vunpack.c.h.b16 %v6072
        %v6234 = vunpack.c.l.b16 %v6073
        %v6235 = vunpack.c.h.b16 %v6073
        %v6236 = vunpack.c.l.b16 %v6074
        %v6237 = vunpack.c.h.b16 %v6074
        %v6238 = vunpack.c.l.b16 %v6075
        %v6239 = vunpack.c.h.b16 %v6075
        %v6240 = vunpack.c.l.b16 %v6076
        %v6241 = vunpack.c.h.b16 %v6076
        %v6242 = vunpack.c.l.b16 %v6077
        %v6243 = vunpack.c.h.b16 %v6077
        %v6244 = vunpack.c.l.b16 %v6078
        %v6245 = vunpack.c.h.b16 %v6078
        %v6246 = vunpack.c.l.b16 %v6079
        %v6247 = vunpack.c.h.b16 %v6079
        %v6248 = vpack.c.b16 %v6234, %v6232
        %v6249 = vpack.c.b16 %v6235, %v6233
        %v6250 = vpack.c.b16 %v6238, %v6236
        %v6251 = vpack.c.b16 %v6239, %v6237
        %v6252 = vpack.c.b16 %v6242, %v6240
        %v6253 = vpack.c.b16 %v6243, %v6241
        %v6254 = vpack.c.b16 %v6246, %v6244
        %v6255 = vpack.c.b16 %v6247, %v6245
        %6264 = vmatpush.bf16.msra.mxu0 %v6215
        %6265 = vmatpush.bf16.msra.mxu0 %v6214
        %6266 = vmatpush.bf16.msra.mxu0 %v6213
        %6267 = vmatpush.bf16.msra.mxu0 %v6212
        %6268 = vmatpush.bf16.msra.mxu0 %v6211
        %6269 = vmatpush.bf16.msra.mxu0 %v6210
        %6270 = vmatpush.bf16.msra.mxu0 %v6209
        %6271 = vmatpush.bf16.msra.mxu0 %v6208
        %6272 = vmatmul.bf16.gmra.mxu0 %v6248
        %v6273 = vpop.f32.mrf.mxu0
        %v6274 = vadd.f32 0.0, %v6273
        %v6275 = vpop.f32.mrf.mxu0
        %v6276 = vadd.f32 0.0, %v6275
        %6277 = vmatmul.bf16.gmra.mxu0 %v6250
        %v6278 = vpop.f32.mrf.mxu0
        %v6279 = vadd.f32 0.0, %v6278
        %v6280 = vpop.f32.mrf.mxu0
        %v6281 = vadd.f32 0.0, %v6280
        %6282 = vmatmul.bf16.gmra.mxu0 %v6252
        %v6283 = vpop.f32.mrf.mxu0
        %v6284 = vadd.f32 0.0, %v6283
        %v6285 = vpop.f32.mrf.mxu0
        %v6286 = vadd.f32 0.0, %v6285
        %6287 = vmatmul.bf16.gmra.mxu0 %v6254
        %v6288 = vpop.f32.mrf.mxu0
        %v6289 = vadd.f32 0.0, %v6288
        %v6290 = vpop.f32.mrf.mxu0
        %v6291 = vadd.f32 0.0, %v6290
        %6292 = vdwg.mxu0
        %6293 = vmatpush.bf16.msra.mxu0 %v6223
        %6294 = vmatpush.bf16.msra.mxu0 %v6222
        %6295 = vmatpush.bf16.msra.mxu0 %v6221
        %6296 = vmatpush.bf16.msra.mxu0 %v6220
        %6297 = vmatpush.bf16.msra.mxu0 %v6219
        %6298 = vmatpush.bf16.msra.mxu0 %v6218
        %6299 = vmatpush.bf16.msra.mxu0 %v6217
        %6300 = vmatpush.bf16.msra.mxu0 %v6216
        %6301 = vmatmul.bf16.gmra.mxu0 %v6249
        %v6302 = vpop.f32.mrf.mxu0
        %v6303 = vadd.f32 %v6274, %v6302
        %v6304 = vpop.f32.mrf.mxu0
        %v6305 = vadd.f32 %v6276, %v6304
        %6306 = vmatmul.bf16.gmra.mxu0 %v6251
        %v6307 = vpop.f32.mrf.mxu0
        %v6308 = vadd.f32 %v6279, %v6307
        %v6309 = vpop.f32.mrf.mxu0
        %v6310 = vadd.f32 %v6281, %v6309
        %6311 = vmatmul.bf16.gmra.mxu0 %v6253
        %v6312 = vpop.f32.mrf.mxu0
        %v6313 = vadd.f32 %v6284, %v6312
        %v6314 = vpop.f32.mrf.mxu0
        %v6315 = vadd.f32 %v6286, %v6314
        %6316 = vmatmul.bf16.gmra.mxu0 %v6255
        %v6317 = vpop.f32.mrf.mxu0
        %v6318 = vadd.f32 %v6289, %v6317
        %v6319 = vpop.f32.mrf.mxu0
        %v6320 = vadd.f32 %v6291, %v6319
        %6321 = vdwg.mxu0
        %v6322 = vld [vmem:[%s2] sm:$0xf]
        %v6323 = vld [vmem:[%s2 + $0x4] sm:$0xf]
        %v6324 = vld [vmem:[%s2 + $0x8] sm:$0xf]
        %v6325 = vld [vmem:[%s2 + $0xc] sm:$0xf]
        %v6326 = vld [vmem:[%s3 + $0x4] sm:$0x1]
        %v6327 = vpack.c.bf16 %v6303, %v6303
        %v6328 = vpack.c.bf16 %v6305, %v6305
        %v6329 = vpack.c.bf16 %v6308, %v6308
        %v6330 = vpack.c.bf16 %v6310, %v6310
        %v6331 = vpack.c.bf16 %v6313, %v6313
        %v6332 = vpack.c.bf16 %v6315, %v6315
        %v6333 = vpack.c.bf16 %v6318, %v6318
        %v6334 = vpack.c.bf16 %v6320, %v6320
        %v6335 = vperm.slane %v6326, 0
        %v6344 = vunpack.c.l.b16 %v6327
        %v6345 = vunpack.c.l.b16 %v6328
        %v6346 = vunpack.c.l.b16 %v6329
        %v6347 = vunpack.c.l.b16 %v6330
        %v6348 = vunpack.c.l.b16 %v6331
        %v6349 = vunpack.c.l.b16 %v6332
        %v6350 = vunpack.c.l.b16 %v6333
        %v6351 = vunpack.c.l.b16 %v6334
        %v6352 = vpack.c.b16 %v6345, %v6344
        %v6353 = vpack.c.b16 %v6347, %v6346
        %v6354 = vpack.c.b16 %v6349, %v6348
        %v6355 = vpack.c.b16 %v6351, %v6350
        %v6360 = vunpack.c.l.b16 %v6322
        %v6361 = vunpack.c.l.b16 %v6323
        %v6362 = vunpack.c.l.b16 %v6324
        %v6363 = vunpack.c.l.b16 %v6325
        %v6364 = vpack.c.b16 %v6361, %v6360
        %v6365 = vpack.c.b16 %v6363, %v6362
        %v6369 = vsel %vm3023, %v6352, 0
        %v6372 = vsel %vm3023, %v6353, 0
        %v6375 = vsel %vm3023, %v6354, 0
        %v6378 = vsel %vm3023, %v6355, 0
        %6380 = vmatpush.bf16.msra.mxu0 0
        %6381 = vmatpush.bf16.msra.mxu0 0
        %6382 = vmatpush.bf16.msra.mxu0 0
        %6383 = vmatpush.bf16.msra.mxu0 0
        %6384 = vmatpush.bf16.msra.mxu0 0
        %6385 = vmatpush.bf16.msra.mxu0 0
        %6386 = vmatpush.bf16.msra.mxu0 %v6365
        %6387 = vmatpush.bf16.msra.mxu0 %v6364
        %6388 = vmatmul.bf16.gmra.mxu0 %v6369
        %v6389 = vpop.f32.mrf.mxu0
        %v6390 = vadd.f32 %v6335, %v6389
        %v6391 = vpop.f32.mrf.mxu0
        %v6392 = vadd.f32 %v6335, %v6391
        %6393 = vmatmul.bf16.gmra.mxu0 %v6372
        %v6394 = vpop.f32.mrf.mxu0
        %v6395 = vadd.f32 %v6335, %v6394
        %v6396 = vpop.f32.mrf.mxu0
        %v6397 = vadd.f32 %v6335, %v6396
        %6398 = vmatmul.bf16.gmra.mxu0 %v6375
        %v6399 = vpop.f32.mrf.mxu0
        %v6400 = vadd.f32 %v6335, %v6399
        %v6401 = vpop.f32.mrf.mxu0
        %v6402 = vadd.f32 %v6335, %v6401
        %6403 = vmatmul.bf16.gmra.mxu0 %v6378
        %v6404 = vpop.f32.mrf.mxu0
        %v6405 = vadd.f32 %v6335, %v6404
        %v6406 = vpop.f32.mrf.mxu0
        %v6407 = vadd.f32 %v6335, %v6406
        %6408 = vdwg.mxu0
        %s6409 = scalar_lea.vmem %s1, 288
        %v6410 = vld [vmem:[%s6409] sm:$0xf]
        %v6411 = vld [vmem:[%s6409 + $0x4] sm:$0xf]
        %v6412 = vld [vmem:[%s6409 + $0x8] sm:$0xf]
        %v6413 = vld [vmem:[%s6409 + $0xc] sm:$0xf]
        %v6414 = vld [vmem:[%s6409 + $0x10] sm:$0xf]
        %v6415 = vld [vmem:[%s6409 + $0x14] sm:$0xf]
        %v6416 = vld [vmem:[%s6409 + $0x18] sm:$0xf]
        %v6417 = vld [vmem:[%s6409 + $0x1c] sm:$0xf]
        %v6418 = vld [vmem:[%s6409 + $0x20] sm:$0xf]
        %v6419 = vld [vmem:[%s6409 + $0x24] sm:$0xf]
        %v6420 = vld [vmem:[%s6409 + $0x28] sm:$0xf]
        %v6421 = vld [vmem:[%s6409 + $0x2c] sm:$0xf]
        %v6422 = vld [vmem:[%s6409 + $0x30] sm:$0xf]
        %v6423 = vld [vmem:[%s6409 + $0x34] sm:$0xf]
        %v6424 = vld [vmem:[%s6409 + $0x38] sm:$0xf]
        %v6425 = vld [vmem:[%s6409 + $0x3c] sm:$0xf]
        %v6426 = vld [vmem:[%s6409 + $0x40] sm:$0xf]
        %v6427 = vld [vmem:[%s6409 + $0x44] sm:$0xf]
        %v6428 = vld [vmem:[%s6409 + $0x48] sm:$0xf]
        %v6429 = vld [vmem:[%s6409 + $0x4c] sm:$0xf]
        %v6430 = vld [vmem:[%s6409 + $0x50] sm:$0xf]
        %v6431 = vld [vmem:[%s6409 + $0x54] sm:$0xf]
        %v6432 = vld [vmem:[%s6409 + $0x58] sm:$0xf]
        %v6433 = vld [vmem:[%s6409 + $0x5c] sm:$0xf]
        %v6434 = vld [vmem:[%s6409 + $0x60] sm:$0xf]
        %v6435 = vld [vmem:[%s6409 + $0x64] sm:$0xf]
        %v6436 = vld [vmem:[%s6409 + $0x68] sm:$0xf]
        %v6437 = vld [vmem:[%s6409 + $0x6c] sm:$0xf]
        %v6438 = vld [vmem:[%s6409 + $0x70] sm:$0xf]
        %v6439 = vld [vmem:[%s6409 + $0x74] sm:$0xf]
        %v6440 = vld [vmem:[%s6409 + $0x78] sm:$0xf]
        %v6441 = vld [vmem:[%s6409 + $0x7c] sm:$0xf]
        %v6442 = vld [vmem:[%s6409 + $0x80] sm:$0xf]
        %v6443 = vld [vmem:[%s6409 + $0x84] sm:$0xf]
        %v6444 = vld [vmem:[%s6409 + $0x88] sm:$0xf]
        %v6445 = vld [vmem:[%s6409 + $0x8c] sm:$0xf]
        %v6446 = vld [vmem:[%s3 + $0x2] sm:$0x1]
        %v6447 = vld [vmem:[%s4 + $0x100] sm:$0xff]
        %v6448 = vld [vmem:[%s4 + $0x108] sm:$0xff]
        %v6449 = vld [vmem:[%s4 + $0x110] sm:$0xff]
        %v6450 = vld [vmem:[%s4 + $0x118] sm:$0xff]
        %v6451 = vld [vmem:[%s4 + $0x120] sm:$0xff]
        %v6452 = vld [vmem:[%s4 + $0x128] sm:$0xff]
        %v6453 = vld [vmem:[%s4 + $0x130] sm:$0xff]
        %v6454 = vld [vmem:[%s4 + $0x138] sm:$0xff]
        %v6455 = vrot.slane %v6303, 7
        %v6456 = vrot.slane %v6305, 7
        %v6457 = vrot.slane %v6308, 7
        %v6458 = vrot.slane %v6310, 7
        %v6459 = vrot.slane %v6313, 7
        %v6460 = vrot.slane %v6315, 7
        %v6461 = vrot.slane %v6318, 7
        %v6462 = vrot.slane %v6320, 7
        %v6463 = vsel %vm413, %v6461, %v6462
        %v6464 = vsel %vm413, %v6460, %v6461
        %v6465 = vsel %vm413, %v6459, %v6460
        %v6466 = vsel %vm413, %v6458, %v6459
        %v6467 = vsel %vm413, %v6457, %v6458
        %v6468 = vsel %vm413, %v6456, %v6457
        %v6469 = vsel %vm413, %v6455, %v6456
        %v6470 = vsel %vm413, %v6462, %v6455
        %6472 = vset.pattern.permute.xlu0 0
        %6473 = vperm.xlu0 %6472, %v6447
        %v6474 = vpop.permute.xlu0 %6473
        %6477 = vset.pattern.permute.xlu0 0
        %6478 = vperm.xlu0 %6477, %v6448
        %v6479 = vpop.permute.xlu0 %6478
        %6482 = vset.pattern.permute.xlu0 0
        %6483 = vperm.xlu0 %6482, %v6449
        %v6484 = vpop.permute.xlu0 %6483
        %6487 = vset.pattern.permute.xlu0 0
        %6488 = vperm.xlu0 %6487, %v6450
        %v6489 = vpop.permute.xlu0 %6488
        %6492 = vset.pattern.permute.xlu0 0
        %6493 = vperm.xlu0 %6492, %v6451
        %v6494 = vpop.permute.xlu0 %6493
        %6497 = vset.pattern.permute.xlu0 0
        %6498 = vperm.xlu0 %6497, %v6452
        %v6499 = vpop.permute.xlu0 %6498
        %6502 = vset.pattern.permute.xlu0 0
        %6503 = vperm.xlu0 %6502, %v6453
        %v6504 = vpop.permute.xlu0 %6503
        %6507 = vset.pattern.permute.xlu0 0
        %6508 = vperm.xlu0 %6507, %v6454
        %v6509 = vpop.permute.xlu0 %6508
        %v6511 = vmul.f32 %v6463, %v6474
        %v6512 = vmul.f32 %v6470, %v6479
        %v6513 = vmul.f32 %v6469, %v6484
        %v6514 = vmul.f32 %v6468, %v6489
        %v6515 = vmul.f32 %v6467, %v6494
        %v6516 = vmul.f32 %v6466, %v6499
        %v6517 = vmul.f32 %v6465, %v6504
        %v6518 = vmul.f32 %v6464, %v6509
        %v6519 = vpack.c.bf16 %v6511, %v6511
        %v6520 = vpack.c.bf16 %v6512, %v6512
        %v6521 = vpack.c.bf16 %v6513, %v6513
        %v6522 = vpack.c.bf16 %v6514, %v6514
        %v6523 = vpack.c.bf16 %v6515, %v6515
        %v6524 = vpack.c.bf16 %v6516, %v6516
        %v6525 = vpack.c.bf16 %v6517, %v6517
        %v6526 = vpack.c.bf16 %v6518, %v6518
        %6527 = vset.pattern.permute.xlu0 1
        %6528 = vperm.xlu0 %6527, %v6447
        %v6529 = vpop.permute.xlu0 %6528
        %6531 = vset.pattern.permute.xlu0 1
        %6532 = vperm.xlu0 %6531, %v6448
        %v6533 = vpop.permute.xlu0 %6532
        %6535 = vset.pattern.permute.xlu0 1
        %6536 = vperm.xlu0 %6535, %v6449
        %v6537 = vpop.permute.xlu0 %6536
        %6539 = vset.pattern.permute.xlu0 1
        %6540 = vperm.xlu0 %6539, %v6450
        %v6541 = vpop.permute.xlu0 %6540
        %6543 = vset.pattern.permute.xlu0 1
        %6544 = vperm.xlu0 %6543, %v6451
        %v6545 = vpop.permute.xlu0 %6544
        %6547 = vset.pattern.permute.xlu0 1
        %6548 = vperm.xlu0 %6547, %v6452
        %v6549 = vpop.permute.xlu0 %6548
        %6551 = vset.pattern.permute.xlu0 1
        %6552 = vperm.xlu0 %6551, %v6453
        %v6553 = vpop.permute.xlu0 %6552
        %6555 = vset.pattern.permute.xlu0 1
        %6556 = vperm.xlu0 %6555, %v6454
        %v6557 = vpop.permute.xlu0 %6556
        %v6559 = vmul.f32 %v6320, %v6529
        %v6560 = vmul.f32 %v6303, %v6533
        %v6561 = vmul.f32 %v6305, %v6537
        %v6562 = vmul.f32 %v6308, %v6541
        %v6563 = vmul.f32 %v6310, %v6545
        %v6564 = vmul.f32 %v6313, %v6549
        %v6565 = vmul.f32 %v6315, %v6553
        %v6566 = vmul.f32 %v6318, %v6557
        %v6567 = vpack.c.bf16 %v6559, %v6559
        %v6568 = vpack.c.bf16 %v6560, %v6560
        %v6569 = vpack.c.bf16 %v6561, %v6561
        %v6570 = vpack.c.bf16 %v6562, %v6562
        %v6571 = vpack.c.bf16 %v6563, %v6563
        %v6572 = vpack.c.bf16 %v6564, %v6564
        %v6573 = vpack.c.bf16 %v6565, %v6565
        %v6574 = vpack.c.bf16 %v6566, %v6566
        %v6575 = vrot.slane %v6303, 1
        %v6576 = vrot.slane %v6305, 1
        %v6577 = vrot.slane %v6308, 1
        %v6578 = vrot.slane %v6310, 1
        %v6579 = vrot.slane %v6313, 1
        %v6580 = vrot.slane %v6315, 1
        %v6581 = vrot.slane %v6318, 1
        %v6582 = vrot.slane %v6320, 1
        %v6583 = vsel %vm894, %v6581, %v6582
        %v6584 = vsel %vm894, %v6580, %v6581
        %v6585 = vsel %vm894, %v6579, %v6580
        %v6586 = vsel %vm894, %v6578, %v6579
        %v6587 = vsel %vm894, %v6577, %v6578
        %v6588 = vsel %vm894, %v6576, %v6577
        %v6589 = vsel %vm894, %v6575, %v6576
        %v6590 = vsel %vm894, %v6582, %v6575
        %6591 = vset.pattern.permute.xlu0 2
        %6592 = vperm.xlu0 %6591, %v6447
        %v6593 = vpop.permute.xlu0 %6592
        %6595 = vset.pattern.permute.xlu0 2
        %6596 = vperm.xlu0 %6595, %v6448
        %v6597 = vpop.permute.xlu0 %6596
        %6599 = vset.pattern.permute.xlu0 2
        %6600 = vperm.xlu0 %6599, %v6449
        %v6601 = vpop.permute.xlu0 %6600
        %6603 = vset.pattern.permute.xlu0 2
        %6604 = vperm.xlu0 %6603, %v6450
        %v6605 = vpop.permute.xlu0 %6604
        %6607 = vset.pattern.permute.xlu0 2
        %6608 = vperm.xlu0 %6607, %v6451
        %v6609 = vpop.permute.xlu0 %6608
        %6611 = vset.pattern.permute.xlu0 2
        %6612 = vperm.xlu0 %6611, %v6452
        %v6613 = vpop.permute.xlu0 %6612
        %6615 = vset.pattern.permute.xlu0 2
        %6616 = vperm.xlu0 %6615, %v6453
        %v6617 = vpop.permute.xlu0 %6616
        %6619 = vset.pattern.permute.xlu0 2
        %6620 = vperm.xlu0 %6619, %v6454
        %v6621 = vpop.permute.xlu0 %6620
        %v6623 = vmul.f32 %v6590, %v6593
        %v6624 = vmul.f32 %v6589, %v6597
        %v6625 = vmul.f32 %v6588, %v6601
        %v6626 = vmul.f32 %v6587, %v6605
        %v6627 = vmul.f32 %v6586, %v6609
        %v6628 = vmul.f32 %v6585, %v6613
        %v6629 = vmul.f32 %v6584, %v6617
        %v6630 = vmul.f32 %v6583, %v6621
        %v6631 = vpack.c.bf16 %v6623, %v6623
        %v6632 = vpack.c.bf16 %v6624, %v6624
        %v6633 = vpack.c.bf16 %v6625, %v6625
        %v6634 = vpack.c.bf16 %v6626, %v6626
        %v6635 = vpack.c.bf16 %v6627, %v6627
        %v6636 = vpack.c.bf16 %v6628, %v6628
        %v6637 = vpack.c.bf16 %v6629, %v6629
        %v6638 = vpack.c.bf16 %v6630, %v6630
        %6639 = vset.pattern.permute.xlu0 3
        %6640 = vperm.xlu0 %6639, %v6447
        %v6641 = vpop.permute.xlu0 %6640
        %6643 = vset.pattern.permute.xlu0 3
        %6644 = vperm.xlu0 %6643, %v6448
        %v6645 = vpop.permute.xlu0 %6644
        %6647 = vset.pattern.permute.xlu0 3
        %6648 = vperm.xlu0 %6647, %v6449
        %v6649 = vpop.permute.xlu0 %6648
        %6651 = vset.pattern.permute.xlu0 3
        %6652 = vperm.xlu0 %6651, %v6450
        %v6653 = vpop.permute.xlu0 %6652
        %6655 = vset.pattern.permute.xlu0 3
        %6656 = vperm.xlu0 %6655, %v6451
        %v6657 = vpop.permute.xlu0 %6656
        %6659 = vset.pattern.permute.xlu0 3
        %6660 = vperm.xlu0 %6659, %v6452
        %v6661 = vpop.permute.xlu0 %6660
        %6663 = vset.pattern.permute.xlu0 3
        %6664 = vperm.xlu0 %6663, %v6453
        %v6665 = vpop.permute.xlu0 %6664
        %6667 = vset.pattern.permute.xlu0 3
        %6668 = vperm.xlu0 %6667, %v6454
        %v6669 = vpop.permute.xlu0 %6668
        %v6671 = vmul.f32 %v6470, %v6641
        %v6672 = vmul.f32 %v6469, %v6645
        %v6673 = vmul.f32 %v6468, %v6649
        %v6674 = vmul.f32 %v6467, %v6653
        %v6675 = vmul.f32 %v6466, %v6657
        %v6676 = vmul.f32 %v6465, %v6661
        %v6677 = vmul.f32 %v6464, %v6665
        %v6678 = vmul.f32 %v6463, %v6669
        %v6679 = vpack.c.bf16 %v6671, %v6671
        %v6680 = vpack.c.bf16 %v6672, %v6672
        %v6681 = vpack.c.bf16 %v6673, %v6673
        %v6682 = vpack.c.bf16 %v6674, %v6674
        %v6683 = vpack.c.bf16 %v6675, %v6675
        %v6684 = vpack.c.bf16 %v6676, %v6676
        %v6685 = vpack.c.bf16 %v6677, %v6677
        %v6686 = vpack.c.bf16 %v6678, %v6678
        %6687 = vset.pattern.permute.xlu0 4
        %6688 = vperm.xlu0 %6687, %v6447
        %v6689 = vpop.permute.xlu0 %6688
        %6691 = vset.pattern.permute.xlu0 4
        %6692 = vperm.xlu0 %6691, %v6448
        %v6693 = vpop.permute.xlu0 %6692
        %6695 = vset.pattern.permute.xlu0 4
        %6696 = vperm.xlu0 %6695, %v6449
        %v6697 = vpop.permute.xlu0 %6696
        %6699 = vset.pattern.permute.xlu0 4
        %6700 = vperm.xlu0 %6699, %v6450
        %v6701 = vpop.permute.xlu0 %6700
        %6703 = vset.pattern.permute.xlu0 4
        %6704 = vperm.xlu0 %6703, %v6451
        %v6705 = vpop.permute.xlu0 %6704
        %6707 = vset.pattern.permute.xlu0 4
        %6708 = vperm.xlu0 %6707, %v6452
        %v6709 = vpop.permute.xlu0 %6708
        %6711 = vset.pattern.permute.xlu0 4
        %6712 = vperm.xlu0 %6711, %v6453
        %v6713 = vpop.permute.xlu0 %6712
        %6715 = vset.pattern.permute.xlu0 4
        %6716 = vperm.xlu0 %6715, %v6454
        %v6717 = vpop.permute.xlu0 %6716
        %v6719 = vmul.f32 %v6589, %v6689
        %v6720 = vmul.f32 %v6588, %v6693
        %v6721 = vmul.f32 %v6587, %v6697
        %v6722 = vmul.f32 %v6586, %v6701
        %v6723 = vmul.f32 %v6585, %v6705
        %v6724 = vmul.f32 %v6584, %v6709
        %v6725 = vmul.f32 %v6583, %v6713
        %v6726 = vmul.f32 %v6590, %v6717
        %v6727 = vpack.c.bf16 %v6719, %v6719
        %v6728 = vpack.c.bf16 %v6720, %v6720
        %v6729 = vpack.c.bf16 %v6721, %v6721
        %v6730 = vpack.c.bf16 %v6722, %v6722
        %v6731 = vpack.c.bf16 %v6723, %v6723
        %v6732 = vpack.c.bf16 %v6724, %v6724
        %v6733 = vpack.c.bf16 %v6725, %v6725
        %v6734 = vpack.c.bf16 %v6726, %v6726
        %6735 = vset.pattern.permute.xlu0 5
        %6736 = vperm.xlu0 %6735, %v6447
        %v6737 = vpop.permute.xlu0 %6736
        %6739 = vset.pattern.permute.xlu0 5
        %6740 = vperm.xlu0 %6739, %v6448
        %v6741 = vpop.permute.xlu0 %6740
        %6743 = vset.pattern.permute.xlu0 5
        %6744 = vperm.xlu0 %6743, %v6449
        %v6745 = vpop.permute.xlu0 %6744
        %6747 = vset.pattern.permute.xlu0 5
        %6748 = vperm.xlu0 %6747, %v6450
        %v6749 = vpop.permute.xlu0 %6748
        %6751 = vset.pattern.permute.xlu0 5
        %6752 = vperm.xlu0 %6751, %v6451
        %v6753 = vpop.permute.xlu0 %6752
        %6755 = vset.pattern.permute.xlu0 5
        %6756 = vperm.xlu0 %6755, %v6452
        %v6757 = vpop.permute.xlu0 %6756
        %6759 = vset.pattern.permute.xlu0 5
        %6760 = vperm.xlu0 %6759, %v6453
        %v6761 = vpop.permute.xlu0 %6760
        %6763 = vset.pattern.permute.xlu0 5
        %6764 = vperm.xlu0 %6763, %v6454
        %v6765 = vpop.permute.xlu0 %6764
        %v6767 = vmul.f32 %v6469, %v6737
        %v6768 = vmul.f32 %v6468, %v6741
        %v6769 = vmul.f32 %v6467, %v6745
        %v6770 = vmul.f32 %v6466, %v6749
        %v6771 = vmul.f32 %v6465, %v6753
        %v6772 = vmul.f32 %v6464, %v6757
        %v6773 = vmul.f32 %v6463, %v6761
        %v6774 = vmul.f32 %v6470, %v6765
        %v6775 = vpack.c.bf16 %v6767, %v6767
        %v6776 = vpack.c.bf16 %v6768, %v6768
        %v6777 = vpack.c.bf16 %v6769, %v6769
        %v6778 = vpack.c.bf16 %v6770, %v6770
        %v6779 = vpack.c.bf16 %v6771, %v6771
        %v6780 = vpack.c.bf16 %v6772, %v6772
        %v6781 = vpack.c.bf16 %v6773, %v6773
        %v6782 = vpack.c.bf16 %v6774, %v6774
        %6783 = vset.pattern.permute.xlu0 6
        %6784 = vperm.xlu0 %6783, %v6447
        %v6785 = vpop.permute.xlu0 %6784
        %6787 = vset.pattern.permute.xlu0 6
        %6788 = vperm.xlu0 %6787, %v6448
        %v6789 = vpop.permute.xlu0 %6788
        %6791 = vset.pattern.permute.xlu0 6
        %6792 = vperm.xlu0 %6791, %v6449
        %v6793 = vpop.permute.xlu0 %6792
        %6795 = vset.pattern.permute.xlu0 6
        %6796 = vperm.xlu0 %6795, %v6450
        %v6797 = vpop.permute.xlu0 %6796
        %6799 = vset.pattern.permute.xlu0 6
        %6800 = vperm.xlu0 %6799, %v6451
        %v6801 = vpop.permute.xlu0 %6800
        %6803 = vset.pattern.permute.xlu0 6
        %6804 = vperm.xlu0 %6803, %v6452
        %v6805 = vpop.permute.xlu0 %6804
        %6807 = vset.pattern.permute.xlu0 6
        %6808 = vperm.xlu0 %6807, %v6453
        %v6809 = vpop.permute.xlu0 %6808
        %6811 = vset.pattern.permute.xlu0 6
        %6812 = vperm.xlu0 %6811, %v6454
        %v6813 = vpop.permute.xlu0 %6812
        %v6815 = vmul.f32 %v6305, %v6785
        %v6816 = vmul.f32 %v6308, %v6789
        %v6817 = vmul.f32 %v6310, %v6793
        %v6818 = vmul.f32 %v6313, %v6797
        %v6819 = vmul.f32 %v6315, %v6801
        %v6820 = vmul.f32 %v6318, %v6805
        %v6821 = vmul.f32 %v6320, %v6809
        %v6822 = vmul.f32 %v6303, %v6813
        %v6823 = vpack.c.bf16 %v6815, %v6815
        %v6824 = vpack.c.bf16 %v6816, %v6816
        %v6825 = vpack.c.bf16 %v6817, %v6817
        %v6826 = vpack.c.bf16 %v6818, %v6818
        %v6827 = vpack.c.bf16 %v6819, %v6819
        %v6828 = vpack.c.bf16 %v6820, %v6820
        %v6829 = vpack.c.bf16 %v6821, %v6821
        %v6830 = vpack.c.bf16 %v6822, %v6822
        %6831 = vset.pattern.permute.xlu0 7
        %6832 = vperm.xlu0 %6831, %v6447
        %v6833 = vpop.permute.xlu0 %6832
        %6835 = vset.pattern.permute.xlu0 7
        %6836 = vperm.xlu0 %6835, %v6448
        %v6837 = vpop.permute.xlu0 %6836
        %6839 = vset.pattern.permute.xlu0 7
        %6840 = vperm.xlu0 %6839, %v6449
        %v6841 = vpop.permute.xlu0 %6840
        %6843 = vset.pattern.permute.xlu0 7
        %6844 = vperm.xlu0 %6843, %v6450
        %v6845 = vpop.permute.xlu0 %6844
        %6847 = vset.pattern.permute.xlu0 7
        %6848 = vperm.xlu0 %6847, %v6451
        %v6849 = vpop.permute.xlu0 %6848
        %6851 = vset.pattern.permute.xlu0 7
        %6852 = vperm.xlu0 %6851, %v6452
        %v6853 = vpop.permute.xlu0 %6852
        %6855 = vset.pattern.permute.xlu0 7
        %6856 = vperm.xlu0 %6855, %v6453
        %v6857 = vpop.permute.xlu0 %6856
        %6859 = vset.pattern.permute.xlu0 7
        %6860 = vperm.xlu0 %6859, %v6454
        %v6861 = vpop.permute.xlu0 %6860
        %v6863 = vmul.f32 %v6588, %v6833
        %v6864 = vmul.f32 %v6587, %v6837
        %v6865 = vmul.f32 %v6586, %v6841
        %v6866 = vmul.f32 %v6585, %v6845
        %v6867 = vmul.f32 %v6584, %v6849
        %v6868 = vmul.f32 %v6583, %v6853
        %v6869 = vmul.f32 %v6590, %v6857
        %v6870 = vmul.f32 %v6589, %v6861
        %v6871 = vpack.c.bf16 %v6863, %v6863
        %v6872 = vpack.c.bf16 %v6864, %v6864
        %v6873 = vpack.c.bf16 %v6865, %v6865
        %v6874 = vpack.c.bf16 %v6866, %v6866
        %v6875 = vpack.c.bf16 %v6867, %v6867
        %v6876 = vpack.c.bf16 %v6868, %v6868
        %v6877 = vpack.c.bf16 %v6869, %v6869
        %v6878 = vpack.c.bf16 %v6870, %v6870
        %v6887 = vunpack.c.l.b16 %v6519
        %v6888 = vunpack.c.l.b16 %v6520
        %v6889 = vunpack.c.l.b16 %v6521
        %v6890 = vunpack.c.l.b16 %v6522
        %v6891 = vunpack.c.l.b16 %v6523
        %v6892 = vunpack.c.l.b16 %v6524
        %v6893 = vunpack.c.l.b16 %v6525
        %v6894 = vunpack.c.l.b16 %v6526
        %v6895 = vpack.c.b16 %v6888, %v6887
        %v6896 = vpack.c.b16 %v6890, %v6889
        %v6897 = vpack.c.b16 %v6892, %v6891
        %v6898 = vpack.c.b16 %v6894, %v6893
        %v6907 = vunpack.c.l.b16 %v6567
        %v6908 = vunpack.c.l.b16 %v6568
        %v6909 = vunpack.c.l.b16 %v6569
        %v6910 = vunpack.c.l.b16 %v6570
        %v6911 = vunpack.c.l.b16 %v6571
        %v6912 = vunpack.c.l.b16 %v6572
        %v6913 = vunpack.c.l.b16 %v6573
        %v6914 = vunpack.c.l.b16 %v6574
        %v6915 = vpack.c.b16 %v6908, %v6907
        %v6916 = vpack.c.b16 %v6910, %v6909
        %v6917 = vpack.c.b16 %v6912, %v6911
        %v6918 = vpack.c.b16 %v6914, %v6913
        %6919 = vrot.lane.b32.xlu0 %v6915, 32
        %v6920 = vpop.permute.xlu0 %6919
        %6921 = vrot.lane.b32.xlu0 %v6916, 32
        %v6922 = vpop.permute.xlu0 %6921
        %6923 = vrot.lane.b32.xlu0 %v6917, 32
        %v6924 = vpop.permute.xlu0 %6923
        %6925 = vrot.lane.b32.xlu0 %v6918, 32
        %v6926 = vpop.permute.xlu0 %6925
        %v6935 = vunpack.c.l.b16 %v6631
        %v6936 = vunpack.c.l.b16 %v6632
        %v6937 = vunpack.c.l.b16 %v6633
        %v6938 = vunpack.c.l.b16 %v6634
        %v6939 = vunpack.c.l.b16 %v6635
        %v6940 = vunpack.c.l.b16 %v6636
        %v6941 = vunpack.c.l.b16 %v6637
        %v6942 = vunpack.c.l.b16 %v6638
        %v6943 = vpack.c.b16 %v6936, %v6935
        %v6944 = vpack.c.b16 %v6938, %v6937
        %v6945 = vpack.c.b16 %v6940, %v6939
        %v6946 = vpack.c.b16 %v6942, %v6941
        %6947 = vrot.lane.b32.xlu0 %v6943, 64
        %v6948 = vpop.permute.xlu0 %6947
        %6949 = vrot.lane.b32.xlu0 %v6944, 64
        %v6950 = vpop.permute.xlu0 %6949
        %6951 = vrot.lane.b32.xlu0 %v6945, 64
        %v6952 = vpop.permute.xlu0 %6951
        %6953 = vrot.lane.b32.xlu0 %v6946, 64
        %v6954 = vpop.permute.xlu0 %6953
        %v6963 = vunpack.c.l.b16 %v6679
        %v6964 = vunpack.c.l.b16 %v6680
        %v6965 = vunpack.c.l.b16 %v6681
        %v6966 = vunpack.c.l.b16 %v6682
        %v6967 = vunpack.c.l.b16 %v6683
        %v6968 = vunpack.c.l.b16 %v6684
        %v6969 = vunpack.c.l.b16 %v6685
        %v6970 = vunpack.c.l.b16 %v6686
        %v6971 = vpack.c.b16 %v6964, %v6963
        %v6972 = vpack.c.b16 %v6966, %v6965
        %v6973 = vpack.c.b16 %v6968, %v6967
        %v6974 = vpack.c.b16 %v6970, %v6969
        %6975 = vrot.lane.b32.xlu0 %v6971, 96
        %v6976 = vpop.permute.xlu0 %6975
        %6977 = vrot.lane.b32.xlu0 %v6972, 96
        %v6978 = vpop.permute.xlu0 %6977
        %6979 = vrot.lane.b32.xlu0 %v6973, 96
        %v6980 = vpop.permute.xlu0 %6979
        %6981 = vrot.lane.b32.xlu0 %v6974, 96
        %v6982 = vpop.permute.xlu0 %6981
        %v6991 = vunpack.c.l.b16 %v6727
        %v6992 = vunpack.c.l.b16 %v6728
        %v6993 = vunpack.c.l.b16 %v6729
        %v6994 = vunpack.c.l.b16 %v6730
        %v6995 = vunpack.c.l.b16 %v6731
        %v6996 = vunpack.c.l.b16 %v6732
        %v6997 = vunpack.c.l.b16 %v6733
        %v6998 = vunpack.c.l.b16 %v6734
        %v6999 = vpack.c.b16 %v6992, %v6991
        %v7000 = vpack.c.b16 %v6994, %v6993
        %v7001 = vpack.c.b16 %v6996, %v6995
        %v7002 = vpack.c.b16 %v6998, %v6997
        %7003 = vrot.lane.b32.xlu0 %v6999, 32
        %v7004 = vpop.permute.xlu0 %7003
        %7005 = vrot.lane.b32.xlu0 %v7000, 32
        %v7006 = vpop.permute.xlu0 %7005
        %7007 = vrot.lane.b32.xlu0 %v7001, 32
        %v7008 = vpop.permute.xlu0 %7007
        %7009 = vrot.lane.b32.xlu0 %v7002, 32
        %v7010 = vpop.permute.xlu0 %7009
        %v7019 = vunpack.c.l.b16 %v6775
        %v7020 = vunpack.c.l.b16 %v6776
        %v7021 = vunpack.c.l.b16 %v6777
        %v7022 = vunpack.c.l.b16 %v6778
        %v7023 = vunpack.c.l.b16 %v6779
        %v7024 = vunpack.c.l.b16 %v6780
        %v7025 = vunpack.c.l.b16 %v6781
        %v7026 = vunpack.c.l.b16 %v6782
        %v7027 = vpack.c.b16 %v7020, %v7019
        %v7028 = vpack.c.b16 %v7022, %v7021
        %v7029 = vpack.c.b16 %v7024, %v7023
        %v7030 = vpack.c.b16 %v7026, %v7025
        %7031 = vrot.lane.b32.xlu0 %v7027, 64
        %v7032 = vpop.permute.xlu0 %7031
        %7033 = vrot.lane.b32.xlu0 %v7028, 64
        %v7034 = vpop.permute.xlu0 %7033
        %7035 = vrot.lane.b32.xlu0 %v7029, 64
        %v7036 = vpop.permute.xlu0 %7035
        %7037 = vrot.lane.b32.xlu0 %v7030, 64
        %v7038 = vpop.permute.xlu0 %7037
        %v7047 = vunpack.c.l.b16 %v6823
        %v7048 = vunpack.c.l.b16 %v6824
        %v7049 = vunpack.c.l.b16 %v6825
        %v7050 = vunpack.c.l.b16 %v6826
        %v7051 = vunpack.c.l.b16 %v6827
        %v7052 = vunpack.c.l.b16 %v6828
        %v7053 = vunpack.c.l.b16 %v6829
        %v7054 = vunpack.c.l.b16 %v6830
        %v7055 = vpack.c.b16 %v7048, %v7047
        %v7056 = vpack.c.b16 %v7050, %v7049
        %v7057 = vpack.c.b16 %v7052, %v7051
        %v7058 = vpack.c.b16 %v7054, %v7053
        %7059 = vrot.lane.b32.xlu0 %v7055, 96
        %v7060 = vpop.permute.xlu0 %7059
        %7061 = vrot.lane.b32.xlu0 %v7056, 96
        %v7062 = vpop.permute.xlu0 %7061
        %7063 = vrot.lane.b32.xlu0 %v7057, 96
        %v7064 = vpop.permute.xlu0 %7063
        %7065 = vrot.lane.b32.xlu0 %v7058, 96
        %v7066 = vpop.permute.xlu0 %7065
        %v7075 = vunpack.c.l.b16 %v6871
        %v7076 = vunpack.c.l.b16 %v6872
        %v7077 = vunpack.c.l.b16 %v6873
        %v7078 = vunpack.c.l.b16 %v6874
        %v7079 = vunpack.c.l.b16 %v6875
        %v7080 = vunpack.c.l.b16 %v6876
        %v7081 = vunpack.c.l.b16 %v6877
        %v7082 = vunpack.c.l.b16 %v6878
        %v7083 = vpack.c.b16 %v7076, %v7075
        %v7084 = vpack.c.b16 %v7078, %v7077
        %v7085 = vpack.c.b16 %v7080, %v7079
        %v7086 = vpack.c.b16 %v7082, %v7081
        %v7089 = vsel %vm3023, %v6895, %v6920
        %v7092 = vsel %vm3023, %v6896, %v6922
        %v7095 = vsel %vm3023, %v6897, %v6924
        %v7098 = vsel %vm3023, %v6898, %v6926
        %v7100 = vsel %vm3072, %v7089, %v6948
        %v7102 = vsel %vm3072, %v7092, %v6950
        %v7104 = vsel %vm3072, %v7095, %v6952
        %v7106 = vsel %vm3072, %v7098, %v6954
        %v7108 = vsel %vm3105, %v7100, %v6976
        %v7111 = vsel %vm3105, %v7102, %v6978
        %v7114 = vsel %vm3105, %v7104, %v6980
        %v7117 = vsel %vm3105, %v7106, %v6982
        %v7120 = vsel %vm3023, %v6352, %v7004
        %v7122 = vsel %vm3023, %v6353, %v7006
        %v7124 = vsel %vm3023, %v6354, %v7008
        %v7126 = vsel %vm3023, %v6355, %v7010
        %v7128 = vsel %vm3072, %v7120, %v7032
        %v7130 = vsel %vm3072, %v7122, %v7034
        %v7132 = vsel %vm3072, %v7124, %v7036
        %v7134 = vsel %vm3072, %v7126, %v7038
        %v7136 = vsel %vm3105, %v7128, %v7060
        %v7139 = vsel %vm3105, %v7130, %v7062
        %v7142 = vsel %vm3105, %v7132, %v7064
        %v7145 = vsel %vm3105, %v7134, %v7066
        %v7147 = vperm.slane %v6446, 0
        %v7184 = vunpack.c.l.b16 %v6410
        %v7185 = vunpack.c.l.b16 %v6411
        %v7186 = vunpack.c.l.b16 %v6412
        %v7187 = vunpack.c.l.b16 %v6413
        %v7188 = vunpack.c.l.b16 %v6414
        %v7189 = vunpack.c.l.b16 %v6415
        %v7190 = vunpack.c.l.b16 %v6416
        %v7191 = vunpack.c.l.b16 %v6417
        %v7192 = vunpack.c.l.b16 %v6418
        %v7193 = vunpack.c.l.b16 %v6419
        %v7194 = vunpack.c.l.b16 %v6420
        %v7195 = vunpack.c.l.b16 %v6421
        %v7196 = vunpack.c.l.b16 %v6422
        %v7197 = vunpack.c.l.b16 %v6423
        %v7198 = vunpack.c.l.b16 %v6424
        %v7199 = vunpack.c.l.b16 %v6425
        %v7200 = vunpack.c.l.b16 %v6426
        %v7201 = vunpack.c.l.b16 %v6427
        %v7202 = vunpack.c.l.b16 %v6428
        %v7203 = vunpack.c.l.b16 %v6429
        %v7204 = vunpack.c.l.b16 %v6430
        %v7205 = vunpack.c.l.b16 %v6431
        %v7206 = vunpack.c.l.b16 %v6432
        %v7207 = vunpack.c.l.b16 %v6433
        %v7208 = vunpack.c.l.b16 %v6434
        %v7209 = vunpack.c.l.b16 %v6435
        %v7210 = vunpack.c.l.b16 %v6436
        %v7211 = vunpack.c.l.b16 %v6437
        %v7212 = vunpack.c.l.b16 %v6438
        %v7213 = vunpack.c.l.b16 %v6439
        %v7214 = vunpack.c.l.b16 %v6440
        %v7215 = vunpack.c.l.b16 %v6441
        %v7216 = vunpack.c.l.b16 %v6442
        %v7217 = vunpack.c.l.b16 %v6443
        %v7218 = vunpack.c.l.b16 %v6444
        %v7219 = vunpack.c.l.b16 %v6445
        %v7220 = vpack.c.b16 %v7185, %v7184
        %v7221 = vpack.c.b16 %v7187, %v7186
        %v7222 = vpack.c.b16 %v7189, %v7188
        %v7223 = vpack.c.b16 %v7191, %v7190
        %v7224 = vpack.c.b16 %v7193, %v7192
        %v7225 = vpack.c.b16 %v7195, %v7194
        %v7226 = vpack.c.b16 %v7197, %v7196
        %v7227 = vpack.c.b16 %v7199, %v7198
        %v7228 = vpack.c.b16 %v7201, %v7200
        %v7229 = vpack.c.b16 %v7203, %v7202
        %v7230 = vpack.c.b16 %v7205, %v7204
        %v7231 = vpack.c.b16 %v7207, %v7206
        %v7232 = vpack.c.b16 %v7209, %v7208
        %v7233 = vpack.c.b16 %v7211, %v7210
        %v7234 = vpack.c.b16 %v7213, %v7212
        %v7235 = vpack.c.b16 %v7215, %v7214
        %v7236 = vpack.c.b16 %v7217, %v7216
        %v7237 = vpack.c.b16 %v7219, %v7218
        %v7257 = vsel %vm3023, %v7083, 0
        %v7260 = vsel %vm3023, %v7084, 0
        %v7263 = vsel %vm3023, %v7085, 0
        %v7266 = vsel %vm3023, %v7086, 0
        %7268 = vmatpush.bf16.msra.mxu0 %v7227
        %7269 = vmatpush.bf16.msra.mxu0 %v7226
        %7270 = vmatpush.bf16.msra.mxu0 %v7225
        %7271 = vmatpush.bf16.msra.mxu0 %v7224
        %7272 = vmatpush.bf16.msra.mxu0 %v7223
        %7273 = vmatpush.bf16.msra.mxu0 %v7222
        %7274 = vmatpush.bf16.msra.mxu0 %v7221
        %7275 = vmatpush.bf16.msra.mxu0 %v7220
        %7276 = vmatmul.bf16.gmra.mxu0 %v7108
        %v7277 = vpop.f32.mrf.mxu0
        %v7278 = vadd.f32 %v7147, %v7277
        %v7279 = vpop.f32.mrf.mxu0
        %v7280 = vadd.f32 %v7147, %v7279
        %7281 = vmatmul.bf16.gmra.mxu0 %v7111
        %v7282 = vpop.f32.mrf.mxu0
        %v7283 = vadd.f32 %v7147, %v7282
        %v7284 = vpop.f32.mrf.mxu0
        %v7285 = vadd.f32 %v7147, %v7284
        %7286 = vmatmul.bf16.gmra.mxu0 %v7114
        %v7287 = vpop.f32.mrf.mxu0
        %v7288 = vadd.f32 %v7147, %v7287
        %v7289 = vpop.f32.mrf.mxu0
        %v7290 = vadd.f32 %v7147, %v7289
        %7291 = vmatmul.bf16.gmra.mxu0 %v7117
        %v7292 = vpop.f32.mrf.mxu0
        %v7293 = vadd.f32 %v7147, %v7292
        %v7294 = vpop.f32.mrf.mxu0
        %v7295 = vadd.f32 %v7147, %v7294
        %7296 = vdwg.mxu0
        %7297 = vmatpush.bf16.msra.mxu0 %v7235
        %7298 = vmatpush.bf16.msra.mxu0 %v7234
        %7299 = vmatpush.bf16.msra.mxu0 %v7233
        %7300 = vmatpush.bf16.msra.mxu0 %v7232
        %7301 = vmatpush.bf16.msra.mxu0 %v7231
        %7302 = vmatpush.bf16.msra.mxu0 %v7230
        %7303 = vmatpush.bf16.msra.mxu0 %v7229
        %7304 = vmatpush.bf16.msra.mxu0 %v7228
        %7305 = vmatmul.bf16.gmra.mxu0 %v7136
        %v7306 = vpop.f32.mrf.mxu0
        %v7307 = vadd.f32 %v7278, %v7306
        %v7308 = vpop.f32.mrf.mxu0
        %v7309 = vadd.f32 %v7280, %v7308
        %7310 = vmatmul.bf16.gmra.mxu0 %v7139
        %v7311 = vpop.f32.mrf.mxu0
        %v7312 = vadd.f32 %v7283, %v7311
        %v7313 = vpop.f32.mrf.mxu0
        %v7314 = vadd.f32 %v7285, %v7313
        %7315 = vmatmul.bf16.gmra.mxu0 %v7142
        %v7316 = vpop.f32.mrf.mxu0
        %v7317 = vadd.f32 %v7288, %v7316
        %v7318 = vpop.f32.mrf.mxu0
        %v7319 = vadd.f32 %v7290, %v7318
        %7320 = vmatmul.bf16.gmra.mxu0 %v7145
        %v7321 = vpop.f32.mrf.mxu0
        %v7322 = vadd.f32 %v7293, %v7321
        %v7323 = vpop.f32.mrf.mxu0
        %v7324 = vadd.f32 %v7295, %v7323
        %7325 = vdwg.mxu0
        %7326 = vmatpush.bf16.msra.mxu0 0
        %7327 = vmatpush.bf16.msra.mxu0 0
        %7328 = vmatpush.bf16.msra.mxu0 0
        %7329 = vmatpush.bf16.msra.mxu0 0
        %7330 = vmatpush.bf16.msra.mxu0 0
        %7331 = vmatpush.bf16.msra.mxu0 0
        %7332 = vmatpush.bf16.msra.mxu0 %v7237
        %7333 = vmatpush.bf16.msra.mxu0 %v7236
        %7334 = vmatmul.bf16.gmra.mxu0 %v7257
        %v7335 = vpop.f32.mrf.mxu0
        %v7336 = vadd.f32 %v7307, %v7335
        %v7337 = vpop.f32.mrf.mxu0
        %v7338 = vadd.f32 %v7309, %v7337
        %7339 = vmatmul.bf16.gmra.mxu0 %v7260
        %v7340 = vpop.f32.mrf.mxu0
        %v7341 = vadd.f32 %v7312, %v7340
        %v7342 = vpop.f32.mrf.mxu0
        %v7343 = vadd.f32 %v7314, %v7342
        %7344 = vmatmul.bf16.gmra.mxu0 %v7263
        %v7345 = vpop.f32.mrf.mxu0
        %v7346 = vadd.f32 %v7317, %v7345
        %v7347 = vpop.f32.mrf.mxu0
        %v7348 = vadd.f32 %v7319, %v7347
        %7349 = vmatmul.bf16.gmra.mxu0 %v7266
        %v7350 = vpop.f32.mrf.mxu0
        %v7351 = vadd.f32 %v7322, %v7350
        %v7352 = vpop.f32.mrf.mxu0
        %v7353 = vadd.f32 %v7324, %v7352
        %7354 = vdwg.mxu0
        %v7355 = vmax.f32 %v7336, 0.0
        %v7356 = vmax.f32 %v7338, 0.0
        %v7357 = vmax.f32 %v7341, 0.0
        %v7358 = vmax.f32 %v7343, 0.0
        %v7359 = vmax.f32 %v7346, 0.0
        %v7360 = vmax.f32 %v7348, 0.0
        %v7361 = vmax.f32 %v7351, 0.0
        %v7362 = vmax.f32 %v7353, 0.0
        %s7363 = scalar_lea.vmem %s1, 432
        %v7364 = vld [vmem:[%s7363] sm:$0xf]
        %v7365 = vld [vmem:[%s7363 + $0x4] sm:$0xf]
        %v7366 = vld [vmem:[%s7363 + $0x8] sm:$0xf]
        %v7367 = vld [vmem:[%s7363 + $0xc] sm:$0xf]
        %v7368 = vld [vmem:[%s7363 + $0x10] sm:$0xf]
        %v7369 = vld [vmem:[%s7363 + $0x14] sm:$0xf]
        %v7370 = vld [vmem:[%s7363 + $0x18] sm:$0xf]
        %v7371 = vld [vmem:[%s7363 + $0x1c] sm:$0xf]
        %v7372 = vld [vmem:[%s7363 + $0x20] sm:$0xf]
        %v7373 = vld [vmem:[%s7363 + $0x24] sm:$0xf]
        %v7374 = vld [vmem:[%s7363 + $0x28] sm:$0xf]
        %v7375 = vld [vmem:[%s7363 + $0x2c] sm:$0xf]
        %v7376 = vld [vmem:[%s7363 + $0x30] sm:$0xf]
        %v7377 = vld [vmem:[%s7363 + $0x34] sm:$0xf]
        %v7378 = vld [vmem:[%s7363 + $0x38] sm:$0xf]
        %v7379 = vld [vmem:[%s7363 + $0x3c] sm:$0xf]
        %v7380 = vld [vmem:[%s7363 + $0x40] sm:$0xf]
        %v7381 = vld [vmem:[%s7363 + $0x44] sm:$0xf]
        %v7382 = vld [vmem:[%s7363 + $0x48] sm:$0xf]
        %v7383 = vld [vmem:[%s7363 + $0x4c] sm:$0xf]
        %v7384 = vld [vmem:[%s7363 + $0x50] sm:$0xf]
        %v7385 = vld [vmem:[%s7363 + $0x54] sm:$0xf]
        %v7386 = vld [vmem:[%s7363 + $0x58] sm:$0xf]
        %v7387 = vld [vmem:[%s7363 + $0x5c] sm:$0xf]
        %v7388 = vld [vmem:[%s7363 + $0x60] sm:$0xf]
        %v7389 = vld [vmem:[%s7363 + $0x64] sm:$0xf]
        %v7390 = vld [vmem:[%s7363 + $0x68] sm:$0xf]
        %v7391 = vld [vmem:[%s7363 + $0x6c] sm:$0xf]
        %v7392 = vld [vmem:[%s7363 + $0x70] sm:$0xf]
        %v7393 = vld [vmem:[%s7363 + $0x74] sm:$0xf]
        %v7394 = vld [vmem:[%s7363 + $0x78] sm:$0xf]
        %v7395 = vld [vmem:[%s7363 + $0x7c] sm:$0xf]
        %v7396 = vld [vmem:[%s7363 + $0x80] sm:$0xf]
        %v7397 = vld [vmem:[%s7363 + $0x84] sm:$0xf]
        %v7398 = vld [vmem:[%s7363 + $0x88] sm:$0xf]
        %v7399 = vld [vmem:[%s7363 + $0x8c] sm:$0xf]
        %v7400 = vld [vmem:[%s3 + $0x3] sm:$0x1]
        %v7401 = vrot.slane %v7355, 7
        %v7402 = vrot.slane %v7356, 7
        %v7403 = vrot.slane %v7357, 7
        %v7404 = vrot.slane %v7358, 7
        %v7405 = vrot.slane %v7359, 7
        %v7406 = vrot.slane %v7360, 7
        %v7407 = vrot.slane %v7361, 7
        %v7408 = vrot.slane %v7362, 7
        %v7409 = vsel %vm413, %v7407, %v7408
        %v7410 = vsel %vm413, %v7406, %v7407
        %v7411 = vsel %vm413, %v7405, %v7406
        %v7412 = vsel %vm413, %v7404, %v7405
        %v7413 = vsel %vm413, %v7403, %v7404
        %v7414 = vsel %vm413, %v7402, %v7403
        %v7415 = vsel %vm413, %v7401, %v7402
        %v7416 = vsel %vm413, %v7408, %v7401
        %v7417 = vmul.f32 %v7409, %v6474
        %v7418 = vmul.f32 %v7416, %v6479
        %v7419 = vmul.f32 %v7415, %v6484
        %v7420 = vmul.f32 %v7414, %v6489
        %v7421 = vmul.f32 %v7413, %v6494
        %v7422 = vmul.f32 %v7412, %v6499
        %v7423 = vmul.f32 %v7411, %v6504
        %v7424 = vmul.f32 %v7410, %v6509
        %v7425 = vpack.c.bf16 %v7417, %v7417
        %v7426 = vpack.c.bf16 %v7418, %v7418
        %v7427 = vpack.c.bf16 %v7419, %v7419
        %v7428 = vpack.c.bf16 %v7420, %v7420
        %v7429 = vpack.c.bf16 %v7421, %v7421
        %v7430 = vpack.c.bf16 %v7422, %v7422
        %v7431 = vpack.c.bf16 %v7423, %v7423
        %v7432 = vpack.c.bf16 %v7424, %v7424
        %v7433 = vmul.f32 %v7362, %v6529
        %v7434 = vmul.f32 %v7355, %v6533
        %v7435 = vmul.f32 %v7356, %v6537
        %v7436 = vmul.f32 %v7357, %v6541
        %v7437 = vmul.f32 %v7358, %v6545
        %v7438 = vmul.f32 %v7359, %v6549
        %v7439 = vmul.f32 %v7360, %v6553
        %v7440 = vmul.f32 %v7361, %v6557
        %v7441 = vpack.c.bf16 %v7433, %v7433
        %v7442 = vpack.c.bf16 %v7434, %v7434
        %v7443 = vpack.c.bf16 %v7435, %v7435
        %v7444 = vpack.c.bf16 %v7436, %v7436
        %v7445 = vpack.c.bf16 %v7437, %v7437
        %v7446 = vpack.c.bf16 %v7438, %v7438
        %v7447 = vpack.c.bf16 %v7439, %v7439
        %v7448 = vpack.c.bf16 %v7440, %v7440
        %v7449 = vrot.slane %v7355, 1
        %v7450 = vrot.slane %v7356, 1
        %v7451 = vrot.slane %v7357, 1
        %v7452 = vrot.slane %v7358, 1
        %v7453 = vrot.slane %v7359, 1
        %v7454 = vrot.slane %v7360, 1
        %v7455 = vrot.slane %v7361, 1
        %v7456 = vrot.slane %v7362, 1
        %v7457 = vsel %vm894, %v7455, %v7456
        %v7458 = vsel %vm894, %v7454, %v7455
        %v7459 = vsel %vm894, %v7453, %v7454
        %v7460 = vsel %vm894, %v7452, %v7453
        %v7461 = vsel %vm894, %v7451, %v7452
        %v7462 = vsel %vm894, %v7450, %v7451
        %v7463 = vsel %vm894, %v7449, %v7450
        %v7464 = vsel %vm894, %v7456, %v7449
        %v7465 = vmul.f32 %v7464, %v6593
        %v7466 = vmul.f32 %v7463, %v6597
        %v7467 = vmul.f32 %v7462, %v6601
        %v7468 = vmul.f32 %v7461, %v6605
        %v7469 = vmul.f32 %v7460, %v6609
        %v7470 = vmul.f32 %v7459, %v6613
        %v7471 = vmul.f32 %v7458, %v6617
        %v7472 = vmul.f32 %v7457, %v6621
        %v7473 = vpack.c.bf16 %v7465, %v7465
        %v7474 = vpack.c.bf16 %v7466, %v7466
        %v7475 = vpack.c.bf16 %v7467, %v7467
        %v7476 = vpack.c.bf16 %v7468, %v7468
        %v7477 = vpack.c.bf16 %v7469, %v7469
        %v7478 = vpack.c.bf16 %v7470, %v7470
        %v7479 = vpack.c.bf16 %v7471, %v7471
        %v7480 = vpack.c.bf16 %v7472, %v7472
        %v7481 = vmul.f32 %v7416, %v6641
        %v7482 = vmul.f32 %v7415, %v6645
        %v7483 = vmul.f32 %v7414, %v6649
        %v7484 = vmul.f32 %v7413, %v6653
        %v7485 = vmul.f32 %v7412, %v6657
        %v7486 = vmul.f32 %v7411, %v6661
        %v7487 = vmul.f32 %v7410, %v6665
        %v7488 = vmul.f32 %v7409, %v6669
        %v7489 = vpack.c.bf16 %v7481, %v7481
        %v7490 = vpack.c.bf16 %v7482, %v7482
        %v7491 = vpack.c.bf16 %v7483, %v7483
        %v7492 = vpack.c.bf16 %v7484, %v7484
        %v7493 = vpack.c.bf16 %v7485, %v7485
        %v7494 = vpack.c.bf16 %v7486, %v7486
        %v7495 = vpack.c.bf16 %v7487, %v7487
        %v7496 = vpack.c.bf16 %v7488, %v7488
        %v7497 = vpack.c.bf16 %v7355, %v7355
        %v7498 = vpack.c.bf16 %v7356, %v7356
        %v7499 = vpack.c.bf16 %v7357, %v7357
        %v7500 = vpack.c.bf16 %v7358, %v7358
        %v7501 = vpack.c.bf16 %v7359, %v7359
        %v7502 = vpack.c.bf16 %v7360, %v7360
        %v7503 = vpack.c.bf16 %v7361, %v7361
        %v7504 = vpack.c.bf16 %v7362, %v7362
        %v7505 = vmul.f32 %v7463, %v6689
        %v7506 = vmul.f32 %v7462, %v6693
        %v7507 = vmul.f32 %v7461, %v6697
        %v7508 = vmul.f32 %v7460, %v6701
        %v7509 = vmul.f32 %v7459, %v6705
        %v7510 = vmul.f32 %v7458, %v6709
        %v7511 = vmul.f32 %v7457, %v6713
        %v7512 = vmul.f32 %v7464, %v6717
        %v7513 = vpack.c.bf16 %v7505, %v7505
        %v7514 = vpack.c.bf16 %v7506, %v7506
        %v7515 = vpack.c.bf16 %v7507, %v7507
        %v7516 = vpack.c.bf16 %v7508, %v7508
        %v7517 = vpack.c.bf16 %v7509, %v7509
        %v7518 = vpack.c.bf16 %v7510, %v7510
        %v7519 = vpack.c.bf16 %v7511, %v7511
        %v7520 = vpack.c.bf16 %v7512, %v7512
        %v7521 = vmul.f32 %v7415, %v6737
        %v7522 = vmul.f32 %v7414, %v6741
        %v7523 = vmul.f32 %v7413, %v6745
        %v7524 = vmul.f32 %v7412, %v6749
        %v7525 = vmul.f32 %v7411, %v6753
        %v7526 = vmul.f32 %v7410, %v6757
        %v7527 = vmul.f32 %v7409, %v6761
        %v7528 = vmul.f32 %v7416, %v6765
        %v7529 = vpack.c.bf16 %v7521, %v7521
        %v7530 = vpack.c.bf16 %v7522, %v7522
        %v7531 = vpack.c.bf16 %v7523, %v7523
        %v7532 = vpack.c.bf16 %v7524, %v7524
        %v7533 = vpack.c.bf16 %v7525, %v7525
        %v7534 = vpack.c.bf16 %v7526, %v7526
        %v7535 = vpack.c.bf16 %v7527, %v7527
        %v7536 = vpack.c.bf16 %v7528, %v7528
        %v7537 = vmul.f32 %v7356, %v6785
        %v7538 = vmul.f32 %v7357, %v6789
        %v7539 = vmul.f32 %v7358, %v6793
        %v7540 = vmul.f32 %v7359, %v6797
        %v7541 = vmul.f32 %v7360, %v6801
        %v7542 = vmul.f32 %v7361, %v6805
        %v7543 = vmul.f32 %v7362, %v6809
        %v7544 = vmul.f32 %v7355, %v6813
        %v7545 = vpack.c.bf16 %v7537, %v7537
        %v7546 = vpack.c.bf16 %v7538, %v7538
        %v7547 = vpack.c.bf16 %v7539, %v7539
        %v7548 = vpack.c.bf16 %v7540, %v7540
        %v7549 = vpack.c.bf16 %v7541, %v7541
        %v7550 = vpack.c.bf16 %v7542, %v7542
        %v7551 = vpack.c.bf16 %v7543, %v7543
        %v7552 = vpack.c.bf16 %v7544, %v7544
        %v7553 = vmul.f32 %v7462, %v6833
        %v7554 = vmul.f32 %v7461, %v6837
        %v7555 = vmul.f32 %v7460, %v6841
        %v7556 = vmul.f32 %v7459, %v6845
        %v7557 = vmul.f32 %v7458, %v6849
        %v7558 = vmul.f32 %v7457, %v6853
        %v7559 = vmul.f32 %v7464, %v6857
        %v7560 = vmul.f32 %v7463, %v6861
        %v7561 = vpack.c.bf16 %v7553, %v7553
        %v7562 = vpack.c.bf16 %v7554, %v7554
        %v7563 = vpack.c.bf16 %v7555, %v7555
        %v7564 = vpack.c.bf16 %v7556, %v7556
        %v7565 = vpack.c.bf16 %v7557, %v7557
        %v7566 = vpack.c.bf16 %v7558, %v7558
        %v7567 = vpack.c.bf16 %v7559, %v7559
        %v7568 = vpack.c.bf16 %v7560, %v7560
        %v7577 = vunpack.c.l.b16 %v7425
        %v7578 = vunpack.c.l.b16 %v7426
        %v7579 = vunpack.c.l.b16 %v7427
        %v7580 = vunpack.c.l.b16 %v7428
        %v7581 = vunpack.c.l.b16 %v7429
        %v7582 = vunpack.c.l.b16 %v7430
        %v7583 = vunpack.c.l.b16 %v7431
        %v7584 = vunpack.c.l.b16 %v7432
        %v7585 = vpack.c.b16 %v7578, %v7577
        %v7586 = vpack.c.b16 %v7580, %v7579
        %v7587 = vpack.c.b16 %v7582, %v7581
        %v7588 = vpack.c.b16 %v7584, %v7583
        %v7597 = vunpack.c.l.b16 %v7441
        %v7598 = vunpack.c.l.b16 %v7442
        %v7599 = vunpack.c.l.b16 %v7443
        %v7600 = vunpack.c.l.b16 %v7444
        %v7601 = vunpack.c.l.b16 %v7445
        %v7602 = vunpack.c.l.b16 %v7446
        %v7603 = vunpack.c.l.b16 %v7447
        %v7604 = vunpack.c.l.b16 %v7448
        %v7605 = vpack.c.b16 %v7598, %v7597
        %v7606 = vpack.c.b16 %v7600, %v7599
        %v7607 = vpack.c.b16 %v7602, %v7601
        %v7608 = vpack.c.b16 %v7604, %v7603
        %7609 = vrot.lane.b32.xlu0 %v7605, 32
        %v7610 = vpop.permute.xlu0 %7609
        %7611 = vrot.lane.b32.xlu0 %v7606, 32
        %v7612 = vpop.permute.xlu0 %7611
        %7613 = vrot.lane.b32.xlu0 %v7607, 32
        %v7614 = vpop.permute.xlu0 %7613
        %7615 = vrot.lane.b32.xlu0 %v7608, 32
        %v7616 = vpop.permute.xlu0 %7615
        %v7625 = vunpack.c.l.b16 %v7473
        %v7626 = vunpack.c.l.b16 %v7474
        %v7627 = vunpack.c.l.b16 %v7475
        %v7628 = vunpack.c.l.b16 %v7476
        %v7629 = vunpack.c.l.b16 %v7477
        %v7630 = vunpack.c.l.b16 %v7478
        %v7631 = vunpack.c.l.b16 %v7479
        %v7632 = vunpack.c.l.b16 %v7480
        %v7633 = vpack.c.b16 %v7626, %v7625
        %v7634 = vpack.c.b16 %v7628, %v7627
        %v7635 = vpack.c.b16 %v7630, %v7629
        %v7636 = vpack.c.b16 %v7632, %v7631
        %7637 = vrot.lane.b32.xlu0 %v7633, 64
        %v7638 = vpop.permute.xlu0 %7637
        %7639 = vrot.lane.b32.xlu0 %v7634, 64
        %v7640 = vpop.permute.xlu0 %7639
        %7641 = vrot.lane.b32.xlu0 %v7635, 64
        %v7642 = vpop.permute.xlu0 %7641
        %7643 = vrot.lane.b32.xlu0 %v7636, 64
        %v7644 = vpop.permute.xlu0 %7643
        %v7653 = vunpack.c.l.b16 %v7489
        %v7654 = vunpack.c.l.b16 %v7490
        %v7655 = vunpack.c.l.b16 %v7491
        %v7656 = vunpack.c.l.b16 %v7492
        %v7657 = vunpack.c.l.b16 %v7493
        %v7658 = vunpack.c.l.b16 %v7494
        %v7659 = vunpack.c.l.b16 %v7495
        %v7660 = vunpack.c.l.b16 %v7496
        %v7661 = vpack.c.b16 %v7654, %v7653
        %v7662 = vpack.c.b16 %v7656, %v7655
        %v7663 = vpack.c.b16 %v7658, %v7657
        %v7664 = vpack.c.b16 %v7660, %v7659
        %7665 = vrot.lane.b32.xlu0 %v7661, 96
        %v7666 = vpop.permute.xlu0 %7665
        %7667 = vrot.lane.b32.xlu0 %v7662, 96
        %v7668 = vpop.permute.xlu0 %7667
        %7669 = vrot.lane.b32.xlu0 %v7663, 96
        %v7670 = vpop.permute.xlu0 %7669
        %7671 = vrot.lane.b32.xlu0 %v7664, 96
        %v7672 = vpop.permute.xlu0 %7671
        %v7681 = vunpack.c.l.b16 %v7497
        %v7682 = vunpack.c.l.b16 %v7498
        %v7683 = vunpack.c.l.b16 %v7499
        %v7684 = vunpack.c.l.b16 %v7500
        %v7685 = vunpack.c.l.b16 %v7501
        %v7686 = vunpack.c.l.b16 %v7502
        %v7687 = vunpack.c.l.b16 %v7503
        %v7688 = vunpack.c.l.b16 %v7504
        %v7689 = vpack.c.b16 %v7682, %v7681
        %v7690 = vpack.c.b16 %v7684, %v7683
        %v7691 = vpack.c.b16 %v7686, %v7685
        %v7692 = vpack.c.b16 %v7688, %v7687
        %v7701 = vunpack.c.l.b16 %v7513
        %v7702 = vunpack.c.l.b16 %v7514
        %v7703 = vunpack.c.l.b16 %v7515
        %v7704 = vunpack.c.l.b16 %v7516
        %v7705 = vunpack.c.l.b16 %v7517
        %v7706 = vunpack.c.l.b16 %v7518
        %v7707 = vunpack.c.l.b16 %v7519
        %v7708 = vunpack.c.l.b16 %v7520
        %v7709 = vpack.c.b16 %v7702, %v7701
        %v7710 = vpack.c.b16 %v7704, %v7703
        %v7711 = vpack.c.b16 %v7706, %v7705
        %v7712 = vpack.c.b16 %v7708, %v7707
        %7713 = vrot.lane.b32.xlu0 %v7709, 32
        %v7714 = vpop.permute.xlu0 %7713
        %7715 = vrot.lane.b32.xlu0 %v7710, 32
        %v7716 = vpop.permute.xlu0 %7715
        %7717 = vrot.lane.b32.xlu0 %v7711, 32
        %v7718 = vpop.permute.xlu0 %7717
        %7719 = vrot.lane.b32.xlu0 %v7712, 32
        %v7720 = vpop.permute.xlu0 %7719
        %v7729 = vunpack.c.l.b16 %v7529
        %v7730 = vunpack.c.l.b16 %v7530
        %v7731 = vunpack.c.l.b16 %v7531
        %v7732 = vunpack.c.l.b16 %v7532
        %v7733 = vunpack.c.l.b16 %v7533
        %v7734 = vunpack.c.l.b16 %v7534
        %v7735 = vunpack.c.l.b16 %v7535
        %v7736 = vunpack.c.l.b16 %v7536
        %v7737 = vpack.c.b16 %v7730, %v7729
        %v7738 = vpack.c.b16 %v7732, %v7731
        %v7739 = vpack.c.b16 %v7734, %v7733
        %v7740 = vpack.c.b16 %v7736, %v7735
        %7741 = vrot.lane.b32.xlu0 %v7737, 64
        %v7742 = vpop.permute.xlu0 %7741
        %7743 = vrot.lane.b32.xlu0 %v7738, 64
        %v7744 = vpop.permute.xlu0 %7743
        %7745 = vrot.lane.b32.xlu0 %v7739, 64
        %v7746 = vpop.permute.xlu0 %7745
        %7747 = vrot.lane.b32.xlu0 %v7740, 64
        %v7748 = vpop.permute.xlu0 %7747
        %v7757 = vunpack.c.l.b16 %v7545
        %v7758 = vunpack.c.l.b16 %v7546
        %v7759 = vunpack.c.l.b16 %v7547
        %v7760 = vunpack.c.l.b16 %v7548
        %v7761 = vunpack.c.l.b16 %v7549
        %v7762 = vunpack.c.l.b16 %v7550
        %v7763 = vunpack.c.l.b16 %v7551
        %v7764 = vunpack.c.l.b16 %v7552
        %v7765 = vpack.c.b16 %v7758, %v7757
        %v7766 = vpack.c.b16 %v7760, %v7759
        %v7767 = vpack.c.b16 %v7762, %v7761
        %v7768 = vpack.c.b16 %v7764, %v7763
        %7769 = vrot.lane.b32.xlu0 %v7765, 96
        %v7770 = vpop.permute.xlu0 %7769
        %7771 = vrot.lane.b32.xlu0 %v7766, 96
        %v7772 = vpop.permute.xlu0 %7771
        %7773 = vrot.lane.b32.xlu0 %v7767, 96
        %v7774 = vpop.permute.xlu0 %7773
        %7775 = vrot.lane.b32.xlu0 %v7768, 96
        %v7776 = vpop.permute.xlu0 %7775
        %v7785 = vunpack.c.l.b16 %v7561
        %v7786 = vunpack.c.l.b16 %v7562
        %v7787 = vunpack.c.l.b16 %v7563
        %v7788 = vunpack.c.l.b16 %v7564
        %v7789 = vunpack.c.l.b16 %v7565
        %v7790 = vunpack.c.l.b16 %v7566
        %v7791 = vunpack.c.l.b16 %v7567
        %v7792 = vunpack.c.l.b16 %v7568
        %v7793 = vpack.c.b16 %v7786, %v7785
        %v7794 = vpack.c.b16 %v7788, %v7787
        %v7795 = vpack.c.b16 %v7790, %v7789
        %v7796 = vpack.c.b16 %v7792, %v7791
        %v7799 = vsel %vm3023, %v7585, %v7610
        %v7802 = vsel %vm3023, %v7586, %v7612
        %v7805 = vsel %vm3023, %v7587, %v7614
        %v7808 = vsel %vm3023, %v7588, %v7616
        %v7810 = vsel %vm3072, %v7799, %v7638
        %v7812 = vsel %vm3072, %v7802, %v7640
        %v7814 = vsel %vm3072, %v7805, %v7642
        %v7816 = vsel %vm3072, %v7808, %v7644
        %v7818 = vsel %vm3105, %v7810, %v7666
        %v7821 = vsel %vm3105, %v7812, %v7668
        %v7824 = vsel %vm3105, %v7814, %v7670
        %v7827 = vsel %vm3105, %v7816, %v7672
        %v7831 = vsel %vm3023, %v7689, %v7714
        %v7834 = vsel %vm3023, %v7690, %v7716
        %v7837 = vsel %vm3023, %v7691, %v7718
        %v7840 = vsel %vm3023, %v7692, %v7720
        %v7842 = vsel %vm3072, %v7831, %v7742
        %v7844 = vsel %vm3072, %v7834, %v7744
        %v7846 = vsel %vm3072, %v7837, %v7746
        %v7848 = vsel %vm3072, %v7840, %v7748
        %v7850 = vsel %vm3105, %v7842, %v7770
        %v7853 = vsel %vm3105, %v7844, %v7772
        %v7856 = vsel %vm3105, %v7846, %v7774
        %v7859 = vsel %vm3105, %v7848, %v7776
        %v7861 = vperm.slane %v7400, 0
        %v7898 = vunpack.c.l.b16 %v7364
        %v7899 = vunpack.c.l.b16 %v7365
        %v7900 = vunpack.c.l.b16 %v7366
        %v7901 = vunpack.c.l.b16 %v7367
        %v7902 = vunpack.c.l.b16 %v7368
        %v7903 = vunpack.c.l.b16 %v7369
        %v7904 = vunpack.c.l.b16 %v7370
        %v7905 = vunpack.c.l.b16 %v7371
        %v7906 = vunpack.c.l.b16 %v7372
        %v7907 = vunpack.c.l.b16 %v7373
        %v7908 = vunpack.c.l.b16 %v7374
        %v7909 = vunpack.c.l.b16 %v7375
        %v7910 = vunpack.c.l.b16 %v7376
        %v7911 = vunpack.c.l.b16 %v7377
        %v7912 = vunpack.c.l.b16 %v7378
        %v7913 = vunpack.c.l.b16 %v7379
        %v7914 = vunpack.c.l.b16 %v7380
        %v7915 = vunpack.c.l.b16 %v7381
        %v7916 = vunpack.c.l.b16 %v7382
        %v7917 = vunpack.c.l.b16 %v7383
        %v7918 = vunpack.c.l.b16 %v7384
        %v7919 = vunpack.c.l.b16 %v7385
        %v7920 = vunpack.c.l.b16 %v7386
        %v7921 = vunpack.c.l.b16 %v7387
        %v7922 = vunpack.c.l.b16 %v7388
        %v7923 = vunpack.c.l.b16 %v7389
        %v7924 = vunpack.c.l.b16 %v7390
        %v7925 = vunpack.c.l.b16 %v7391
        %v7926 = vunpack.c.l.b16 %v7392
        %v7927 = vunpack.c.l.b16 %v7393
        %v7928 = vunpack.c.l.b16 %v7394
        %v7929 = vunpack.c.l.b16 %v7395
        %v7930 = vunpack.c.l.b16 %v7396
        %v7931 = vunpack.c.l.b16 %v7397
        %v7932 = vunpack.c.l.b16 %v7398
        %v7933 = vunpack.c.l.b16 %v7399
        %v7934 = vpack.c.b16 %v7899, %v7898
        %v7935 = vpack.c.b16 %v7901, %v7900
        %v7936 = vpack.c.b16 %v7903, %v7902
        %v7937 = vpack.c.b16 %v7905, %v7904
        %v7938 = vpack.c.b16 %v7907, %v7906
        %v7939 = vpack.c.b16 %v7909, %v7908
        %v7940 = vpack.c.b16 %v7911, %v7910
        %v7941 = vpack.c.b16 %v7913, %v7912
        %v7942 = vpack.c.b16 %v7915, %v7914
        %v7943 = vpack.c.b16 %v7917, %v7916
        %v7944 = vpack.c.b16 %v7919, %v7918
        %v7945 = vpack.c.b16 %v7921, %v7920
        %v7946 = vpack.c.b16 %v7923, %v7922
        %v7947 = vpack.c.b16 %v7925, %v7924
        %v7948 = vpack.c.b16 %v7927, %v7926
        %v7949 = vpack.c.b16 %v7929, %v7928
        %v7950 = vpack.c.b16 %v7931, %v7930
        %v7951 = vpack.c.b16 %v7933, %v7932
        %v7971 = vsel %vm3023, %v7793, 0
        %v7974 = vsel %vm3023, %v7794, 0
        %v7977 = vsel %vm3023, %v7795, 0
        %v7980 = vsel %vm3023, %v7796, 0
        %7982 = vmatpush.bf16.msra.mxu0 %v7941
        %7983 = vmatpush.bf16.msra.mxu0 %v7940
        %7984 = vmatpush.bf16.msra.mxu0 %v7939
        %7985 = vmatpush.bf16.msra.mxu0 %v7938
        %7986 = vmatpush.bf16.msra.mxu0 %v7937
        %7987 = vmatpush.bf16.msra.mxu0 %v7936
        %7988 = vmatpush.bf16.msra.mxu0 %v7935
        %7989 = vmatpush.bf16.msra.mxu0 %v7934
        %7990 = vmatmul.bf16.gmra.mxu0 %v7818
        %v7991 = vpop.f32.mrf.mxu0
        %v7992 = vadd.f32 %v7861, %v7991
        %v7993 = vpop.f32.mrf.mxu0
        %v7994 = vadd.f32 %v7861, %v7993
        %7995 = vmatmul.bf16.gmra.mxu0 %v7821
        %v7996 = vpop.f32.mrf.mxu0
        %v7997 = vadd.f32 %v7861, %v7996
        %v7998 = vpop.f32.mrf.mxu0
        %v7999 = vadd.f32 %v7861, %v7998
        %8000 = vmatmul.bf16.gmra.mxu0 %v7824
        %v8001 = vpop.f32.mrf.mxu0
        %v8002 = vadd.f32 %v7861, %v8001
        %v8003 = vpop.f32.mrf.mxu0
        %v8004 = vadd.f32 %v7861, %v8003
        %8005 = vmatmul.bf16.gmra.mxu0 %v7827
        %v8006 = vpop.f32.mrf.mxu0
        %v8007 = vadd.f32 %v7861, %v8006
        %v8008 = vpop.f32.mrf.mxu0
        %v8009 = vadd.f32 %v7861, %v8008
        %8010 = vdwg.mxu0
        %8011 = vmatpush.bf16.msra.mxu0 %v7949
        %8012 = vmatpush.bf16.msra.mxu0 %v7948
        %8013 = vmatpush.bf16.msra.mxu0 %v7947
        %8014 = vmatpush.bf16.msra.mxu0 %v7946
        %8015 = vmatpush.bf16.msra.mxu0 %v7945
        %8016 = vmatpush.bf16.msra.mxu0 %v7944
        %8017 = vmatpush.bf16.msra.mxu0 %v7943
        %8018 = vmatpush.bf16.msra.mxu0 %v7942
        %8019 = vmatmul.bf16.gmra.mxu0 %v7850
        %v8020 = vpop.f32.mrf.mxu0
        %v8021 = vadd.f32 %v7992, %v8020
        %v8022 = vpop.f32.mrf.mxu0
        %v8023 = vadd.f32 %v7994, %v8022
        %8024 = vmatmul.bf16.gmra.mxu0 %v7853
        %v8025 = vpop.f32.mrf.mxu0
        %v8026 = vadd.f32 %v7997, %v8025
        %v8027 = vpop.f32.mrf.mxu0
        %v8028 = vadd.f32 %v7999, %v8027
        %8029 = vmatmul.bf16.gmra.mxu0 %v7856
        %v8030 = vpop.f32.mrf.mxu0
        %v8031 = vadd.f32 %v8002, %v8030
        %v8032 = vpop.f32.mrf.mxu0
        %v8033 = vadd.f32 %v8004, %v8032
        %8034 = vmatmul.bf16.gmra.mxu0 %v7859
        %v8035 = vpop.f32.mrf.mxu0
        %v8036 = vadd.f32 %v8007, %v8035
        %v8037 = vpop.f32.mrf.mxu0
        %v8038 = vadd.f32 %v8009, %v8037
        %8039 = vdwg.mxu0
        %8040 = vmatpush.bf16.msra.mxu0 0
        %8041 = vmatpush.bf16.msra.mxu0 0
        %8042 = vmatpush.bf16.msra.mxu0 0
        %8043 = vmatpush.bf16.msra.mxu0 0
        %8044 = vmatpush.bf16.msra.mxu0 0
        %8045 = vmatpush.bf16.msra.mxu0 0
        %8046 = vmatpush.bf16.msra.mxu0 %v7951
        %8047 = vmatpush.bf16.msra.mxu0 %v7950
        %8048 = vmatmul.bf16.gmra.mxu0 %v7971
        %v8049 = vpop.f32.mrf.mxu0
        %v8050 = vadd.f32 %v8021, %v8049
        %v8051 = vpop.f32.mrf.mxu0
        %v8052 = vadd.f32 %v8023, %v8051
        %8053 = vmatmul.bf16.gmra.mxu0 %v7974
        %v8054 = vpop.f32.mrf.mxu0
        %v8055 = vadd.f32 %v8026, %v8054
        %v8056 = vpop.f32.mrf.mxu0
        %v8057 = vadd.f32 %v8028, %v8056
        %8058 = vmatmul.bf16.gmra.mxu0 %v7977
        %v8059 = vpop.f32.mrf.mxu0
        %v8060 = vadd.f32 %v8031, %v8059
        %v8061 = vpop.f32.mrf.mxu0
        %v8062 = vadd.f32 %v8033, %v8061
        %8063 = vmatmul.bf16.gmra.mxu0 %v7980
        %v8064 = vpop.f32.mrf.mxu0
        %v8065 = vadd.f32 %v8036, %v8064
        %v8066 = vpop.f32.mrf.mxu0
        %v8067 = vadd.f32 %v8038, %v8066
        %8068 = vdwg.mxu0
        %v8069 = vadd.f32 %v8050, %v6390
        %v8070 = vadd.f32 %v8052, %v6392
        %v8071 = vadd.f32 %v8055, %v6395
        %v8072 = vadd.f32 %v8057, %v6397
        %v8073 = vadd.f32 %v8060, %v6400
        %v8074 = vadd.f32 %v8062, %v6402
        %v8075 = vadd.f32 %v8065, %v6405
        %v8076 = vadd.f32 %v8067, %v6407
        %v8077 = vmax.f32 %v8069, 0.0
        %v8078 = vmax.f32 %v8070, 0.0
        %v8079 = vmax.f32 %v8071, 0.0
        %v8080 = vmax.f32 %v8072, 0.0
        %v8081 = vmax.f32 %v8073, 0.0
        %v8082 = vmax.f32 %v8074, 0.0
        %v8083 = vmax.f32 %v8075, 0.0
        %v8084 = vmax.f32 %v8076, 0.0
        %s8085 = scalar_lea.vmem %s1, 576
        %v8086 = vld [vmem:[%s8085] sm:$0xf]
        %v8087 = vld [vmem:[%s8085 + $0x4] sm:$0xf]
        %v8088 = vld [vmem:[%s8085 + $0x8] sm:$0xf]
        %v8089 = vld [vmem:[%s8085 + $0xc] sm:$0xf]
        %v8090 = vld [vmem:[%s8085 + $0x10] sm:$0xf]
        %v8091 = vld [vmem:[%s8085 + $0x14] sm:$0xf]
        %v8092 = vld [vmem:[%s8085 + $0x18] sm:$0xf]
        %v8093 = vld [vmem:[%s8085 + $0x1c] sm:$0xf]
        %v8094 = vld [vmem:[%s8085 + $0x20] sm:$0xf]
        %v8095 = vld [vmem:[%s8085 + $0x24] sm:$0xf]
        %v8096 = vld [vmem:[%s8085 + $0x28] sm:$0xf]
        %v8097 = vld [vmem:[%s8085 + $0x2c] sm:$0xf]
        %v8098 = vld [vmem:[%s8085 + $0x30] sm:$0xf]
        %v8099 = vld [vmem:[%s8085 + $0x34] sm:$0xf]
        %v8100 = vld [vmem:[%s8085 + $0x38] sm:$0xf]
        %v8101 = vld [vmem:[%s8085 + $0x3c] sm:$0xf]
        %v8102 = vld [vmem:[%s8085 + $0x40] sm:$0xf]
        %v8103 = vld [vmem:[%s8085 + $0x44] sm:$0xf]
        %v8104 = vld [vmem:[%s8085 + $0x48] sm:$0xf]
        %v8105 = vld [vmem:[%s8085 + $0x4c] sm:$0xf]
        %v8106 = vld [vmem:[%s8085 + $0x50] sm:$0xf]
        %v8107 = vld [vmem:[%s8085 + $0x54] sm:$0xf]
        %v8108 = vld [vmem:[%s8085 + $0x58] sm:$0xf]
        %v8109 = vld [vmem:[%s8085 + $0x5c] sm:$0xf]
        %v8110 = vld [vmem:[%s8085 + $0x60] sm:$0xf]
        %v8111 = vld [vmem:[%s8085 + $0x64] sm:$0xf]
        %v8112 = vld [vmem:[%s8085 + $0x68] sm:$0xf]
        %v8113 = vld [vmem:[%s8085 + $0x6c] sm:$0xf]
        %v8114 = vld [vmem:[%s8085 + $0x70] sm:$0xf]
        %v8115 = vld [vmem:[%s8085 + $0x74] sm:$0xf]
        %v8116 = vld [vmem:[%s8085 + $0x78] sm:$0xf]
        %v8117 = vld [vmem:[%s8085 + $0x7c] sm:$0xf]
        %v8118 = vld [vmem:[%s8085 + $0x80] sm:$0xf]
        %v8119 = vld [vmem:[%s8085 + $0x84] sm:$0xf]
        %v8120 = vld [vmem:[%s8085 + $0x88] sm:$0xf]
        %v8121 = vld [vmem:[%s8085 + $0x8c] sm:$0xf]
        %v8122 = vld [vmem:[%s3 + $0x5] sm:$0x1]
        %v8123 = vrot.slane %v8077, 7
        %v8124 = vrot.slane %v8078, 7
        %v8125 = vrot.slane %v8079, 7
        %v8126 = vrot.slane %v8080, 7
        %v8127 = vrot.slane %v8081, 7
        %v8128 = vrot.slane %v8082, 7
        %v8129 = vrot.slane %v8083, 7
        %v8130 = vrot.slane %v8084, 7
        %v8131 = vsel %vm413, %v8129, %v8130
        %v8132 = vsel %vm413, %v8128, %v8129
        %v8133 = vsel %vm413, %v8127, %v8128
        %v8134 = vsel %vm413, %v8126, %v8127
        %v8135 = vsel %vm413, %v8125, %v8126
        %v8136 = vsel %vm413, %v8124, %v8125
        %v8137 = vsel %vm413, %v8123, %v8124
        %v8138 = vsel %vm413, %v8130, %v8123
        %v8139 = vmul.f32 %v8131, %v6474
        %v8140 = vmul.f32 %v8138, %v6479
        %v8141 = vmul.f32 %v8137, %v6484
        %v8142 = vmul.f32 %v8136, %v6489
        %v8143 = vmul.f32 %v8135, %v6494
        %v8144 = vmul.f32 %v8134, %v6499
        %v8145 = vmul.f32 %v8133, %v6504
        %v8146 = vmul.f32 %v8132, %v6509
        %v8147 = vpack.c.bf16 %v8139, %v8139
        %v8148 = vpack.c.bf16 %v8140, %v8140
        %v8149 = vpack.c.bf16 %v8141, %v8141
        %v8150 = vpack.c.bf16 %v8142, %v8142
        %v8151 = vpack.c.bf16 %v8143, %v8143
        %v8152 = vpack.c.bf16 %v8144, %v8144
        %v8153 = vpack.c.bf16 %v8145, %v8145
        %v8154 = vpack.c.bf16 %v8146, %v8146
        %v8155 = vmul.f32 %v8084, %v6529
        %v8156 = vmul.f32 %v8077, %v6533
        %v8157 = vmul.f32 %v8078, %v6537
        %v8158 = vmul.f32 %v8079, %v6541
        %v8159 = vmul.f32 %v8080, %v6545
        %v8160 = vmul.f32 %v8081, %v6549
        %v8161 = vmul.f32 %v8082, %v6553
        %v8162 = vmul.f32 %v8083, %v6557
        %v8163 = vpack.c.bf16 %v8155, %v8155
        %v8164 = vpack.c.bf16 %v8156, %v8156
        %v8165 = vpack.c.bf16 %v8157, %v8157
        %v8166 = vpack.c.bf16 %v8158, %v8158
        %v8167 = vpack.c.bf16 %v8159, %v8159
        %v8168 = vpack.c.bf16 %v8160, %v8160
        %v8169 = vpack.c.bf16 %v8161, %v8161
        %v8170 = vpack.c.bf16 %v8162, %v8162
        %v8171 = vrot.slane %v8077, 1
        %v8172 = vrot.slane %v8078, 1
        %v8173 = vrot.slane %v8079, 1
        %v8174 = vrot.slane %v8080, 1
        %v8175 = vrot.slane %v8081, 1
        %v8176 = vrot.slane %v8082, 1
        %v8177 = vrot.slane %v8083, 1
        %v8178 = vrot.slane %v8084, 1
        %v8179 = vsel %vm894, %v8177, %v8178
        %v8180 = vsel %vm894, %v8176, %v8177
        %v8181 = vsel %vm894, %v8175, %v8176
        %v8182 = vsel %vm894, %v8174, %v8175
        %v8183 = vsel %vm894, %v8173, %v8174
        %v8184 = vsel %vm894, %v8172, %v8173
        %v8185 = vsel %vm894, %v8171, %v8172
        %v8186 = vsel %vm894, %v8178, %v8171
        %v8187 = vmul.f32 %v8186, %v6593
        %v8188 = vmul.f32 %v8185, %v6597
        %v8189 = vmul.f32 %v8184, %v6601
        %v8190 = vmul.f32 %v8183, %v6605
        %v8191 = vmul.f32 %v8182, %v6609
        %v8192 = vmul.f32 %v8181, %v6613
        %v8193 = vmul.f32 %v8180, %v6617
        %v8194 = vmul.f32 %v8179, %v6621
        %v8195 = vpack.c.bf16 %v8187, %v8187
        %v8196 = vpack.c.bf16 %v8188, %v8188
        %v8197 = vpack.c.bf16 %v8189, %v8189
        %v8198 = vpack.c.bf16 %v8190, %v8190
        %v8199 = vpack.c.bf16 %v8191, %v8191
        %v8200 = vpack.c.bf16 %v8192, %v8192
        %v8201 = vpack.c.bf16 %v8193, %v8193
        %v8202 = vpack.c.bf16 %v8194, %v8194
        %v8203 = vmul.f32 %v8138, %v6641
        %v8204 = vmul.f32 %v8137, %v6645
        %v8205 = vmul.f32 %v8136, %v6649
        %v8206 = vmul.f32 %v8135, %v6653
        %v8207 = vmul.f32 %v8134, %v6657
        %v8208 = vmul.f32 %v8133, %v6661
        %v8209 = vmul.f32 %v8132, %v6665
        %v8210 = vmul.f32 %v8131, %v6669
        %v8211 = vpack.c.bf16 %v8203, %v8203
        %v8212 = vpack.c.bf16 %v8204, %v8204
        %v8213 = vpack.c.bf16 %v8205, %v8205
        %v8214 = vpack.c.bf16 %v8206, %v8206
        %v8215 = vpack.c.bf16 %v8207, %v8207
        %v8216 = vpack.c.bf16 %v8208, %v8208
        %v8217 = vpack.c.bf16 %v8209, %v8209
        %v8218 = vpack.c.bf16 %v8210, %v8210
        %v8219 = vpack.c.bf16 %v8077, %v8077
        %v8220 = vpack.c.bf16 %v8078, %v8078
        %v8221 = vpack.c.bf16 %v8079, %v8079
        %v8222 = vpack.c.bf16 %v8080, %v8080
        %v8223 = vpack.c.bf16 %v8081, %v8081
        %v8224 = vpack.c.bf16 %v8082, %v8082
        %v8225 = vpack.c.bf16 %v8083, %v8083
        %v8226 = vpack.c.bf16 %v8084, %v8084
        %v8227 = vmul.f32 %v8185, %v6689
        %v8228 = vmul.f32 %v8184, %v6693
        %v8229 = vmul.f32 %v8183, %v6697
        %v8230 = vmul.f32 %v8182, %v6701
        %v8231 = vmul.f32 %v8181, %v6705
        %v8232 = vmul.f32 %v8180, %v6709
        %v8233 = vmul.f32 %v8179, %v6713
        %v8234 = vmul.f32 %v8186, %v6717
        %v8235 = vpack.c.bf16 %v8227, %v8227
        %v8236 = vpack.c.bf16 %v8228, %v8228
        %v8237 = vpack.c.bf16 %v8229, %v8229
        %v8238 = vpack.c.bf16 %v8230, %v8230
        %v8239 = vpack.c.bf16 %v8231, %v8231
        %v8240 = vpack.c.bf16 %v8232, %v8232
        %v8241 = vpack.c.bf16 %v8233, %v8233
        %v8242 = vpack.c.bf16 %v8234, %v8234
        %v8243 = vmul.f32 %v8137, %v6737
        %v8244 = vmul.f32 %v8136, %v6741
        %v8245 = vmul.f32 %v8135, %v6745
        %v8246 = vmul.f32 %v8134, %v6749
        %v8247 = vmul.f32 %v8133, %v6753
        %v8248 = vmul.f32 %v8132, %v6757
        %v8249 = vmul.f32 %v8131, %v6761
        %v8250 = vmul.f32 %v8138, %v6765
        %v8251 = vpack.c.bf16 %v8243, %v8243
        %v8252 = vpack.c.bf16 %v8244, %v8244
        %v8253 = vpack.c.bf16 %v8245, %v8245
        %v8254 = vpack.c.bf16 %v8246, %v8246
        %v8255 = vpack.c.bf16 %v8247, %v8247
        %v8256 = vpack.c.bf16 %v8248, %v8248
        %v8257 = vpack.c.bf16 %v8249, %v8249
        %v8258 = vpack.c.bf16 %v8250, %v8250
        %v8259 = vmul.f32 %v8078, %v6785
        %v8260 = vmul.f32 %v8079, %v6789
        %v8261 = vmul.f32 %v8080, %v6793
        %v8262 = vmul.f32 %v8081, %v6797
        %v8263 = vmul.f32 %v8082, %v6801
        %v8264 = vmul.f32 %v8083, %v6805
        %v8265 = vmul.f32 %v8084, %v6809
        %v8266 = vmul.f32 %v8077, %v6813
        %v8267 = vpack.c.bf16 %v8259, %v8259
        %v8268 = vpack.c.bf16 %v8260, %v8260
        %v8269 = vpack.c.bf16 %v8261, %v8261
        %v8270 = vpack.c.bf16 %v8262, %v8262
        %v8271 = vpack.c.bf16 %v8263, %v8263
        %v8272 = vpack.c.bf16 %v8264, %v8264
        %v8273 = vpack.c.bf16 %v8265, %v8265
        %v8274 = vpack.c.bf16 %v8266, %v8266
        %v8275 = vmul.f32 %v8184, %v6833
        %v8276 = vmul.f32 %v8183, %v6837
        %v8277 = vmul.f32 %v8182, %v6841
        %v8278 = vmul.f32 %v8181, %v6845
        %v8279 = vmul.f32 %v8180, %v6849
        %v8280 = vmul.f32 %v8179, %v6853
        %v8281 = vmul.f32 %v8186, %v6857
        %v8282 = vmul.f32 %v8185, %v6861
        %v8283 = vpack.c.bf16 %v8275, %v8275
        %v8284 = vpack.c.bf16 %v8276, %v8276
        %v8285 = vpack.c.bf16 %v8277, %v8277
        %v8286 = vpack.c.bf16 %v8278, %v8278
        %v8287 = vpack.c.bf16 %v8279, %v8279
        %v8288 = vpack.c.bf16 %v8280, %v8280
        %v8289 = vpack.c.bf16 %v8281, %v8281
        %v8290 = vpack.c.bf16 %v8282, %v8282
        %v8299 = vunpack.c.l.b16 %v8147
        %v8300 = vunpack.c.l.b16 %v8148
        %v8301 = vunpack.c.l.b16 %v8149
        %v8302 = vunpack.c.l.b16 %v8150
        %v8303 = vunpack.c.l.b16 %v8151
        %v8304 = vunpack.c.l.b16 %v8152
        %v8305 = vunpack.c.l.b16 %v8153
        %v8306 = vunpack.c.l.b16 %v8154
        %v8307 = vpack.c.b16 %v8300, %v8299
        %v8308 = vpack.c.b16 %v8302, %v8301
        %v8309 = vpack.c.b16 %v8304, %v8303
        %v8310 = vpack.c.b16 %v8306, %v8305
        %v8319 = vunpack.c.l.b16 %v8163
        %v8320 = vunpack.c.l.b16 %v8164
        %v8321 = vunpack.c.l.b16 %v8165
        %v8322 = vunpack.c.l.b16 %v8166
        %v8323 = vunpack.c.l.b16 %v8167
        %v8324 = vunpack.c.l.b16 %v8168
        %v8325 = vunpack.c.l.b16 %v8169
        %v8326 = vunpack.c.l.b16 %v8170
        %v8327 = vpack.c.b16 %v8320, %v8319
        %v8328 = vpack.c.b16 %v8322, %v8321
        %v8329 = vpack.c.b16 %v8324, %v8323
        %v8330 = vpack.c.b16 %v8326, %v8325
        %8331 = vrot.lane.b32.xlu0 %v8327, 32
        %v8332 = vpop.permute.xlu0 %8331
        %8333 = vrot.lane.b32.xlu0 %v8328, 32
        %v8334 = vpop.permute.xlu0 %8333
        %8335 = vrot.lane.b32.xlu0 %v8329, 32
        %v8336 = vpop.permute.xlu0 %8335
        %8337 = vrot.lane.b32.xlu0 %v8330, 32
        %v8338 = vpop.permute.xlu0 %8337
        %v8347 = vunpack.c.l.b16 %v8195
        %v8348 = vunpack.c.l.b16 %v8196
        %v8349 = vunpack.c.l.b16 %v8197
        %v8350 = vunpack.c.l.b16 %v8198
        %v8351 = vunpack.c.l.b16 %v8199
        %v8352 = vunpack.c.l.b16 %v8200
        %v8353 = vunpack.c.l.b16 %v8201
        %v8354 = vunpack.c.l.b16 %v8202
        %v8355 = vpack.c.b16 %v8348, %v8347
        %v8356 = vpack.c.b16 %v8350, %v8349
        %v8357 = vpack.c.b16 %v8352, %v8351
        %v8358 = vpack.c.b16 %v8354, %v8353
        %8359 = vrot.lane.b32.xlu0 %v8355, 64
        %v8360 = vpop.permute.xlu0 %8359
        %8361 = vrot.lane.b32.xlu0 %v8356, 64
        %v8362 = vpop.permute.xlu0 %8361
        %8363 = vrot.lane.b32.xlu0 %v8357, 64
        %v8364 = vpop.permute.xlu0 %8363
        %8365 = vrot.lane.b32.xlu0 %v8358, 64
        %v8366 = vpop.permute.xlu0 %8365
        %v8375 = vunpack.c.l.b16 %v8211
        %v8376 = vunpack.c.l.b16 %v8212
        %v8377 = vunpack.c.l.b16 %v8213
        %v8378 = vunpack.c.l.b16 %v8214
        %v8379 = vunpack.c.l.b16 %v8215
        %v8380 = vunpack.c.l.b16 %v8216
        %v8381 = vunpack.c.l.b16 %v8217
        %v8382 = vunpack.c.l.b16 %v8218
        %v8383 = vpack.c.b16 %v8376, %v8375
        %v8384 = vpack.c.b16 %v8378, %v8377
        %v8385 = vpack.c.b16 %v8380, %v8379
        %v8386 = vpack.c.b16 %v8382, %v8381
        %8387 = vrot.lane.b32.xlu0 %v8383, 96
        %v8388 = vpop.permute.xlu0 %8387
        %8389 = vrot.lane.b32.xlu0 %v8384, 96
        %v8390 = vpop.permute.xlu0 %8389
        %8391 = vrot.lane.b32.xlu0 %v8385, 96
        %v8392 = vpop.permute.xlu0 %8391
        %8393 = vrot.lane.b32.xlu0 %v8386, 96
        %v8394 = vpop.permute.xlu0 %8393
        %v8403 = vunpack.c.l.b16 %v8219
        %v8404 = vunpack.c.l.b16 %v8220
        %v8405 = vunpack.c.l.b16 %v8221
        %v8406 = vunpack.c.l.b16 %v8222
        %v8407 = vunpack.c.l.b16 %v8223
        %v8408 = vunpack.c.l.b16 %v8224
        %v8409 = vunpack.c.l.b16 %v8225
        %v8410 = vunpack.c.l.b16 %v8226
        %v8411 = vpack.c.b16 %v8404, %v8403
        %v8412 = vpack.c.b16 %v8406, %v8405
        %v8413 = vpack.c.b16 %v8408, %v8407
        %v8414 = vpack.c.b16 %v8410, %v8409
        %v8423 = vunpack.c.l.b16 %v8235
        %v8424 = vunpack.c.l.b16 %v8236
        %v8425 = vunpack.c.l.b16 %v8237
        %v8426 = vunpack.c.l.b16 %v8238
        %v8427 = vunpack.c.l.b16 %v8239
        %v8428 = vunpack.c.l.b16 %v8240
        %v8429 = vunpack.c.l.b16 %v8241
        %v8430 = vunpack.c.l.b16 %v8242
        %v8431 = vpack.c.b16 %v8424, %v8423
        %v8432 = vpack.c.b16 %v8426, %v8425
        %v8433 = vpack.c.b16 %v8428, %v8427
        %v8434 = vpack.c.b16 %v8430, %v8429
        %8435 = vrot.lane.b32.xlu0 %v8431, 32
        %v8436 = vpop.permute.xlu0 %8435
        %8437 = vrot.lane.b32.xlu0 %v8432, 32
        %v8438 = vpop.permute.xlu0 %8437
        %8439 = vrot.lane.b32.xlu0 %v8433, 32
        %v8440 = vpop.permute.xlu0 %8439
        %8441 = vrot.lane.b32.xlu0 %v8434, 32
        %v8442 = vpop.permute.xlu0 %8441
        %v8451 = vunpack.c.l.b16 %v8251
        %v8452 = vunpack.c.l.b16 %v8252
        %v8453 = vunpack.c.l.b16 %v8253
        %v8454 = vunpack.c.l.b16 %v8254
        %v8455 = vunpack.c.l.b16 %v8255
        %v8456 = vunpack.c.l.b16 %v8256
        %v8457 = vunpack.c.l.b16 %v8257
        %v8458 = vunpack.c.l.b16 %v8258
        %v8459 = vpack.c.b16 %v8452, %v8451
        %v8460 = vpack.c.b16 %v8454, %v8453
        %v8461 = vpack.c.b16 %v8456, %v8455
        %v8462 = vpack.c.b16 %v8458, %v8457
        %8463 = vrot.lane.b32.xlu0 %v8459, 64
        %v8464 = vpop.permute.xlu0 %8463
        %8465 = vrot.lane.b32.xlu0 %v8460, 64
        %v8466 = vpop.permute.xlu0 %8465
        %8467 = vrot.lane.b32.xlu0 %v8461, 64
        %v8468 = vpop.permute.xlu0 %8467
        %8469 = vrot.lane.b32.xlu0 %v8462, 64
        %v8470 = vpop.permute.xlu0 %8469
        %v8479 = vunpack.c.l.b16 %v8267
        %v8480 = vunpack.c.l.b16 %v8268
        %v8481 = vunpack.c.l.b16 %v8269
        %v8482 = vunpack.c.l.b16 %v8270
        %v8483 = vunpack.c.l.b16 %v8271
        %v8484 = vunpack.c.l.b16 %v8272
        %v8485 = vunpack.c.l.b16 %v8273
        %v8486 = vunpack.c.l.b16 %v8274
        %v8487 = vpack.c.b16 %v8480, %v8479
        %v8488 = vpack.c.b16 %v8482, %v8481
        %v8489 = vpack.c.b16 %v8484, %v8483
        %v8490 = vpack.c.b16 %v8486, %v8485
        %8491 = vrot.lane.b32.xlu0 %v8487, 96
        %v8492 = vpop.permute.xlu0 %8491
        %8493 = vrot.lane.b32.xlu0 %v8488, 96
        %v8494 = vpop.permute.xlu0 %8493
        %8495 = vrot.lane.b32.xlu0 %v8489, 96
        %v8496 = vpop.permute.xlu0 %8495
        %8497 = vrot.lane.b32.xlu0 %v8490, 96
        %v8498 = vpop.permute.xlu0 %8497
        %v8507 = vunpack.c.l.b16 %v8283
        %v8508 = vunpack.c.l.b16 %v8284
        %v8509 = vunpack.c.l.b16 %v8285
        %v8510 = vunpack.c.l.b16 %v8286
        %v8511 = vunpack.c.l.b16 %v8287
        %v8512 = vunpack.c.l.b16 %v8288
        %v8513 = vunpack.c.l.b16 %v8289
        %v8514 = vunpack.c.l.b16 %v8290
        %v8515 = vpack.c.b16 %v8508, %v8507
        %v8516 = vpack.c.b16 %v8510, %v8509
        %v8517 = vpack.c.b16 %v8512, %v8511
        %v8518 = vpack.c.b16 %v8514, %v8513
        %v8521 = vsel %vm3023, %v8307, %v8332
        %v8524 = vsel %vm3023, %v8308, %v8334
        %v8527 = vsel %vm3023, %v8309, %v8336
        %v8530 = vsel %vm3023, %v8310, %v8338
        %v8532 = vsel %vm3072, %v8521, %v8360
        %v8534 = vsel %vm3072, %v8524, %v8362
        %v8536 = vsel %vm3072, %v8527, %v8364
        %v8538 = vsel %vm3072, %v8530, %v8366
        %v8540 = vsel %vm3105, %v8532, %v8388
        %v8543 = vsel %vm3105, %v8534, %v8390
        %v8546 = vsel %vm3105, %v8536, %v8392
        %v8549 = vsel %vm3105, %v8538, %v8394
        %v8553 = vsel %vm3023, %v8411, %v8436
        %v8556 = vsel %vm3023, %v8412, %v8438
        %v8559 = vsel %vm3023, %v8413, %v8440
        %v8562 = vsel %vm3023, %v8414, %v8442
        %v8564 = vsel %vm3072, %v8553, %v8464
        %v8566 = vsel %vm3072, %v8556, %v8466
        %v8568 = vsel %vm3072, %v8559, %v8468
        %v8570 = vsel %vm3072, %v8562, %v8470
        %v8572 = vsel %vm3105, %v8564, %v8492
        %v8575 = vsel %vm3105, %v8566, %v8494
        %v8578 = vsel %vm3105, %v8568, %v8496
        %v8581 = vsel %vm3105, %v8570, %v8498
        %v8583 = vperm.slane %v8122, 0
        %v8620 = vunpack.c.l.b16 %v8086
        %v8621 = vunpack.c.l.b16 %v8087
        %v8622 = vunpack.c.l.b16 %v8088
        %v8623 = vunpack.c.l.b16 %v8089
        %v8624 = vunpack.c.l.b16 %v8090
        %v8625 = vunpack.c.l.b16 %v8091
        %v8626 = vunpack.c.l.b16 %v8092
        %v8627 = vunpack.c.l.b16 %v8093
        %v8628 = vunpack.c.l.b16 %v8094
        %v8629 = vunpack.c.l.b16 %v8095
        %v8630 = vunpack.c.l.b16 %v8096
        %v8631 = vunpack.c.l.b16 %v8097
        %v8632 = vunpack.c.l.b16 %v8098
        %v8633 = vunpack.c.l.b16 %v8099
        %v8634 = vunpack.c.l.b16 %v8100
        %v8635 = vunpack.c.l.b16 %v8101
        %v8636 = vunpack.c.l.b16 %v8102
        %v8637 = vunpack.c.l.b16 %v8103
        %v8638 = vunpack.c.l.b16 %v8104
        %v8639 = vunpack.c.l.b16 %v8105
        %v8640 = vunpack.c.l.b16 %v8106
        %v8641 = vunpack.c.l.b16 %v8107
        %v8642 = vunpack.c.l.b16 %v8108
        %v8643 = vunpack.c.l.b16 %v8109
        %v8644 = vunpack.c.l.b16 %v8110
        %v8645 = vunpack.c.l.b16 %v8111
        %v8646 = vunpack.c.l.b16 %v8112
        %v8647 = vunpack.c.l.b16 %v8113
        %v8648 = vunpack.c.l.b16 %v8114
        %v8649 = vunpack.c.l.b16 %v8115
        %v8650 = vunpack.c.l.b16 %v8116
        %v8651 = vunpack.c.l.b16 %v8117
        %v8652 = vunpack.c.l.b16 %v8118
        %v8653 = vunpack.c.l.b16 %v8119
        %v8654 = vunpack.c.l.b16 %v8120
        %v8655 = vunpack.c.l.b16 %v8121
        %v8656 = vpack.c.b16 %v8621, %v8620
        %v8657 = vpack.c.b16 %v8623, %v8622
        %v8658 = vpack.c.b16 %v8625, %v8624
        %v8659 = vpack.c.b16 %v8627, %v8626
        %v8660 = vpack.c.b16 %v8629, %v8628
        %v8661 = vpack.c.b16 %v8631, %v8630
        %v8662 = vpack.c.b16 %v8633, %v8632
        %v8663 = vpack.c.b16 %v8635, %v8634
        %v8664 = vpack.c.b16 %v8637, %v8636
        %v8665 = vpack.c.b16 %v8639, %v8638
        %v8666 = vpack.c.b16 %v8641, %v8640
        %v8667 = vpack.c.b16 %v8643, %v8642
        %v8668 = vpack.c.b16 %v8645, %v8644
        %v8669 = vpack.c.b16 %v8647, %v8646
        %v8670 = vpack.c.b16 %v8649, %v8648
        %v8671 = vpack.c.b16 %v8651, %v8650
        %v8672 = vpack.c.b16 %v8653, %v8652
        %v8673 = vpack.c.b16 %v8655, %v8654
        %v8693 = vsel %vm3023, %v8515, 0
        %v8696 = vsel %vm3023, %v8516, 0
        %v8699 = vsel %vm3023, %v8517, 0
        %v8702 = vsel %vm3023, %v8518, 0
        %8704 = vmatpush.bf16.msra.mxu0 %v8663
        %8705 = vmatpush.bf16.msra.mxu0 %v8662
        %8706 = vmatpush.bf16.msra.mxu0 %v8661
        %8707 = vmatpush.bf16.msra.mxu0 %v8660
        %8708 = vmatpush.bf16.msra.mxu0 %v8659
        %8709 = vmatpush.bf16.msra.mxu0 %v8658
        %8710 = vmatpush.bf16.msra.mxu0 %v8657
        %8711 = vmatpush.bf16.msra.mxu0 %v8656
        %8712 = vmatmul.bf16.gmra.mxu0 %v8540
        %v8713 = vpop.f32.mrf.mxu0
        %v8714 = vadd.f32 %v8583, %v8713
        %v8715 = vpop.f32.mrf.mxu0
        %v8716 = vadd.f32 %v8583, %v8715
        %8717 = vmatmul.bf16.gmra.mxu0 %v8543
        %v8718 = vpop.f32.mrf.mxu0
        %v8719 = vadd.f32 %v8583, %v8718
        %v8720 = vpop.f32.mrf.mxu0
        %v8721 = vadd.f32 %v8583, %v8720
        %8722 = vmatmul.bf16.gmra.mxu0 %v8546
        %v8723 = vpop.f32.mrf.mxu0
        %v8724 = vadd.f32 %v8583, %v8723
        %v8725 = vpop.f32.mrf.mxu0
        %v8726 = vadd.f32 %v8583, %v8725
        %8727 = vmatmul.bf16.gmra.mxu0 %v8549
        %v8728 = vpop.f32.mrf.mxu0
        %v8729 = vadd.f32 %v8583, %v8728
        %v8730 = vpop.f32.mrf.mxu0
        %v8731 = vadd.f32 %v8583, %v8730
        %8732 = vdwg.mxu0
        %8733 = vmatpush.bf16.msra.mxu0 %v8671
        %8734 = vmatpush.bf16.msra.mxu0 %v8670
        %8735 = vmatpush.bf16.msra.mxu0 %v8669
        %8736 = vmatpush.bf16.msra.mxu0 %v8668
        %8737 = vmatpush.bf16.msra.mxu0 %v8667
        %8738 = vmatpush.bf16.msra.mxu0 %v8666
        %8739 = vmatpush.bf16.msra.mxu0 %v8665
        %8740 = vmatpush.bf16.msra.mxu0 %v8664
        %8741 = vmatmul.bf16.gmra.mxu0 %v8572
        %v8742 = vpop.f32.mrf.mxu0
        %v8743 = vadd.f32 %v8714, %v8742
        %v8744 = vpop.f32.mrf.mxu0
        %v8745 = vadd.f32 %v8716, %v8744
        %8746 = vmatmul.bf16.gmra.mxu0 %v8575
        %v8747 = vpop.f32.mrf.mxu0
        %v8748 = vadd.f32 %v8719, %v8747
        %v8749 = vpop.f32.mrf.mxu0
        %v8750 = vadd.f32 %v8721, %v8749
        %8751 = vmatmul.bf16.gmra.mxu0 %v8578
        %v8752 = vpop.f32.mrf.mxu0
        %v8753 = vadd.f32 %v8724, %v8752
        %v8754 = vpop.f32.mrf.mxu0
        %v8755 = vadd.f32 %v8726, %v8754
        %8756 = vmatmul.bf16.gmra.mxu0 %v8581
        %v8757 = vpop.f32.mrf.mxu0
        %v8758 = vadd.f32 %v8729, %v8757
        %v8759 = vpop.f32.mrf.mxu0
        %v8760 = vadd.f32 %v8731, %v8759
        %8761 = vdwg.mxu0
        %8762 = vmatpush.bf16.msra.mxu0 0
        %8763 = vmatpush.bf16.msra.mxu0 0
        %8764 = vmatpush.bf16.msra.mxu0 0
        %8765 = vmatpush.bf16.msra.mxu0 0
        %8766 = vmatpush.bf16.msra.mxu0 0
        %8767 = vmatpush.bf16.msra.mxu0 0
        %8768 = vmatpush.bf16.msra.mxu0 %v8673
        %8769 = vmatpush.bf16.msra.mxu0 %v8672
        %8770 = vmatmul.bf16.gmra.mxu0 %v8693
        %v8771 = vpop.f32.mrf.mxu0
        %v8772 = vadd.f32 %v8743, %v8771
        %v8773 = vpop.f32.mrf.mxu0
        %v8774 = vadd.f32 %v8745, %v8773
        %8775 = vmatmul.bf16.gmra.mxu0 %v8696
        %v8776 = vpop.f32.mrf.mxu0
        %v8777 = vadd.f32 %v8748, %v8776
        %v8778 = vpop.f32.mrf.mxu0
        %v8779 = vadd.f32 %v8750, %v8778
        %8780 = vmatmul.bf16.gmra.mxu0 %v8699
        %v8781 = vpop.f32.mrf.mxu0
        %v8782 = vadd.f32 %v8753, %v8781
        %v8783 = vpop.f32.mrf.mxu0
        %v8784 = vadd.f32 %v8755, %v8783
        %8785 = vmatmul.bf16.gmra.mxu0 %v8702
        %v8786 = vpop.f32.mrf.mxu0
        %v8787 = vadd.f32 %v8758, %v8786
        %v8788 = vpop.f32.mrf.mxu0
        %v8789 = vadd.f32 %v8760, %v8788
        %8790 = vdwg.mxu0
        %v8791 = vmax.f32 %v8772, 0.0
        %v8792 = vmax.f32 %v8774, 0.0
        %v8793 = vmax.f32 %v8777, 0.0
        %v8794 = vmax.f32 %v8779, 0.0
        %v8795 = vmax.f32 %v8782, 0.0
        %v8796 = vmax.f32 %v8784, 0.0
        %v8797 = vmax.f32 %v8787, 0.0
        %v8798 = vmax.f32 %v8789, 0.0
        %v8799 = vld [vmem:[%s6] sm:$0xf]
        %v8800 = vld [vmem:[%s6 + $0x4] sm:$0xf]
        %v8801 = vrot.slane %v8791, 1
        %v8802 = vrot.slane %v8792, 1
        %v8803 = vrot.slane %v8793, 1
        %v8804 = vrot.slane %v8794, 1
        %v8805 = vrot.slane %v8795, 1
        %v8806 = vrot.slane %v8796, 1
        %v8807 = vrot.slane %v8797, 1
        %v8808 = vrot.slane %v8798, 1
        %v8809 = vsel %vm894, %v8807, %v8808
        %v8810 = vsel %vm894, %v8806, %v8807
        %v8811 = vsel %vm894, %v8805, %v8806
        %v8812 = vsel %vm894, %v8804, %v8805
        %v8813 = vsel %vm894, %v8803, %v8804
        %v8814 = vsel %vm894, %v8802, %v8803
        %v8815 = vsel %vm894, %v8801, %v8802
        %v8816 = vsel %vm894, %v8808, %v8801
        %v8817 = vmax.f32 %v8791, %v8815
        %v8818 = vmax.f32 %v8792, %v8814
        %v8819 = vmax.f32 %v8793, %v8813
        %v8820 = vmax.f32 %v8794, %v8812
        %v8821 = vmax.f32 %v8795, %v8811
        %v8822 = vmax.f32 %v8796, %v8810
        %v8823 = vmax.f32 %v8797, %v8809
        %v8824 = vmax.f32 %v8798, %v8816
        %v8825 = vmax.f32 %v8817, %v8818
        %v8826 = vmax.f32 %v8818, %v8819
        %v8827 = vmax.f32 %v8819, %v8820
        %v8828 = vmax.f32 %v8820, %v8821
        %v8829 = vmax.f32 %v8821, %v8822
        %v8830 = vmax.f32 %v8822, %v8823
        %v8831 = vmax.f32 %v8823, %v8824
        %v8832 = vmax.f32 %v8824, %v8817
        %v8833 = vpack.c.bf16 %v8826, %v8825
        %v8834 = vpack.c.bf16 %v8828, %v8827
        %v8835 = vpack.c.bf16 %v8830, %v8829
        %v8836 = vpack.c.bf16 %v8832, %v8831
        %v8839 = vunpack.c.l.b16 %v8799
        %v8840 = vunpack.c.l.b16 %v8800
        %v8841 = vpack.c.b16 %v8840, %v8839
        %v8843 = vsel %vm3072, %v8841, 0
        %8845 = vmatpush.bf16.msra.mxu0 0
        %8846 = vmatpush.bf16.msra.mxu0 0
        %8847 = vmatpush.bf16.msra.mxu0 0
        %8848 = vmatpush.bf16.msra.mxu0 0
        %8849 = vmatpush.bf16.msra.mxu0 %v8836
        %8850 = vmatpush.bf16.msra.mxu0 %v8835
        %8851 = vmatpush.bf16.msra.mxu0 %v8834
        %8852 = vmatpush.bf16.msra.mxu0 %v8833
        %8853 = vmatmul.bf16.gmra.mxu0 %v8843
        %v8854 = vpop.f32.mrf.mxu0
        %v8855 = vadd.f32 0.0, %v8854
        %v8856 = vpop.f32.mrf.mxu0
        %v8857 = vadd.f32 0.0, %v8856
        %8858 = vdwg.mxu0
        %s8859 = scalar_lea.vmem %s2, 16
        %v8860 = vld [vmem:[%s8859] sm:$0xf]
        %v8861 = vld [vmem:[%s8859 + $0x4] sm:$0xf]
        %v8862 = vld [vmem:[%s8859 + $0x8] sm:$0xf]
        %v8863 = vld [vmem:[%s8859 + $0xc] sm:$0xf]
        %v8864 = vld [vmem:[%s3 + $0x8] sm:$0x1]
        %v8865 = vpack.c.bf16 %v8855, %v8855
        %v8866 = vpack.c.bf16 %v8857, %v8857
        %v8867 = vperm.slane %v8864, 0
        %v8870 = vunpack.c.l.b16 %v8865
        %v8871 = vunpack.c.l.b16 %v8866
        %v8872 = vpack.c.b16 %v8871, %v8870
        %v8877 = vunpack.c.l.b16 %v8860
        %v8878 = vunpack.c.l.b16 %v8861
        %v8879 = vunpack.c.l.b16 %v8862
        %v8880 = vunpack.c.l.b16 %v8863
        %v8881 = vpack.c.b16 %v8878, %v8877
        %v8882 = vpack.c.b16 %v8880, %v8879
        %v8886 = vsel %vm3023, %v8872, 0
        %8888 = vmatpush.bf16.msra.mxu0 0
        %8889 = vmatpush.bf16.msra.mxu0 0
        %8890 = vmatpush.bf16.msra.mxu0 0
        %8891 = vmatpush.bf16.msra.mxu0 0
        %8892 = vmatpush.bf16.msra.mxu0 0
        %8893 = vmatpush.bf16.msra.mxu0 0
        %8894 = vmatpush.bf16.msra.mxu0 %v8882
        %8895 = vmatpush.bf16.msra.mxu0 %v8881
        %8896 = vmatmul.bf16.gmra.mxu0 %v8886
        %v8897 = vpop.f32.mrf.mxu0
        %v8898 = vadd.f32 %v8867, %v8897
        %v8899 = vpop.f32.mrf.mxu0
        %v8900 = vadd.f32 %v8867, %v8899
        %8901 = vdwg.mxu0
        %s8902 = scalar_lea.vmem %s1, 720
        %v8903 = vld [vmem:[%s8902] sm:$0xf]
        %v8904 = vld [vmem:[%s8902 + $0x4] sm:$0xf]
        %v8905 = vld [vmem:[%s8902 + $0x8] sm:$0xf]
        %v8906 = vld [vmem:[%s8902 + $0xc] sm:$0xf]
        %v8907 = vld [vmem:[%s8902 + $0x10] sm:$0xf]
        %v8908 = vld [vmem:[%s8902 + $0x14] sm:$0xf]
        %v8909 = vld [vmem:[%s8902 + $0x18] sm:$0xf]
        %v8910 = vld [vmem:[%s8902 + $0x1c] sm:$0xf]
        %v8911 = vld [vmem:[%s8902 + $0x20] sm:$0xf]
        %v8912 = vld [vmem:[%s8902 + $0x24] sm:$0xf]
        %v8913 = vld [vmem:[%s8902 + $0x28] sm:$0xf]
        %v8914 = vld [vmem:[%s8902 + $0x2c] sm:$0xf]
        %v8915 = vld [vmem:[%s8902 + $0x30] sm:$0xf]
        %v8916 = vld [vmem:[%s8902 + $0x34] sm:$0xf]
        %v8917 = vld [vmem:[%s8902 + $0x38] sm:$0xf]
        %v8918 = vld [vmem:[%s8902 + $0x3c] sm:$0xf]
        %v8919 = vld [vmem:[%s8902 + $0x40] sm:$0xf]
        %v8920 = vld [vmem:[%s8902 + $0x44] sm:$0xf]
        %v8921 = vld [vmem:[%s8902 + $0x48] sm:$0xf]
        %v8922 = vld [vmem:[%s8902 + $0x4c] sm:$0xf]
        %v8923 = vld [vmem:[%s8902 + $0x50] sm:$0xf]
        %v8924 = vld [vmem:[%s8902 + $0x54] sm:$0xf]
        %v8925 = vld [vmem:[%s8902 + $0x58] sm:$0xf]
        %v8926 = vld [vmem:[%s8902 + $0x5c] sm:$0xf]
        %v8927 = vld [vmem:[%s8902 + $0x60] sm:$0xf]
        %v8928 = vld [vmem:[%s8902 + $0x64] sm:$0xf]
        %v8929 = vld [vmem:[%s8902 + $0x68] sm:$0xf]
        %v8930 = vld [vmem:[%s8902 + $0x6c] sm:$0xf]
        %v8931 = vld [vmem:[%s8902 + $0x70] sm:$0xf]
        %v8932 = vld [vmem:[%s8902 + $0x74] sm:$0xf]
        %v8933 = vld [vmem:[%s8902 + $0x78] sm:$0xf]
        %v8934 = vld [vmem:[%s8902 + $0x7c] sm:$0xf]
        %v8935 = vld [vmem:[%s8902 + $0x80] sm:$0xf]
        %v8936 = vld [vmem:[%s8902 + $0x84] sm:$0xf]
        %v8937 = vld [vmem:[%s8902 + $0x88] sm:$0xf]
        %v8938 = vld [vmem:[%s8902 + $0x8c] sm:$0xf]
        %v8939 = vld [vmem:[%s3 + $0x6] sm:$0x1]
        %v8940 = vld [vmem:[%s4 + $0x140] sm:$0xff]
        %v8941 = vld [vmem:[%s4 + $0x148] sm:$0xff]
        %v8942 = vrot.slane %v8855, 3
        %v8943 = vrot.slane %v8857, 3
        %vm8944 = vcmp.lt.s32.totalorder %v412, 5
        %v8945 = vsel %vm8944, %v8942, %v8943
        %v8946 = vsel %vm8944, %v8943, %v8942
        %8948 = vset.pattern.permute.xlu0 0
        %8949 = vperm.xlu0 %8948, %v8940
        %v8950 = vpop.permute.xlu0 %8949
        %8953 = vset.pattern.permute.xlu0 0
        %8954 = vperm.xlu0 %8953, %v8941
        %v8955 = vpop.permute.xlu0 %8954
        %v8957 = vmul.f32 %v8946, %v8950
        %v8958 = vmul.f32 %v8945, %v8955
        %v8959 = vpack.c.bf16 %v8957, %v8957
        %v8960 = vpack.c.bf16 %v8958, %v8958
        %v8961 = vrot.slane %v8855, 4
        %v8962 = vrot.slane %v8857, 4
        %vm8963 = vcmp.lt.s32.totalorder %v412, 4
        %v8964 = vsel %vm8963, %v8961, %v8962
        %v8965 = vsel %vm8963, %v8962, %v8961
        %8966 = vset.pattern.permute.xlu0 1
        %8967 = vperm.xlu0 %8966, %v8940
        %v8968 = vpop.permute.xlu0 %8967
        %8970 = vset.pattern.permute.xlu0 1
        %8971 = vperm.xlu0 %8970, %v8941
        %v8972 = vpop.permute.xlu0 %8971
        %v8974 = vmul.f32 %v8965, %v8968
        %v8975 = vmul.f32 %v8964, %v8972
        %v8976 = vpack.c.bf16 %v8974, %v8974
        %v8977 = vpack.c.bf16 %v8975, %v8975
        %v8978 = vrot.slane %v8855, 5
        %v8979 = vrot.slane %v8857, 5
        %vm8980 = vcmp.lt.s32.totalorder %v412, 3
        %v8981 = vsel %vm8980, %v8978, %v8979
        %v8982 = vsel %vm8980, %v8979, %v8978
        %8983 = vset.pattern.permute.xlu0 2
        %8984 = vperm.xlu0 %8983, %v8940
        %v8985 = vpop.permute.xlu0 %8984
        %8987 = vset.pattern.permute.xlu0 2
        %8988 = vperm.xlu0 %8987, %v8941
        %v8989 = vpop.permute.xlu0 %8988
        %v8991 = vmul.f32 %v8982, %v8985
        %v8992 = vmul.f32 %v8981, %v8989
        %v8993 = vpack.c.bf16 %v8991, %v8991
        %v8994 = vpack.c.bf16 %v8992, %v8992
        %v8995 = vrot.slane %v8855, 7
        %v8996 = vrot.slane %v8857, 7
        %v8997 = vsel %vm413, %v8995, %v8996
        %v8998 = vsel %vm413, %v8996, %v8995
        %8999 = vset.pattern.permute.xlu0 3
        %9000 = vperm.xlu0 %8999, %v8940
        %v9001 = vpop.permute.xlu0 %9000
        %9003 = vset.pattern.permute.xlu0 3
        %9004 = vperm.xlu0 %9003, %v8941
        %v9005 = vpop.permute.xlu0 %9004
        %v9007 = vmul.f32 %v8998, %v9001
        %v9008 = vmul.f32 %v8997, %v9005
        %v9009 = vpack.c.bf16 %v9007, %v9007
        %v9010 = vpack.c.bf16 %v9008, %v9008
        %v9011 = vrot.slane %v8855, 1
        %v9012 = vrot.slane %v8857, 1
        %v9013 = vsel %vm894, %v9011, %v9012
        %v9014 = vsel %vm894, %v9012, %v9011
        %9015 = vset.pattern.permute.xlu0 4
        %9016 = vperm.xlu0 %9015, %v8940
        %v9017 = vpop.permute.xlu0 %9016
        %9019 = vset.pattern.permute.xlu0 4
        %9020 = vperm.xlu0 %9019, %v8941
        %v9021 = vpop.permute.xlu0 %9020
        %v9023 = vmul.f32 %v9013, %v9017
        %v9024 = vmul.f32 %v9014, %v9021
        %v9025 = vpack.c.bf16 %v9023, %v9023
        %v9026 = vpack.c.bf16 %v9024, %v9024
        %9027 = vset.pattern.permute.xlu0 5
        %9028 = vperm.xlu0 %9027, %v8940
        %v9029 = vpop.permute.xlu0 %9028
        %9031 = vset.pattern.permute.xlu0 5
        %9032 = vperm.xlu0 %9031, %v8941
        %v9033 = vpop.permute.xlu0 %9032
        %v9035 = vmul.f32 %v8945, %v9029
        %v9036 = vmul.f32 %v8946, %v9033
        %v9037 = vpack.c.bf16 %v9035, %v9035
        %v9038 = vpack.c.bf16 %v9036, %v9036
        %9039 = vset.pattern.permute.xlu0 6
        %9040 = vperm.xlu0 %9039, %v8940
        %v9041 = vpop.permute.xlu0 %9040
        %9043 = vset.pattern.permute.xlu0 6
        %9044 = vperm.xlu0 %9043, %v8941
        %v9045 = vpop.permute.xlu0 %9044
        %v9047 = vmul.f32 %v8964, %v9041
        %v9048 = vmul.f32 %v8965, %v9045
        %v9049 = vpack.c.bf16 %v9047, %v9047
        %v9050 = vpack.c.bf16 %v9048, %v9048
        %9051 = vset.pattern.permute.xlu0 7
        %9052 = vperm.xlu0 %9051, %v8940
        %v9053 = vpop.permute.xlu0 %9052
        %9055 = vset.pattern.permute.xlu0 7
        %9056 = vperm.xlu0 %9055, %v8941
        %v9057 = vpop.permute.xlu0 %9056
        %v9059 = vmul.f32 %v8981, %v9053
        %v9060 = vmul.f32 %v8982, %v9057
        %v9061 = vpack.c.bf16 %v9059, %v9059
        %v9062 = vpack.c.bf16 %v9060, %v9060
        %v9065 = vunpack.c.l.b16 %v8959
        %v9066 = vunpack.c.l.b16 %v8960
        %v9067 = vpack.c.b16 %v9066, %v9065
        %v9070 = vunpack.c.l.b16 %v8976
        %v9071 = vunpack.c.l.b16 %v8977
        %v9072 = vpack.c.b16 %v9071, %v9070
        %9073 = vrot.lane.b32.xlu0 %v9072, 32
        %v9074 = vpop.permute.xlu0 %9073
        %v9077 = vunpack.c.l.b16 %v8993
        %v9078 = vunpack.c.l.b16 %v8994
        %v9079 = vpack.c.b16 %v9078, %v9077
        %9080 = vrot.lane.b32.xlu0 %v9079, 64
        %v9081 = vpop.permute.xlu0 %9080
        %v9084 = vunpack.c.l.b16 %v9009
        %v9085 = vunpack.c.l.b16 %v9010
        %v9086 = vpack.c.b16 %v9085, %v9084
        %9087 = vrot.lane.b32.xlu0 %v9086, 96
        %v9088 = vpop.permute.xlu0 %9087
        %v9091 = vunpack.c.l.b16 %v9025
        %v9092 = vunpack.c.l.b16 %v9026
        %v9093 = vpack.c.b16 %v9092, %v9091
        %9094 = vrot.lane.b32.xlu0 %v9093, 32
        %v9095 = vpop.permute.xlu0 %9094
        %v9098 = vunpack.c.l.b16 %v9037
        %v9099 = vunpack.c.l.b16 %v9038
        %v9100 = vpack.c.b16 %v9099, %v9098
        %9101 = vrot.lane.b32.xlu0 %v9100, 64
        %v9102 = vpop.permute.xlu0 %9101
        %v9105 = vunpack.c.l.b16 %v9049
        %v9106 = vunpack.c.l.b16 %v9050
        %v9107 = vpack.c.b16 %v9106, %v9105
        %9108 = vrot.lane.b32.xlu0 %v9107, 96
        %v9109 = vpop.permute.xlu0 %9108
        %v9112 = vunpack.c.l.b16 %v9061
        %v9113 = vunpack.c.l.b16 %v9062
        %v9114 = vpack.c.b16 %v9113, %v9112
        %v9117 = vsel %vm3023, %v9067, %v9074
        %v9119 = vsel %vm3072, %v9117, %v9081
        %v9121 = vsel %vm3105, %v9119, %v9088
        %v9124 = vsel %vm3023, %v8872, %v9095
        %v9126 = vsel %vm3072, %v9124, %v9102
        %v9128 = vsel %vm3105, %v9126, %v9109
        %v9130 = vperm.slane %v8939, 0
        %v9167 = vunpack.c.l.b16 %v8903
        %v9168 = vunpack.c.l.b16 %v8904
        %v9169 = vunpack.c.l.b16 %v8905
        %v9170 = vunpack.c.l.b16 %v8906
        %v9171 = vunpack.c.l.b16 %v8907
        %v9172 = vunpack.c.l.b16 %v8908
        %v9173 = vunpack.c.l.b16 %v8909
        %v9174 = vunpack.c.l.b16 %v8910
        %v9175 = vunpack.c.l.b16 %v8911
        %v9176 = vunpack.c.l.b16 %v8912
        %v9177 = vunpack.c.l.b16 %v8913
        %v9178 = vunpack.c.l.b16 %v8914
        %v9179 = vunpack.c.l.b16 %v8915
        %v9180 = vunpack.c.l.b16 %v8916
        %v9181 = vunpack.c.l.b16 %v8917
        %v9182 = vunpack.c.l.b16 %v8918
        %v9183 = vunpack.c.l.b16 %v8919
        %v9184 = vunpack.c.l.b16 %v8920
        %v9185 = vunpack.c.l.b16 %v8921
        %v9186 = vunpack.c.l.b16 %v8922
        %v9187 = vunpack.c.l.b16 %v8923
        %v9188 = vunpack.c.l.b16 %v8924
        %v9189 = vunpack.c.l.b16 %v8925
        %v9190 = vunpack.c.l.b16 %v8926
        %v9191 = vunpack.c.l.b16 %v8927
        %v9192 = vunpack.c.l.b16 %v8928
        %v9193 = vunpack.c.l.b16 %v8929
        %v9194 = vunpack.c.l.b16 %v8930
        %v9195 = vunpack.c.l.b16 %v8931
        %v9196 = vunpack.c.l.b16 %v8932
        %v9197 = vunpack.c.l.b16 %v8933
        %v9198 = vunpack.c.l.b16 %v8934
        %v9199 = vunpack.c.l.b16 %v8935
        %v9200 = vunpack.c.l.b16 %v8936
        %v9201 = vunpack.c.l.b16 %v8937
        %v9202 = vunpack.c.l.b16 %v8938
        %v9203 = vpack.c.b16 %v9168, %v9167
        %v9204 = vpack.c.b16 %v9170, %v9169
        %v9205 = vpack.c.b16 %v9172, %v9171
        %v9206 = vpack.c.b16 %v9174, %v9173
        %v9207 = vpack.c.b16 %v9176, %v9175
        %v9208 = vpack.c.b16 %v9178, %v9177
        %v9209 = vpack.c.b16 %v9180, %v9179
        %v9210 = vpack.c.b16 %v9182, %v9181
        %v9211 = vpack.c.b16 %v9184, %v9183
        %v9212 = vpack.c.b16 %v9186, %v9185
        %v9213 = vpack.c.b16 %v9188, %v9187
        %v9214 = vpack.c.b16 %v9190, %v9189
        %v9215 = vpack.c.b16 %v9192, %v9191
        %v9216 = vpack.c.b16 %v9194, %v9193
        %v9217 = vpack.c.b16 %v9196, %v9195
        %v9218 = vpack.c.b16 %v9198, %v9197
        %v9219 = vpack.c.b16 %v9200, %v9199
        %v9220 = vpack.c.b16 %v9202, %v9201
        %v9240 = vsel %vm3023, %v9114, 0
        %9242 = vmatpush.bf16.msra.mxu0 %v9210
        %9243 = vmatpush.bf16.msra.mxu0 %v9209
        %9244 = vmatpush.bf16.msra.mxu0 %v9208
        %9245 = vmatpush.bf16.msra.mxu0 %v9207
        %9246 = vmatpush.bf16.msra.mxu0 %v9206
        %9247 = vmatpush.bf16.msra.mxu0 %v9205
        %9248 = vmatpush.bf16.msra.mxu0 %v9204
        %9249 = vmatpush.bf16.msra.mxu0 %v9203
        %9250 = vmatmul.bf16.gmra.mxu0 %v9121
        %v9251 = vpop.f32.mrf.mxu0
        %v9252 = vadd.f32 %v9130, %v9251
        %v9253 = vpop.f32.mrf.mxu0
        %v9254 = vadd.f32 %v9130, %v9253
        %9255 = vdwg.mxu0
        %9256 = vmatpush.bf16.msra.mxu0 %v9218
        %9257 = vmatpush.bf16.msra.mxu0 %v9217
        %9258 = vmatpush.bf16.msra.mxu0 %v9216
        %9259 = vmatpush.bf16.msra.mxu0 %v9215
        %9260 = vmatpush.bf16.msra.mxu0 %v9214
        %9261 = vmatpush.bf16.msra.mxu0 %v9213
        %9262 = vmatpush.bf16.msra.mxu0 %v9212
        %9263 = vmatpush.bf16.msra.mxu0 %v9211
        %9264 = vmatmul.bf16.gmra.mxu0 %v9128
        %v9265 = vpop.f32.mrf.mxu0
        %v9266 = vadd.f32 %v9252, %v9265
        %v9267 = vpop.f32.mrf.mxu0
        %v9268 = vadd.f32 %v9254, %v9267
        %9269 = vdwg.mxu0
        %9270 = vmatpush.bf16.msra.mxu0 0
        %9271 = vmatpush.bf16.msra.mxu0 0
        %9272 = vmatpush.bf16.msra.mxu0 0
        %9273 = vmatpush.bf16.msra.mxu0 0
        %9274 = vmatpush.bf16.msra.mxu0 0
        %9275 = vmatpush.bf16.msra.mxu0 0
        %9276 = vmatpush.bf16.msra.mxu0 %v9220
        %9277 = vmatpush.bf16.msra.mxu0 %v9219
        %9278 = vmatmul.bf16.gmra.mxu0 %v9240
        %v9279 = vpop.f32.mrf.mxu0
        %v9280 = vadd.f32 %v9266, %v9279
        %v9281 = vpop.f32.mrf.mxu0
        %v9282 = vadd.f32 %v9268, %v9281
        %9283 = vdwg.mxu0
        %v9284 = vmax.f32 %v9280, 0.0
        %v9285 = vmax.f32 %v9282, 0.0
        %s9286 = scalar_lea.vmem %s1, 864
        %v9287 = vld [vmem:[%s9286] sm:$0xf]
        %v9288 = vld [vmem:[%s9286 + $0x4] sm:$0xf]
        %v9289 = vld [vmem:[%s9286 + $0x8] sm:$0xf]
        %v9290 = vld [vmem:[%s9286 + $0xc] sm:$0xf]
        %v9291 = vld [vmem:[%s9286 + $0x10] sm:$0xf]
        %v9292 = vld [vmem:[%s9286 + $0x14] sm:$0xf]
        %v9293 = vld [vmem:[%s9286 + $0x18] sm:$0xf]
        %v9294 = vld [vmem:[%s9286 + $0x1c] sm:$0xf]
        %v9295 = vld [vmem:[%s9286 + $0x20] sm:$0xf]
        %v9296 = vld [vmem:[%s9286 + $0x24] sm:$0xf]
        %v9297 = vld [vmem:[%s9286 + $0x28] sm:$0xf]
        %v9298 = vld [vmem:[%s9286 + $0x2c] sm:$0xf]
        %v9299 = vld [vmem:[%s9286 + $0x30] sm:$0xf]
        %v9300 = vld [vmem:[%s9286 + $0x34] sm:$0xf]
        %v9301 = vld [vmem:[%s9286 + $0x38] sm:$0xf]
        %v9302 = vld [vmem:[%s9286 + $0x3c] sm:$0xf]
        %v9303 = vld [vmem:[%s9286 + $0x40] sm:$0xf]
        %v9304 = vld [vmem:[%s9286 + $0x44] sm:$0xf]
        %v9305 = vld [vmem:[%s9286 + $0x48] sm:$0xf]
        %v9306 = vld [vmem:[%s9286 + $0x4c] sm:$0xf]
        %v9307 = vld [vmem:[%s9286 + $0x50] sm:$0xf]
        %v9308 = vld [vmem:[%s9286 + $0x54] sm:$0xf]
        %v9309 = vld [vmem:[%s9286 + $0x58] sm:$0xf]
        %v9310 = vld [vmem:[%s9286 + $0x5c] sm:$0xf]
        %v9311 = vld [vmem:[%s9286 + $0x60] sm:$0xf]
        %v9312 = vld [vmem:[%s9286 + $0x64] sm:$0xf]
        %v9313 = vld [vmem:[%s9286 + $0x68] sm:$0xf]
        %v9314 = vld [vmem:[%s9286 + $0x6c] sm:$0xf]
        %v9315 = vld [vmem:[%s9286 + $0x70] sm:$0xf]
        %v9316 = vld [vmem:[%s9286 + $0x74] sm:$0xf]
        %v9317 = vld [vmem:[%s9286 + $0x78] sm:$0xf]
        %v9318 = vld [vmem:[%s9286 + $0x7c] sm:$0xf]
        %v9319 = vld [vmem:[%s9286 + $0x80] sm:$0xf]
        %v9320 = vld [vmem:[%s9286 + $0x84] sm:$0xf]
        %v9321 = vld [vmem:[%s9286 + $0x88] sm:$0xf]
        %v9322 = vld [vmem:[%s9286 + $0x8c] sm:$0xf]
        %v9323 = vld [vmem:[%s3 + $0x7] sm:$0x1]
        %v9324 = vrot.slane %v9284, 3
        %v9325 = vrot.slane %v9285, 3
        %v9326 = vsel %vm8944, %v9324, %v9325
        %v9327 = vsel %vm8944, %v9325, %v9324
        %v9328 = vmul.f32 %v9327, %v8950
        %v9329 = vmul.f32 %v9326, %v8955
        %v9330 = vpack.c.bf16 %v9328, %v9328
        %v9331 = vpack.c.bf16 %v9329, %v9329
        %v9332 = vrot.slane %v9284, 4
        %v9333 = vrot.slane %v9285, 4
        %v9334 = vsel %vm8963, %v9332, %v9333
        %v9335 = vsel %vm8963, %v9333, %v9332
        %v9336 = vmul.f32 %v9335, %v8968
        %v9337 = vmul.f32 %v9334, %v8972
        %v9338 = vpack.c.bf16 %v9336, %v9336
        %v9339 = vpack.c.bf16 %v9337, %v9337
        %v9340 = vrot.slane %v9284, 5
        %v9341 = vrot.slane %v9285, 5
        %v9342 = vsel %vm8980, %v9340, %v9341
        %v9343 = vsel %vm8980, %v9341, %v9340
        %v9344 = vmul.f32 %v9343, %v8985
        %v9345 = vmul.f32 %v9342, %v8989
        %v9346 = vpack.c.bf16 %v9344, %v9344
        %v9347 = vpack.c.bf16 %v9345, %v9345
        %v9348 = vrot.slane %v9284, 7
        %v9349 = vrot.slane %v9285, 7
        %v9350 = vsel %vm413, %v9348, %v9349
        %v9351 = vsel %vm413, %v9349, %v9348
        %v9352 = vmul.f32 %v9351, %v9001
        %v9353 = vmul.f32 %v9350, %v9005
        %v9354 = vpack.c.bf16 %v9352, %v9352
        %v9355 = vpack.c.bf16 %v9353, %v9353
        %v9356 = vpack.c.bf16 %v9284, %v9284
        %v9357 = vpack.c.bf16 %v9285, %v9285
        %v9358 = vrot.slane %v9284, 1
        %v9359 = vrot.slane %v9285, 1
        %v9360 = vsel %vm894, %v9358, %v9359
        %v9361 = vsel %vm894, %v9359, %v9358
        %v9362 = vmul.f32 %v9360, %v9017
        %v9363 = vmul.f32 %v9361, %v9021
        %v9364 = vpack.c.bf16 %v9362, %v9362
        %v9365 = vpack.c.bf16 %v9363, %v9363
        %v9366 = vmul.f32 %v9326, %v9029
        %v9367 = vmul.f32 %v9327, %v9033
        %v9368 = vpack.c.bf16 %v9366, %v9366
        %v9369 = vpack.c.bf16 %v9367, %v9367
        %v9370 = vmul.f32 %v9334, %v9041
        %v9371 = vmul.f32 %v9335, %v9045
        %v9372 = vpack.c.bf16 %v9370, %v9370
        %v9373 = vpack.c.bf16 %v9371, %v9371
        %v9374 = vmul.f32 %v9342, %v9053
        %v9375 = vmul.f32 %v9343, %v9057
        %v9376 = vpack.c.bf16 %v9374, %v9374
        %v9377 = vpack.c.bf16 %v9375, %v9375
        %v9380 = vunpack.c.l.b16 %v9330
        %v9381 = vunpack.c.l.b16 %v9331
        %v9382 = vpack.c.b16 %v9381, %v9380
        %v9385 = vunpack.c.l.b16 %v9338
        %v9386 = vunpack.c.l.b16 %v9339
        %v9387 = vpack.c.b16 %v9386, %v9385
        %9388 = vrot.lane.b32.xlu0 %v9387, 32
        %v9389 = vpop.permute.xlu0 %9388
        %v9392 = vunpack.c.l.b16 %v9346
        %v9393 = vunpack.c.l.b16 %v9347
        %v9394 = vpack.c.b16 %v9393, %v9392
        %9395 = vrot.lane.b32.xlu0 %v9394, 64
        %v9396 = vpop.permute.xlu0 %9395
        %v9399 = vunpack.c.l.b16 %v9354
        %v9400 = vunpack.c.l.b16 %v9355
        %v9401 = vpack.c.b16 %v9400, %v9399
        %9402 = vrot.lane.b32.xlu0 %v9401, 96
        %v9403 = vpop.permute.xlu0 %9402
        %v9406 = vunpack.c.l.b16 %v9356
        %v9407 = vunpack.c.l.b16 %v9357
        %v9408 = vpack.c.b16 %v9407, %v9406
        %v9411 = vunpack.c.l.b16 %v9364
        %v9412 = vunpack.c.l.b16 %v9365
        %v9413 = vpack.c.b16 %v9412, %v9411
        %9414 = vrot.lane.b32.xlu0 %v9413, 32
        %v9415 = vpop.permute.xlu0 %9414
        %v9418 = vunpack.c.l.b16 %v9368
        %v9419 = vunpack.c.l.b16 %v9369
        %v9420 = vpack.c.b16 %v9419, %v9418
        %9421 = vrot.lane.b32.xlu0 %v9420, 64
        %v9422 = vpop.permute.xlu0 %9421
        %v9425 = vunpack.c.l.b16 %v9372
        %v9426 = vunpack.c.l.b16 %v9373
        %v9427 = vpack.c.b16 %v9426, %v9425
        %9428 = vrot.lane.b32.xlu0 %v9427, 96
        %v9429 = vpop.permute.xlu0 %9428
        %v9432 = vunpack.c.l.b16 %v9376
        %v9433 = vunpack.c.l.b16 %v9377
        %v9434 = vpack.c.b16 %v9433, %v9432
        %v9437 = vsel %vm3023, %v9382, %v9389
        %v9439 = vsel %vm3072, %v9437, %v9396
        %v9441 = vsel %vm3105, %v9439, %v9403
        %v9445 = vsel %vm3023, %v9408, %v9415
        %v9447 = vsel %vm3072, %v9445, %v9422
        %v9449 = vsel %vm3105, %v9447, %v9429
        %v9451 = vperm.slane %v9323, 0
        %v9488 = vunpack.c.l.b16 %v9287
        %v9489 = vunpack.c.l.b16 %v9288
        %v9490 = vunpack.c.l.b16 %v9289
        %v9491 = vunpack.c.l.b16 %v9290
        %v9492 = vunpack.c.l.b16 %v9291
        %v9493 = vunpack.c.l.b16 %v9292
        %v9494 = vunpack.c.l.b16 %v9293
        %v9495 = vunpack.c.l.b16 %v9294
        %v9496 = vunpack.c.l.b16 %v9295
        %v9497 = vunpack.c.l.b16 %v9296
        %v9498 = vunpack.c.l.b16 %v9297
        %v9499 = vunpack.c.l.b16 %v9298
        %v9500 = vunpack.c.l.b16 %v9299
        %v9501 = vunpack.c.l.b16 %v9300
        %v9502 = vunpack.c.l.b16 %v9301
        %v9503 = vunpack.c.l.b16 %v9302
        %v9504 = vunpack.c.l.b16 %v9303
        %v9505 = vunpack.c.l.b16 %v9304
        %v9506 = vunpack.c.l.b16 %v9305
        %v9507 = vunpack.c.l.b16 %v9306
        %v9508 = vunpack.c.l.b16 %v9307
        %v9509 = vunpack.c.l.b16 %v9308
        %v9510 = vunpack.c.l.b16 %v9309
        %v9511 = vunpack.c.l.b16 %v9310
        %v9512 = vunpack.c.l.b16 %v9311
        %v9513 = vunpack.c.l.b16 %v9312
        %v9514 = vunpack.c.l.b16 %v9313
        %v9515 = vunpack.c.l.b16 %v9314
        %v9516 = vunpack.c.l.b16 %v9315
        %v9517 = vunpack.c.l.b16 %v9316
        %v9518 = vunpack.c.l.b16 %v9317
        %v9519 = vunpack.c.l.b16 %v9318
        %v9520 = vunpack.c.l.b16 %v9319
        %v9521 = vunpack.c.l.b16 %v9320
        %v9522 = vunpack.c.l.b16 %v9321
        %v9523 = vunpack.c.l.b16 %v9322
        %v9524 = vpack.c.b16 %v9489, %v9488
        %v9525 = vpack.c.b16 %v9491, %v9490
        %v9526 = vpack.c.b16 %v9493, %v9492
        %v9527 = vpack.c.b16 %v9495, %v9494
        %v9528 = vpack.c.b16 %v9497, %v9496
        %v9529 = vpack.c.b16 %v9499, %v9498
        %v9530 = vpack.c.b16 %v9501, %v9500
        %v9531 = vpack.c.b16 %v9503, %v9502
        %v9532 = vpack.c.b16 %v9505, %v9504
        %v9533 = vpack.c.b16 %v9507, %v9506
        %v9534 = vpack.c.b16 %v9509, %v9508
        %v9535 = vpack.c.b16 %v9511, %v9510
        %v9536 = vpack.c.b16 %v9513, %v9512
        %v9537 = vpack.c.b16 %v9515, %v9514
        %v9538 = vpack.c.b16 %v9517, %v9516
        %v9539 = vpack.c.b16 %v9519, %v9518
        %v9540 = vpack.c.b16 %v9521, %v9520
        %v9541 = vpack.c.b16 %v9523, %v9522
        %v9561 = vsel %vm3023, %v9434, 0
        %9563 = vmatpush.bf16.msra.mxu0 %v9531
        %9564 = vmatpush.bf16.msra.mxu0 %v9530
        %9565 = vmatpush.bf16.msra.mxu0 %v9529
        %9566 = vmatpush.bf16.msra.mxu0 %v9528
        %9567 = vmatpush.bf16.msra.mxu0 %v9527
        %9568 = vmatpush.bf16.msra.mxu0 %v9526
        %9569 = vmatpush.bf16.msra.mxu0 %v9525
        %9570 = vmatpush.bf16.msra.mxu0 %v9524
        %9571 = vmatmul.bf16.gmra.mxu0 %v9441
        %v9572 = vpop.f32.mrf.mxu0
        %v9573 = vadd.f32 %v9451, %v9572
        %v9574 = vpop.f32.mrf.mxu0
        %v9575 = vadd.f32 %v9451, %v9574
        %9576 = vdwg.mxu0
        %9577 = vmatpush.bf16.msra.mxu0 %v9539
        %9578 = vmatpush.bf16.msra.mxu0 %v9538
        %9579 = vmatpush.bf16.msra.mxu0 %v9537
        %9580 = vmatpush.bf16.msra.mxu0 %v9536
        %9581 = vmatpush.bf16.msra.mxu0 %v9535
        %9582 = vmatpush.bf16.msra.mxu0 %v9534
        %9583 = vmatpush.bf16.msra.mxu0 %v9533
        %9584 = vmatpush.bf16.msra.mxu0 %v9532
        %9585 = vmatmul.bf16.gmra.mxu0 %v9449
        %v9586 = vpop.f32.mrf.mxu0
        %v9587 = vadd.f32 %v9573, %v9586
        %v9588 = vpop.f32.mrf.mxu0
        %v9589 = vadd.f32 %v9575, %v9588
        %9590 = vdwg.mxu0
        %9591 = vmatpush.bf16.msra.mxu0 0
        %9592 = vmatpush.bf16.msra.mxu0 0
        %9593 = vmatpush.bf16.msra.mxu0 0
        %9594 = vmatpush.bf16.msra.mxu0 0
        %9595 = vmatpush.bf16.msra.mxu0 0
        %9596 = vmatpush.bf16.msra.mxu0 0
        %9597 = vmatpush.bf16.msra.mxu0 %v9541
        %9598 = vmatpush.bf16.msra.mxu0 %v9540
        %9599 = vmatmul.bf16.gmra.mxu0 %v9561
        %v9600 = vpop.f32.mrf.mxu0
        %v9601 = vadd.f32 %v9587, %v9600
        %v9602 = vpop.f32.mrf.mxu0
        %v9603 = vadd.f32 %v9589, %v9602
        %9604 = vdwg.mxu0
        %v9605 = vadd.f32 %v9601, %v8898
        %v9606 = vadd.f32 %v9603, %v8900
        %v9607 = vmax.f32 %v9605, 0.0
        %v9608 = vmax.f32 %v9606, 0.0
        %s9609 = scalar_lea.vmem %s1, 1008
        %v9610 = vld [vmem:[%s9609] sm:$0xf]
        %v9611 = vld [vmem:[%s9609 + $0x4] sm:$0xf]
        %v9612 = vld [vmem:[%s9609 + $0x8] sm:$0xf]
        %v9613 = vld [vmem:[%s9609 + $0xc] sm:$0xf]
        %v9614 = vld [vmem:[%s9609 + $0x10] sm:$0xf]
        %v9615 = vld [vmem:[%s9609 + $0x14] sm:$0xf]
        %v9616 = vld [vmem:[%s9609 + $0x18] sm:$0xf]
        %v9617 = vld [vmem:[%s9609 + $0x1c] sm:$0xf]
        %v9618 = vld [vmem:[%s9609 + $0x20] sm:$0xf]
        %v9619 = vld [vmem:[%s9609 + $0x24] sm:$0xf]
        %v9620 = vld [vmem:[%s9609 + $0x28] sm:$0xf]
        %v9621 = vld [vmem:[%s9609 + $0x2c] sm:$0xf]
        %v9622 = vld [vmem:[%s9609 + $0x30] sm:$0xf]
        %v9623 = vld [vmem:[%s9609 + $0x34] sm:$0xf]
        %v9624 = vld [vmem:[%s9609 + $0x38] sm:$0xf]
        %v9625 = vld [vmem:[%s9609 + $0x3c] sm:$0xf]
        %v9626 = vld [vmem:[%s9609 + $0x40] sm:$0xf]
        %v9627 = vld [vmem:[%s9609 + $0x44] sm:$0xf]
        %v9628 = vld [vmem:[%s9609 + $0x48] sm:$0xf]
        %v9629 = vld [vmem:[%s9609 + $0x4c] sm:$0xf]
        %v9630 = vld [vmem:[%s9609 + $0x50] sm:$0xf]
        %v9631 = vld [vmem:[%s9609 + $0x54] sm:$0xf]
        %v9632 = vld [vmem:[%s9609 + $0x58] sm:$0xf]
        %v9633 = vld [vmem:[%s9609 + $0x5c] sm:$0xf]
        %v9634 = vld [vmem:[%s9609 + $0x60] sm:$0xf]
        %v9635 = vld [vmem:[%s9609 + $0x64] sm:$0xf]
        %v9636 = vld [vmem:[%s9609 + $0x68] sm:$0xf]
        %v9637 = vld [vmem:[%s9609 + $0x6c] sm:$0xf]
        %v9638 = vld [vmem:[%s9609 + $0x70] sm:$0xf]
        %v9639 = vld [vmem:[%s9609 + $0x74] sm:$0xf]
        %v9640 = vld [vmem:[%s9609 + $0x78] sm:$0xf]
        %v9641 = vld [vmem:[%s9609 + $0x7c] sm:$0xf]
        %v9642 = vld [vmem:[%s9609 + $0x80] sm:$0xf]
        %v9643 = vld [vmem:[%s9609 + $0x84] sm:$0xf]
        %v9644 = vld [vmem:[%s9609 + $0x88] sm:$0xf]
        %v9645 = vld [vmem:[%s9609 + $0x8c] sm:$0xf]
        %v9646 = vld [vmem:[%s3 + $0x9] sm:$0x1]
        %v9647 = vrot.slane %v9607, 3
        %v9648 = vrot.slane %v9608, 3
        %v9649 = vsel %vm8944, %v9647, %v9648
        %v9650 = vsel %vm8944, %v9648, %v9647
        %v9651 = vmul.f32 %v9650, %v8950
        %v9652 = vmul.f32 %v9649, %v8955
        %v9653 = vpack.c.bf16 %v9651, %v9651
        %v9654 = vpack.c.bf16 %v9652, %v9652
        %v9655 = vrot.slane %v9607, 4
        %v9656 = vrot.slane %v9608, 4
        %v9657 = vsel %vm8963, %v9655, %v9656
        %v9658 = vsel %vm8963, %v9656, %v9655
        %v9659 = vmul.f32 %v9658, %v8968
        %v9660 = vmul.f32 %v9657, %v8972
        %v9661 = vpack.c.bf16 %v9659, %v9659
        %v9662 = vpack.c.bf16 %v9660, %v9660
        %v9663 = vrot.slane %v9607, 5
        %v9664 = vrot.slane %v9608, 5
        %v9665 = vsel %vm8980, %v9663, %v9664
        %v9666 = vsel %vm8980, %v9664, %v9663
        %v9667 = vmul.f32 %v9666, %v8985
        %v9668 = vmul.f32 %v9665, %v8989
        %v9669 = vpack.c.bf16 %v9667, %v9667
        %v9670 = vpack.c.bf16 %v9668, %v9668
        %v9671 = vrot.slane %v9607, 7
        %v9672 = vrot.slane %v9608, 7
        %v9673 = vsel %vm413, %v9671, %v9672
        %v9674 = vsel %vm413, %v9672, %v9671
        %v9675 = vmul.f32 %v9674, %v9001
        %v9676 = vmul.f32 %v9673, %v9005
        %v9677 = vpack.c.bf16 %v9675, %v9675
        %v9678 = vpack.c.bf16 %v9676, %v9676
        %v9679 = vpack.c.bf16 %v9607, %v9607
        %v9680 = vpack.c.bf16 %v9608, %v9608
        %v9681 = vrot.slane %v9607, 1
        %v9682 = vrot.slane %v9608, 1
        %v9683 = vsel %vm894, %v9681, %v9682
        %v9684 = vsel %vm894, %v9682, %v9681
        %v9685 = vmul.f32 %v9683, %v9017
        %v9686 = vmul.f32 %v9684, %v9021
        %v9687 = vpack.c.bf16 %v9685, %v9685
        %v9688 = vpack.c.bf16 %v9686, %v9686
        %v9689 = vmul.f32 %v9649, %v9029
        %v9690 = vmul.f32 %v9650, %v9033
        %v9691 = vpack.c.bf16 %v9689, %v9689
        %v9692 = vpack.c.bf16 %v9690, %v9690
        %v9693 = vmul.f32 %v9657, %v9041
        %v9694 = vmul.f32 %v9658, %v9045
        %v9695 = vpack.c.bf16 %v9693, %v9693
        %v9696 = vpack.c.bf16 %v9694, %v9694
        %v9697 = vmul.f32 %v9665, %v9053
        %v9698 = vmul.f32 %v9666, %v9057
        %v9699 = vpack.c.bf16 %v9697, %v9697
        %v9700 = vpack.c.bf16 %v9698, %v9698
        %v9703 = vunpack.c.l.b16 %v9653
        %v9704 = vunpack.c.l.b16 %v9654
        %v9705 = vpack.c.b16 %v9704, %v9703
        %v9708 = vunpack.c.l.b16 %v9661
        %v9709 = vunpack.c.l.b16 %v9662
        %v9710 = vpack.c.b16 %v9709, %v9708
        %9711 = vrot.lane.b32.xlu0 %v9710, 32
        %v9712 = vpop.permute.xlu0 %9711
        %v9715 = vunpack.c.l.b16 %v9669
        %v9716 = vunpack.c.l.b16 %v9670
        %v9717 = vpack.c.b16 %v9716, %v9715
        %9718 = vrot.lane.b32.xlu0 %v9717, 64
        %v9719 = vpop.permute.xlu0 %9718
        %v9722 = vunpack.c.l.b16 %v9677
        %v9723 = vunpack.c.l.b16 %v9678
        %v9724 = vpack.c.b16 %v9723, %v9722
        %9725 = vrot.lane.b32.xlu0 %v9724, 96
        %v9726 = vpop.permute.xlu0 %9725
        %v9729 = vunpack.c.l.b16 %v9679
        %v9730 = vunpack.c.l.b16 %v9680
        %v9731 = vpack.c.b16 %v9730, %v9729
        %v9734 = vunpack.c.l.b16 %v9687
        %v9735 = vunpack.c.l.b16 %v9688
        %v9736 = vpack.c.b16 %v9735, %v9734
        %9737 = vrot.lane.b32.xlu0 %v9736, 32
        %v9738 = vpop.permute.xlu0 %9737
        %v9741 = vunpack.c.l.b16 %v9691
        %v9742 = vunpack.c.l.b16 %v9692
        %v9743 = vpack.c.b16 %v9742, %v9741
        %9744 = vrot.lane.b32.xlu0 %v9743, 64
        %v9745 = vpop.permute.xlu0 %9744
        %v9748 = vunpack.c.l.b16 %v9695
        %v9749 = vunpack.c.l.b16 %v9696
        %v9750 = vpack.c.b16 %v9749, %v9748
        %9751 = vrot.lane.b32.xlu0 %v9750, 96
        %v9752 = vpop.permute.xlu0 %9751
        %v9755 = vunpack.c.l.b16 %v9699
        %v9756 = vunpack.c.l.b16 %v9700
        %v9757 = vpack.c.b16 %v9756, %v9755
        %v9760 = vsel %vm3023, %v9705, %v9712
        %v9762 = vsel %vm3072, %v9760, %v9719
        %v9764 = vsel %vm3105, %v9762, %v9726
        %v9768 = vsel %vm3023, %v9731, %v9738
        %v9770 = vsel %vm3072, %v9768, %v9745
        %v9772 = vsel %vm3105, %v9770, %v9752
        %v9774 = vperm.slane %v9646, 0
        %v9811 = vunpack.c.l.b16 %v9610
        %v9812 = vunpack.c.l.b16 %v9611
        %v9813 = vunpack.c.l.b16 %v9612
        %v9814 = vunpack.c.l.b16 %v9613
        %v9815 = vunpack.c.l.b16 %v9614
        %v9816 = vunpack.c.l.b16 %v9615
        %v9817 = vunpack.c.l.b16 %v9616
        %v9818 = vunpack.c.l.b16 %v9617
        %v9819 = vunpack.c.l.b16 %v9618
        %v9820 = vunpack.c.l.b16 %v9619
        %v9821 = vunpack.c.l.b16 %v9620
        %v9822 = vunpack.c.l.b16 %v9621
        %v9823 = vunpack.c.l.b16 %v9622
        %v9824 = vunpack.c.l.b16 %v9623
        %v9825 = vunpack.c.l.b16 %v9624
        %v9826 = vunpack.c.l.b16 %v9625
        %v9827 = vunpack.c.l.b16 %v9626
        %v9828 = vunpack.c.l.b16 %v9627
        %v9829 = vunpack.c.l.b16 %v9628
        %v9830 = vunpack.c.l.b16 %v9629
        %v9831 = vunpack.c.l.b16 %v9630
        %v9832 = vunpack.c.l.b16 %v9631
        %v9833 = vunpack.c.l.b16 %v9632
        %v9834 = vunpack.c.l.b16 %v9633
        %v9835 = vunpack.c.l.b16 %v9634
        %v9836 = vunpack.c.l.b16 %v9635
        %v9837 = vunpack.c.l.b16 %v9636
        %v9838 = vunpack.c.l.b16 %v9637
        %v9839 = vunpack.c.l.b16 %v9638
        %v9840 = vunpack.c.l.b16 %v9639
        %v9841 = vunpack.c.l.b16 %v9640
        %v9842 = vunpack.c.l.b16 %v9641
        %v9843 = vunpack.c.l.b16 %v9642
        %v9844 = vunpack.c.l.b16 %v9643
        %v9845 = vunpack.c.l.b16 %v9644
        %v9846 = vunpack.c.l.b16 %v9645
        %v9847 = vpack.c.b16 %v9812, %v9811
        %v9848 = vpack.c.b16 %v9814, %v9813
        %v9849 = vpack.c.b16 %v9816, %v9815
        %v9850 = vpack.c.b16 %v9818, %v9817
        %v9851 = vpack.c.b16 %v9820, %v9819
        %v9852 = vpack.c.b16 %v9822, %v9821
        %v9853 = vpack.c.b16 %v9824, %v9823
        %v9854 = vpack.c.b16 %v9826, %v9825
        %v9855 = vpack.c.b16 %v9828, %v9827
        %v9856 = vpack.c.b16 %v9830, %v9829
        %v9857 = vpack.c.b16 %v9832, %v9831
        %v9858 = vpack.c.b16 %v9834, %v9833
        %v9859 = vpack.c.b16 %v9836, %v9835
        %v9860 = vpack.c.b16 %v9838, %v9837
        %v9861 = vpack.c.b16 %v9840, %v9839
        %v9862 = vpack.c.b16 %v9842, %v9841
        %v9863 = vpack.c.b16 %v9844, %v9843
        %v9864 = vpack.c.b16 %v9846, %v9845
        %v9884 = vsel %vm3023, %v9757, 0
        %9886 = vmatpush.bf16.msra.mxu0 %v9854
        %9887 = vmatpush.bf16.msra.mxu0 %v9853
        %9888 = vmatpush.bf16.msra.mxu0 %v9852
        %9889 = vmatpush.bf16.msra.mxu0 %v9851
        %9890 = vmatpush.bf16.msra.mxu0 %v9850
        %9891 = vmatpush.bf16.msra.mxu0 %v9849
        %9892 = vmatpush.bf16.msra.mxu0 %v9848
        %9893 = vmatpush.bf16.msra.mxu0 %v9847
        %9894 = vmatmul.bf16.gmra.mxu0 %v9764
        %v9895 = vpop.f32.mrf.mxu0
        %v9896 = vadd.f32 %v9774, %v9895
        %v9897 = vpop.f32.mrf.mxu0
        %v9898 = vadd.f32 %v9774, %v9897
        %9899 = vdwg.mxu0
        %9900 = vmatpush.bf16.msra.mxu0 %v9862
        %9901 = vmatpush.bf16.msra.mxu0 %v9861
        %9902 = vmatpush.bf16.msra.mxu0 %v9860
        %9903 = vmatpush.bf16.msra.mxu0 %v9859
        %9904 = vmatpush.bf16.msra.mxu0 %v9858
        %9905 = vmatpush.bf16.msra.mxu0 %v9857
        %9906 = vmatpush.bf16.msra.mxu0 %v9856
        %9907 = vmatpush.bf16.msra.mxu0 %v9855
        %9908 = vmatmul.bf16.gmra.mxu0 %v9772
        %v9909 = vpop.f32.mrf.mxu0
        %v9910 = vadd.f32 %v9896, %v9909
        %v9911 = vpop.f32.mrf.mxu0
        %v9912 = vadd.f32 %v9898, %v9911
        %9913 = vdwg.mxu0
        %9914 = vmatpush.bf16.msra.mxu0 0
        %9915 = vmatpush.bf16.msra.mxu0 0
        %9916 = vmatpush.bf16.msra.mxu0 0
        %9917 = vmatpush.bf16.msra.mxu0 0
        %9918 = vmatpush.bf16.msra.mxu0 0
        %9919 = vmatpush.bf16.msra.mxu0 0
        %9920 = vmatpush.bf16.msra.mxu0 %v9864
        %9921 = vmatpush.bf16.msra.mxu0 %v9863
        %9922 = vmatmul.bf16.gmra.mxu0 %v9884
        %v9923 = vpop.f32.mrf.mxu0
        %v9924 = vadd.f32 %v9910, %v9923
        %v9925 = vpop.f32.mrf.mxu0
        %v9926 = vadd.f32 %v9912, %v9925
        %9927 = vdwg.mxu0
        %v9928 = vmax.f32 %v9924, 0.0
        %v9929 = vmax.f32 %v9926, 0.0
        %s9930 = scalar_lea.vmem %s2, 32
        %v9931 = vld [vmem:[%s9930] sm:$0xf]
        %v9932 = vld [vmem:[%s9930 + $0x4] sm:$0xf]
        %v9933 = vld [vmem:[%s9930 + $0x8] sm:$0xf]
        %v9934 = vld [vmem:[%s9930 + $0xc] sm:$0xf]
        %v9935 = vld [vmem:[%s3 + $0xc] sm:$0x1]
        %v9936 = vpack.c.bf16 %v9928, %v9928
        %v9937 = vpack.c.bf16 %v9929, %v9929
        %v9938 = vperm.slane %v9935, 0
        %v9941 = vunpack.c.l.b16 %v9936
        %v9942 = vunpack.c.l.b16 %v9937
        %v9943 = vpack.c.b16 %v9942, %v9941
        %v9948 = vunpack.c.l.b16 %v9931
        %v9949 = vunpack.c.l.b16 %v9932
        %v9950 = vunpack.c.l.b16 %v9933
        %v9951 = vunpack.c.l.b16 %v9934
        %v9952 = vpack.c.b16 %v9949, %v9948
        %v9953 = vpack.c.b16 %v9951, %v9950
        %v9957 = vsel %vm3023, %v9943, 0
        %9959 = vmatpush.bf16.msra.mxu0 0
        %9960 = vmatpush.bf16.msra.mxu0 0
        %9961 = vmatpush.bf16.msra.mxu0 0
        %9962 = vmatpush.bf16.msra.mxu0 0
        %9963 = vmatpush.bf16.msra.mxu0 0
        %9964 = vmatpush.bf16.msra.mxu0 0
        %9965 = vmatpush.bf16.msra.mxu0 %v9953
        %9966 = vmatpush.bf16.msra.mxu0 %v9952
        %9967 = vmatmul.bf16.gmra.mxu0 %v9957
        %v9968 = vpop.f32.mrf.mxu0
        %v9969 = vadd.f32 %v9938, %v9968
        %v9970 = vpop.f32.mrf.mxu0
        %v9971 = vadd.f32 %v9938, %v9970
        %9972 = vdwg.mxu0
        %s9973 = scalar_lea.vmem %s1, 1152
        %v9974 = vld [vmem:[%s9973] sm:$0xf]
        %v9975 = vld [vmem:[%s9973 + $0x4] sm:$0xf]
        %v9976 = vld [vmem:[%s9973 + $0x8] sm:$0xf]
        %v9977 = vld [vmem:[%s9973 + $0xc] sm:$0xf]
        %v9978 = vld [vmem:[%s9973 + $0x10] sm:$0xf]
        %v9979 = vld [vmem:[%s9973 + $0x14] sm:$0xf]
        %v9980 = vld [vmem:[%s9973 + $0x18] sm:$0xf]
        %v9981 = vld [vmem:[%s9973 + $0x1c] sm:$0xf]
        %v9982 = vld [vmem:[%s9973 + $0x20] sm:$0xf]
        %v9983 = vld [vmem:[%s9973 + $0x24] sm:$0xf]
        %v9984 = vld [vmem:[%s9973 + $0x28] sm:$0xf]
        %v9985 = vld [vmem:[%s9973 + $0x2c] sm:$0xf]
        %v9986 = vld [vmem:[%s9973 + $0x30] sm:$0xf]
        %v9987 = vld [vmem:[%s9973 + $0x34] sm:$0xf]
        %v9988 = vld [vmem:[%s9973 + $0x38] sm:$0xf]
        %v9989 = vld [vmem:[%s9973 + $0x3c] sm:$0xf]
        %v9990 = vld [vmem:[%s9973 + $0x40] sm:$0xf]
        %v9991 = vld [vmem:[%s9973 + $0x44] sm:$0xf]
        %v9992 = vld [vmem:[%s9973 + $0x48] sm:$0xf]
        %v9993 = vld [vmem:[%s9973 + $0x4c] sm:$0xf]
        %v9994 = vld [vmem:[%s9973 + $0x50] sm:$0xf]
        %v9995 = vld [vmem:[%s9973 + $0x54] sm:$0xf]
        %v9996 = vld [vmem:[%s9973 + $0x58] sm:$0xf]
        %v9997 = vld [vmem:[%s9973 + $0x5c] sm:$0xf]
        %v9998 = vld [vmem:[%s9973 + $0x60] sm:$0xf]
        %v9999 = vld [vmem:[%s9973 + $0x64] sm:$0xf]
        %v10000 = vld [vmem:[%s9973 + $0x68] sm:$0xf]
        %v10001 = vld [vmem:[%s9973 + $0x6c] sm:$0xf]
        %v10002 = vld [vmem:[%s9973 + $0x70] sm:$0xf]
        %v10003 = vld [vmem:[%s9973 + $0x74] sm:$0xf]
        %v10004 = vld [vmem:[%s9973 + $0x78] sm:$0xf]
        %v10005 = vld [vmem:[%s9973 + $0x7c] sm:$0xf]
        %v10006 = vld [vmem:[%s9973 + $0x80] sm:$0xf]
        %v10007 = vld [vmem:[%s9973 + $0x84] sm:$0xf]
        %v10008 = vld [vmem:[%s9973 + $0x88] sm:$0xf]
        %v10009 = vld [vmem:[%s9973 + $0x8c] sm:$0xf]
        %v10010 = vld [vmem:[%s3 + $0xa] sm:$0x1]
        %v10011 = vrot.slane %v9928, 3
        %v10012 = vrot.slane %v9929, 3
        %v10013 = vsel %vm8944, %v10011, %v10012
        %v10014 = vsel %vm8944, %v10012, %v10011
        %v10015 = vmul.f32 %v10014, %v8950
        %v10016 = vmul.f32 %v10013, %v8955
        %v10017 = vpack.c.bf16 %v10015, %v10015
        %v10018 = vpack.c.bf16 %v10016, %v10016
        %v10019 = vrot.slane %v9928, 4
        %v10020 = vrot.slane %v9929, 4
        %v10021 = vsel %vm8963, %v10019, %v10020
        %v10022 = vsel %vm8963, %v10020, %v10019
        %v10023 = vmul.f32 %v10022, %v8968
        %v10024 = vmul.f32 %v10021, %v8972
        %v10025 = vpack.c.bf16 %v10023, %v10023
        %v10026 = vpack.c.bf16 %v10024, %v10024
        %v10027 = vrot.slane %v9928, 5
        %v10028 = vrot.slane %v9929, 5
        %v10029 = vsel %vm8980, %v10027, %v10028
        %v10030 = vsel %vm8980, %v10028, %v10027
        %v10031 = vmul.f32 %v10030, %v8985
        %v10032 = vmul.f32 %v10029, %v8989
        %v10033 = vpack.c.bf16 %v10031, %v10031
        %v10034 = vpack.c.bf16 %v10032, %v10032
        %v10035 = vrot.slane %v9928, 7
        %v10036 = vrot.slane %v9929, 7
        %v10037 = vsel %vm413, %v10035, %v10036
        %v10038 = vsel %vm413, %v10036, %v10035
        %v10039 = vmul.f32 %v10038, %v9001
        %v10040 = vmul.f32 %v10037, %v9005
        %v10041 = vpack.c.bf16 %v10039, %v10039
        %v10042 = vpack.c.bf16 %v10040, %v10040
        %v10043 = vrot.slane %v9928, 1
        %v10044 = vrot.slane %v9929, 1
        %v10045 = vsel %vm894, %v10043, %v10044
        %v10046 = vsel %vm894, %v10044, %v10043
        %v10047 = vmul.f32 %v10045, %v9017
        %v10048 = vmul.f32 %v10046, %v9021
        %v10049 = vpack.c.bf16 %v10047, %v10047
        %v10050 = vpack.c.bf16 %v10048, %v10048
        %v10051 = vmul.f32 %v10013, %v9029
        %v10052 = vmul.f32 %v10014, %v9033
        %v10053 = vpack.c.bf16 %v10051, %v10051
        %v10054 = vpack.c.bf16 %v10052, %v10052
        %v10055 = vmul.f32 %v10021, %v9041
        %v10056 = vmul.f32 %v10022, %v9045
        %v10057 = vpack.c.bf16 %v10055, %v10055
        %v10058 = vpack.c.bf16 %v10056, %v10056
        %v10059 = vmul.f32 %v10029, %v9053
        %v10060 = vmul.f32 %v10030, %v9057
        %v10061 = vpack.c.bf16 %v10059, %v10059
        %v10062 = vpack.c.bf16 %v10060, %v10060
        %v10065 = vunpack.c.l.b16 %v10017
        %v10066 = vunpack.c.l.b16 %v10018
        %v10067 = vpack.c.b16 %v10066, %v10065
        %v10070 = vunpack.c.l.b16 %v10025
        %v10071 = vunpack.c.l.b16 %v10026
        %v10072 = vpack.c.b16 %v10071, %v10070
        %10073 = vrot.lane.b32.xlu0 %v10072, 32
        %v10074 = vpop.permute.xlu0 %10073
        %v10077 = vunpack.c.l.b16 %v10033
        %v10078 = vunpack.c.l.b16 %v10034
        %v10079 = vpack.c.b16 %v10078, %v10077
        %10080 = vrot.lane.b32.xlu0 %v10079, 64
        %v10081 = vpop.permute.xlu0 %10080
        %v10084 = vunpack.c.l.b16 %v10041
        %v10085 = vunpack.c.l.b16 %v10042
        %v10086 = vpack.c.b16 %v10085, %v10084
        %10087 = vrot.lane.b32.xlu0 %v10086, 96
        %v10088 = vpop.permute.xlu0 %10087
        %v10091 = vunpack.c.l.b16 %v10049
        %v10092 = vunpack.c.l.b16 %v10050
        %v10093 = vpack.c.b16 %v10092, %v10091
        %10094 = vrot.lane.b32.xlu0 %v10093, 32
        %v10095 = vpop.permute.xlu0 %10094
        %v10098 = vunpack.c.l.b16 %v10053
        %v10099 = vunpack.c.l.b16 %v10054
        %v10100 = vpack.c.b16 %v10099, %v10098
        %10101 = vrot.lane.b32.xlu0 %v10100, 64
        %v10102 = vpop.permute.xlu0 %10101
        %v10105 = vunpack.c.l.b16 %v10057
        %v10106 = vunpack.c.l.b16 %v10058
        %v10107 = vpack.c.b16 %v10106, %v10105
        %10108 = vrot.lane.b32.xlu0 %v10107, 96
        %v10109 = vpop.permute.xlu0 %10108
        %v10112 = vunpack.c.l.b16 %v10061
        %v10113 = vunpack.c.l.b16 %v10062
        %v10114 = vpack.c.b16 %v10113, %v10112
        %v10117 = vsel %vm3023, %v10067, %v10074
        %v10119 = vsel %vm3072, %v10117, %v10081
        %v10121 = vsel %vm3105, %v10119, %v10088
        %v10124 = vsel %vm3023, %v9943, %v10095
        %v10126 = vsel %vm3072, %v10124, %v10102
        %v10128 = vsel %vm3105, %v10126, %v10109
        %v10130 = vperm.slane %v10010, 0
        %v10167 = vunpack.c.l.b16 %v9974
        %v10168 = vunpack.c.l.b16 %v9975
        %v10169 = vunpack.c.l.b16 %v9976
        %v10170 = vunpack.c.l.b16 %v9977
        %v10171 = vunpack.c.l.b16 %v9978
        %v10172 = vunpack.c.l.b16 %v9979
        %v10173 = vunpack.c.l.b16 %v9980
        %v10174 = vunpack.c.l.b16 %v9981
        %v10175 = vunpack.c.l.b16 %v9982
        %v10176 = vunpack.c.l.b16 %v9983
        %v10177 = vunpack.c.l.b16 %v9984
        %v10178 = vunpack.c.l.b16 %v9985
        %v10179 = vunpack.c.l.b16 %v9986
        %v10180 = vunpack.c.l.b16 %v9987
        %v10181 = vunpack.c.l.b16 %v9988
        %v10182 = vunpack.c.l.b16 %v9989
        %v10183 = vunpack.c.l.b16 %v9990
        %v10184 = vunpack.c.l.b16 %v9991
        %v10185 = vunpack.c.l.b16 %v9992
        %v10186 = vunpack.c.l.b16 %v9993
        %v10187 = vunpack.c.l.b16 %v9994
        %v10188 = vunpack.c.l.b16 %v9995
        %v10189 = vunpack.c.l.b16 %v9996
        %v10190 = vunpack.c.l.b16 %v9997
        %v10191 = vunpack.c.l.b16 %v9998
        %v10192 = vunpack.c.l.b16 %v9999
        %v10193 = vunpack.c.l.b16 %v10000
        %v10194 = vunpack.c.l.b16 %v10001
        %v10195 = vunpack.c.l.b16 %v10002
        %v10196 = vunpack.c.l.b16 %v10003
        %v10197 = vunpack.c.l.b16 %v10004
        %v10198 = vunpack.c.l.b16 %v10005
        %v10199 = vunpack.c.l.b16 %v10006
        %v10200 = vunpack.c.l.b16 %v10007
        %v10201 = vunpack.c.l.b16 %v10008
        %v10202 = vunpack.c.l.b16 %v10009
        %v10203 = vpack.c.b16 %v10168, %v10167
        %v10204 = vpack.c.b16 %v10170, %v10169
        %v10205 = vpack.c.b16 %v10172, %v10171
        %v10206 = vpack.c.b16 %v10174, %v10173
        %v10207 = vpack.c.b16 %v10176, %v10175
        %v10208 = vpack.c.b16 %v10178, %v10177
        %v10209 = vpack.c.b16 %v10180, %v10179
        %v10210 = vpack.c.b16 %v10182, %v10181
        %v10211 = vpack.c.b16 %v10184, %v10183
        %v10212 = vpack.c.b16 %v10186, %v10185
        %v10213 = vpack.c.b16 %v10188, %v10187
        %v10214 = vpack.c.b16 %v10190, %v10189
        %v10215 = vpack.c.b16 %v10192, %v10191
        %v10216 = vpack.c.b16 %v10194, %v10193
        %v10217 = vpack.c.b16 %v10196, %v10195
        %v10218 = vpack.c.b16 %v10198, %v10197
        %v10219 = vpack.c.b16 %v10200, %v10199
        %v10220 = vpack.c.b16 %v10202, %v10201
        %v10240 = vsel %vm3023, %v10114, 0
        %10242 = vmatpush.bf16.msra.mxu0 %v10210
        %10243 = vmatpush.bf16.msra.mxu0 %v10209
        %10244 = vmatpush.bf16.msra.mxu0 %v10208
        %10245 = vmatpush.bf16.msra.mxu0 %v10207
        %10246 = vmatpush.bf16.msra.mxu0 %v10206
        %10247 = vmatpush.bf16.msra.mxu0 %v10205
        %10248 = vmatpush.bf16.msra.mxu0 %v10204
        %10249 = vmatpush.bf16.msra.mxu0 %v10203
        %10250 = vmatmul.bf16.gmra.mxu0 %v10121
        %v10251 = vpop.f32.mrf.mxu0
        %v10252 = vadd.f32 %v10130, %v10251
        %v10253 = vpop.f32.mrf.mxu0
        %v10254 = vadd.f32 %v10130, %v10253
        %10255 = vdwg.mxu0
        %10256 = vmatpush.bf16.msra.mxu0 %v10218
        %10257 = vmatpush.bf16.msra.mxu0 %v10217
        %10258 = vmatpush.bf16.msra.mxu0 %v10216
        %10259 = vmatpush.bf16.msra.mxu0 %v10215
        %10260 = vmatpush.bf16.msra.mxu0 %v10214
        %10261 = vmatpush.bf16.msra.mxu0 %v10213
        %10262 = vmatpush.bf16.msra.mxu0 %v10212
        %10263 = vmatpush.bf16.msra.mxu0 %v10211
        %10264 = vmatmul.bf16.gmra.mxu0 %v10128
        %v10265 = vpop.f32.mrf.mxu0
        %v10266 = vadd.f32 %v10252, %v10265
        %v10267 = vpop.f32.mrf.mxu0
        %v10268 = vadd.f32 %v10254, %v10267
        %10269 = vdwg.mxu0
        %10270 = vmatpush.bf16.msra.mxu0 0
        %10271 = vmatpush.bf16.msra.mxu0 0
        %10272 = vmatpush.bf16.msra.mxu0 0
        %10273 = vmatpush.bf16.msra.mxu0 0
        %10274 = vmatpush.bf16.msra.mxu0 0
        %10275 = vmatpush.bf16.msra.mxu0 0
        %10276 = vmatpush.bf16.msra.mxu0 %v10220
        %10277 = vmatpush.bf16.msra.mxu0 %v10219
        %10278 = vmatmul.bf16.gmra.mxu0 %v10240
        %v10279 = vpop.f32.mrf.mxu0
        %v10280 = vadd.f32 %v10266, %v10279
        %v10281 = vpop.f32.mrf.mxu0
        %v10282 = vadd.f32 %v10268, %v10281
        %10283 = vdwg.mxu0
        %v10284 = vmax.f32 %v10280, 0.0
        %v10285 = vmax.f32 %v10282, 0.0
        %s10286 = scalar_lea.vmem %s1, 1296
        %v10287 = vld [vmem:[%s10286] sm:$0xf]
        %v10288 = vld [vmem:[%s10286 + $0x4] sm:$0xf]
        %v10289 = vld [vmem:[%s10286 + $0x8] sm:$0xf]
        %v10290 = vld [vmem:[%s10286 + $0xc] sm:$0xf]
        %v10291 = vld [vmem:[%s10286 + $0x10] sm:$0xf]
        %v10292 = vld [vmem:[%s10286 + $0x14] sm:$0xf]
        %v10293 = vld [vmem:[%s10286 + $0x18] sm:$0xf]
        %v10294 = vld [vmem:[%s10286 + $0x1c] sm:$0xf]
        %v10295 = vld [vmem:[%s10286 + $0x20] sm:$0xf]
        %v10296 = vld [vmem:[%s10286 + $0x24] sm:$0xf]
        %v10297 = vld [vmem:[%s10286 + $0x28] sm:$0xf]
        %v10298 = vld [vmem:[%s10286 + $0x2c] sm:$0xf]
        %v10299 = vld [vmem:[%s10286 + $0x30] sm:$0xf]
        %v10300 = vld [vmem:[%s10286 + $0x34] sm:$0xf]
        %v10301 = vld [vmem:[%s10286 + $0x38] sm:$0xf]
        %v10302 = vld [vmem:[%s10286 + $0x3c] sm:$0xf]
        %v10303 = vld [vmem:[%s10286 + $0x40] sm:$0xf]
        %v10304 = vld [vmem:[%s10286 + $0x44] sm:$0xf]
        %v10305 = vld [vmem:[%s10286 + $0x48] sm:$0xf]
        %v10306 = vld [vmem:[%s10286 + $0x4c] sm:$0xf]
        %v10307 = vld [vmem:[%s10286 + $0x50] sm:$0xf]
        %v10308 = vld [vmem:[%s10286 + $0x54] sm:$0xf]
        %v10309 = vld [vmem:[%s10286 + $0x58] sm:$0xf]
        %v10310 = vld [vmem:[%s10286 + $0x5c] sm:$0xf]
        %v10311 = vld [vmem:[%s10286 + $0x60] sm:$0xf]
        %v10312 = vld [vmem:[%s10286 + $0x64] sm:$0xf]
        %v10313 = vld [vmem:[%s10286 + $0x68] sm:$0xf]
        %v10314 = vld [vmem:[%s10286 + $0x6c] sm:$0xf]
        %v10315 = vld [vmem:[%s10286 + $0x70] sm:$0xf]
        %v10316 = vld [vmem:[%s10286 + $0x74] sm:$0xf]
        %v10317 = vld [vmem:[%s10286 + $0x78] sm:$0xf]
        %v10318 = vld [vmem:[%s10286 + $0x7c] sm:$0xf]
        %v10319 = vld [vmem:[%s10286 + $0x80] sm:$0xf]
        %v10320 = vld [vmem:[%s10286 + $0x84] sm:$0xf]
        %v10321 = vld [vmem:[%s10286 + $0x88] sm:$0xf]
        %v10322 = vld [vmem:[%s10286 + $0x8c] sm:$0xf]
        %v10323 = vld [vmem:[%s3 + $0xb] sm:$0x1]
        %v10324 = vrot.slane %v10284, 3
        %v10325 = vrot.slane %v10285, 3
        %v10326 = vsel %vm8944, %v10324, %v10325
        %v10327 = vsel %vm8944, %v10325, %v10324
        %v10328 = vmul.f32 %v10327, %v8950
        %v10329 = vmul.f32 %v10326, %v8955
        %v10330 = vpack.c.bf16 %v10328, %v10328
        %v10331 = vpack.c.bf16 %v10329, %v10329
        %v10332 = vrot.slane %v10284, 4
        %v10333 = vrot.slane %v10285, 4
        %v10334 = vsel %vm8963, %v10332, %v10333
        %v10335 = vsel %vm8963, %v10333, %v10332
        %v10336 = vmul.f32 %v10335, %v8968
        %v10337 = vmul.f32 %v10334, %v8972
        %v10338 = vpack.c.bf16 %v10336, %v10336
        %v10339 = vpack.c.bf16 %v10337, %v10337
        %v10340 = vrot.slane %v10284, 5
        %v10341 = vrot.slane %v10285, 5
        %v10342 = vsel %vm8980, %v10340, %v10341
        %v10343 = vsel %vm8980, %v10341, %v10340
        %v10344 = vmul.f32 %v10343, %v8985
        %v10345 = vmul.f32 %v10342, %v8989
        %v10346 = vpack.c.bf16 %v10344, %v10344
        %v10347 = vpack.c.bf16 %v10345, %v10345
        %v10348 = vrot.slane %v10284, 7
        %v10349 = vrot.slane %v10285, 7
        %v10350 = vsel %vm413, %v10348, %v10349
        %v10351 = vsel %vm413, %v10349, %v10348
        %v10352 = vmul.f32 %v10351, %v9001
        %v10353 = vmul.f32 %v10350, %v9005
        %v10354 = vpack.c.bf16 %v10352, %v10352
        %v10355 = vpack.c.bf16 %v10353, %v10353
        %v10356 = vpack.c.bf16 %v10284, %v10284
        %v10357 = vpack.c.bf16 %v10285, %v10285
        %v10358 = vrot.slane %v10284, 1
        %v10359 = vrot.slane %v10285, 1
        %v10360 = vsel %vm894, %v10358, %v10359
        %v10361 = vsel %vm894, %v10359, %v10358
        %v10362 = vmul.f32 %v10360, %v9017
        %v10363 = vmul.f32 %v10361, %v9021
        %v10364 = vpack.c.bf16 %v10362, %v10362
        %v10365 = vpack.c.bf16 %v10363, %v10363
        %v10366 = vmul.f32 %v10326, %v9029
        %v10367 = vmul.f32 %v10327, %v9033
        %v10368 = vpack.c.bf16 %v10366, %v10366
        %v10369 = vpack.c.bf16 %v10367, %v10367
        %v10370 = vmul.f32 %v10334, %v9041
        %v10371 = vmul.f32 %v10335, %v9045
        %v10372 = vpack.c.bf16 %v10370, %v10370
        %v10373 = vpack.c.bf16 %v10371, %v10371
        %v10374 = vmul.f32 %v10342, %v9053
        %v10375 = vmul.f32 %v10343, %v9057
        %v10376 = vpack.c.bf16 %v10374, %v10374
        %v10377 = vpack.c.bf16 %v10375, %v10375
        %v10380 = vunpack.c.l.b16 %v10330
        %v10381 = vunpack.c.l.b16 %v10331
        %v10382 = vpack.c.b16 %v10381, %v10380
        %v10385 = vunpack.c.l.b16 %v10338
        %v10386 = vunpack.c.l.b16 %v10339
        %v10387 = vpack.c.b16 %v10386, %v10385
        %10388 = vrot.lane.b32.xlu0 %v10387, 32
        %v10389 = vpop.permute.xlu0 %10388
        %v10392 = vunpack.c.l.b16 %v10346
        %v10393 = vunpack.c.l.b16 %v10347
        %v10394 = vpack.c.b16 %v10393, %v10392
        %10395 = vrot.lane.b32.xlu0 %v10394, 64
        %v10396 = vpop.permute.xlu0 %10395
        %v10399 = vunpack.c.l.b16 %v10354
        %v10400 = vunpack.c.l.b16 %v10355
        %v10401 = vpack.c.b16 %v10400, %v10399
        %10402 = vrot.lane.b32.xlu0 %v10401, 96
        %v10403 = vpop.permute.xlu0 %10402
        %v10406 = vunpack.c.l.b16 %v10356
        %v10407 = vunpack.c.l.b16 %v10357
        %v10408 = vpack.c.b16 %v10407, %v10406
        %v10411 = vunpack.c.l.b16 %v10364
        %v10412 = vunpack.c.l.b16 %v10365
        %v10413 = vpack.c.b16 %v10412, %v10411
        %10414 = vrot.lane.b32.xlu0 %v10413, 32
        %v10415 = vpop.permute.xlu0 %10414
        %v10418 = vunpack.c.l.b16 %v10368
        %v10419 = vunpack.c.l.b16 %v10369
        %v10420 = vpack.c.b16 %v10419, %v10418
        %10421 = vrot.lane.b32.xlu0 %v10420, 64
        %v10422 = vpop.permute.xlu0 %10421
        %v10425 = vunpack.c.l.b16 %v10372
        %v10426 = vunpack.c.l.b16 %v10373
        %v10427 = vpack.c.b16 %v10426, %v10425
        %10428 = vrot.lane.b32.xlu0 %v10427, 96
        %v10429 = vpop.permute.xlu0 %10428
        %v10432 = vunpack.c.l.b16 %v10376
        %v10433 = vunpack.c.l.b16 %v10377
        %v10434 = vpack.c.b16 %v10433, %v10432
        %v10437 = vsel %vm3023, %v10382, %v10389
        %v10439 = vsel %vm3072, %v10437, %v10396
        %v10441 = vsel %vm3105, %v10439, %v10403
        %v10445 = vsel %vm3023, %v10408, %v10415
        %v10447 = vsel %vm3072, %v10445, %v10422
        %v10449 = vsel %vm3105, %v10447, %v10429
        %v10451 = vperm.slane %v10323, 0
        %v10488 = vunpack.c.l.b16 %v10287
        %v10489 = vunpack.c.l.b16 %v10288
        %v10490 = vunpack.c.l.b16 %v10289
        %v10491 = vunpack.c.l.b16 %v10290
        %v10492 = vunpack.c.l.b16 %v10291
        %v10493 = vunpack.c.l.b16 %v10292
        %v10494 = vunpack.c.l.b16 %v10293
        %v10495 = vunpack.c.l.b16 %v10294
        %v10496 = vunpack.c.l.b16 %v10295
        %v10497 = vunpack.c.l.b16 %v10296
        %v10498 = vunpack.c.l.b16 %v10297
        %v10499 = vunpack.c.l.b16 %v10298
        %v10500 = vunpack.c.l.b16 %v10299
        %v10501 = vunpack.c.l.b16 %v10300
        %v10502 = vunpack.c.l.b16 %v10301
        %v10503 = vunpack.c.l.b16 %v10302
        %v10504 = vunpack.c.l.b16 %v10303
        %v10505 = vunpack.c.l.b16 %v10304
        %v10506 = vunpack.c.l.b16 %v10305
        %v10507 = vunpack.c.l.b16 %v10306
        %v10508 = vunpack.c.l.b16 %v10307
        %v10509 = vunpack.c.l.b16 %v10308
        %v10510 = vunpack.c.l.b16 %v10309
        %v10511 = vunpack.c.l.b16 %v10310
        %v10512 = vunpack.c.l.b16 %v10311
        %v10513 = vunpack.c.l.b16 %v10312
        %v10514 = vunpack.c.l.b16 %v10313
        %v10515 = vunpack.c.l.b16 %v10314
        %v10516 = vunpack.c.l.b16 %v10315
        %v10517 = vunpack.c.l.b16 %v10316
        %v10518 = vunpack.c.l.b16 %v10317
        %v10519 = vunpack.c.l.b16 %v10318
        %v10520 = vunpack.c.l.b16 %v10319
        %v10521 = vunpack.c.l.b16 %v10320
        %v10522 = vunpack.c.l.b16 %v10321
        %v10523 = vunpack.c.l.b16 %v10322
        %v10524 = vpack.c.b16 %v10489, %v10488
        %v10525 = vpack.c.b16 %v10491, %v10490
        %v10526 = vpack.c.b16 %v10493, %v10492
        %v10527 = vpack.c.b16 %v10495, %v10494
        %v10528 = vpack.c.b16 %v10497, %v10496
        %v10529 = vpack.c.b16 %v10499, %v10498
        %v10530 = vpack.c.b16 %v10501, %v10500
        %v10531 = vpack.c.b16 %v10503, %v10502
        %v10532 = vpack.c.b16 %v10505, %v10504
        %v10533 = vpack.c.b16 %v10507, %v10506
        %v10534 = vpack.c.b16 %v10509, %v10508
        %v10535 = vpack.c.b16 %v10511, %v10510
        %v10536 = vpack.c.b16 %v10513, %v10512
        %v10537 = vpack.c.b16 %v10515, %v10514
        %v10538 = vpack.c.b16 %v10517, %v10516
        %v10539 = vpack.c.b16 %v10519, %v10518
        %v10540 = vpack.c.b16 %v10521, %v10520
        %v10541 = vpack.c.b16 %v10523, %v10522
        %v10561 = vsel %vm3023, %v10434, 0
        %10563 = vmatpush.bf16.msra.mxu0 %v10531
        %10564 = vmatpush.bf16.msra.mxu0 %v10530
        %10565 = vmatpush.bf16.msra.mxu0 %v10529
        %10566 = vmatpush.bf16.msra.mxu0 %v10528
        %10567 = vmatpush.bf16.msra.mxu0 %v10527
        %10568 = vmatpush.bf16.msra.mxu0 %v10526
        %10569 = vmatpush.bf16.msra.mxu0 %v10525
        %10570 = vmatpush.bf16.msra.mxu0 %v10524
        %10571 = vmatmul.bf16.gmra.mxu0 %v10441
        %v10572 = vpop.f32.mrf.mxu0
        %v10573 = vadd.f32 %v10451, %v10572
        %v10574 = vpop.f32.mrf.mxu0
        %v10575 = vadd.f32 %v10451, %v10574
        %10576 = vdwg.mxu0
        %10577 = vmatpush.bf16.msra.mxu0 %v10539
        %10578 = vmatpush.bf16.msra.mxu0 %v10538
        %10579 = vmatpush.bf16.msra.mxu0 %v10537
        %10580 = vmatpush.bf16.msra.mxu0 %v10536
        %10581 = vmatpush.bf16.msra.mxu0 %v10535
        %10582 = vmatpush.bf16.msra.mxu0 %v10534
        %10583 = vmatpush.bf16.msra.mxu0 %v10533
        %10584 = vmatpush.bf16.msra.mxu0 %v10532
        %10585 = vmatmul.bf16.gmra.mxu0 %v10449
        %v10586 = vpop.f32.mrf.mxu0
        %v10587 = vadd.f32 %v10573, %v10586
        %v10588 = vpop.f32.mrf.mxu0
        %v10589 = vadd.f32 %v10575, %v10588
        %10590 = vdwg.mxu0
        %10591 = vmatpush.bf16.msra.mxu0 0
        %10592 = vmatpush.bf16.msra.mxu0 0
        %10593 = vmatpush.bf16.msra.mxu0 0
        %10594 = vmatpush.bf16.msra.mxu0 0
        %10595 = vmatpush.bf16.msra.mxu0 0
        %10596 = vmatpush.bf16.msra.mxu0 0
        %10597 = vmatpush.bf16.msra.mxu0 %v10541
        %10598 = vmatpush.bf16.msra.mxu0 %v10540
        %10599 = vmatmul.bf16.gmra.mxu0 %v10561
        %v10600 = vpop.f32.mrf.mxu0
        %v10601 = vadd.f32 %v10587, %v10600
        %v10602 = vpop.f32.mrf.mxu0
        %v10603 = vadd.f32 %v10589, %v10602
        %10604 = vdwg.mxu0
        %v10605 = vadd.f32 %v10601, %v9969
        %v10606 = vadd.f32 %v10603, %v9971
        %v10607 = vmax.f32 %v10605, 0.0
        %v10608 = vmax.f32 %v10606, 0.0
        %s10609 = scalar_lea.vmem %s1, 1440
        %v10610 = vld [vmem:[%s10609] sm:$0xf]
        %v10611 = vld [vmem:[%s10609 + $0x4] sm:$0xf]
        %v10612 = vld [vmem:[%s10609 + $0x8] sm:$0xf]
        %v10613 = vld [vmem:[%s10609 + $0xc] sm:$0xf]
        %v10614 = vld [vmem:[%s10609 + $0x10] sm:$0xf]
        %v10615 = vld [vmem:[%s10609 + $0x14] sm:$0xf]
        %v10616 = vld [vmem:[%s10609 + $0x18] sm:$0xf]
        %v10617 = vld [vmem:[%s10609 + $0x1c] sm:$0xf]
        %v10618 = vld [vmem:[%s10609 + $0x20] sm:$0xf]
        %v10619 = vld [vmem:[%s10609 + $0x24] sm:$0xf]
        %v10620 = vld [vmem:[%s10609 + $0x28] sm:$0xf]
        %v10621 = vld [vmem:[%s10609 + $0x2c] sm:$0xf]
        %v10622 = vld [vmem:[%s10609 + $0x30] sm:$0xf]
        %v10623 = vld [vmem:[%s10609 + $0x34] sm:$0xf]
        %v10624 = vld [vmem:[%s10609 + $0x38] sm:$0xf]
        %v10625 = vld [vmem:[%s10609 + $0x3c] sm:$0xf]
        %v10626 = vld [vmem:[%s10609 + $0x40] sm:$0xf]
        %v10627 = vld [vmem:[%s10609 + $0x44] sm:$0xf]
        %v10628 = vld [vmem:[%s10609 + $0x48] sm:$0xf]
        %v10629 = vld [vmem:[%s10609 + $0x4c] sm:$0xf]
        %v10630 = vld [vmem:[%s10609 + $0x50] sm:$0xf]
        %v10631 = vld [vmem:[%s10609 + $0x54] sm:$0xf]
        %v10632 = vld [vmem:[%s10609 + $0x58] sm:$0xf]
        %v10633 = vld [vmem:[%s10609 + $0x5c] sm:$0xf]
        %v10634 = vld [vmem:[%s10609 + $0x60] sm:$0xf]
        %v10635 = vld [vmem:[%s10609 + $0x64] sm:$0xf]
        %v10636 = vld [vmem:[%s10609 + $0x68] sm:$0xf]
        %v10637 = vld [vmem:[%s10609 + $0x6c] sm:$0xf]
        %v10638 = vld [vmem:[%s10609 + $0x70] sm:$0xf]
        %v10639 = vld [vmem:[%s10609 + $0x74] sm:$0xf]
        %v10640 = vld [vmem:[%s10609 + $0x78] sm:$0xf]
        %v10641 = vld [vmem:[%s10609 + $0x7c] sm:$0xf]
        %v10642 = vld [vmem:[%s10609 + $0x80] sm:$0xf]
        %v10643 = vld [vmem:[%s10609 + $0x84] sm:$0xf]
        %v10644 = vld [vmem:[%s10609 + $0x88] sm:$0xf]
        %v10645 = vld [vmem:[%s10609 + $0x8c] sm:$0xf]
        %v10646 = vld [vmem:[%s3 + $0xd] sm:$0x1]
        %v10647 = vrot.slane %v10607, 3
        %v10648 = vrot.slane %v10608, 3
        %v10649 = vsel %vm8944, %v10647, %v10648
        %v10650 = vsel %vm8944, %v10648, %v10647
        %v10651 = vmul.f32 %v10650, %v8950
        %v10652 = vmul.f32 %v10649, %v8955
        %v10653 = vpack.c.bf16 %v10651, %v10651
        %v10654 = vpack.c.bf16 %v10652, %v10652
        %v10655 = vrot.slane %v10607, 4
        %v10656 = vrot.slane %v10608, 4
        %v10657 = vsel %vm8963, %v10655, %v10656
        %v10658 = vsel %vm8963, %v10656, %v10655
        %v10659 = vmul.f32 %v10658, %v8968
        %v10660 = vmul.f32 %v10657, %v8972
        %v10661 = vpack.c.bf16 %v10659, %v10659
        %v10662 = vpack.c.bf16 %v10660, %v10660
        %v10663 = vrot.slane %v10607, 5
        %v10664 = vrot.slane %v10608, 5
        %v10665 = vsel %vm8980, %v10663, %v10664
        %v10666 = vsel %vm8980, %v10664, %v10663
        %v10667 = vmul.f32 %v10666, %v8985
        %v10668 = vmul.f32 %v10665, %v8989
        %v10669 = vpack.c.bf16 %v10667, %v10667
        %v10670 = vpack.c.bf16 %v10668, %v10668
        %v10671 = vrot.slane %v10607, 7
        %v10672 = vrot.slane %v10608, 7
        %v10673 = vsel %vm413, %v10671, %v10672
        %v10674 = vsel %vm413, %v10672, %v10671
        %v10675 = vmul.f32 %v10674, %v9001
        %v10676 = vmul.f32 %v10673, %v9005
        %v10677 = vpack.c.bf16 %v10675, %v10675
        %v10678 = vpack.c.bf16 %v10676, %v10676
        %v10679 = vpack.c.bf16 %v10607, %v10607
        %v10680 = vpack.c.bf16 %v10608, %v10608
        %v10681 = vrot.slane %v10607, 1
        %v10682 = vrot.slane %v10608, 1
        %v10683 = vsel %vm894, %v10681, %v10682
        %v10684 = vsel %vm894, %v10682, %v10681
        %v10685 = vmul.f32 %v10683, %v9017
        %v10686 = vmul.f32 %v10684, %v9021
        %v10687 = vpack.c.bf16 %v10685, %v10685
        %v10688 = vpack.c.bf16 %v10686, %v10686
        %v10689 = vmul.f32 %v10649, %v9029
        %v10690 = vmul.f32 %v10650, %v9033
        %v10691 = vpack.c.bf16 %v10689, %v10689
        %v10692 = vpack.c.bf16 %v10690, %v10690
        %v10693 = vmul.f32 %v10657, %v9041
        %v10694 = vmul.f32 %v10658, %v9045
        %v10695 = vpack.c.bf16 %v10693, %v10693
        %v10696 = vpack.c.bf16 %v10694, %v10694
        %v10697 = vmul.f32 %v10665, %v9053
        %v10698 = vmul.f32 %v10666, %v9057
        %v10699 = vpack.c.bf16 %v10697, %v10697
        %v10700 = vpack.c.bf16 %v10698, %v10698
        %v10703 = vunpack.c.l.b16 %v10653
        %v10704 = vunpack.c.l.b16 %v10654
        %v10705 = vpack.c.b16 %v10704, %v10703
        %v10708 = vunpack.c.l.b16 %v10661
        %v10709 = vunpack.c.l.b16 %v10662
        %v10710 = vpack.c.b16 %v10709, %v10708
        %10711 = vrot.lane.b32.xlu0 %v10710, 32
        %v10712 = vpop.permute.xlu0 %10711
        %v10715 = vunpack.c.l.b16 %v10669
        %v10716 = vunpack.c.l.b16 %v10670
        %v10717 = vpack.c.b16 %v10716, %v10715
        %10718 = vrot.lane.b32.xlu0 %v10717, 64
        %v10719 = vpop.permute.xlu0 %10718
        %v10722 = vunpack.c.l.b16 %v10677
        %v10723 = vunpack.c.l.b16 %v10678
        %v10724 = vpack.c.b16 %v10723, %v10722
        %10725 = vrot.lane.b32.xlu0 %v10724, 96
        %v10726 = vpop.permute.xlu0 %10725
        %v10729 = vunpack.c.l.b16 %v10679
        %v10730 = vunpack.c.l.b16 %v10680
        %v10731 = vpack.c.b16 %v10730, %v10729
        %v10734 = vunpack.c.l.b16 %v10687
        %v10735 = vunpack.c.l.b16 %v10688
        %v10736 = vpack.c.b16 %v10735, %v10734
        %10737 = vrot.lane.b32.xlu0 %v10736, 32
        %v10738 = vpop.permute.xlu0 %10737
        %v10741 = vunpack.c.l.b16 %v10691
        %v10742 = vunpack.c.l.b16 %v10692
        %v10743 = vpack.c.b16 %v10742, %v10741
        %10744 = vrot.lane.b32.xlu0 %v10743, 64
        %v10745 = vpop.permute.xlu0 %10744
        %v10748 = vunpack.c.l.b16 %v10695
        %v10749 = vunpack.c.l.b16 %v10696
        %v10750 = vpack.c.b16 %v10749, %v10748
        %10751 = vrot.lane.b32.xlu0 %v10750, 96
        %v10752 = vpop.permute.xlu0 %10751
        %v10755 = vunpack.c.l.b16 %v10699
        %v10756 = vunpack.c.l.b16 %v10700
        %v10757 = vpack.c.b16 %v10756, %v10755
        %v10760 = vsel %vm3023, %v10705, %v10712
        %v10762 = vsel %vm3072, %v10760, %v10719
        %v10764 = vsel %vm3105, %v10762, %v10726
        %v10768 = vsel %vm3023, %v10731, %v10738
        %v10770 = vsel %vm3072, %v10768, %v10745
        %v10772 = vsel %vm3105, %v10770, %v10752
        %v10774 = vperm.slane %v10646, 0
        %v10811 = vunpack.c.l.b16 %v10610
        %v10812 = vunpack.c.l.b16 %v10611
        %v10813 = vunpack.c.l.b16 %v10612
        %v10814 = vunpack.c.l.b16 %v10613
        %v10815 = vunpack.c.l.b16 %v10614
        %v10816 = vunpack.c.l.b16 %v10615
        %v10817 = vunpack.c.l.b16 %v10616
        %v10818 = vunpack.c.l.b16 %v10617
        %v10819 = vunpack.c.l.b16 %v10618
        %v10820 = vunpack.c.l.b16 %v10619
        %v10821 = vunpack.c.l.b16 %v10620
        %v10822 = vunpack.c.l.b16 %v10621
        %v10823 = vunpack.c.l.b16 %v10622
        %v10824 = vunpack.c.l.b16 %v10623
        %v10825 = vunpack.c.l.b16 %v10624
        %v10826 = vunpack.c.l.b16 %v10625
        %v10827 = vunpack.c.l.b16 %v10626
        %v10828 = vunpack.c.l.b16 %v10627
        %v10829 = vunpack.c.l.b16 %v10628
        %v10830 = vunpack.c.l.b16 %v10629
        %v10831 = vunpack.c.l.b16 %v10630
        %v10832 = vunpack.c.l.b16 %v10631
        %v10833 = vunpack.c.l.b16 %v10632
        %v10834 = vunpack.c.l.b16 %v10633
        %v10835 = vunpack.c.l.b16 %v10634
        %v10836 = vunpack.c.l.b16 %v10635
        %v10837 = vunpack.c.l.b16 %v10636
        %v10838 = vunpack.c.l.b16 %v10637
        %v10839 = vunpack.c.l.b16 %v10638
        %v10840 = vunpack.c.l.b16 %v10639
        %v10841 = vunpack.c.l.b16 %v10640
        %v10842 = vunpack.c.l.b16 %v10641
        %v10843 = vunpack.c.l.b16 %v10642
        %v10844 = vunpack.c.l.b16 %v10643
        %v10845 = vunpack.c.l.b16 %v10644
        %v10846 = vunpack.c.l.b16 %v10645
        %v10847 = vpack.c.b16 %v10812, %v10811
        %v10848 = vpack.c.b16 %v10814, %v10813
        %v10849 = vpack.c.b16 %v10816, %v10815
        %v10850 = vpack.c.b16 %v10818, %v10817
        %v10851 = vpack.c.b16 %v10820, %v10819
        %v10852 = vpack.c.b16 %v10822, %v10821
        %v10853 = vpack.c.b16 %v10824, %v10823
        %v10854 = vpack.c.b16 %v10826, %v10825
        %v10855 = vpack.c.b16 %v10828, %v10827
        %v10856 = vpack.c.b16 %v10830, %v10829
        %v10857 = vpack.c.b16 %v10832, %v10831
        %v10858 = vpack.c.b16 %v10834, %v10833
        %v10859 = vpack.c.b16 %v10836, %v10835
        %v10860 = vpack.c.b16 %v10838, %v10837
        %v10861 = vpack.c.b16 %v10840, %v10839
        %v10862 = vpack.c.b16 %v10842, %v10841
        %v10863 = vpack.c.b16 %v10844, %v10843
        %v10864 = vpack.c.b16 %v10846, %v10845
        %v10884 = vsel %vm3023, %v10757, 0
        %10886 = vmatpush.bf16.msra.mxu0 %v10854
        %10887 = vmatpush.bf16.msra.mxu0 %v10853
        %10888 = vmatpush.bf16.msra.mxu0 %v10852
        %10889 = vmatpush.bf16.msra.mxu0 %v10851
        %10890 = vmatpush.bf16.msra.mxu0 %v10850
        %10891 = vmatpush.bf16.msra.mxu0 %v10849
        %10892 = vmatpush.bf16.msra.mxu0 %v10848
        %10893 = vmatpush.bf16.msra.mxu0 %v10847
        %10894 = vmatmul.bf16.gmra.mxu0 %v10764
        %v10895 = vpop.f32.mrf.mxu0
        %v10896 = vadd.f32 %v10774, %v10895
        %v10897 = vpop.f32.mrf.mxu0
        %v10898 = vadd.f32 %v10774, %v10897
        %10899 = vdwg.mxu0
        %10900 = vmatpush.bf16.msra.mxu0 %v10862
        %10901 = vmatpush.bf16.msra.mxu0 %v10861
        %10902 = vmatpush.bf16.msra.mxu0 %v10860
        %10903 = vmatpush.bf16.msra.mxu0 %v10859
        %10904 = vmatpush.bf16.msra.mxu0 %v10858
        %10905 = vmatpush.bf16.msra.mxu0 %v10857
        %10906 = vmatpush.bf16.msra.mxu0 %v10856
        %10907 = vmatpush.bf16.msra.mxu0 %v10855
        %10908 = vmatmul.bf16.gmra.mxu0 %v10772
        %v10909 = vpop.f32.mrf.mxu0
        %v10910 = vadd.f32 %v10896, %v10909
        %v10911 = vpop.f32.mrf.mxu0
        %v10912 = vadd.f32 %v10898, %v10911
        %10913 = vdwg.mxu0
        %10914 = vmatpush.bf16.msra.mxu0 0
        %10915 = vmatpush.bf16.msra.mxu0 0
        %10916 = vmatpush.bf16.msra.mxu0 0
        %10917 = vmatpush.bf16.msra.mxu0 0
        %10918 = vmatpush.bf16.msra.mxu0 0
        %10919 = vmatpush.bf16.msra.mxu0 0
        %10920 = vmatpush.bf16.msra.mxu0 %v10864
        %10921 = vmatpush.bf16.msra.mxu0 %v10863
        %10922 = vmatmul.bf16.gmra.mxu0 %v10884
        %v10923 = vpop.f32.mrf.mxu0
        %v10924 = vadd.f32 %v10910, %v10923
        %v10925 = vpop.f32.mrf.mxu0
        %v10926 = vadd.f32 %v10912, %v10925
        %10927 = vdwg.mxu0
        %v10928 = vmax.f32 %v10924, 0.0
        %v10929 = vmax.f32 %v10926, 0.0
        %s10930 = scalar_lea.vmem %s1, 1584
        %v10931 = vld [vmem:[%s10930] sm:$0xf]
        %v10932 = vld [vmem:[%s10930 + $0x4] sm:$0xf]
        %v10933 = vld [vmem:[%s10930 + $0x8] sm:$0xf]
        %v10934 = vld [vmem:[%s10930 + $0xc] sm:$0xf]
        %v10935 = vld [vmem:[%s10930 + $0x10] sm:$0xf]
        %v10936 = vld [vmem:[%s10930 + $0x14] sm:$0xf]
        %v10937 = vld [vmem:[%s10930 + $0x18] sm:$0xf]
        %v10938 = vld [vmem:[%s10930 + $0x1c] sm:$0xf]
        %v10939 = vld [vmem:[%s10930 + $0x20] sm:$0xf]
        %v10940 = vld [vmem:[%s10930 + $0x24] sm:$0xf]
        %v10941 = vld [vmem:[%s10930 + $0x28] sm:$0xf]
        %v10942 = vld [vmem:[%s10930 + $0x2c] sm:$0xf]
        %v10943 = vld [vmem:[%s10930 + $0x30] sm:$0xf]
        %v10944 = vld [vmem:[%s10930 + $0x34] sm:$0xf]
        %v10945 = vld [vmem:[%s10930 + $0x38] sm:$0xf]
        %v10946 = vld [vmem:[%s10930 + $0x3c] sm:$0xf]
        %v10947 = vld [vmem:[%s10930 + $0x40] sm:$0xf]
        %v10948 = vld [vmem:[%s10930 + $0x44] sm:$0xf]
        %v10949 = vld [vmem:[%s10930 + $0x48] sm:$0xf]
        %v10950 = vld [vmem:[%s10930 + $0x4c] sm:$0xf]
        %v10951 = vld [vmem:[%s10930 + $0x50] sm:$0xf]
        %v10952 = vld [vmem:[%s10930 + $0x54] sm:$0xf]
        %v10953 = vld [vmem:[%s10930 + $0x58] sm:$0xf]
        %v10954 = vld [vmem:[%s10930 + $0x5c] sm:$0xf]
        %v10955 = vld [vmem:[%s10930 + $0x60] sm:$0xf]
        %v10956 = vld [vmem:[%s10930 + $0x64] sm:$0xf]
        %v10957 = vld [vmem:[%s10930 + $0x68] sm:$0xf]
        %v10958 = vld [vmem:[%s10930 + $0x6c] sm:$0xf]
        %v10959 = vld [vmem:[%s10930 + $0x70] sm:$0xf]
        %v10960 = vld [vmem:[%s10930 + $0x74] sm:$0xf]
        %v10961 = vld [vmem:[%s10930 + $0x78] sm:$0xf]
        %v10962 = vld [vmem:[%s10930 + $0x7c] sm:$0xf]
        %v10963 = vld [vmem:[%s10930 + $0x80] sm:$0xf]
        %v10964 = vld [vmem:[%s10930 + $0x84] sm:$0xf]
        %v10965 = vld [vmem:[%s10930 + $0x88] sm:$0xf]
        %v10966 = vld [vmem:[%s10930 + $0x8c] sm:$0xf]
        %v10967 = vld [vmem:[%s3 + $0xe] sm:$0x1]
        %v10968 = vrot.slane %v10928, 3
        %v10969 = vrot.slane %v10929, 3
        %v10970 = vsel %vm8944, %v10968, %v10969
        %v10971 = vsel %vm8944, %v10969, %v10968
        %v10972 = vmul.f32 %v10971, %v8950
        %v10973 = vmul.f32 %v10970, %v8955
        %v10974 = vpack.c.bf16 %v10972, %v10972
        %v10975 = vpack.c.bf16 %v10973, %v10973
        %v10976 = vrot.slane %v10928, 4
        %v10977 = vrot.slane %v10929, 4
        %v10978 = vsel %vm8963, %v10976, %v10977
        %v10979 = vsel %vm8963, %v10977, %v10976
        %v10980 = vmul.f32 %v10979, %v8968
        %v10981 = vmul.f32 %v10978, %v8972
        %v10982 = vpack.c.bf16 %v10980, %v10980
        %v10983 = vpack.c.bf16 %v10981, %v10981
        %v10984 = vrot.slane %v10928, 5
        %v10985 = vrot.slane %v10929, 5
        %v10986 = vsel %vm8980, %v10984, %v10985
        %v10987 = vsel %vm8980, %v10985, %v10984
        %v10988 = vmul.f32 %v10987, %v8985
        %v10989 = vmul.f32 %v10986, %v8989
        %v10990 = vpack.c.bf16 %v10988, %v10988
        %v10991 = vpack.c.bf16 %v10989, %v10989
        %v10992 = vrot.slane %v10928, 7
        %v10993 = vrot.slane %v10929, 7
        %v10994 = vsel %vm413, %v10992, %v10993
        %v10995 = vsel %vm413, %v10993, %v10992
        %v10996 = vmul.f32 %v10995, %v9001
        %v10997 = vmul.f32 %v10994, %v9005
        %v10998 = vpack.c.bf16 %v10996, %v10996
        %v10999 = vpack.c.bf16 %v10997, %v10997
        %v11000 = vpack.c.bf16 %v10928, %v10928
        %v11001 = vpack.c.bf16 %v10929, %v10929
        %v11002 = vrot.slane %v10928, 1
        %v11003 = vrot.slane %v10929, 1
        %v11004 = vsel %vm894, %v11002, %v11003
        %v11005 = vsel %vm894, %v11003, %v11002
        %v11006 = vmul.f32 %v11004, %v9017
        %v11007 = vmul.f32 %v11005, %v9021
        %v11008 = vpack.c.bf16 %v11006, %v11006
        %v11009 = vpack.c.bf16 %v11007, %v11007
        %v11010 = vmul.f32 %v10970, %v9029
        %v11011 = vmul.f32 %v10971, %v9033
        %v11012 = vpack.c.bf16 %v11010, %v11010
        %v11013 = vpack.c.bf16 %v11011, %v11011
        %v11014 = vmul.f32 %v10978, %v9041
        %v11015 = vmul.f32 %v10979, %v9045
        %v11016 = vpack.c.bf16 %v11014, %v11014
        %v11017 = vpack.c.bf16 %v11015, %v11015
        %v11018 = vmul.f32 %v10986, %v9053
        %v11019 = vmul.f32 %v10987, %v9057
        %v11020 = vpack.c.bf16 %v11018, %v11018
        %v11021 = vpack.c.bf16 %v11019, %v11019
        %v11024 = vunpack.c.l.b16 %v10974
        %v11025 = vunpack.c.l.b16 %v10975
        %v11026 = vpack.c.b16 %v11025, %v11024
        %v11029 = vunpack.c.l.b16 %v10982
        %v11030 = vunpack.c.l.b16 %v10983
        %v11031 = vpack.c.b16 %v11030, %v11029
        %11032 = vrot.lane.b32.xlu0 %v11031, 32
        %v11033 = vpop.permute.xlu0 %11032
        %v11036 = vunpack.c.l.b16 %v10990
        %v11037 = vunpack.c.l.b16 %v10991
        %v11038 = vpack.c.b16 %v11037, %v11036
        %11039 = vrot.lane.b32.xlu0 %v11038, 64
        %v11040 = vpop.permute.xlu0 %11039
        %v11043 = vunpack.c.l.b16 %v10998
        %v11044 = vunpack.c.l.b16 %v10999
        %v11045 = vpack.c.b16 %v11044, %v11043
        %11046 = vrot.lane.b32.xlu0 %v11045, 96
        %v11047 = vpop.permute.xlu0 %11046
        %v11050 = vunpack.c.l.b16 %v11000
        %v11051 = vunpack.c.l.b16 %v11001
        %v11052 = vpack.c.b16 %v11051, %v11050
        %v11055 = vunpack.c.l.b16 %v11008
        %v11056 = vunpack.c.l.b16 %v11009
        %v11057 = vpack.c.b16 %v11056, %v11055
        %11058 = vrot.lane.b32.xlu0 %v11057, 32
        %v11059 = vpop.permute.xlu0 %11058
        %v11062 = vunpack.c.l.b16 %v11012
        %v11063 = vunpack.c.l.b16 %v11013
        %v11064 = vpack.c.b16 %v11063, %v11062
        %11065 = vrot.lane.b32.xlu0 %v11064, 64
        %v11066 = vpop.permute.xlu0 %11065
        %v11069 = vunpack.c.l.b16 %v11016
        %v11070 = vunpack.c.l.b16 %v11017
        %v11071 = vpack.c.b16 %v11070, %v11069
        %11072 = vrot.lane.b32.xlu0 %v11071, 96
        %v11073 = vpop.permute.xlu0 %11072
        %v11076 = vunpack.c.l.b16 %v11020
        %v11077 = vunpack.c.l.b16 %v11021
        %v11078 = vpack.c.b16 %v11077, %v11076
        %v11081 = vsel %vm3023, %v11026, %v11033
        %v11083 = vsel %vm3072, %v11081, %v11040
        %v11085 = vsel %vm3105, %v11083, %v11047
        %v11089 = vsel %vm3023, %v11052, %v11059
        %v11091 = vsel %vm3072, %v11089, %v11066
        %v11093 = vsel %vm3105, %v11091, %v11073
        %v11095 = vperm.slane %v10967, 0
        %v11132 = vunpack.c.l.b16 %v10931
        %v11133 = vunpack.c.l.b16 %v10932
        %v11134 = vunpack.c.l.b16 %v10933
        %v11135 = vunpack.c.l.b16 %v10934
        %v11136 = vunpack.c.l.b16 %v10935
        %v11137 = vunpack.c.l.b16 %v10936
        %v11138 = vunpack.c.l.b16 %v10937
        %v11139 = vunpack.c.l.b16 %v10938
        %v11140 = vunpack.c.l.b16 %v10939
        %v11141 = vunpack.c.l.b16 %v10940
        %v11142 = vunpack.c.l.b16 %v10941
        %v11143 = vunpack.c.l.b16 %v10942
        %v11144 = vunpack.c.l.b16 %v10943
        %v11145 = vunpack.c.l.b16 %v10944
        %v11146 = vunpack.c.l.b16 %v10945
        %v11147 = vunpack.c.l.b16 %v10946
        %v11148 = vunpack.c.l.b16 %v10947
        %v11149 = vunpack.c.l.b16 %v10948
        %v11150 = vunpack.c.l.b16 %v10949
        %v11151 = vunpack.c.l.b16 %v10950
        %v11152 = vunpack.c.l.b16 %v10951
        %v11153 = vunpack.c.l.b16 %v10952
        %v11154 = vunpack.c.l.b16 %v10953
        %v11155 = vunpack.c.l.b16 %v10954
        %v11156 = vunpack.c.l.b16 %v10955
        %v11157 = vunpack.c.l.b16 %v10956
        %v11158 = vunpack.c.l.b16 %v10957
        %v11159 = vunpack.c.l.b16 %v10958
        %v11160 = vunpack.c.l.b16 %v10959
        %v11161 = vunpack.c.l.b16 %v10960
        %v11162 = vunpack.c.l.b16 %v10961
        %v11163 = vunpack.c.l.b16 %v10962
        %v11164 = vunpack.c.l.b16 %v10963
        %v11165 = vunpack.c.l.b16 %v10964
        %v11166 = vunpack.c.l.b16 %v10965
        %v11167 = vunpack.c.l.b16 %v10966
        %v11168 = vpack.c.b16 %v11133, %v11132
        %v11169 = vpack.c.b16 %v11135, %v11134
        %v11170 = vpack.c.b16 %v11137, %v11136
        %v11171 = vpack.c.b16 %v11139, %v11138
        %v11172 = vpack.c.b16 %v11141, %v11140
        %v11173 = vpack.c.b16 %v11143, %v11142
        %v11174 = vpack.c.b16 %v11145, %v11144
        %v11175 = vpack.c.b16 %v11147, %v11146
        %v11176 = vpack.c.b16 %v11149, %v11148
        %v11177 = vpack.c.b16 %v11151, %v11150
        %v11178 = vpack.c.b16 %v11153, %v11152
        %v11179 = vpack.c.b16 %v11155, %v11154
        %v11180 = vpack.c.b16 %v11157, %v11156
        %v11181 = vpack.c.b16 %v11159, %v11158
        %v11182 = vpack.c.b16 %v11161, %v11160
        %v11183 = vpack.c.b16 %v11163, %v11162
        %v11184 = vpack.c.b16 %v11165, %v11164
        %v11185 = vpack.c.b16 %v11167, %v11166
        %v11205 = vsel %vm3023, %v11078, 0
        %11207 = vmatpush.bf16.msra.mxu0 %v11175
        %11208 = vmatpush.bf16.msra.mxu0 %v11174
        %11209 = vmatpush.bf16.msra.mxu0 %v11173
        %11210 = vmatpush.bf16.msra.mxu0 %v11172
        %11211 = vmatpush.bf16.msra.mxu0 %v11171
        %11212 = vmatpush.bf16.msra.mxu0 %v11170
        %11213 = vmatpush.bf16.msra.mxu0 %v11169
        %11214 = vmatpush.bf16.msra.mxu0 %v11168
        %11215 = vmatmul.bf16.gmra.mxu0 %v11085
        %v11216 = vpop.f32.mrf.mxu0
        %v11217 = vadd.f32 %v11095, %v11216
        %v11218 = vpop.f32.mrf.mxu0
        %v11219 = vadd.f32 %v11095, %v11218
        %11220 = vdwg.mxu0
        %11221 = vmatpush.bf16.msra.mxu0 %v11183
        %11222 = vmatpush.bf16.msra.mxu0 %v11182
        %11223 = vmatpush.bf16.msra.mxu0 %v11181
        %11224 = vmatpush.bf16.msra.mxu0 %v11180
        %11225 = vmatpush.bf16.msra.mxu0 %v11179
        %11226 = vmatpush.bf16.msra.mxu0 %v11178
        %11227 = vmatpush.bf16.msra.mxu0 %v11177
        %11228 = vmatpush.bf16.msra.mxu0 %v11176
        %11229 = vmatmul.bf16.gmra.mxu0 %v11093
        %v11230 = vpop.f32.mrf.mxu0
        %v11231 = vadd.f32 %v11217, %v11230
        %v11232 = vpop.f32.mrf.mxu0
        %v11233 = vadd.f32 %v11219, %v11232
        %11234 = vdwg.mxu0
        %11235 = vmatpush.bf16.msra.mxu0 0
        %11236 = vmatpush.bf16.msra.mxu0 0
        %11237 = vmatpush.bf16.msra.mxu0 0
        %11238 = vmatpush.bf16.msra.mxu0 0
        %11239 = vmatpush.bf16.msra.mxu0 0
        %11240 = vmatpush.bf16.msra.mxu0 0
        %11241 = vmatpush.bf16.msra.mxu0 %v11185
        %11242 = vmatpush.bf16.msra.mxu0 %v11184
        %11243 = vmatmul.bf16.gmra.mxu0 %v11205
        %v11244 = vpop.f32.mrf.mxu0
        %v11245 = vadd.f32 %v11231, %v11244
        %v11246 = vpop.f32.mrf.mxu0
        %v11247 = vadd.f32 %v11233, %v11246
        %11248 = vdwg.mxu0
        %v11249 = vmax.f32 %v11245, 0.0
        %v11250 = vmax.f32 %v11247, 0.0
        %s11251 = scalar_lea.vmem %s1, 1728
        %v11252 = vld [vmem:[%s11251] sm:$0xf]
        %v11253 = vld [vmem:[%s11251 + $0x4] sm:$0xf]
        %v11254 = vld [vmem:[%s11251 + $0x8] sm:$0xf]
        %v11255 = vld [vmem:[%s11251 + $0xc] sm:$0xf]
        %v11256 = vld [vmem:[%s11251 + $0x10] sm:$0xf]
        %v11257 = vld [vmem:[%s11251 + $0x14] sm:$0xf]
        %v11258 = vld [vmem:[%s11251 + $0x18] sm:$0xf]
        %v11259 = vld [vmem:[%s11251 + $0x1c] sm:$0xf]
        %v11260 = vld [vmem:[%s11251 + $0x20] sm:$0xf]
        %v11261 = vld [vmem:[%s11251 + $0x24] sm:$0xf]
        %v11262 = vld [vmem:[%s11251 + $0x28] sm:$0xf]
        %v11263 = vld [vmem:[%s11251 + $0x2c] sm:$0xf]
        %v11264 = vld [vmem:[%s11251 + $0x30] sm:$0xf]
        %v11265 = vld [vmem:[%s11251 + $0x34] sm:$0xf]
        %v11266 = vld [vmem:[%s11251 + $0x38] sm:$0xf]
        %v11267 = vld [vmem:[%s11251 + $0x3c] sm:$0xf]
        %v11268 = vld [vmem:[%s11251 + $0x40] sm:$0xf]
        %v11269 = vld [vmem:[%s11251 + $0x44] sm:$0xf]
        %v11270 = vld [vmem:[%s11251 + $0x48] sm:$0xf]
        %v11271 = vld [vmem:[%s11251 + $0x4c] sm:$0xf]
        %v11272 = vld [vmem:[%s11251 + $0x50] sm:$0xf]
        %v11273 = vld [vmem:[%s11251 + $0x54] sm:$0xf]
        %v11274 = vld [vmem:[%s11251 + $0x58] sm:$0xf]
        %v11275 = vld [vmem:[%s11251 + $0x5c] sm:$0xf]
        %v11276 = vld [vmem:[%s11251 + $0x60] sm:$0xf]
        %v11277 = vld [vmem:[%s11251 + $0x64] sm:$0xf]
        %v11278 = vld [vmem:[%s11251 + $0x68] sm:$0xf]
        %v11279 = vld [vmem:[%s11251 + $0x6c] sm:$0xf]
        %v11280 = vld [vmem:[%s11251 + $0x70] sm:$0xf]
        %v11281 = vld [vmem:[%s11251 + $0x74] sm:$0xf]
        %v11282 = vld [vmem:[%s11251 + $0x78] sm:$0xf]
        %v11283 = vld [vmem:[%s11251 + $0x7c] sm:$0xf]
        %v11284 = vld [vmem:[%s11251 + $0x80] sm:$0xf]
        %v11285 = vld [vmem:[%s11251 + $0x84] sm:$0xf]
        %v11286 = vld [vmem:[%s11251 + $0x88] sm:$0xf]
        %v11287 = vld [vmem:[%s11251 + $0x8c] sm:$0xf]
        %v11288 = vld [vmem:[%s3 + $0xf] sm:$0x1]
        %v11289 = vrot.slane %v11249, 3
        %v11290 = vrot.slane %v11250, 3
        %v11291 = vsel %vm8944, %v11289, %v11290
        %v11292 = vsel %vm8944, %v11290, %v11289
        %v11293 = vmul.f32 %v11292, %v8950
        %v11294 = vmul.f32 %v11291, %v8955
        %v11295 = vpack.c.bf16 %v11293, %v11293
        %v11296 = vpack.c.bf16 %v11294, %v11294
        %v11297 = vrot.slane %v11249, 4
        %v11298 = vrot.slane %v11250, 4
        %v11299 = vsel %vm8963, %v11297, %v11298
        %v11300 = vsel %vm8963, %v11298, %v11297
        %v11301 = vmul.f32 %v11300, %v8968
        %v11302 = vmul.f32 %v11299, %v8972
        %v11303 = vpack.c.bf16 %v11301, %v11301
        %v11304 = vpack.c.bf16 %v11302, %v11302
        %v11305 = vrot.slane %v11249, 5
        %v11306 = vrot.slane %v11250, 5
        %v11307 = vsel %vm8980, %v11305, %v11306
        %v11308 = vsel %vm8980, %v11306, %v11305
        %v11309 = vmul.f32 %v11308, %v8985
        %v11310 = vmul.f32 %v11307, %v8989
        %v11311 = vpack.c.bf16 %v11309, %v11309
        %v11312 = vpack.c.bf16 %v11310, %v11310
        %v11313 = vrot.slane %v11249, 7
        %v11314 = vrot.slane %v11250, 7
        %v11315 = vsel %vm413, %v11313, %v11314
        %v11316 = vsel %vm413, %v11314, %v11313
        %v11317 = vmul.f32 %v11316, %v9001
        %v11318 = vmul.f32 %v11315, %v9005
        %v11319 = vpack.c.bf16 %v11317, %v11317
        %v11320 = vpack.c.bf16 %v11318, %v11318
        %v11321 = vpack.c.bf16 %v11249, %v11249
        %v11322 = vpack.c.bf16 %v11250, %v11250
        %v11323 = vrot.slane %v11249, 1
        %v11324 = vrot.slane %v11250, 1
        %v11325 = vsel %vm894, %v11323, %v11324
        %v11326 = vsel %vm894, %v11324, %v11323
        %v11327 = vmul.f32 %v11325, %v9017
        %v11328 = vmul.f32 %v11326, %v9021
        %v11329 = vpack.c.bf16 %v11327, %v11327
        %v11330 = vpack.c.bf16 %v11328, %v11328
        %v11331 = vmul.f32 %v11291, %v9029
        %v11332 = vmul.f32 %v11292, %v9033
        %v11333 = vpack.c.bf16 %v11331, %v11331
        %v11334 = vpack.c.bf16 %v11332, %v11332
        %v11335 = vmul.f32 %v11299, %v9041
        %v11336 = vmul.f32 %v11300, %v9045
        %v11337 = vpack.c.bf16 %v11335, %v11335
        %v11338 = vpack.c.bf16 %v11336, %v11336
        %v11339 = vmul.f32 %v11307, %v9053
        %v11340 = vmul.f32 %v11308, %v9057
        %v11341 = vpack.c.bf16 %v11339, %v11339
        %v11342 = vpack.c.bf16 %v11340, %v11340
        %v11345 = vunpack.c.l.b16 %v11295
        %v11346 = vunpack.c.l.b16 %v11296
        %v11347 = vpack.c.b16 %v11346, %v11345
        %v11350 = vunpack.c.l.b16 %v11303
        %v11351 = vunpack.c.l.b16 %v11304
        %v11352 = vpack.c.b16 %v11351, %v11350
        %11353 = vrot.lane.b32.xlu0 %v11352, 32
        %v11354 = vpop.permute.xlu0 %11353
        %v11357 = vunpack.c.l.b16 %v11311
        %v11358 = vunpack.c.l.b16 %v11312
        %v11359 = vpack.c.b16 %v11358, %v11357
        %11360 = vrot.lane.b32.xlu0 %v11359, 64
        %v11361 = vpop.permute.xlu0 %11360
        %v11364 = vunpack.c.l.b16 %v11319
        %v11365 = vunpack.c.l.b16 %v11320
        %v11366 = vpack.c.b16 %v11365, %v11364
        %11367 = vrot.lane.b32.xlu0 %v11366, 96
        %v11368 = vpop.permute.xlu0 %11367
        %v11371 = vunpack.c.l.b16 %v11321
        %v11372 = vunpack.c.l.b16 %v11322
        %v11373 = vpack.c.b16 %v11372, %v11371
        %v11376 = vunpack.c.l.b16 %v11329
        %v11377 = vunpack.c.l.b16 %v11330
        %v11378 = vpack.c.b16 %v11377, %v11376
        %11379 = vrot.lane.b32.xlu0 %v11378, 32
        %v11380 = vpop.permute.xlu0 %11379
        %v11383 = vunpack.c.l.b16 %v11333
        %v11384 = vunpack.c.l.b16 %v11334
        %v11385 = vpack.c.b16 %v11384, %v11383
        %11386 = vrot.lane.b32.xlu0 %v11385, 64
        %v11387 = vpop.permute.xlu0 %11386
        %v11390 = vunpack.c.l.b16 %v11337
        %v11391 = vunpack.c.l.b16 %v11338
        %v11392 = vpack.c.b16 %v11391, %v11390
        %11393 = vrot.lane.b32.xlu0 %v11392, 96
        %v11394 = vpop.permute.xlu0 %11393
        %v11397 = vunpack.c.l.b16 %v11341
        %v11398 = vunpack.c.l.b16 %v11342
        %v11399 = vpack.c.b16 %v11398, %v11397
        %v11402 = vsel %vm3023, %v11347, %v11354
        %v11404 = vsel %vm3072, %v11402, %v11361
        %v11406 = vsel %vm3105, %v11404, %v11368
        %v11410 = vsel %vm3023, %v11373, %v11380
        %v11412 = vsel %vm3072, %v11410, %v11387
        %v11414 = vsel %vm3105, %v11412, %v11394
        %v11416 = vperm.slane %v11288, 0
        %v11453 = vunpack.c.l.b16 %v11252
        %v11454 = vunpack.c.l.b16 %v11253
        %v11455 = vunpack.c.l.b16 %v11254
        %v11456 = vunpack.c.l.b16 %v11255
        %v11457 = vunpack.c.l.b16 %v11256
        %v11458 = vunpack.c.l.b16 %v11257
        %v11459 = vunpack.c.l.b16 %v11258
        %v11460 = vunpack.c.l.b16 %v11259
        %v11461 = vunpack.c.l.b16 %v11260
        %v11462 = vunpack.c.l.b16 %v11261
        %v11463 = vunpack.c.l.b16 %v11262
        %v11464 = vunpack.c.l.b16 %v11263
        %v11465 = vunpack.c.l.b16 %v11264
        %v11466 = vunpack.c.l.b16 %v11265
        %v11467 = vunpack.c.l.b16 %v11266
        %v11468 = vunpack.c.l.b16 %v11267
        %v11469 = vunpack.c.l.b16 %v11268
        %v11470 = vunpack.c.l.b16 %v11269
        %v11471 = vunpack.c.l.b16 %v11270
        %v11472 = vunpack.c.l.b16 %v11271
        %v11473 = vunpack.c.l.b16 %v11272
        %v11474 = vunpack.c.l.b16 %v11273
        %v11475 = vunpack.c.l.b16 %v11274
        %v11476 = vunpack.c.l.b16 %v11275
        %v11477 = vunpack.c.l.b16 %v11276
        %v11478 = vunpack.c.l.b16 %v11277
        %v11479 = vunpack.c.l.b16 %v11278
        %v11480 = vunpack.c.l.b16 %v11279
        %v11481 = vunpack.c.l.b16 %v11280
        %v11482 = vunpack.c.l.b16 %v11281
        %v11483 = vunpack.c.l.b16 %v11282
        %v11484 = vunpack.c.l.b16 %v11283
        %v11485 = vunpack.c.l.b16 %v11284
        %v11486 = vunpack.c.l.b16 %v11285
        %v11487 = vunpack.c.l.b16 %v11286
        %v11488 = vunpack.c.l.b16 %v11287
        %v11489 = vpack.c.b16 %v11454, %v11453
        %v11490 = vpack.c.b16 %v11456, %v11455
        %v11491 = vpack.c.b16 %v11458, %v11457
        %v11492 = vpack.c.b16 %v11460, %v11459
        %v11493 = vpack.c.b16 %v11462, %v11461
        %v11494 = vpack.c.b16 %v11464, %v11463
        %v11495 = vpack.c.b16 %v11466, %v11465
        %v11496 = vpack.c.b16 %v11468, %v11467
        %v11497 = vpack.c.b16 %v11470, %v11469
        %v11498 = vpack.c.b16 %v11472, %v11471
        %v11499 = vpack.c.b16 %v11474, %v11473
        %v11500 = vpack.c.b16 %v11476, %v11475
        %v11501 = vpack.c.b16 %v11478, %v11477
        %v11502 = vpack.c.b16 %v11480, %v11479
        %v11503 = vpack.c.b16 %v11482, %v11481
        %v11504 = vpack.c.b16 %v11484, %v11483
        %v11505 = vpack.c.b16 %v11486, %v11485
        %v11506 = vpack.c.b16 %v11488, %v11487
        %v11526 = vsel %vm3023, %v11399, 0
        %11528 = vmatpush.bf16.msra.mxu0 %v11496
        %11529 = vmatpush.bf16.msra.mxu0 %v11495
        %11530 = vmatpush.bf16.msra.mxu0 %v11494
        %11531 = vmatpush.bf16.msra.mxu0 %v11493
        %11532 = vmatpush.bf16.msra.mxu0 %v11492
        %11533 = vmatpush.bf16.msra.mxu0 %v11491
        %11534 = vmatpush.bf16.msra.mxu0 %v11490
        %11535 = vmatpush.bf16.msra.mxu0 %v11489
        %11536 = vmatmul.bf16.gmra.mxu0 %v11406
        %v11537 = vpop.f32.mrf.mxu0
        %v11538 = vadd.f32 %v11416, %v11537
        %v11539 = vpop.f32.mrf.mxu0
        %v11540 = vadd.f32 %v11416, %v11539
        %11541 = vdwg.mxu0
        %11542 = vmatpush.bf16.msra.mxu0 %v11504
        %11543 = vmatpush.bf16.msra.mxu0 %v11503
        %11544 = vmatpush.bf16.msra.mxu0 %v11502
        %11545 = vmatpush.bf16.msra.mxu0 %v11501
        %11546 = vmatpush.bf16.msra.mxu0 %v11500
        %11547 = vmatpush.bf16.msra.mxu0 %v11499
        %11548 = vmatpush.bf16.msra.mxu0 %v11498
        %11549 = vmatpush.bf16.msra.mxu0 %v11497
        %11550 = vmatmul.bf16.gmra.mxu0 %v11414
        %v11551 = vpop.f32.mrf.mxu0
        %v11552 = vadd.f32 %v11538, %v11551
        %v11553 = vpop.f32.mrf.mxu0
        %v11554 = vadd.f32 %v11540, %v11553
        %11555 = vdwg.mxu0
        %11556 = vmatpush.bf16.msra.mxu0 0
        %11557 = vmatpush.bf16.msra.mxu0 0
        %11558 = vmatpush.bf16.msra.mxu0 0
        %11559 = vmatpush.bf16.msra.mxu0 0
        %11560 = vmatpush.bf16.msra.mxu0 0
        %11561 = vmatpush.bf16.msra.mxu0 0
        %11562 = vmatpush.bf16.msra.mxu0 %v11506
        %11563 = vmatpush.bf16.msra.mxu0 %v11505
        %11564 = vmatmul.bf16.gmra.mxu0 %v11526
        %v11565 = vpop.f32.mrf.mxu0
        %v11566 = vadd.f32 %v11552, %v11565
        %v11567 = vpop.f32.mrf.mxu0
        %v11568 = vadd.f32 %v11554, %v11567
        %11569 = vdwg.mxu0
        %v11570 = vadd.f32 %v11566, %v10928
        %v11571 = vadd.f32 %v11568, %v10929
        %v11572 = vmax.f32 %v11570, 0.0
        %v11573 = vmax.f32 %v11571, 0.0
        %s11574 = scalar_lea.vmem %s1, 1872
        %v11575 = vld [vmem:[%s11574] sm:$0xf]
        %v11576 = vld [vmem:[%s11574 + $0x4] sm:$0xf]
        %v11577 = vld [vmem:[%s11574 + $0x8] sm:$0xf]
        %v11578 = vld [vmem:[%s11574 + $0xc] sm:$0xf]
        %v11579 = vld [vmem:[%s11574 + $0x10] sm:$0xf]
        %v11580 = vld [vmem:[%s11574 + $0x14] sm:$0xf]
        %v11581 = vld [vmem:[%s11574 + $0x18] sm:$0xf]
        %v11582 = vld [vmem:[%s11574 + $0x1c] sm:$0xf]
        %v11583 = vld [vmem:[%s11574 + $0x20] sm:$0xf]
        %v11584 = vld [vmem:[%s11574 + $0x24] sm:$0xf]
        %v11585 = vld [vmem:[%s11574 + $0x28] sm:$0xf]
        %v11586 = vld [vmem:[%s11574 + $0x2c] sm:$0xf]
        %v11587 = vld [vmem:[%s11574 + $0x30] sm:$0xf]
        %v11588 = vld [vmem:[%s11574 + $0x34] sm:$0xf]
        %v11589 = vld [vmem:[%s11574 + $0x38] sm:$0xf]
        %v11590 = vld [vmem:[%s11574 + $0x3c] sm:$0xf]
        %v11591 = vld [vmem:[%s11574 + $0x40] sm:$0xf]
        %v11592 = vld [vmem:[%s11574 + $0x44] sm:$0xf]
        %v11593 = vld [vmem:[%s11574 + $0x48] sm:$0xf]
        %v11594 = vld [vmem:[%s11574 + $0x4c] sm:$0xf]
        %v11595 = vld [vmem:[%s11574 + $0x50] sm:$0xf]
        %v11596 = vld [vmem:[%s11574 + $0x54] sm:$0xf]
        %v11597 = vld [vmem:[%s11574 + $0x58] sm:$0xf]
        %v11598 = vld [vmem:[%s11574 + $0x5c] sm:$0xf]
        %v11599 = vld [vmem:[%s11574 + $0x60] sm:$0xf]
        %v11600 = vld [vmem:[%s11574 + $0x64] sm:$0xf]
        %v11601 = vld [vmem:[%s11574 + $0x68] sm:$0xf]
        %v11602 = vld [vmem:[%s11574 + $0x6c] sm:$0xf]
        %v11603 = vld [vmem:[%s11574 + $0x70] sm:$0xf]
        %v11604 = vld [vmem:[%s11574 + $0x74] sm:$0xf]
        %v11605 = vld [vmem:[%s11574 + $0x78] sm:$0xf]
        %v11606 = vld [vmem:[%s11574 + $0x7c] sm:$0xf]
        %v11607 = vld [vmem:[%s11574 + $0x80] sm:$0xf]
        %v11608 = vld [vmem:[%s11574 + $0x84] sm:$0xf]
        %v11609 = vld [vmem:[%s11574 + $0x88] sm:$0xf]
        %v11610 = vld [vmem:[%s11574 + $0x8c] sm:$0xf]
        %v11611 = vld [vmem:[%s3 + $0x10] sm:$0x1]
        %v11612 = vrot.slane %v11572, 3
        %v11613 = vrot.slane %v11573, 3
        %v11614 = vsel %vm8944, %v11612, %v11613
        %v11615 = vsel %vm8944, %v11613, %v11612
        %v11616 = vmul.f32 %v11615, %v8950
        %v11617 = vmul.f32 %v11614, %v8955
        %v11618 = vpack.c.bf16 %v11616, %v11616
        %v11619 = vpack.c.bf16 %v11617, %v11617
        %v11620 = vrot.slane %v11572, 4
        %v11621 = vrot.slane %v11573, 4
        %v11622 = vsel %vm8963, %v11620, %v11621
        %v11623 = vsel %vm8963, %v11621, %v11620
        %v11624 = vmul.f32 %v11623, %v8968
        %v11625 = vmul.f32 %v11622, %v8972
        %v11626 = vpack.c.bf16 %v11624, %v11624
        %v11627 = vpack.c.bf16 %v11625, %v11625
        %v11628 = vrot.slane %v11572, 5
        %v11629 = vrot.slane %v11573, 5
        %v11630 = vsel %vm8980, %v11628, %v11629
        %v11631 = vsel %vm8980, %v11629, %v11628
        %v11632 = vmul.f32 %v11631, %v8985
        %v11633 = vmul.f32 %v11630, %v8989
        %v11634 = vpack.c.bf16 %v11632, %v11632
        %v11635 = vpack.c.bf16 %v11633, %v11633
        %v11636 = vrot.slane %v11572, 7
        %v11637 = vrot.slane %v11573, 7
        %v11638 = vsel %vm413, %v11636, %v11637
        %v11639 = vsel %vm413, %v11637, %v11636
        %v11640 = vmul.f32 %v11639, %v9001
        %v11641 = vmul.f32 %v11638, %v9005
        %v11642 = vpack.c.bf16 %v11640, %v11640
        %v11643 = vpack.c.bf16 %v11641, %v11641
        %v11644 = vpack.c.bf16 %v11572, %v11572
        %v11645 = vpack.c.bf16 %v11573, %v11573
        %v11646 = vrot.slane %v11572, 1
        %v11647 = vrot.slane %v11573, 1
        %v11648 = vsel %vm894, %v11646, %v11647
        %v11649 = vsel %vm894, %v11647, %v11646
        %v11650 = vmul.f32 %v11648, %v9017
        %v11651 = vmul.f32 %v11649, %v9021
        %v11652 = vpack.c.bf16 %v11650, %v11650
        %v11653 = vpack.c.bf16 %v11651, %v11651
        %v11654 = vmul.f32 %v11614, %v9029
        %v11655 = vmul.f32 %v11615, %v9033
        %v11656 = vpack.c.bf16 %v11654, %v11654
        %v11657 = vpack.c.bf16 %v11655, %v11655
        %v11658 = vmul.f32 %v11622, %v9041
        %v11659 = vmul.f32 %v11623, %v9045
        %v11660 = vpack.c.bf16 %v11658, %v11658
        %v11661 = vpack.c.bf16 %v11659, %v11659
        %v11662 = vmul.f32 %v11630, %v9053
        %v11663 = vmul.f32 %v11631, %v9057
        %v11664 = vpack.c.bf16 %v11662, %v11662
        %v11665 = vpack.c.bf16 %v11663, %v11663
        %v11668 = vunpack.c.l.b16 %v11618
        %v11669 = vunpack.c.l.b16 %v11619
        %v11670 = vpack.c.b16 %v11669, %v11668
        %v11673 = vunpack.c.l.b16 %v11626
        %v11674 = vunpack.c.l.b16 %v11627
        %v11675 = vpack.c.b16 %v11674, %v11673
        %11676 = vrot.lane.b32.xlu0 %v11675, 32
        %v11677 = vpop.permute.xlu0 %11676
        %v11680 = vunpack.c.l.b16 %v11634
        %v11681 = vunpack.c.l.b16 %v11635
        %v11682 = vpack.c.b16 %v11681, %v11680
        %11683 = vrot.lane.b32.xlu0 %v11682, 64
        %v11684 = vpop.permute.xlu0 %11683
        %v11687 = vunpack.c.l.b16 %v11642
        %v11688 = vunpack.c.l.b16 %v11643
        %v11689 = vpack.c.b16 %v11688, %v11687
        %11690 = vrot.lane.b32.xlu0 %v11689, 96
        %v11691 = vpop.permute.xlu0 %11690
        %v11694 = vunpack.c.l.b16 %v11644
        %v11695 = vunpack.c.l.b16 %v11645
        %v11696 = vpack.c.b16 %v11695, %v11694
        %v11699 = vunpack.c.l.b16 %v11652
        %v11700 = vunpack.c.l.b16 %v11653
        %v11701 = vpack.c.b16 %v11700, %v11699
        %11702 = vrot.lane.b32.xlu0 %v11701, 32
        %v11703 = vpop.permute.xlu0 %11702
        %v11706 = vunpack.c.l.b16 %v11656
        %v11707 = vunpack.c.l.b16 %v11657
        %v11708 = vpack.c.b16 %v11707, %v11706
        %11709 = vrot.lane.b32.xlu0 %v11708, 64
        %v11710 = vpop.permute.xlu0 %11709
        %v11713 = vunpack.c.l.b16 %v11660
        %v11714 = vunpack.c.l.b16 %v11661
        %v11715 = vpack.c.b16 %v11714, %v11713
        %11716 = vrot.lane.b32.xlu0 %v11715, 96
        %v11717 = vpop.permute.xlu0 %11716
        %v11720 = vunpack.c.l.b16 %v11664
        %v11721 = vunpack.c.l.b16 %v11665
        %v11722 = vpack.c.b16 %v11721, %v11720
        %v11725 = vsel %vm3023, %v11670, %v11677
        %v11727 = vsel %vm3072, %v11725, %v11684
        %v11729 = vsel %vm3105, %v11727, %v11691
        %v11733 = vsel %vm3023, %v11696, %v11703
        %v11735 = vsel %vm3072, %v11733, %v11710
        %v11737 = vsel %vm3105, %v11735, %v11717
        %v11739 = vperm.slane %v11611, 0
        %v11776 = vunpack.c.l.b16 %v11575
        %v11777 = vunpack.c.l.b16 %v11576
        %v11778 = vunpack.c.l.b16 %v11577
        %v11779 = vunpack.c.l.b16 %v11578
        %v11780 = vunpack.c.l.b16 %v11579
        %v11781 = vunpack.c.l.b16 %v11580
        %v11782 = vunpack.c.l.b16 %v11581
        %v11783 = vunpack.c.l.b16 %v11582
        %v11784 = vunpack.c.l.b16 %v11583
        %v11785 = vunpack.c.l.b16 %v11584
        %v11786 = vunpack.c.l.b16 %v11585
        %v11787 = vunpack.c.l.b16 %v11586
        %v11788 = vunpack.c.l.b16 %v11587
        %v11789 = vunpack.c.l.b16 %v11588
        %v11790 = vunpack.c.l.b16 %v11589
        %v11791 = vunpack.c.l.b16 %v11590
        %v11792 = vunpack.c.l.b16 %v11591
        %v11793 = vunpack.c.l.b16 %v11592
        %v11794 = vunpack.c.l.b16 %v11593
        %v11795 = vunpack.c.l.b16 %v11594
        %v11796 = vunpack.c.l.b16 %v11595
        %v11797 = vunpack.c.l.b16 %v11596
        %v11798 = vunpack.c.l.b16 %v11597
        %v11799 = vunpack.c.l.b16 %v11598
        %v11800 = vunpack.c.l.b16 %v11599
        %v11801 = vunpack.c.l.b16 %v11600
        %v11802 = vunpack.c.l.b16 %v11601
        %v11803 = vunpack.c.l.b16 %v11602
        %v11804 = vunpack.c.l.b16 %v11603
        %v11805 = vunpack.c.l.b16 %v11604
        %v11806 = vunpack.c.l.b16 %v11605
        %v11807 = vunpack.c.l.b16 %v11606
        %v11808 = vunpack.c.l.b16 %v11607
        %v11809 = vunpack.c.l.b16 %v11608
        %v11810 = vunpack.c.l.b16 %v11609
        %v11811 = vunpack.c.l.b16 %v11610
        %v11812 = vpack.c.b16 %v11777, %v11776
        %v11813 = vpack.c.b16 %v11779, %v11778
        %v11814 = vpack.c.b16 %v11781, %v11780
        %v11815 = vpack.c.b16 %v11783, %v11782
        %v11816 = vpack.c.b16 %v11785, %v11784
        %v11817 = vpack.c.b16 %v11787, %v11786
        %v11818 = vpack.c.b16 %v11789, %v11788
        %v11819 = vpack.c.b16 %v11791, %v11790
        %v11820 = vpack.c.b16 %v11793, %v11792
        %v11821 = vpack.c.b16 %v11795, %v11794
        %v11822 = vpack.c.b16 %v11797, %v11796
        %v11823 = vpack.c.b16 %v11799, %v11798
        %v11824 = vpack.c.b16 %v11801, %v11800
        %v11825 = vpack.c.b16 %v11803, %v11802
        %v11826 = vpack.c.b16 %v11805, %v11804
        %v11827 = vpack.c.b16 %v11807, %v11806
        %v11828 = vpack.c.b16 %v11809, %v11808
        %v11829 = vpack.c.b16 %v11811, %v11810
        %v11849 = vsel %vm3023, %v11722, 0
        %11851 = vmatpush.bf16.msra.mxu0 %v11819
        %11852 = vmatpush.bf16.msra.mxu0 %v11818
        %11853 = vmatpush.bf16.msra.mxu0 %v11817
        %11854 = vmatpush.bf16.msra.mxu0 %v11816
        %11855 = vmatpush.bf16.msra.mxu0 %v11815
        %11856 = vmatpush.bf16.msra.mxu0 %v11814
        %11857 = vmatpush.bf16.msra.mxu0 %v11813
        %11858 = vmatpush.bf16.msra.mxu0 %v11812
        %11859 = vmatmul.bf16.gmra.mxu0 %v11729
        %v11860 = vpop.f32.mrf.mxu0
        %v11861 = vadd.f32 %v11739, %v11860
        %v11862 = vpop.f32.mrf.mxu0
        %v11863 = vadd.f32 %v11739, %v11862
        %11864 = vdwg.mxu0
        %11865 = vmatpush.bf16.msra.mxu0 %v11827
        %11866 = vmatpush.bf16.msra.mxu0 %v11826
        %11867 = vmatpush.bf16.msra.mxu0 %v11825
        %11868 = vmatpush.bf16.msra.mxu0 %v11824
        %11869 = vmatpush.bf16.msra.mxu0 %v11823
        %11870 = vmatpush.bf16.msra.mxu0 %v11822
        %11871 = vmatpush.bf16.msra.mxu0 %v11821
        %11872 = vmatpush.bf16.msra.mxu0 %v11820
        %11873 = vmatmul.bf16.gmra.mxu0 %v11737
        %v11874 = vpop.f32.mrf.mxu0
        %v11875 = vadd.f32 %v11861, %v11874
        %v11876 = vpop.f32.mrf.mxu0
        %v11877 = vadd.f32 %v11863, %v11876
        %11878 = vdwg.mxu0
        %11879 = vmatpush.bf16.msra.mxu0 0
        %11880 = vmatpush.bf16.msra.mxu0 0
        %11881 = vmatpush.bf16.msra.mxu0 0
        %11882 = vmatpush.bf16.msra.mxu0 0
        %11883 = vmatpush.bf16.msra.mxu0 0
        %11884 = vmatpush.bf16.msra.mxu0 0
        %11885 = vmatpush.bf16.msra.mxu0 %v11829
        %11886 = vmatpush.bf16.msra.mxu0 %v11828
        %11887 = vmatmul.bf16.gmra.mxu0 %v11849
        %v11888 = vpop.f32.mrf.mxu0
        %v11889 = vadd.f32 %v11875, %v11888
        %v11890 = vpop.f32.mrf.mxu0
        %v11891 = vadd.f32 %v11877, %v11890
        %11892 = vdwg.mxu0
        %v11893 = vmax.f32 %v11889, 0.0
        %v11894 = vmax.f32 %v11891, 0.0
        %11895 = vst.msk [vmem:[%s271] sm:$0xff] %vm3023, %v11893
        %11896 = vst.msk [vmem:[%s271 + $0x8] sm:$0xff] %vm3023, %v11894
        %s11897 = sand.u32 %s181, 1
        %s11898 = scalar_lea.sflag [#allocation3], %s11897
        %s11899 = sand.u32 %s181, 1
        %s11900 = smul.addr %s11899, 16
        %s11901 = scalar_lea.vmem [#allocation2], %s11900
        // Predicated region
        $region49: #{resnet_v2_forward.1} parent=47 // pred_check
          %p11902 = pneg %p191
        $region50: #{resnet_v2_forward.1} parent=47 // pred_check_branch
          %11904 = sbr.rel (%p11902) target = $region52
        $region51: #{resnet_v2_forward.1} parent=47 // pred_region
          %11906 = vsyncadd %s11898, 0
          %s11907 = smul.addr %s21, 2
          %s11908 = smul.addr %s11907, 8
          %s11909 = scalar_lea.hbm %s7, %s11908
          %s11910 = sshll.u32 %s11901, 4
          %s11911 = int_to_ptr.vmem [resolvable:$true] %s11910
          %s11912 = sshll.u32 %s11909, 4
          %s11913 = int_to_ptr.hbm [resolvable:$true] %s11912
          %11918 = dma.vmem_to_hbm [thread:$0]  %s11911, 256, %s11913, %s11898, 128, 128, 8
        $region52: #{resnet_v2_forward.1} parent=47 // pred_fallthru
          _
      $region48: #{resnet_v2_forward.1} parent=5 // pred_fallthru
        _
      %p11919 = scmp.le.s32.totalorder 2, %s16
      // Predicated region
      $region53: #{resnet_v2_forward.1} parent=5 // pred_check
        %p11920 = pneg %p11919
      $region54: #{resnet_v2_forward.1} parent=5 // pred_check_branch
        %11922 = sbr.rel (%p11920) target = $region56
      $region55: #{resnet_v2_forward.1} parent=5 // pred_region
        %s11923 = ssub.s32 %s16, 2
        // Predicated region
        $region57: #{resnet_v2_forward.1} parent=55 // pred_check
          %p11924 = pneg %p197
        $region58: #{resnet_v2_forward.1} parent=55 // pred_check_branch
          %11926 = sbr.rel (%p11924) target = $region60
        $region59: #{resnet_v2_forward.1} parent=55 // pred_region
          %s11927 = sand.u32 %s182, 1
          %s11928 = scalar_lea.sflag [#allocation3], %s11927
          %s11929 = sand.u32 %s182, 1
          %s11930 = smul.addr %s11929, 16
          %s11931 = scalar_lea.vmem [#allocation2], %s11930
          %11933 = dma.done %s11928, 256
        $region60: #{resnet_v2_forward.1} parent=55 // pred_fallthru
          _
      $region56: #{resnet_v2_forward.1} parent=5 // pred_fallthru
        _
    $region6: #{resnet_v2_forward.1} parent=1 // loop_footer
      %s20 = sadd.s32 1, %s16
    $region7: #{resnet_v2_forward.1} parent=1 // loop_footer_branch
      %15 = sbr.rel target = $region3
    $region8: #{resnet_v2_forward.1} parent=1 // loop_exit
      _
    %11934 = vsyncpa [#allocation3], 1
    %s11935 = scalar_lea.sflag [#allocation3], 1
    %11936 = vsyncpa %s11935, 1

</llo_original>
